<compile_context>
chip_gen: v6e
topology: v6e:2x2x1
jax: 0.10.0
libtpu: 0.0.40
codegen_flags: <defaults>
</compile_context>

<pallas_src>
import functools
import math

import jax
import jax.numpy as jnp
from jax.experimental import pallas as pl
from jax.experimental.pallas import tpu as pltpu

EPS = 1e-5  # PyTorch LayerNorm default eps


# ----------------------------- fused kernel -----------------------------

def _fused_transformer_kernel(tok_ref, emb_ref,
                              w_qkv, b_qkv, w_out, b_out,
                              w1, b1, w2, b2,
                              ln_g, ln_b, fc_w, fc_b,
                              o_ref, *, num_layers, num_heads):
    """Embedding gather + full encoder + full decoder + fc_out for ONE batch element."""
    T = tok_ref.shape[0]                     # tokens handled by this grid step (= seq)
    Vp, E = emb_ref.shape
    Dh = E // num_heads
    scale = 1.0 / math.sqrt(Dh)

    # ---- embedding gather as a one-hot matmul (stays on the MXU) ----
    ids = tok_ref[...]                                            # (T, 1) int32
    cols = jax.lax.broadcasted_iota(jnp.int32, (T, Vp), 1)        # (T, Vp)
    onehot = jnp.where(cols == ids, 1.0, 0.0)                     # (T, Vp) f32
    x = jnp.dot(onehot, emb_ref[...], preferred_element_type=jnp.float32)   # (T, E)

    def layer_norm(y, i):
        mean = jnp.mean(y, axis=-1, keepdims=True)
        var = jnp.mean(jnp.square(y - mean), axis=-1, keepdims=True)
        return (y - mean) * jax.lax.rsqrt(var + EPS) * ln_g[i] + ln_b[i]

    def attention(xq, xkv, blk):
        acc = None
        for h in range(num_heads):                                # tiny static unroll
            base = (blk * num_heads + h) * 3
            q = jnp.dot(xq, w_qkv[base + 0],
                        preferred_element_type=jnp.float32) + b_qkv[base + 0]
            k = jnp.dot(xkv, w_qkv[base + 1],
                        preferred_element_type=jnp.float32) + b_qkv[base + 1]
            v = jnp.dot(xkv, w_qkv[base + 2],
                        preferred_element_type=jnp.float32) + b_qkv[base + 2]
            # one MXU push per head for scores over all tokens of this batch element
            s = jax.lax.dot_general(q, k, (((1,), (1,)), ((), ())),
                                    preferred_element_type=jnp.float32) * scale
            s = s - jnp.max(s, axis=-1, keepdims=True)
            p = jnp.exp(s)
            p = p / jnp.sum(p, axis=-1, keepdims=True)            # exact divide (parity)
            ctx = jnp.dot(p, v, preferred_element_type=jnp.float32)
            c = jnp.dot(ctx, w_out[blk * num_heads + h],
                        preferred_element_type=jnp.float32)
            acc = c if acc is None else acc + c
        return acc + b_out[blk]                                   # bias added once

    def ffn(y, i):
        h = jnp.maximum(jnp.dot(y, w1[i], preferred_element_type=jnp.float32) + b1[i],
                        0.0)
        return jnp.dot(h, w2[i], preferred_element_type=jnp.float32) + b2[i]

    blk = 0      # attention-block counter (enc self, dec self/cross interleaved)
    ffn_i = 0    # FFN counter (enc layers then dec layers)
    ln_i = 0     # LayerNorm counter

    # ---- encoder stack (post-norm, ReLU) ----
    enc = x
    for _ in range(num_layers):
        enc = layer_norm(enc + attention(enc, enc, blk), ln_i); blk += 1; ln_i += 1
        enc = layer_norm(enc + ffn(enc, ffn_i), ln_i); ffn_i += 1; ln_i += 1
    mem = layer_norm(enc, ln_i); ln_i += 1            # final encoder norm

    # ---- decoder stack ----
    dec = x
    for _ in range(num_layers):
        dec = layer_norm(dec + attention(dec, dec, blk), ln_i); blk += 1; ln_i += 1
        dec = layer_norm(dec + attention(dec, mem, blk), ln_i); blk += 1; ln_i += 1
        dec = layer_norm(dec + ffn(dec, ffn_i), ln_i); ffn_i += 1; ln_i += 1
    dec = layer_norm(dec, ln_i); ln_i += 1            # final decoder norm

    # ---- fc_out: lane-dense (T, 128) padded logits ----
    o_ref[...] = (jnp.dot(dec, fc_w[...], preferred_element_type=jnp.float32)
                  + fc_b[...]).astype(o_ref.dtype)


# ----------------------------- wrapper -----------------------------

def _full_vmem():
    return pl.BlockSpec(memory_space=pltpu.MemorySpace.VMEM)


@functools.partial(jax.jit, static_argnames=("num_heads", "vocab_size"))
def simple_transformer_forward(packed, src, *, num_heads, vocab_size):
    """src: (batch, seq) int32 -> (batch, seq, vocab) float32."""
    N, S = src.shape
    Vpad = packed["fc_w"].shape[1]
    num_layers = packed["w1"].shape[0] // 2

    tok = src.reshape(N * S, 1).astype(jnp.int32)

    kernel = functools.partial(_fused_transformer_kernel,
                               num_layers=num_layers, num_heads=num_heads)
    weight_args = (packed["emb"],
                   packed["w_qkv"], packed["b_qkv"],
                   packed["w_out"], packed["b_out"],
                   packed["w1"], packed["b1"], packed["w2"], packed["b2"],
                   packed["ln_g"], packed["ln_b"],
                   packed["fc_w"], packed["fc_b"])

    logits = pl.pallas_call(
        kernel,
        out_shape=jax.ShapeDtypeStruct((N * S, Vpad), jnp.float32),
        grid=(N,),
        in_specs=[pl.BlockSpec((S, 1), lambda n: (n, 0))]
                 + [_full_vmem() for _ in weight_args],
        out_specs=pl.BlockSpec((S, Vpad), lambda n: (n, 0)),
        compiler_params=pltpu.CompilerParams(
            dimension_semantics=("parallel",)),
    )(tok, *weight_args)

    return logits.reshape(N, S, Vpad)[:, :, :vocab_size]


# ----------------------------- parameters -----------------------------

def init_params(key, vocab_size, embed_dim=32, hidden_dim=64, num_heads=2, num_layers=2):
    """Parameters in PyTorch layout ((out, in) weights), mirroring SimpleTransformer."""
    del num_heads
    scale = 0.05
    keys = iter(jax.random.split(key, 256))

    def nrm(shape):
        return scale * jax.random.normal(next(keys), shape, dtype=jnp.float32)

    def mha_p():
        return dict(in_proj_w=nrm((3 * embed_dim, embed_dim)),
                    in_proj_b=nrm((3 * embed_dim,)),
                    out_proj_w=nrm((embed_dim, embed_dim)),
                    out_proj_b=nrm((embed_dim,)))

    def ln_p():
        return dict(g=jnp.ones((embed_dim,), jnp.float32),
                    b=jnp.zeros((embed_dim,), jnp.float32))

    def ffn_p():
        return dict(w1=nrm((hidden_dim, embed_dim)), b1=nrm((hidden_dim,)),
                    w2=nrm((embed_dim, hidden_dim)), b2=nrm((embed_dim,)))

    enc_layers = [dict(self_attn=mha_p(), ffn=ffn_p(), norm1=ln_p(), norm2=ln_p())
                  for _ in range(num_layers)]
    dec_layers = [dict(self_attn=mha_p(), cross_attn=mha_p(), ffn=ffn_p(),
                       norm1=ln_p(), norm2=ln_p(), norm3=ln_p())
                  for _ in range(num_layers)]

    return dict(embedding=nrm((vocab_size, embed_dim)),
                enc_layers=enc_layers, enc_norm=ln_p(),
                dec_layers=dec_layers, dec_norm=ln_p(),
                fc_out_w=nrm((vocab_size, embed_dim)), fc_out_b=nrm((vocab_size,)))


def pack_params(p, num_heads):
    """One-time prep: split attention weights per head, transpose to (in, out),
    stack everything into a handful of VMEM buffers, pad embedding / fc_out."""
    E = p["embedding"].shape[1]
    Dh = E // num_heads

    # Attention blocks in exactly the order the kernel consumes them:
    # enc0.self, enc1.self, dec0.self, dec0.cross, dec1.self, dec1.cross
    blocks = [l["self_attn"] for l in p["enc_layers"]]
    for l in p["dec_layers"]:
        blocks.append(l["self_attn"])
        blocks.append(l["cross_attn"])

    w_qkv, b_qkv, w_out, b_out = [], [], [], []
    for mha in blocks:
        wi, bi = mha["in_proj_w"], mha["in_proj_b"]       # (3E, E), (3E,)
        wo_t = mha["out_proj_w"].T                        # (E, E): rows = concat-ctx feats
        for h in range(num_heads):
            for j in range(3):                            # q, k, v
                rows = slice(j * E + h * Dh, j * E + (h + 1) * Dh)
                w_qkv.append(wi[rows, :].T)               # (E, Dh)
                b_qkv.append(bi[rows].reshape(1, Dh))     # (1, Dh)
            w_out.append(wo_t[h * Dh:(h + 1) * Dh, :])    # (Dh, E)
        b_out.append(mha["out_proj_b"].reshape(1, E))     # (1, E)

    # FFNs: enc layers then dec layers.
    ffns = [l["ffn"] for l in p["enc_layers"]] + [l["ffn"] for l in p["dec_layers"]]

    # LayerNorms: enc(n1,n2)*L, enc_final, dec(n1,n2,n3)*L, dec_final.
    lns = []
    for l in p["enc_layers"]:
        lns += [l["norm1"], l["norm2"]]
    lns.append(p["enc_norm"])
    for l in p["dec_layers"]:
        lns += [l["norm1"], l["norm2"], l["norm3"]]
    lns.append(p["dec_norm"])

    V = p["embedding"].shape[0]
    Vpad = ((V + 127) // 128) * 128                       # 50 -> 128 (lane dense)

    emb = jnp.zeros((Vpad, E), jnp.float32).at[:V, :].set(p["embedding"])
    fc_w = jnp.zeros((E, Vpad), jnp.float32).at[:, :V].set(p["fc_out_w"].T)
    fc_b = jnp.zeros((1, Vpad), jnp.float32).at[:, :V].set(p["fc_out_b"])

    return dict(
        emb=emb,
        w_qkv=jnp.stack(w_qkv),                           # (blocks*heads*3, E, Dh)
        b_qkv=jnp.stack(b_qkv),                           # (blocks*heads*3, 1, Dh)
        w_out=jnp.stack(w_out),                           # (blocks*heads, Dh, E)
        b_out=jnp.stack(b_out),                           # (blocks, 1, E)
        w1=jnp.stack([f["w1"].T for f in ffns]),          # (4, E, H)
        b1=jnp.stack([f["b1"].reshape(1, -1) for f in ffns]),
        w2=jnp.stack([f["w2"].T for f in ffns]),          # (4, H, E)
        b2=jnp.stack([f["b2"].reshape(1, -1) for f in ffns]),
        ln_g=jnp.stack([ln["g"].reshape(1, E) for ln in lns]),   # (12, 1, E)
        ln_b=jnp.stack([ln["b"].reshape(1, E) for ln in lns]),
        fc_w=fc_w, fc_b=fc_b,
    )


# ----------------------------- main -----------------------------

if __name__ == "__main__":
    VOCAB = 50
    BATCH, SEQ = 2, 8
    EMBED, HIDDEN, HEADS, LAYERS = 32, 64, 2, 2

    root = jax.random.PRNGKey(0)
    pkey, dkey = jax.random.split(root)
    params = init_params(pkey, VOCAB, EMBED, HIDDEN, HEADS, LAYERS)
    packed = pack_params(params, HEADS)          # one-time split / transpose / stack / pad
    src = jax.random.randint(dkey, (BATCH, SEQ), 0, VOCAB, dtype=jnp.int32)

    out = simple_transformer_forward(packed, src, num_heads=HEADS, vocab_size=VOCAB)
    out = jax.block_until_ready(out)
    assert out.shape == (BATCH, SEQ, VOCAB), out.shape
    assert bool(jnp.all(jnp.isfinite(out)))
    print("KERNEL_OK")
</pallas_src>

<mosaic_0001>
module attributes {stable_mosaic.version = 11 : i64} {
  func.func @_fused_transformer_kernel(%arg0: i32, %arg1: memref<8x1xi32, #tpu.memory_space<vmem>>, %arg2: memref<128x32xf32, #tpu.memory_space<vmem>>, %arg3: memref<36x32x16xf32, #tpu.memory_space<vmem>>, %arg4: memref<36x1x16xf32, #tpu.memory_space<vmem>>, %arg5: memref<12x16x32xf32, #tpu.memory_space<vmem>>, %arg6: memref<6x1x32xf32, #tpu.memory_space<vmem>>, %arg7: memref<4x32x64xf32, #tpu.memory_space<vmem>>, %arg8: memref<4x1x64xf32, #tpu.memory_space<vmem>>, %arg9: memref<4x64x32xf32, #tpu.memory_space<vmem>>, %arg10: memref<4x1x32xf32, #tpu.memory_space<vmem>>, %arg11: memref<12x1x32xf32, #tpu.memory_space<vmem>>, %arg12: memref<12x1x32xf32, #tpu.memory_space<vmem>>, %arg13: memref<32x128xf32, #tpu.memory_space<vmem>>, %arg14: memref<1x128xf32, #tpu.memory_space<vmem>>, %arg15: memref<8x128xf32, #tpu.memory_space<vmem>>) attributes {dimension_semantics = [#tpu.dimension_semantics<parallel>], iteration_bounds = array<i64: 2>, scalar_prefetch = 0 : i64, scratch_operands = 0 : i64, tpu.core_type = #tpu.core_type<tc>, window_params = [{transform_indices = @transform_0, window_bounds = array<i64: 8, 1>}, {pipeline_mode = #tpu.pipeline_mode<synchronous>, transform_indices = @transform_1, window_bounds = array<i64: 128, 32>}, {pipeline_mode = #tpu.pipeline_mode<synchronous>, transform_indices = @transform_2, window_bounds = array<i64: 36, 32, 16>}, {pipeline_mode = #tpu.pipeline_mode<synchronous>, transform_indices = @transform_3, window_bounds = array<i64: 36, 1, 16>}, {pipeline_mode = #tpu.pipeline_mode<synchronous>, transform_indices = @transform_4, window_bounds = array<i64: 12, 16, 32>}, {pipeline_mode = #tpu.pipeline_mode<synchronous>, transform_indices = @transform_5, window_bounds = array<i64: 6, 1, 32>}, {pipeline_mode = #tpu.pipeline_mode<synchronous>, transform_indices = @transform_6, window_bounds = array<i64: 4, 32, 64>}, {pipeline_mode = #tpu.pipeline_mode<synchronous>, transform_indices = @transform_7, window_bounds = array<i64: 4, 1, 64>}, {pipeline_mode = #tpu.pipeline_mode<synchronous>, transform_indices = @transform_8, window_bounds = array<i64: 4, 64, 32>}, {pipeline_mode = #tpu.pipeline_mode<synchronous>, transform_indices = @transform_9, window_bounds = array<i64: 4, 1, 32>}, {pipeline_mode = #tpu.pipeline_mode<synchronous>, transform_indices = @transform_10, window_bounds = array<i64: 12, 1, 32>}, {pipeline_mode = #tpu.pipeline_mode<synchronous>, transform_indices = @transform_11, window_bounds = array<i64: 12, 1, 32>}, {pipeline_mode = #tpu.pipeline_mode<synchronous>, transform_indices = @transform_12, window_bounds = array<i64: 32, 128>}, {pipeline_mode = #tpu.pipeline_mode<synchronous>, transform_indices = @transform_13, window_bounds = array<i64: 1, 128>}, {transform_indices = @transform_14, window_bounds = array<i64: 8, 128>}]} {
    %c0 = arith.constant 0 : index
    %c0_0 = arith.constant 0 : index
    %0 = vector.load %arg1[%c0, %c0_0] : memref<8x1xi32, #tpu.memory_space<vmem>>, vector<8x1xi32>
    %1 = tpu.iota {dimensions = array<i32: 1>} : vector<8x128xi32>
    %2 = vector.broadcast %0 : vector<8x1xi32> to vector<8x128xi32>
    %3 = arith.cmpi eq, %1, %2 : vector<8x128xi32>
    %cst = arith.constant 1.000000e+00 : f32
    %cst_1 = arith.constant 0.000000e+00 : f32
    %4 = vector.broadcast %cst : f32 to vector<8x128xf32>
    %5 = vector.broadcast %cst_1 : f32 to vector<8x128xf32>
    %6 = arith.select %3, %4, %5 : vector<8x128xi1>, vector<8x128xf32>
    %c0_2 = arith.constant 0 : index
    %c0_3 = arith.constant 0 : index
    %7 = vector.load %arg2[%c0_2, %c0_3] : memref<128x32xf32, #tpu.memory_space<vmem>>, vector<128x32xf32>
    %cst_4 = arith.constant dense<0.000000e+00> : vector<8x32xf32>
    %8 = tpu.matmul %6, %7, %cst_4 {dimension_numbers = #tpu.dot_dimension_numbers<[1], [0], [0], [1], [0, 0, 1, 1], [], []>} : vector<8x128xf32>, vector<128x32xf32>, vector<8x32xf32> -> vector<8x32xf32>
    %c0_5 = arith.constant 0 : index
    %c0_6 = arith.constant 0 : index
    %c0_7 = arith.constant 0 : index
    %9 = vector.load %arg3[%c0_5, %c0_6, %c0_7] : memref<36x32x16xf32, #tpu.memory_space<vmem>>, vector<1x32x16xf32>
    %10 = vector.shape_cast %9 : vector<1x32x16xf32> to vector<32x16xf32>
    %cst_8 = arith.constant dense<0.000000e+00> : vector<8x16xf32>
    %11 = tpu.matmul %8, %10, %cst_8 {dimension_numbers = #tpu.dot_dimension_numbers<[1], [0], [0], [1], [0, 0, 1, 1], [], []>} : vector<8x32xf32>, vector<32x16xf32>, vector<8x16xf32> -> vector<8x16xf32>
    %c0_9 = arith.constant 0 : index
    %c0_10 = arith.constant 0 : index
    %c0_11 = arith.constant 0 : index
    %12 = vector.load %arg4[%c0_9, %c0_10, %c0_11] : memref<36x1x16xf32, #tpu.memory_space<vmem>>, vector<1x1x16xf32>
    %13 = vector.shape_cast %12 : vector<1x1x16xf32> to vector<1x16xf32>
    %14 = vector.broadcast %13 : vector<1x16xf32> to vector<8x16xf32>
    %15 = arith.addf %11, %14 : vector<8x16xf32>
    %c1 = arith.constant 1 : index
    %c0_12 = arith.constant 0 : index
    %c0_13 = arith.constant 0 : index
    %16 = vector.load %arg3[%c1, %c0_12, %c0_13] : memref<36x32x16xf32, #tpu.memory_space<vmem>>, vector<1x32x16xf32>
    %17 = vector.shape_cast %16 : vector<1x32x16xf32> to vector<32x16xf32>
    %cst_14 = arith.constant dense<0.000000e+00> : vector<8x16xf32>
    %18 = tpu.matmul %8, %17, %cst_14 {dimension_numbers = #tpu.dot_dimension_numbers<[1], [0], [0], [1], [0, 0, 1, 1], [], []>} : vector<8x32xf32>, vector<32x16xf32>, vector<8x16xf32> -> vector<8x16xf32>
    %c1_15 = arith.constant 1 : index
    %c0_16 = arith.constant 0 : index
    %c0_17 = arith.constant 0 : index
    %19 = vector.load %arg4[%c1_15, %c0_16, %c0_17] : memref<36x1x16xf32, #tpu.memory_space<vmem>>, vector<1x1x16xf32>
    %20 = vector.shape_cast %19 : vector<1x1x16xf32> to vector<1x16xf32>
    %21 = vector.broadcast %20 : vector<1x16xf32> to vector<8x16xf32>
    %22 = arith.addf %18, %21 : vector<8x16xf32>
    %c2 = arith.constant 2 : index
    %c0_18 = arith.constant 0 : index
    %c0_19 = arith.constant 0 : index
    %23 = vector.load %arg3[%c2, %c0_18, %c0_19] : memref<36x32x16xf32, #tpu.memory_space<vmem>>, vector<1x32x16xf32>
    %24 = vector.shape_cast %23 : vector<1x32x16xf32> to vector<32x16xf32>
    %cst_20 = arith.constant dense<0.000000e+00> : vector<8x16xf32>
    %25 = tpu.matmul %8, %24, %cst_20 {dimension_numbers = #tpu.dot_dimension_numbers<[1], [0], [0], [1], [0, 0, 1, 1], [], []>} : vector<8x32xf32>, vector<32x16xf32>, vector<8x16xf32> -> vector<8x16xf32>
    %c2_21 = arith.constant 2 : index
    %c0_22 = arith.constant 0 : index
    %c0_23 = arith.constant 0 : index
    %26 = vector.load %arg4[%c2_21, %c0_22, %c0_23] : memref<36x1x16xf32, #tpu.memory_space<vmem>>, vector<1x1x16xf32>
    %27 = vector.shape_cast %26 : vector<1x1x16xf32> to vector<1x16xf32>
    %28 = vector.broadcast %27 : vector<1x16xf32> to vector<8x16xf32>
    %29 = arith.addf %25, %28 : vector<8x16xf32>
    %cst_24 = arith.constant dense<0.000000e+00> : vector<8x8xf32>
    %30 = tpu.matmul %15, %22, %cst_24 {dimension_numbers = #tpu.dot_dimension_numbers<[1], [1], [0], [0], [0, 0, 1, 0], [], []>} : vector<8x16xf32>, vector<8x16xf32>, vector<8x8xf32> -> vector<8x8xf32>
    %cst_25 = arith.constant 2.500000e-01 : f32
    %31 = vector.broadcast %cst_25 : f32 to vector<8x8xf32>
    %32 = arith.mulf %30, %31 : vector<8x8xf32>
    %cst_26 = arith.constant dense<0xFF800000> : vector<8xf32>
    %33 = vector.multi_reduction <maximumf>, %32, %cst_26 [1] : vector<8x8xf32> to vector<8xf32>
    %34 = vector.shape_cast %33 : vector<8xf32> to vector<8x1xf32>
    %35 = vector.broadcast %34 : vector<8x1xf32> to vector<8x8xf32>
    %36 = arith.subf %32, %35 : vector<8x8xf32>
    %37 = math.exp %36 : vector<8x8xf32>
    %cst_27 = arith.constant dense<0.000000e+00> : vector<8xf32>
    %38 = vector.multi_reduction <add>, %37, %cst_27 [1] : vector<8x8xf32> to vector<8xf32>
    %39 = vector.shape_cast %38 : vector<8xf32> to vector<8x1xf32>
    %40 = vector.broadcast %39 : vector<8x1xf32> to vector<8x8xf32>
    %41 = arith.divf %37, %40 : vector<8x8xf32>
    %cst_28 = arith.constant dense<0.000000e+00> : vector<8x16xf32>
    %42 = tpu.matmul %41, %29, %cst_28 {dimension_numbers = #tpu.dot_dimension_numbers<[1], [0], [0], [1], [0, 0, 1, 1], [], []>} : vector<8x8xf32>, vector<8x16xf32>, vector<8x16xf32> -> vector<8x16xf32>
    %c0_29 = arith.constant 0 : index
    %c0_30 = arith.constant 0 : index
    %c0_31 = arith.constant 0 : index
    %43 = vector.load %arg5[%c0_29, %c0_30, %c0_31] : memref<12x16x32xf32, #tpu.memory_space<vmem>>, vector<1x16x32xf32>
    %44 = vector.shape_cast %43 : vector<1x16x32xf32> to vector<16x32xf32>
    %cst_32 = arith.constant dense<0.000000e+00> : vector<8x32xf32>
    %45 = tpu.matmul %42, %44, %cst_32 {dimension_numbers = #tpu.dot_dimension_numbers<[1], [0], [0], [1], [0, 0, 1, 1], [], []>} : vector<8x16xf32>, vector<16x32xf32>, vector<8x32xf32> -> vector<8x32xf32>
    %c3 = arith.constant 3 : index
    %c0_33 = arith.constant 0 : index
    %c0_34 = arith.constant 0 : index
    %46 = vector.load %arg3[%c3, %c0_33, %c0_34] : memref<36x32x16xf32, #tpu.memory_space<vmem>>, vector<1x32x16xf32>
    %47 = vector.shape_cast %46 : vector<1x32x16xf32> to vector<32x16xf32>
    %cst_35 = arith.constant dense<0.000000e+00> : vector<8x16xf32>
    %48 = tpu.matmul %8, %47, %cst_35 {dimension_numbers = #tpu.dot_dimension_numbers<[1], [0], [0], [1], [0, 0, 1, 1], [], []>} : vector<8x32xf32>, vector<32x16xf32>, vector<8x16xf32> -> vector<8x16xf32>
    %c3_36 = arith.constant 3 : index
    %c0_37 = arith.constant 0 : index
    %c0_38 = arith.constant 0 : index
    %49 = vector.load %arg4[%c3_36, %c0_37, %c0_38] : memref<36x1x16xf32, #tpu.memory_space<vmem>>, vector<1x1x16xf32>
    %50 = vector.shape_cast %49 : vector<1x1x16xf32> to vector<1x16xf32>
    %51 = vector.broadcast %50 : vector<1x16xf32> to vector<8x16xf32>
    %52 = arith.addf %48, %51 : vector<8x16xf32>
    %c4 = arith.constant 4 : index
    %c0_39 = arith.constant 0 : index
    %c0_40 = arith.constant 0 : index
    %53 = vector.load %arg3[%c4, %c0_39, %c0_40] : memref<36x32x16xf32, #tpu.memory_space<vmem>>, vector<1x32x16xf32>
    %54 = vector.shape_cast %53 : vector<1x32x16xf32> to vector<32x16xf32>
    %cst_41 = arith.constant dense<0.000000e+00> : vector<8x16xf32>
    %55 = tpu.matmul %8, %54, %cst_41 {dimension_numbers = #tpu.dot_dimension_numbers<[1], [0], [0], [1], [0, 0, 1, 1], [], []>} : vector<8x32xf32>, vector<32x16xf32>, vector<8x16xf32> -> vector<8x16xf32>
    %c4_42 = arith.constant 4 : index
    %c0_43 = arith.constant 0 : index
    %c0_44 = arith.constant 0 : index
    %56 = vector.load %arg4[%c4_42, %c0_43, %c0_44] : memref<36x1x16xf32, #tpu.memory_space<vmem>>, vector<1x1x16xf32>
    %57 = vector.shape_cast %56 : vector<1x1x16xf32> to vector<1x16xf32>
    %58 = vector.broadcast %57 : vector<1x16xf32> to vector<8x16xf32>
    %59 = arith.addf %55, %58 : vector<8x16xf32>
    %c5 = arith.constant 5 : index
    %c0_45 = arith.constant 0 : index
    %c0_46 = arith.constant 0 : index
    %60 = vector.load %arg3[%c5, %c0_45, %c0_46] : memref<36x32x16xf32, #tpu.memory_space<vmem>>, vector<1x32x16xf32>
    %61 = vector.shape_cast %60 : vector<1x32x16xf32> to vector<32x16xf32>
    %cst_47 = arith.constant dense<0.000000e+00> : vector<8x16xf32>
    %62 = tpu.matmul %8, %61, %cst_47 {dimension_numbers = #tpu.dot_dimension_numbers<[1], [0], [0], [1], [0, 0, 1, 1], [], []>} : vector<8x32xf32>, vector<32x16xf32>, vector<8x16xf32> -> vector<8x16xf32>
    %c5_48 = arith.constant 5 : index
    %c0_49 = arith.constant 0 : index
    %c0_50 = arith.constant 0 : index
    %63 = vector.load %arg4[%c5_48, %c0_49, %c0_50] : memref<36x1x16xf32, #tpu.memory_space<vmem>>, vector<1x1x16xf32>
    %64 = vector.shape_cast %63 : vector<1x1x16xf32> to vector<1x16xf32>
    %65 = vector.broadcast %64 : vector<1x16xf32> to vector<8x16xf32>
    %66 = arith.addf %62, %65 : vector<8x16xf32>
    %cst_51 = arith.constant dense<0.000000e+00> : vector<8x8xf32>
    %67 = tpu.matmul %52, %59, %cst_51 {dimension_numbers = #tpu.dot_dimension_numbers<[1], [1], [0], [0], [0, 0, 1, 0], [], []>} : vector<8x16xf32>, vector<8x16xf32>, vector<8x8xf32> -> vector<8x8xf32>
    %cst_52 = arith.constant 2.500000e-01 : f32
    %68 = vector.broadcast %cst_52 : f32 to vector<8x8xf32>
    %69 = arith.mulf %67, %68 : vector<8x8xf32>
    %cst_53 = arith.constant dense<0xFF800000> : vector<8xf32>
    %70 = vector.multi_reduction <maximumf>, %69, %cst_53 [1] : vector<8x8xf32> to vector<8xf32>
    %71 = vector.shape_cast %70 : vector<8xf32> to vector<8x1xf32>
    %72 = vector.broadcast %71 : vector<8x1xf32> to vector<8x8xf32>
    %73 = arith.subf %69, %72 : vector<8x8xf32>
    %74 = math.exp %73 : vector<8x8xf32>
    %cst_54 = arith.constant dense<0.000000e+00> : vector<8xf32>
    %75 = vector.multi_reduction <add>, %74, %cst_54 [1] : vector<8x8xf32> to vector<8xf32>
    %76 = vector.shape_cast %75 : vector<8xf32> to vector<8x1xf32>
    %77 = vector.broadcast %76 : vector<8x1xf32> to vector<8x8xf32>
    %78 = arith.divf %74, %77 : vector<8x8xf32>
    %cst_55 = arith.constant dense<0.000000e+00> : vector<8x16xf32>
    %79 = tpu.matmul %78, %66, %cst_55 {dimension_numbers = #tpu.dot_dimension_numbers<[1], [0], [0], [1], [0, 0, 1, 1], [], []>} : vector<8x8xf32>, vector<8x16xf32>, vector<8x16xf32> -> vector<8x16xf32>
    %c1_56 = arith.constant 1 : index
    %c0_57 = arith.constant 0 : index
    %c0_58 = arith.constant 0 : index
    %80 = vector.load %arg5[%c1_56, %c0_57, %c0_58] : memref<12x16x32xf32, #tpu.memory_space<vmem>>, vector<1x16x32xf32>
    %81 = vector.shape_cast %80 : vector<1x16x32xf32> to vector<16x32xf32>
    %cst_59 = arith.constant dense<0.000000e+00> : vector<8x32xf32>
    %82 = tpu.matmul %79, %81, %cst_59 {dimension_numbers = #tpu.dot_dimension_numbers<[1], [0], [0], [1], [0, 0, 1, 1], [], []>} : vector<8x16xf32>, vector<16x32xf32>, vector<8x32xf32> -> vector<8x32xf32>
    %83 = arith.addf %45, %82 : vector<8x32xf32>
    %c0_60 = arith.constant 0 : index
    %c0_61 = arith.constant 0 : index
    %c0_62 = arith.constant 0 : index
    %84 = vector.load %arg6[%c0_60, %c0_61, %c0_62] : memref<6x1x32xf32, #tpu.memory_space<vmem>>, vector<1x1x32xf32>
    %85 = vector.shape_cast %84 : vector<1x1x32xf32> to vector<1x32xf32>
    %86 = vector.broadcast %85 : vector<1x32xf32> to vector<8x32xf32>
    %87 = arith.addf %83, %86 : vector<8x32xf32>
    %88 = arith.addf %8, %87 : vector<8x32xf32>
    %cst_63 = arith.constant dense<0.000000e+00> : vector<8xf32>
    %89 = vector.multi_reduction <add>, %88, %cst_63 [1] : vector<8x32xf32> to vector<8xf32>
    %90 = vector.shape_cast %89 : vector<8xf32> to vector<8x1xf32>
    %cst_64 = arith.constant 3.200000e+01 : f32
    %91 = vector.broadcast %cst_64 : f32 to vector<8x1xf32>
    %92 = arith.divf %90, %91 : vector<8x1xf32>
    %93 = vector.broadcast %92 : vector<8x1xf32> to vector<8x32xf32>
    %94 = arith.subf %88, %93 : vector<8x32xf32>
    %95 = arith.mulf %94, %94 : vector<8x32xf32>
    %cst_65 = arith.constant dense<0.000000e+00> : vector<8xf32>
    %96 = vector.multi_reduction <add>, %95, %cst_65 [1] : vector<8x32xf32> to vector<8xf32>
    %97 = vector.shape_cast %96 : vector<8xf32> to vector<8x1xf32>
    %cst_66 = arith.constant 3.200000e+01 : f32
    %98 = vector.broadcast %cst_66 : f32 to vector<8x1xf32>
    %99 = arith.divf %97, %98 : vector<8x1xf32>
    %100 = vector.broadcast %92 : vector<8x1xf32> to vector<8x32xf32>
    %101 = arith.subf %88, %100 : vector<8x32xf32>
    %cst_67 = arith.constant 9.99999974E-6 : f32
    %102 = vector.broadcast %cst_67 : f32 to vector<8x1xf32>
    %103 = arith.addf %99, %102 : vector<8x1xf32>
    %104 = math.rsqrt %103 : vector<8x1xf32>
    %105 = vector.broadcast %104 : vector<8x1xf32> to vector<8x32xf32>
    %106 = arith.mulf %101, %105 : vector<8x32xf32>
    %c0_68 = arith.constant 0 : index
    %c0_69 = arith.constant 0 : index
    %c0_70 = arith.constant 0 : index
    %107 = vector.load %arg11[%c0_68, %c0_69, %c0_70] : memref<12x1x32xf32, #tpu.memory_space<vmem>>, vector<1x1x32xf32>
    %108 = vector.shape_cast %107 : vector<1x1x32xf32> to vector<1x32xf32>
    %109 = vector.broadcast %108 : vector<1x32xf32> to vector<8x32xf32>
    %110 = arith.mulf %106, %109 : vector<8x32xf32>
    %c0_71 = arith.constant 0 : index
    %c0_72 = arith.constant 0 : index
    %c0_73 = arith.constant 0 : index
    %111 = vector.load %arg12[%c0_71, %c0_72, %c0_73] : memref<12x1x32xf32, #tpu.memory_space<vmem>>, vector<1x1x32xf32>
    %112 = vector.shape_cast %111 : vector<1x1x32xf32> to vector<1x32xf32>
    %113 = vector.broadcast %112 : vector<1x32xf32> to vector<8x32xf32>
    %114 = arith.addf %110, %113 : vector<8x32xf32>
    %c0_74 = arith.constant 0 : index
    %c0_75 = arith.constant 0 : index
    %c0_76 = arith.constant 0 : index
    %115 = vector.load %arg7[%c0_74, %c0_75, %c0_76] : memref<4x32x64xf32, #tpu.memory_space<vmem>>, vector<1x32x64xf32>
    %116 = vector.shape_cast %115 : vector<1x32x64xf32> to vector<32x64xf32>
    %cst_77 = arith.constant dense<0.000000e+00> : vector<8x64xf32>
    %117 = tpu.matmul %114, %116, %cst_77 {dimension_numbers = #tpu.dot_dimension_numbers<[1], [0], [0], [1], [0, 0, 1, 1], [], []>} : vector<8x32xf32>, vector<32x64xf32>, vector<8x64xf32> -> vector<8x64xf32>
    %c0_78 = arith.constant 0 : index
    %c0_79 = arith.constant 0 : index
    %c0_80 = arith.constant 0 : index
    %118 = vector.load %arg8[%c0_78, %c0_79, %c0_80] : memref<4x1x64xf32, #tpu.memory_space<vmem>>, vector<1x1x64xf32>
    %119 = vector.shape_cast %118 : vector<1x1x64xf32> to vector<1x64xf32>
    %120 = vector.broadcast %119 : vector<1x64xf32> to vector<8x64xf32>
    %121 = arith.addf %117, %120 : vector<8x64xf32>
    %cst_81 = arith.constant 0.000000e+00 : f32
    %122 = vector.broadcast %cst_81 : f32 to vector<8x64xf32>
    %123 = arith.maximumf %121, %122 : vector<8x64xf32>
    %c0_82 = arith.constant 0 : index
    %c0_83 = arith.constant 0 : index
    %c0_84 = arith.constant 0 : index
    %124 = vector.load %arg9[%c0_82, %c0_83, %c0_84] : memref<4x64x32xf32, #tpu.memory_space<vmem>>, vector<1x64x32xf32>
    %125 = vector.shape_cast %124 : vector<1x64x32xf32> to vector<64x32xf32>
    %cst_85 = arith.constant dense<0.000000e+00> : vector<8x32xf32>
    %126 = tpu.matmul %123, %125, %cst_85 {dimension_numbers = #tpu.dot_dimension_numbers<[1], [0], [0], [1], [0, 0, 1, 1], [], []>} : vector<8x64xf32>, vector<64x32xf32>, vector<8x32xf32> -> vector<8x32xf32>
    %c0_86 = arith.constant 0 : index
    %c0_87 = arith.constant 0 : index
    %c0_88 = arith.constant 0 : index
    %127 = vector.load %arg10[%c0_86, %c0_87, %c0_88] : memref<4x1x32xf32, #tpu.memory_space<vmem>>, vector<1x1x32xf32>
    %128 = vector.shape_cast %127 : vector<1x1x32xf32> to vector<1x32xf32>
    %129 = vector.broadcast %128 : vector<1x32xf32> to vector<8x32xf32>
    %130 = arith.addf %126, %129 : vector<8x32xf32>
    %131 = arith.addf %114, %130 : vector<8x32xf32>
    %cst_89 = arith.constant dense<0.000000e+00> : vector<8xf32>
    %132 = vector.multi_reduction <add>, %131, %cst_89 [1] : vector<8x32xf32> to vector<8xf32>
    %133 = vector.shape_cast %132 : vector<8xf32> to vector<8x1xf32>
    %cst_90 = arith.constant 3.200000e+01 : f32
    %134 = vector.broadcast %cst_90 : f32 to vector<8x1xf32>
    %135 = arith.divf %133, %134 : vector<8x1xf32>
    %136 = vector.broadcast %135 : vector<8x1xf32> to vector<8x32xf32>
    %137 = arith.subf %131, %136 : vector<8x32xf32>
    %138 = arith.mulf %137, %137 : vector<8x32xf32>
    %cst_91 = arith.constant dense<0.000000e+00> : vector<8xf32>
    %139 = vector.multi_reduction <add>, %138, %cst_91 [1] : vector<8x32xf32> to vector<8xf32>
    %140 = vector.shape_cast %139 : vector<8xf32> to vector<8x1xf32>
    %cst_92 = arith.constant 3.200000e+01 : f32
    %141 = vector.broadcast %cst_92 : f32 to vector<8x1xf32>
    %142 = arith.divf %140, %141 : vector<8x1xf32>
    %143 = vector.broadcast %135 : vector<8x1xf32> to vector<8x32xf32>
    %144 = arith.subf %131, %143 : vector<8x32xf32>
    %cst_93 = arith.constant 9.99999974E-6 : f32
    %145 = vector.broadcast %cst_93 : f32 to vector<8x1xf32>
    %146 = arith.addf %142, %145 : vector<8x1xf32>
    %147 = math.rsqrt %146 : vector<8x1xf32>
    %148 = vector.broadcast %147 : vector<8x1xf32> to vector<8x32xf32>
    %149 = arith.mulf %144, %148 : vector<8x32xf32>
    %c1_94 = arith.constant 1 : index
    %c0_95 = arith.constant 0 : index
    %c0_96 = arith.constant 0 : index
    %150 = vector.load %arg11[%c1_94, %c0_95, %c0_96] : memref<12x1x32xf32, #tpu.memory_space<vmem>>, vector<1x1x32xf32>
    %151 = vector.shape_cast %150 : vector<1x1x32xf32> to vector<1x32xf32>
    %152 = vector.broadcast %151 : vector<1x32xf32> to vector<8x32xf32>
    %153 = arith.mulf %149, %152 : vector<8x32xf32>
    %c1_97 = arith.constant 1 : index
    %c0_98 = arith.constant 0 : index
    %c0_99 = arith.constant 0 : index
    %154 = vector.load %arg12[%c1_97, %c0_98, %c0_99] : memref<12x1x32xf32, #tpu.memory_space<vmem>>, vector<1x1x32xf32>
    %155 = vector.shape_cast %154 : vector<1x1x32xf32> to vector<1x32xf32>
    %156 = vector.broadcast %155 : vector<1x32xf32> to vector<8x32xf32>
    %157 = arith.addf %153, %156 : vector<8x32xf32>
    %c6 = arith.constant 6 : index
    %c0_100 = arith.constant 0 : index
    %c0_101 = arith.constant 0 : index
    %158 = vector.load %arg3[%c6, %c0_100, %c0_101] : memref<36x32x16xf32, #tpu.memory_space<vmem>>, vector<1x32x16xf32>
    %159 = vector.shape_cast %158 : vector<1x32x16xf32> to vector<32x16xf32>
    %cst_102 = arith.constant dense<0.000000e+00> : vector<8x16xf32>
    %160 = tpu.matmul %157, %159, %cst_102 {dimension_numbers = #tpu.dot_dimension_numbers<[1], [0], [0], [1], [0, 0, 1, 1], [], []>} : vector<8x32xf32>, vector<32x16xf32>, vector<8x16xf32> -> vector<8x16xf32>
    %c6_103 = arith.constant 6 : index
    %c0_104 = arith.constant 0 : index
    %c0_105 = arith.constant 0 : index
    %161 = vector.load %arg4[%c6_103, %c0_104, %c0_105] : memref<36x1x16xf32, #tpu.memory_space<vmem>>, vector<1x1x16xf32>
    %162 = vector.shape_cast %161 : vector<1x1x16xf32> to vector<1x16xf32>
    %163 = vector.broadcast %162 : vector<1x16xf32> to vector<8x16xf32>
    %164 = arith.addf %160, %163 : vector<8x16xf32>
    %c7 = arith.constant 7 : index
    %c0_106 = arith.constant 0 : index
    %c0_107 = arith.constant 0 : index
    %165 = vector.load %arg3[%c7, %c0_106, %c0_107] : memref<36x32x16xf32, #tpu.memory_space<vmem>>, vector<1x32x16xf32>
    %166 = vector.shape_cast %165 : vector<1x32x16xf32> to vector<32x16xf32>
    %cst_108 = arith.constant dense<0.000000e+00> : vector<8x16xf32>
    %167 = tpu.matmul %157, %166, %cst_108 {dimension_numbers = #tpu.dot_dimension_numbers<[1], [0], [0], [1], [0, 0, 1, 1], [], []>} : vector<8x32xf32>, vector<32x16xf32>, vector<8x16xf32> -> vector<8x16xf32>
    %c7_109 = arith.constant 7 : index
    %c0_110 = arith.constant 0 : index
    %c0_111 = arith.constant 0 : index
    %168 = vector.load %arg4[%c7_109, %c0_110, %c0_111] : memref<36x1x16xf32, #tpu.memory_space<vmem>>, vector<1x1x16xf32>
    %169 = vector.shape_cast %168 : vector<1x1x16xf32> to vector<1x16xf32>
    %170 = vector.broadcast %169 : vector<1x16xf32> to vector<8x16xf32>
    %171 = arith.addf %167, %170 : vector<8x16xf32>
    %c8 = arith.constant 8 : index
    %c0_112 = arith.constant 0 : index
    %c0_113 = arith.constant 0 : index
    %172 = vector.load %arg3[%c8, %c0_112, %c0_113] : memref<36x32x16xf32, #tpu.memory_space<vmem>>, vector<1x32x16xf32>
    %173 = vector.shape_cast %172 : vector<1x32x16xf32> to vector<32x16xf32>
    %cst_114 = arith.constant dense<0.000000e+00> : vector<8x16xf32>
    %174 = tpu.matmul %157, %173, %cst_114 {dimension_numbers = #tpu.dot_dimension_numbers<[1], [0], [0], [1], [0, 0, 1, 1], [], []>} : vector<8x32xf32>, vector<32x16xf32>, vector<8x16xf32> -> vector<8x16xf32>
    %c8_115 = arith.constant 8 : index
    %c0_116 = arith.constant 0 : index
    %c0_117 = arith.constant 0 : index
    %175 = vector.load %arg4[%c8_115, %c0_116, %c0_117] : memref<36x1x16xf32, #tpu.memory_space<vmem>>, vector<1x1x16xf32>
    %176 = vector.shape_cast %175 : vector<1x1x16xf32> to vector<1x16xf32>
    %177 = vector.broadcast %176 : vector<1x16xf32> to vector<8x16xf32>
    %178 = arith.addf %174, %177 : vector<8x16xf32>
    %cst_118 = arith.constant dense<0.000000e+00> : vector<8x8xf32>
    %179 = tpu.matmul %164, %171, %cst_118 {dimension_numbers = #tpu.dot_dimension_numbers<[1], [1], [0], [0], [0, 0, 1, 0], [], []>} : vector<8x16xf32>, vector<8x16xf32>, vector<8x8xf32> -> vector<8x8xf32>
    %cst_119 = arith.constant 2.500000e-01 : f32
    %180 = vector.broadcast %cst_119 : f32 to vector<8x8xf32>
    %181 = arith.mulf %179, %180 : vector<8x8xf32>
    %cst_120 = arith.constant dense<0xFF800000> : vector<8xf32>
    %182 = vector.multi_reduction <maximumf>, %181, %cst_120 [1] : vector<8x8xf32> to vector<8xf32>
    %183 = vector.shape_cast %182 : vector<8xf32> to vector<8x1xf32>
    %184 = vector.broadcast %183 : vector<8x1xf32> to vector<8x8xf32>
    %185 = arith.subf %181, %184 : vector<8x8xf32>
    %186 = math.exp %185 : vector<8x8xf32>
    %cst_121 = arith.constant dense<0.000000e+00> : vector<8xf32>
    %187 = vector.multi_reduction <add>, %186, %cst_121 [1] : vector<8x8xf32> to vector<8xf32>
    %188 = vector.shape_cast %187 : vector<8xf32> to vector<8x1xf32>
    %189 = vector.broadcast %188 : vector<8x1xf32> to vector<8x8xf32>
    %190 = arith.divf %186, %189 : vector<8x8xf32>
    %cst_122 = arith.constant dense<0.000000e+00> : vector<8x16xf32>
    %191 = tpu.matmul %190, %178, %cst_122 {dimension_numbers = #tpu.dot_dimension_numbers<[1], [0], [0], [1], [0, 0, 1, 1], [], []>} : vector<8x8xf32>, vector<8x16xf32>, vector<8x16xf32> -> vector<8x16xf32>
    %c2_123 = arith.constant 2 : index
    %c0_124 = arith.constant 0 : index
    %c0_125 = arith.constant 0 : index
    %192 = vector.load %arg5[%c2_123, %c0_124, %c0_125] : memref<12x16x32xf32, #tpu.memory_space<vmem>>, vector<1x16x32xf32>
    %193 = vector.shape_cast %192 : vector<1x16x32xf32> to vector<16x32xf32>
    %cst_126 = arith.constant dense<0.000000e+00> : vector<8x32xf32>
    %194 = tpu.matmul %191, %193, %cst_126 {dimension_numbers = #tpu.dot_dimension_numbers<[1], [0], [0], [1], [0, 0, 1, 1], [], []>} : vector<8x16xf32>, vector<16x32xf32>, vector<8x32xf32> -> vector<8x32xf32>
    %c9 = arith.constant 9 : index
    %c0_127 = arith.constant 0 : index
    %c0_128 = arith.constant 0 : index
    %195 = vector.load %arg3[%c9, %c0_127, %c0_128] : memref<36x32x16xf32, #tpu.memory_space<vmem>>, vector<1x32x16xf32>
    %196 = vector.shape_cast %195 : vector<1x32x16xf32> to vector<32x16xf32>
    %cst_129 = arith.constant dense<0.000000e+00> : vector<8x16xf32>
    %197 = tpu.matmul %157, %196, %cst_129 {dimension_numbers = #tpu.dot_dimension_numbers<[1], [0], [0], [1], [0, 0, 1, 1], [], []>} : vector<8x32xf32>, vector<32x16xf32>, vector<8x16xf32> -> vector<8x16xf32>
    %c9_130 = arith.constant 9 : index
    %c0_131 = arith.constant 0 : index
    %c0_132 = arith.constant 0 : index
    %198 = vector.load %arg4[%c9_130, %c0_131, %c0_132] : memref<36x1x16xf32, #tpu.memory_space<vmem>>, vector<1x1x16xf32>
    %199 = vector.shape_cast %198 : vector<1x1x16xf32> to vector<1x16xf32>
    %200 = vector.broadcast %199 : vector<1x16xf32> to vector<8x16xf32>
    %201 = arith.addf %197, %200 : vector<8x16xf32>
    %c10 = arith.constant 10 : index
    %c0_133 = arith.constant 0 : index
    %c0_134 = arith.constant 0 : index
    %202 = vector.load %arg3[%c10, %c0_133, %c0_134] : memref<36x32x16xf32, #tpu.memory_space<vmem>>, vector<1x32x16xf32>
    %203 = vector.shape_cast %202 : vector<1x32x16xf32> to vector<32x16xf32>
    %cst_135 = arith.constant dense<0.000000e+00> : vector<8x16xf32>
    %204 = tpu.matmul %157, %203, %cst_135 {dimension_numbers = #tpu.dot_dimension_numbers<[1], [0], [0], [1], [0, 0, 1, 1], [], []>} : vector<8x32xf32>, vector<32x16xf32>, vector<8x16xf32> -> vector<8x16xf32>
    %c10_136 = arith.constant 10 : index
    %c0_137 = arith.constant 0 : index
    %c0_138 = arith.constant 0 : index
    %205 = vector.load %arg4[%c10_136, %c0_137, %c0_138] : memref<36x1x16xf32, #tpu.memory_space<vmem>>, vector<1x1x16xf32>
    %206 = vector.shape_cast %205 : vector<1x1x16xf32> to vector<1x16xf32>
    %207 = vector.broadcast %206 : vector<1x16xf32> to vector<8x16xf32>
    %208 = arith.addf %204, %207 : vector<8x16xf32>
    %c11 = arith.constant 11 : index
    %c0_139 = arith.constant 0 : index
    %c0_140 = arith.constant 0 : index
    %209 = vector.load %arg3[%c11, %c0_139, %c0_140] : memref<36x32x16xf32, #tpu.memory_space<vmem>>, vector<1x32x16xf32>
    %210 = vector.shape_cast %209 : vector<1x32x16xf32> to vector<32x16xf32>
    %cst_141 = arith.constant dense<0.000000e+00> : vector<8x16xf32>
    %211 = tpu.matmul %157, %210, %cst_141 {dimension_numbers = #tpu.dot_dimension_numbers<[1], [0], [0], [1], [0, 0, 1, 1], [], []>} : vector<8x32xf32>, vector<32x16xf32>, vector<8x16xf32> -> vector<8x16xf32>
    %c11_142 = arith.constant 11 : index
    %c0_143 = arith.constant 0 : index
    %c0_144 = arith.constant 0 : index
    %212 = vector.load %arg4[%c11_142, %c0_143, %c0_144] : memref<36x1x16xf32, #tpu.memory_space<vmem>>, vector<1x1x16xf32>
    %213 = vector.shape_cast %212 : vector<1x1x16xf32> to vector<1x16xf32>
    %214 = vector.broadcast %213 : vector<1x16xf32> to vector<8x16xf32>
    %215 = arith.addf %211, %214 : vector<8x16xf32>
    %cst_145 = arith.constant dense<0.000000e+00> : vector<8x8xf32>
    %216 = tpu.matmul %201, %208, %cst_145 {dimension_numbers = #tpu.dot_dimension_numbers<[1], [1], [0], [0], [0, 0, 1, 0], [], []>} : vector<8x16xf32>, vector<8x16xf32>, vector<8x8xf32> -> vector<8x8xf32>
    %cst_146 = arith.constant 2.500000e-01 : f32
    %217 = vector.broadcast %cst_146 : f32 to vector<8x8xf32>
    %218 = arith.mulf %216, %217 : vector<8x8xf32>
    %cst_147 = arith.constant dense<0xFF800000> : vector<8xf32>
    %219 = vector.multi_reduction <maximumf>, %218, %cst_147 [1] : vector<8x8xf32> to vector<8xf32>
    %220 = vector.shape_cast %219 : vector<8xf32> to vector<8x1xf32>
    %221 = vector.broadcast %220 : vector<8x1xf32> to vector<8x8xf32>
    %222 = arith.subf %218, %221 : vector<8x8xf32>
    %223 = math.exp %222 : vector<8x8xf32>
    %cst_148 = arith.constant dense<0.000000e+00> : vector<8xf32>
    %224 = vector.multi_reduction <add>, %223, %cst_148 [1] : vector<8x8xf32> to vector<8xf32>
    %225 = vector.shape_cast %224 : vector<8xf32> to vector<8x1xf32>
    %226 = vector.broadcast %225 : vector<8x1xf32> to vector<8x8xf32>
    %227 = arith.divf %223, %226 : vector<8x8xf32>
    %cst_149 = arith.constant dense<0.000000e+00> : vector<8x16xf32>
    %228 = tpu.matmul %227, %215, %cst_149 {dimension_numbers = #tpu.dot_dimension_numbers<[1], [0], [0], [1], [0, 0, 1, 1], [], []>} : vector<8x8xf32>, vector<8x16xf32>, vector<8x16xf32> -> vector<8x16xf32>
    %c3_150 = arith.constant 3 : index
    %c0_151 = arith.constant 0 : index
    %c0_152 = arith.constant 0 : index
    %229 = vector.load %arg5[%c3_150, %c0_151, %c0_152] : memref<12x16x32xf32, #tpu.memory_space<vmem>>, vector<1x16x32xf32>
    %230 = vector.shape_cast %229 : vector<1x16x32xf32> to vector<16x32xf32>
    %cst_153 = arith.constant dense<0.000000e+00> : vector<8x32xf32>
    %231 = tpu.matmul %228, %230, %cst_153 {dimension_numbers = #tpu.dot_dimension_numbers<[1], [0], [0], [1], [0, 0, 1, 1], [], []>} : vector<8x16xf32>, vector<16x32xf32>, vector<8x32xf32> -> vector<8x32xf32>
    %232 = arith.addf %194, %231 : vector<8x32xf32>
    %c1_154 = arith.constant 1 : index
    %c0_155 = arith.constant 0 : index
    %c0_156 = arith.constant 0 : index
    %233 = vector.load %arg6[%c1_154, %c0_155, %c0_156] : memref<6x1x32xf32, #tpu.memory_space<vmem>>, vector<1x1x32xf32>
    %234 = vector.shape_cast %233 : vector<1x1x32xf32> to vector<1x32xf32>
    %235 = vector.broadcast %234 : vector<1x32xf32> to vector<8x32xf32>
    %236 = arith.addf %232, %235 : vector<8x32xf32>
    %237 = arith.addf %157, %236 : vector<8x32xf32>
    %cst_157 = arith.constant dense<0.000000e+00> : vector<8xf32>
    %238 = vector.multi_reduction <add>, %237, %cst_157 [1] : vector<8x32xf32> to vector<8xf32>
    %239 = vector.shape_cast %238 : vector<8xf32> to vector<8x1xf32>
    %cst_158 = arith.constant 3.200000e+01 : f32
    %240 = vector.broadcast %cst_158 : f32 to vector<8x1xf32>
    %241 = arith.divf %239, %240 : vector<8x1xf32>
    %242 = vector.broadcast %241 : vector<8x1xf32> to vector<8x32xf32>
    %243 = arith.subf %237, %242 : vector<8x32xf32>
    %244 = arith.mulf %243, %243 : vector<8x32xf32>
    %cst_159 = arith.constant dense<0.000000e+00> : vector<8xf32>
    %245 = vector.multi_reduction <add>, %244, %cst_159 [1] : vector<8x32xf32> to vector<8xf32>
    %246 = vector.shape_cast %245 : vector<8xf32> to vector<8x1xf32>
    %cst_160 = arith.constant 3.200000e+01 : f32
    %247 = vector.broadcast %cst_160 : f32 to vector<8x1xf32>
    %248 = arith.divf %246, %247 : vector<8x1xf32>
    %249 = vector.broadcast %241 : vector<8x1xf32> to vector<8x32xf32>
    %250 = arith.subf %237, %249 : vector<8x32xf32>
    %cst_161 = arith.constant 9.99999974E-6 : f32
    %251 = vector.broadcast %cst_161 : f32 to vector<8x1xf32>
    %252 = arith.addf %248, %251 : vector<8x1xf32>
    %253 = math.rsqrt %252 : vector<8x1xf32>
    %254 = vector.broadcast %253 : vector<8x1xf32> to vector<8x32xf32>
    %255 = arith.mulf %250, %254 : vector<8x32xf32>
    %c2_162 = arith.constant 2 : index
    %c0_163 = arith.constant 0 : index
    %c0_164 = arith.constant 0 : index
    %256 = vector.load %arg11[%c2_162, %c0_163, %c0_164] : memref<12x1x32xf32, #tpu.memory_space<vmem>>, vector<1x1x32xf32>
    %257 = vector.shape_cast %256 : vector<1x1x32xf32> to vector<1x32xf32>
    %258 = vector.broadcast %257 : vector<1x32xf32> to vector<8x32xf32>
    %259 = arith.mulf %255, %258 : vector<8x32xf32>
    %c2_165 = arith.constant 2 : index
    %c0_166 = arith.constant 0 : index
    %c0_167 = arith.constant 0 : index
    %260 = vector.load %arg12[%c2_165, %c0_166, %c0_167] : memref<12x1x32xf32, #tpu.memory_space<vmem>>, vector<1x1x32xf32>
    %261 = vector.shape_cast %260 : vector<1x1x32xf32> to vector<1x32xf32>
    %262 = vector.broadcast %261 : vector<1x32xf32> to vector<8x32xf32>
    %263 = arith.addf %259, %262 : vector<8x32xf32>
    %c1_168 = arith.constant 1 : index
    %c0_169 = arith.constant 0 : index
    %c0_170 = arith.constant 0 : index
    %264 = vector.load %arg7[%c1_168, %c0_169, %c0_170] : memref<4x32x64xf32, #tpu.memory_space<vmem>>, vector<1x32x64xf32>
    %265 = vector.shape_cast %264 : vector<1x32x64xf32> to vector<32x64xf32>
    %cst_171 = arith.constant dense<0.000000e+00> : vector<8x64xf32>
    %266 = tpu.matmul %263, %265, %cst_171 {dimension_numbers = #tpu.dot_dimension_numbers<[1], [0], [0], [1], [0, 0, 1, 1], [], []>} : vector<8x32xf32>, vector<32x64xf32>, vector<8x64xf32> -> vector<8x64xf32>
    %c1_172 = arith.constant 1 : index
    %c0_173 = arith.constant 0 : index
    %c0_174 = arith.constant 0 : index
    %267 = vector.load %arg8[%c1_172, %c0_173, %c0_174] : memref<4x1x64xf32, #tpu.memory_space<vmem>>, vector<1x1x64xf32>
    %268 = vector.shape_cast %267 : vector<1x1x64xf32> to vector<1x64xf32>
    %269 = vector.broadcast %268 : vector<1x64xf32> to vector<8x64xf32>
    %270 = arith.addf %266, %269 : vector<8x64xf32>
    %cst_175 = arith.constant 0.000000e+00 : f32
    %271 = vector.broadcast %cst_175 : f32 to vector<8x64xf32>
    %272 = arith.maximumf %270, %271 : vector<8x64xf32>
    %c1_176 = arith.constant 1 : index
    %c0_177 = arith.constant 0 : index
    %c0_178 = arith.constant 0 : index
    %273 = vector.load %arg9[%c1_176, %c0_177, %c0_178] : memref<4x64x32xf32, #tpu.memory_space<vmem>>, vector<1x64x32xf32>
    %274 = vector.shape_cast %273 : vector<1x64x32xf32> to vector<64x32xf32>
    %cst_179 = arith.constant dense<0.000000e+00> : vector<8x32xf32>
    %275 = tpu.matmul %272, %274, %cst_179 {dimension_numbers = #tpu.dot_dimension_numbers<[1], [0], [0], [1], [0, 0, 1, 1], [], []>} : vector<8x64xf32>, vector<64x32xf32>, vector<8x32xf32> -> vector<8x32xf32>
    %c1_180 = arith.constant 1 : index
    %c0_181 = arith.constant 0 : index
    %c0_182 = arith.constant 0 : index
    %276 = vector.load %arg10[%c1_180, %c0_181, %c0_182] : memref<4x1x32xf32, #tpu.memory_space<vmem>>, vector<1x1x32xf32>
    %277 = vector.shape_cast %276 : vector<1x1x32xf32> to vector<1x32xf32>
    %278 = vector.broadcast %277 : vector<1x32xf32> to vector<8x32xf32>
    %279 = arith.addf %275, %278 : vector<8x32xf32>
    %280 = arith.addf %263, %279 : vector<8x32xf32>
    %cst_183 = arith.constant dense<0.000000e+00> : vector<8xf32>
    %281 = vector.multi_reduction <add>, %280, %cst_183 [1] : vector<8x32xf32> to vector<8xf32>
    %282 = vector.shape_cast %281 : vector<8xf32> to vector<8x1xf32>
    %cst_184 = arith.constant 3.200000e+01 : f32
    %283 = vector.broadcast %cst_184 : f32 to vector<8x1xf32>
    %284 = arith.divf %282, %283 : vector<8x1xf32>
    %285 = vector.broadcast %284 : vector<8x1xf32> to vector<8x32xf32>
    %286 = arith.subf %280, %285 : vector<8x32xf32>
    %287 = arith.mulf %286, %286 : vector<8x32xf32>
    %cst_185 = arith.constant dense<0.000000e+00> : vector<8xf32>
    %288 = vector.multi_reduction <add>, %287, %cst_185 [1] : vector<8x32xf32> to vector<8xf32>
    %289 = vector.shape_cast %288 : vector<8xf32> to vector<8x1xf32>
    %cst_186 = arith.constant 3.200000e+01 : f32
    %290 = vector.broadcast %cst_186 : f32 to vector<8x1xf32>
    %291 = arith.divf %289, %290 : vector<8x1xf32>
    %292 = vector.broadcast %284 : vector<8x1xf32> to vector<8x32xf32>
    %293 = arith.subf %280, %292 : vector<8x32xf32>
    %cst_187 = arith.constant 9.99999974E-6 : f32
    %294 = vector.broadcast %cst_187 : f32 to vector<8x1xf32>
    %295 = arith.addf %291, %294 : vector<8x1xf32>
    %296 = math.rsqrt %295 : vector<8x1xf32>
    %297 = vector.broadcast %296 : vector<8x1xf32> to vector<8x32xf32>
    %298 = arith.mulf %293, %297 : vector<8x32xf32>
    %c3_188 = arith.constant 3 : index
    %c0_189 = arith.constant 0 : index
    %c0_190 = arith.constant 0 : index
    %299 = vector.load %arg11[%c3_188, %c0_189, %c0_190] : memref<12x1x32xf32, #tpu.memory_space<vmem>>, vector<1x1x32xf32>
    %300 = vector.shape_cast %299 : vector<1x1x32xf32> to vector<1x32xf32>
    %301 = vector.broadcast %300 : vector<1x32xf32> to vector<8x32xf32>
    %302 = arith.mulf %298, %301 : vector<8x32xf32>
    %c3_191 = arith.constant 3 : index
    %c0_192 = arith.constant 0 : index
    %c0_193 = arith.constant 0 : index
    %303 = vector.load %arg12[%c3_191, %c0_192, %c0_193] : memref<12x1x32xf32, #tpu.memory_space<vmem>>, vector<1x1x32xf32>
    %304 = vector.shape_cast %303 : vector<1x1x32xf32> to vector<1x32xf32>
    %305 = vector.broadcast %304 : vector<1x32xf32> to vector<8x32xf32>
    %306 = arith.addf %302, %305 : vector<8x32xf32>
    %cst_194 = arith.constant dense<0.000000e+00> : vector<8xf32>
    %307 = vector.multi_reduction <add>, %306, %cst_194 [1] : vector<8x32xf32> to vector<8xf32>
    %308 = vector.shape_cast %307 : vector<8xf32> to vector<8x1xf32>
    %cst_195 = arith.constant 3.200000e+01 : f32
    %309 = vector.broadcast %cst_195 : f32 to vector<8x1xf32>
    %310 = arith.divf %308, %309 : vector<8x1xf32>
    %311 = vector.broadcast %310 : vector<8x1xf32> to vector<8x32xf32>
    %312 = arith.subf %306, %311 : vector<8x32xf32>
    %313 = arith.mulf %312, %312 : vector<8x32xf32>
    %cst_196 = arith.constant dense<0.000000e+00> : vector<8xf32>
    %314 = vector.multi_reduction <add>, %313, %cst_196 [1] : vector<8x32xf32> to vector<8xf32>
    %315 = vector.shape_cast %314 : vector<8xf32> to vector<8x1xf32>
    %cst_197 = arith.constant 3.200000e+01 : f32
    %316 = vector.broadcast %cst_197 : f32 to vector<8x1xf32>
    %317 = arith.divf %315, %316 : vector<8x1xf32>
    %318 = vector.broadcast %310 : vector<8x1xf32> to vector<8x32xf32>
    %319 = arith.subf %306, %318 : vector<8x32xf32>
    %cst_198 = arith.constant 9.99999974E-6 : f32
    %320 = vector.broadcast %cst_198 : f32 to vector<8x1xf32>
    %321 = arith.addf %317, %320 : vector<8x1xf32>
    %322 = math.rsqrt %321 : vector<8x1xf32>
    %323 = vector.broadcast %322 : vector<8x1xf32> to vector<8x32xf32>
    %324 = arith.mulf %319, %323 : vector<8x32xf32>
    %c4_199 = arith.constant 4 : index
    %c0_200 = arith.constant 0 : index
    %c0_201 = arith.constant 0 : index
    %325 = vector.load %arg11[%c4_199, %c0_200, %c0_201] : memref<12x1x32xf32, #tpu.memory_space<vmem>>, vector<1x1x32xf32>
    %326 = vector.shape_cast %325 : vector<1x1x32xf32> to vector<1x32xf32>
    %327 = vector.broadcast %326 : vector<1x32xf32> to vector<8x32xf32>
    %328 = arith.mulf %324, %327 : vector<8x32xf32>
    %c4_202 = arith.constant 4 : index
    %c0_203 = arith.constant 0 : index
    %c0_204 = arith.constant 0 : index
    %329 = vector.load %arg12[%c4_202, %c0_203, %c0_204] : memref<12x1x32xf32, #tpu.memory_space<vmem>>, vector<1x1x32xf32>
    %330 = vector.shape_cast %329 : vector<1x1x32xf32> to vector<1x32xf32>
    %331 = vector.broadcast %330 : vector<1x32xf32> to vector<8x32xf32>
    %332 = arith.addf %328, %331 : vector<8x32xf32>
    %c12 = arith.constant 12 : index
    %c0_205 = arith.constant 0 : index
    %c0_206 = arith.constant 0 : index
    %333 = vector.load %arg3[%c12, %c0_205, %c0_206] : memref<36x32x16xf32, #tpu.memory_space<vmem>>, vector<1x32x16xf32>
    %334 = vector.shape_cast %333 : vector<1x32x16xf32> to vector<32x16xf32>
    %cst_207 = arith.constant dense<0.000000e+00> : vector<8x16xf32>
    %335 = tpu.matmul %8, %334, %cst_207 {dimension_numbers = #tpu.dot_dimension_numbers<[1], [0], [0], [1], [0, 0, 1, 1], [], []>} : vector<8x32xf32>, vector<32x16xf32>, vector<8x16xf32> -> vector<8x16xf32>
    %c12_208 = arith.constant 12 : index
    %c0_209 = arith.constant 0 : index
    %c0_210 = arith.constant 0 : index
    %336 = vector.load %arg4[%c12_208, %c0_209, %c0_210] : memref<36x1x16xf32, #tpu.memory_space<vmem>>, vector<1x1x16xf32>
    %337 = vector.shape_cast %336 : vector<1x1x16xf32> to vector<1x16xf32>
    %338 = vector.broadcast %337 : vector<1x16xf32> to vector<8x16xf32>
    %339 = arith.addf %335, %338 : vector<8x16xf32>
    %c13 = arith.constant 13 : index
    %c0_211 = arith.constant 0 : index
    %c0_212 = arith.constant 0 : index
    %340 = vector.load %arg3[%c13, %c0_211, %c0_212] : memref<36x32x16xf32, #tpu.memory_space<vmem>>, vector<1x32x16xf32>
    %341 = vector.shape_cast %340 : vector<1x32x16xf32> to vector<32x16xf32>
    %cst_213 = arith.constant dense<0.000000e+00> : vector<8x16xf32>
    %342 = tpu.matmul %8, %341, %cst_213 {dimension_numbers = #tpu.dot_dimension_numbers<[1], [0], [0], [1], [0, 0, 1, 1], [], []>} : vector<8x32xf32>, vector<32x16xf32>, vector<8x16xf32> -> vector<8x16xf32>
    %c13_214 = arith.constant 13 : index
    %c0_215 = arith.constant 0 : index
    %c0_216 = arith.constant 0 : index
    %343 = vector.load %arg4[%c13_214, %c0_215, %c0_216] : memref<36x1x16xf32, #tpu.memory_space<vmem>>, vector<1x1x16xf32>
    %344 = vector.shape_cast %343 : vector<1x1x16xf32> to vector<1x16xf32>
    %345 = vector.broadcast %344 : vector<1x16xf32> to vector<8x16xf32>
    %346 = arith.addf %342, %345 : vector<8x16xf32>
    %c14 = arith.constant 14 : index
    %c0_217 = arith.constant 0 : index
    %c0_218 = arith.constant 0 : index
    %347 = vector.load %arg3[%c14, %c0_217, %c0_218] : memref<36x32x16xf32, #tpu.memory_space<vmem>>, vector<1x32x16xf32>
    %348 = vector.shape_cast %347 : vector<1x32x16xf32> to vector<32x16xf32>
    %cst_219 = arith.constant dense<0.000000e+00> : vector<8x16xf32>
    %349 = tpu.matmul %8, %348, %cst_219 {dimension_numbers = #tpu.dot_dimension_numbers<[1], [0], [0], [1], [0, 0, 1, 1], [], []>} : vector<8x32xf32>, vector<32x16xf32>, vector<8x16xf32> -> vector<8x16xf32>
    %c14_220 = arith.constant 14 : index
    %c0_221 = arith.constant 0 : index
    %c0_222 = arith.constant 0 : index
    %350 = vector.load %arg4[%c14_220, %c0_221, %c0_222] : memref<36x1x16xf32, #tpu.memory_space<vmem>>, vector<1x1x16xf32>
    %351 = vector.shape_cast %350 : vector<1x1x16xf32> to vector<1x16xf32>
    %352 = vector.broadcast %351 : vector<1x16xf32> to vector<8x16xf32>
    %353 = arith.addf %349, %352 : vector<8x16xf32>
    %cst_223 = arith.constant dense<0.000000e+00> : vector<8x8xf32>
    %354 = tpu.matmul %339, %346, %cst_223 {dimension_numbers = #tpu.dot_dimension_numbers<[1], [1], [0], [0], [0, 0, 1, 0], [], []>} : vector<8x16xf32>, vector<8x16xf32>, vector<8x8xf32> -> vector<8x8xf32>
    %cst_224 = arith.constant 2.500000e-01 : f32
    %355 = vector.broadcast %cst_224 : f32 to vector<8x8xf32>
    %356 = arith.mulf %354, %355 : vector<8x8xf32>
    %cst_225 = arith.constant dense<0xFF800000> : vector<8xf32>
    %357 = vector.multi_reduction <maximumf>, %356, %cst_225 [1] : vector<8x8xf32> to vector<8xf32>
    %358 = vector.shape_cast %357 : vector<8xf32> to vector<8x1xf32>
    %359 = vector.broadcast %358 : vector<8x1xf32> to vector<8x8xf32>
    %360 = arith.subf %356, %359 : vector<8x8xf32>
    %361 = math.exp %360 : vector<8x8xf32>
    %cst_226 = arith.constant dense<0.000000e+00> : vector<8xf32>
    %362 = vector.multi_reduction <add>, %361, %cst_226 [1] : vector<8x8xf32> to vector<8xf32>
    %363 = vector.shape_cast %362 : vector<8xf32> to vector<8x1xf32>
    %364 = vector.broadcast %363 : vector<8x1xf32> to vector<8x8xf32>
    %365 = arith.divf %361, %364 : vector<8x8xf32>
    %cst_227 = arith.constant dense<0.000000e+00> : vector<8x16xf32>
    %366 = tpu.matmul %365, %353, %cst_227 {dimension_numbers = #tpu.dot_dimension_numbers<[1], [0], [0], [1], [0, 0, 1, 1], [], []>} : vector<8x8xf32>, vector<8x16xf32>, vector<8x16xf32> -> vector<8x16xf32>
    %c4_228 = arith.constant 4 : index
    %c0_229 = arith.constant 0 : index
    %c0_230 = arith.constant 0 : index
    %367 = vector.load %arg5[%c4_228, %c0_229, %c0_230] : memref<12x16x32xf32, #tpu.memory_space<vmem>>, vector<1x16x32xf32>
    %368 = vector.shape_cast %367 : vector<1x16x32xf32> to vector<16x32xf32>
    %cst_231 = arith.constant dense<0.000000e+00> : vector<8x32xf32>
    %369 = tpu.matmul %366, %368, %cst_231 {dimension_numbers = #tpu.dot_dimension_numbers<[1], [0], [0], [1], [0, 0, 1, 1], [], []>} : vector<8x16xf32>, vector<16x32xf32>, vector<8x32xf32> -> vector<8x32xf32>
    %c15 = arith.constant 15 : index
    %c0_232 = arith.constant 0 : index
    %c0_233 = arith.constant 0 : index
    %370 = vector.load %arg3[%c15, %c0_232, %c0_233] : memref<36x32x16xf32, #tpu.memory_space<vmem>>, vector<1x32x16xf32>
    %371 = vector.shape_cast %370 : vector<1x32x16xf32> to vector<32x16xf32>
    %cst_234 = arith.constant dense<0.000000e+00> : vector<8x16xf32>
    %372 = tpu.matmul %8, %371, %cst_234 {dimension_numbers = #tpu.dot_dimension_numbers<[1], [0], [0], [1], [0, 0, 1, 1], [], []>} : vector<8x32xf32>, vector<32x16xf32>, vector<8x16xf32> -> vector<8x16xf32>
    %c15_235 = arith.constant 15 : index
    %c0_236 = arith.constant 0 : index
    %c0_237 = arith.constant 0 : index
    %373 = vector.load %arg4[%c15_235, %c0_236, %c0_237] : memref<36x1x16xf32, #tpu.memory_space<vmem>>, vector<1x1x16xf32>
    %374 = vector.shape_cast %373 : vector<1x1x16xf32> to vector<1x16xf32>
    %375 = vector.broadcast %374 : vector<1x16xf32> to vector<8x16xf32>
    %376 = arith.addf %372, %375 : vector<8x16xf32>
    %c16 = arith.constant 16 : index
    %c0_238 = arith.constant 0 : index
    %c0_239 = arith.constant 0 : index
    %377 = vector.load %arg3[%c16, %c0_238, %c0_239] : memref<36x32x16xf32, #tpu.memory_space<vmem>>, vector<1x32x16xf32>
    %378 = vector.shape_cast %377 : vector<1x32x16xf32> to vector<32x16xf32>
    %cst_240 = arith.constant dense<0.000000e+00> : vector<8x16xf32>
    %379 = tpu.matmul %8, %378, %cst_240 {dimension_numbers = #tpu.dot_dimension_numbers<[1], [0], [0], [1], [0, 0, 1, 1], [], []>} : vector<8x32xf32>, vector<32x16xf32>, vector<8x16xf32> -> vector<8x16xf32>
    %c16_241 = arith.constant 16 : index
    %c0_242 = arith.constant 0 : index
    %c0_243 = arith.constant 0 : index
    %380 = vector.load %arg4[%c16_241, %c0_242, %c0_243] : memref<36x1x16xf32, #tpu.memory_space<vmem>>, vector<1x1x16xf32>
    %381 = vector.shape_cast %380 : vector<1x1x16xf32> to vector<1x16xf32>
    %382 = vector.broadcast %381 : vector<1x16xf32> to vector<8x16xf32>
    %383 = arith.addf %379, %382 : vector<8x16xf32>
    %c17 = arith.constant 17 : index
    %c0_244 = arith.constant 0 : index
    %c0_245 = arith.constant 0 : index
    %384 = vector.load %arg3[%c17, %c0_244, %c0_245] : memref<36x32x16xf32, #tpu.memory_space<vmem>>, vector<1x32x16xf32>
    %385 = vector.shape_cast %384 : vector<1x32x16xf32> to vector<32x16xf32>
    %cst_246 = arith.constant dense<0.000000e+00> : vector<8x16xf32>
    %386 = tpu.matmul %8, %385, %cst_246 {dimension_numbers = #tpu.dot_dimension_numbers<[1], [0], [0], [1], [0, 0, 1, 1], [], []>} : vector<8x32xf32>, vector<32x16xf32>, vector<8x16xf32> -> vector<8x16xf32>
    %c17_247 = arith.constant 17 : index
    %c0_248 = arith.constant 0 : index
    %c0_249 = arith.constant 0 : index
    %387 = vector.load %arg4[%c17_247, %c0_248, %c0_249] : memref<36x1x16xf32, #tpu.memory_space<vmem>>, vector<1x1x16xf32>
    %388 = vector.shape_cast %387 : vector<1x1x16xf32> to vector<1x16xf32>
    %389 = vector.broadcast %388 : vector<1x16xf32> to vector<8x16xf32>
    %390 = arith.addf %386, %389 : vector<8x16xf32>
    %cst_250 = arith.constant dense<0.000000e+00> : vector<8x8xf32>
    %391 = tpu.matmul %376, %383, %cst_250 {dimension_numbers = #tpu.dot_dimension_numbers<[1], [1], [0], [0], [0, 0, 1, 0], [], []>} : vector<8x16xf32>, vector<8x16xf32>, vector<8x8xf32> -> vector<8x8xf32>
    %cst_251 = arith.constant 2.500000e-01 : f32
    %392 = vector.broadcast %cst_251 : f32 to vector<8x8xf32>
    %393 = arith.mulf %391, %392 : vector<8x8xf32>
    %cst_252 = arith.constant dense<0xFF800000> : vector<8xf32>
    %394 = vector.multi_reduction <maximumf>, %393, %cst_252 [1] : vector<8x8xf32> to vector<8xf32>
    %395 = vector.shape_cast %394 : vector<8xf32> to vector<8x1xf32>
    %396 = vector.broadcast %395 : vector<8x1xf32> to vector<8x8xf32>
    %397 = arith.subf %393, %396 : vector<8x8xf32>
    %398 = math.exp %397 : vector<8x8xf32>
    %cst_253 = arith.constant dense<0.000000e+00> : vector<8xf32>
    %399 = vector.multi_reduction <add>, %398, %cst_253 [1] : vector<8x8xf32> to vector<8xf32>
    %400 = vector.shape_cast %399 : vector<8xf32> to vector<8x1xf32>
    %401 = vector.broadcast %400 : vector<8x1xf32> to vector<8x8xf32>
    %402 = arith.divf %398, %401 : vector<8x8xf32>
    %cst_254 = arith.constant dense<0.000000e+00> : vector<8x16xf32>
    %403 = tpu.matmul %402, %390, %cst_254 {dimension_numbers = #tpu.dot_dimension_numbers<[1], [0], [0], [1], [0, 0, 1, 1], [], []>} : vector<8x8xf32>, vector<8x16xf32>, vector<8x16xf32> -> vector<8x16xf32>
    %c5_255 = arith.constant 5 : index
    %c0_256 = arith.constant 0 : index
    %c0_257 = arith.constant 0 : index
    %404 = vector.load %arg5[%c5_255, %c0_256, %c0_257] : memref<12x16x32xf32, #tpu.memory_space<vmem>>, vector<1x16x32xf32>
    %405 = vector.shape_cast %404 : vector<1x16x32xf32> to vector<16x32xf32>
    %cst_258 = arith.constant dense<0.000000e+00> : vector<8x32xf32>
    %406 = tpu.matmul %403, %405, %cst_258 {dimension_numbers = #tpu.dot_dimension_numbers<[1], [0], [0], [1], [0, 0, 1, 1], [], []>} : vector<8x16xf32>, vector<16x32xf32>, vector<8x32xf32> -> vector<8x32xf32>
    %407 = arith.addf %369, %406 : vector<8x32xf32>
    %c2_259 = arith.constant 2 : index
    %c0_260 = arith.constant 0 : index
    %c0_261 = arith.constant 0 : index
    %408 = vector.load %arg6[%c2_259, %c0_260, %c0_261] : memref<6x1x32xf32, #tpu.memory_space<vmem>>, vector<1x1x32xf32>
    %409 = vector.shape_cast %408 : vector<1x1x32xf32> to vector<1x32xf32>
    %410 = vector.broadcast %409 : vector<1x32xf32> to vector<8x32xf32>
    %411 = arith.addf %407, %410 : vector<8x32xf32>
    %412 = arith.addf %8, %411 : vector<8x32xf32>
    %cst_262 = arith.constant dense<0.000000e+00> : vector<8xf32>
    %413 = vector.multi_reduction <add>, %412, %cst_262 [1] : vector<8x32xf32> to vector<8xf32>
    %414 = vector.shape_cast %413 : vector<8xf32> to vector<8x1xf32>
    %cst_263 = arith.constant 3.200000e+01 : f32
    %415 = vector.broadcast %cst_263 : f32 to vector<8x1xf32>
    %416 = arith.divf %414, %415 : vector<8x1xf32>
    %417 = vector.broadcast %416 : vector<8x1xf32> to vector<8x32xf32>
    %418 = arith.subf %412, %417 : vector<8x32xf32>
    %419 = arith.mulf %418, %418 : vector<8x32xf32>
    %cst_264 = arith.constant dense<0.000000e+00> : vector<8xf32>
    %420 = vector.multi_reduction <add>, %419, %cst_264 [1] : vector<8x32xf32> to vector<8xf32>
    %421 = vector.shape_cast %420 : vector<8xf32> to vector<8x1xf32>
    %cst_265 = arith.constant 3.200000e+01 : f32
    %422 = vector.broadcast %cst_265 : f32 to vector<8x1xf32>
    %423 = arith.divf %421, %422 : vector<8x1xf32>
    %424 = vector.broadcast %416 : vector<8x1xf32> to vector<8x32xf32>
    %425 = arith.subf %412, %424 : vector<8x32xf32>
    %cst_266 = arith.constant 9.99999974E-6 : f32
    %426 = vector.broadcast %cst_266 : f32 to vector<8x1xf32>
    %427 = arith.addf %423, %426 : vector<8x1xf32>
    %428 = math.rsqrt %427 : vector<8x1xf32>
    %429 = vector.broadcast %428 : vector<8x1xf32> to vector<8x32xf32>
    %430 = arith.mulf %425, %429 : vector<8x32xf32>
    %c5_267 = arith.constant 5 : index
    %c0_268 = arith.constant 0 : index
    %c0_269 = arith.constant 0 : index
    %431 = vector.load %arg11[%c5_267, %c0_268, %c0_269] : memref<12x1x32xf32, #tpu.memory_space<vmem>>, vector<1x1x32xf32>
    %432 = vector.shape_cast %431 : vector<1x1x32xf32> to vector<1x32xf32>
    %433 = vector.broadcast %432 : vector<1x32xf32> to vector<8x32xf32>
    %434 = arith.mulf %430, %433 : vector<8x32xf32>
    %c5_270 = arith.constant 5 : index
    %c0_271 = arith.constant 0 : index
    %c0_272 = arith.constant 0 : index
    %435 = vector.load %arg12[%c5_270, %c0_271, %c0_272] : memref<12x1x32xf32, #tpu.memory_space<vmem>>, vector<1x1x32xf32>
    %436 = vector.shape_cast %435 : vector<1x1x32xf32> to vector<1x32xf32>
    %437 = vector.broadcast %436 : vector<1x32xf32> to vector<8x32xf32>
    %438 = arith.addf %434, %437 : vector<8x32xf32>
    %c18 = arith.constant 18 : index
    %c0_273 = arith.constant 0 : index
    %c0_274 = arith.constant 0 : index
    %439 = vector.load %arg3[%c18, %c0_273, %c0_274] : memref<36x32x16xf32, #tpu.memory_space<vmem>>, vector<1x32x16xf32>
    %440 = vector.shape_cast %439 : vector<1x32x16xf32> to vector<32x16xf32>
    %cst_275 = arith.constant dense<0.000000e+00> : vector<8x16xf32>
    %441 = tpu.matmul %438, %440, %cst_275 {dimension_numbers = #tpu.dot_dimension_numbers<[1], [0], [0], [1], [0, 0, 1, 1], [], []>} : vector<8x32xf32>, vector<32x16xf32>, vector<8x16xf32> -> vector<8x16xf32>
    %c18_276 = arith.constant 18 : index
    %c0_277 = arith.constant 0 : index
    %c0_278 = arith.constant 0 : index
    %442 = vector.load %arg4[%c18_276, %c0_277, %c0_278] : memref<36x1x16xf32, #tpu.memory_space<vmem>>, vector<1x1x16xf32>
    %443 = vector.shape_cast %442 : vector<1x1x16xf32> to vector<1x16xf32>
    %444 = vector.broadcast %443 : vector<1x16xf32> to vector<8x16xf32>
    %445 = arith.addf %441, %444 : vector<8x16xf32>
    %c19 = arith.constant 19 : index
    %c0_279 = arith.constant 0 : index
    %c0_280 = arith.constant 0 : index
    %446 = vector.load %arg3[%c19, %c0_279, %c0_280] : memref<36x32x16xf32, #tpu.memory_space<vmem>>, vector<1x32x16xf32>
    %447 = vector.shape_cast %446 : vector<1x32x16xf32> to vector<32x16xf32>
    %cst_281 = arith.constant dense<0.000000e+00> : vector<8x16xf32>
    %448 = tpu.matmul %332, %447, %cst_281 {dimension_numbers = #tpu.dot_dimension_numbers<[1], [0], [0], [1], [0, 0, 1, 1], [], []>} : vector<8x32xf32>, vector<32x16xf32>, vector<8x16xf32> -> vector<8x16xf32>
    %c19_282 = arith.constant 19 : index
    %c0_283 = arith.constant 0 : index
    %c0_284 = arith.constant 0 : index
    %449 = vector.load %arg4[%c19_282, %c0_283, %c0_284] : memref<36x1x16xf32, #tpu.memory_space<vmem>>, vector<1x1x16xf32>
    %450 = vector.shape_cast %449 : vector<1x1x16xf32> to vector<1x16xf32>
    %451 = vector.broadcast %450 : vector<1x16xf32> to vector<8x16xf32>
    %452 = arith.addf %448, %451 : vector<8x16xf32>
    %c20 = arith.constant 20 : index
    %c0_285 = arith.constant 0 : index
    %c0_286 = arith.constant 0 : index
    %453 = vector.load %arg3[%c20, %c0_285, %c0_286] : memref<36x32x16xf32, #tpu.memory_space<vmem>>, vector<1x32x16xf32>
    %454 = vector.shape_cast %453 : vector<1x32x16xf32> to vector<32x16xf32>
    %cst_287 = arith.constant dense<0.000000e+00> : vector<8x16xf32>
    %455 = tpu.matmul %332, %454, %cst_287 {dimension_numbers = #tpu.dot_dimension_numbers<[1], [0], [0], [1], [0, 0, 1, 1], [], []>} : vector<8x32xf32>, vector<32x16xf32>, vector<8x16xf32> -> vector<8x16xf32>
    %c20_288 = arith.constant 20 : index
    %c0_289 = arith.constant 0 : index
    %c0_290 = arith.constant 0 : index
    %456 = vector.load %arg4[%c20_288, %c0_289, %c0_290] : memref<36x1x16xf32, #tpu.memory_space<vmem>>, vector<1x1x16xf32>
    %457 = vector.shape_cast %456 : vector<1x1x16xf32> to vector<1x16xf32>
    %458 = vector.broadcast %457 : vector<1x16xf32> to vector<8x16xf32>
    %459 = arith.addf %455, %458 : vector<8x16xf32>
    %cst_291 = arith.constant dense<0.000000e+00> : vector<8x8xf32>
    %460 = tpu.matmul %445, %452, %cst_291 {dimension_numbers = #tpu.dot_dimension_numbers<[1], [1], [0], [0], [0, 0, 1, 0], [], []>} : vector<8x16xf32>, vector<8x16xf32>, vector<8x8xf32> -> vector<8x8xf32>
    %cst_292 = arith.constant 2.500000e-01 : f32
    %461 = vector.broadcast %cst_292 : f32 to vector<8x8xf32>
    %462 = arith.mulf %460, %461 : vector<8x8xf32>
    %cst_293 = arith.constant dense<0xFF800000> : vector<8xf32>
    %463 = vector.multi_reduction <maximumf>, %462, %cst_293 [1] : vector<8x8xf32> to vector<8xf32>
    %464 = vector.shape_cast %463 : vector<8xf32> to vector<8x1xf32>
    %465 = vector.broadcast %464 : vector<8x1xf32> to vector<8x8xf32>
    %466 = arith.subf %462, %465 : vector<8x8xf32>
    %467 = math.exp %466 : vector<8x8xf32>
    %cst_294 = arith.constant dense<0.000000e+00> : vector<8xf32>
    %468 = vector.multi_reduction <add>, %467, %cst_294 [1] : vector<8x8xf32> to vector<8xf32>
    %469 = vector.shape_cast %468 : vector<8xf32> to vector<8x1xf32>
    %470 = vector.broadcast %469 : vector<8x1xf32> to vector<8x8xf32>
    %471 = arith.divf %467, %470 : vector<8x8xf32>
    %cst_295 = arith.constant dense<0.000000e+00> : vector<8x16xf32>
    %472 = tpu.matmul %471, %459, %cst_295 {dimension_numbers = #tpu.dot_dimension_numbers<[1], [0], [0], [1], [0, 0, 1, 1], [], []>} : vector<8x8xf32>, vector<8x16xf32>, vector<8x16xf32> -> vector<8x16xf32>
    %c6_296 = arith.constant 6 : index
    %c0_297 = arith.constant 0 : index
    %c0_298 = arith.constant 0 : index
    %473 = vector.load %arg5[%c6_296, %c0_297, %c0_298] : memref<12x16x32xf32, #tpu.memory_space<vmem>>, vector<1x16x32xf32>
    %474 = vector.shape_cast %473 : vector<1x16x32xf32> to vector<16x32xf32>
    %cst_299 = arith.constant dense<0.000000e+00> : vector<8x32xf32>
    %475 = tpu.matmul %472, %474, %cst_299 {dimension_numbers = #tpu.dot_dimension_numbers<[1], [0], [0], [1], [0, 0, 1, 1], [], []>} : vector<8x16xf32>, vector<16x32xf32>, vector<8x32xf32> -> vector<8x32xf32>
    %c21 = arith.constant 21 : index
    %c0_300 = arith.constant 0 : index
    %c0_301 = arith.constant 0 : index
    %476 = vector.load %arg3[%c21, %c0_300, %c0_301] : memref<36x32x16xf32, #tpu.memory_space<vmem>>, vector<1x32x16xf32>
    %477 = vector.shape_cast %476 : vector<1x32x16xf32> to vector<32x16xf32>
    %cst_302 = arith.constant dense<0.000000e+00> : vector<8x16xf32>
    %478 = tpu.matmul %438, %477, %cst_302 {dimension_numbers = #tpu.dot_dimension_numbers<[1], [0], [0], [1], [0, 0, 1, 1], [], []>} : vector<8x32xf32>, vector<32x16xf32>, vector<8x16xf32> -> vector<8x16xf32>
    %c21_303 = arith.constant 21 : index
    %c0_304 = arith.constant 0 : index
    %c0_305 = arith.constant 0 : index
    %479 = vector.load %arg4[%c21_303, %c0_304, %c0_305] : memref<36x1x16xf32, #tpu.memory_space<vmem>>, vector<1x1x16xf32>
    %480 = vector.shape_cast %479 : vector<1x1x16xf32> to vector<1x16xf32>
    %481 = vector.broadcast %480 : vector<1x16xf32> to vector<8x16xf32>
    %482 = arith.addf %478, %481 : vector<8x16xf32>
    %c22 = arith.constant 22 : index
    %c0_306 = arith.constant 0 : index
    %c0_307 = arith.constant 0 : index
    %483 = vector.load %arg3[%c22, %c0_306, %c0_307] : memref<36x32x16xf32, #tpu.memory_space<vmem>>, vector<1x32x16xf32>
    %484 = vector.shape_cast %483 : vector<1x32x16xf32> to vector<32x16xf32>
    %cst_308 = arith.constant dense<0.000000e+00> : vector<8x16xf32>
    %485 = tpu.matmul %332, %484, %cst_308 {dimension_numbers = #tpu.dot_dimension_numbers<[1], [0], [0], [1], [0, 0, 1, 1], [], []>} : vector<8x32xf32>, vector<32x16xf32>, vector<8x16xf32> -> vector<8x16xf32>
    %c22_309 = arith.constant 22 : index
    %c0_310 = arith.constant 0 : index
    %c0_311 = arith.constant 0 : index
    %486 = vector.load %arg4[%c22_309, %c0_310, %c0_311] : memref<36x1x16xf32, #tpu.memory_space<vmem>>, vector<1x1x16xf32>
    %487 = vector.shape_cast %486 : vector<1x1x16xf32> to vector<1x16xf32>
    %488 = vector.broadcast %487 : vector<1x16xf32> to vector<8x16xf32>
    %489 = arith.addf %485, %488 : vector<8x16xf32>
    %c23 = arith.constant 23 : index
    %c0_312 = arith.constant 0 : index
    %c0_313 = arith.constant 0 : index
    %490 = vector.load %arg3[%c23, %c0_312, %c0_313] : memref<36x32x16xf32, #tpu.memory_space<vmem>>, vector<1x32x16xf32>
    %491 = vector.shape_cast %490 : vector<1x32x16xf32> to vector<32x16xf32>
    %cst_314 = arith.constant dense<0.000000e+00> : vector<8x16xf32>
    %492 = tpu.matmul %332, %491, %cst_314 {dimension_numbers = #tpu.dot_dimension_numbers<[1], [0], [0], [1], [0, 0, 1, 1], [], []>} : vector<8x32xf32>, vector<32x16xf32>, vector<8x16xf32> -> vector<8x16xf32>
    %c23_315 = arith.constant 23 : index
    %c0_316 = arith.constant 0 : index
    %c0_317 = arith.constant 0 : index
    %493 = vector.load %arg4[%c23_315, %c0_316, %c0_317] : memref<36x1x16xf32, #tpu.memory_space<vmem>>, vector<1x1x16xf32>
    %494 = vector.shape_cast %493 : vector<1x1x16xf32> to vector<1x16xf32>
    %495 = vector.broadcast %494 : vector<1x16xf32> to vector<8x16xf32>
    %496 = arith.addf %492, %495 : vector<8x16xf32>
    %cst_318 = arith.constant dense<0.000000e+00> : vector<8x8xf32>
    %497 = tpu.matmul %482, %489, %cst_318 {dimension_numbers = #tpu.dot_dimension_numbers<[1], [1], [0], [0], [0, 0, 1, 0], [], []>} : vector<8x16xf32>, vector<8x16xf32>, vector<8x8xf32> -> vector<8x8xf32>
    %cst_319 = arith.constant 2.500000e-01 : f32
    %498 = vector.broadcast %cst_319 : f32 to vector<8x8xf32>
    %499 = arith.mulf %497, %498 : vector<8x8xf32>
    %cst_320 = arith.constant dense<0xFF800000> : vector<8xf32>
    %500 = vector.multi_reduction <maximumf>, %499, %cst_320 [1] : vector<8x8xf32> to vector<8xf32>
    %501 = vector.shape_cast %500 : vector<8xf32> to vector<8x1xf32>
    %502 = vector.broadcast %501 : vector<8x1xf32> to vector<8x8xf32>
    %503 = arith.subf %499, %502 : vector<8x8xf32>
    %504 = math.exp %503 : vector<8x8xf32>
    %cst_321 = arith.constant dense<0.000000e+00> : vector<8xf32>
    %505 = vector.multi_reduction <add>, %504, %cst_321 [1] : vector<8x8xf32> to vector<8xf32>
    %506 = vector.shape_cast %505 : vector<8xf32> to vector<8x1xf32>
    %507 = vector.broadcast %506 : vector<8x1xf32> to vector<8x8xf32>
    %508 = arith.divf %504, %507 : vector<8x8xf32>
    %cst_322 = arith.constant dense<0.000000e+00> : vector<8x16xf32>
    %509 = tpu.matmul %508, %496, %cst_322 {dimension_numbers = #tpu.dot_dimension_numbers<[1], [0], [0], [1], [0, 0, 1, 1], [], []>} : vector<8x8xf32>, vector<8x16xf32>, vector<8x16xf32> -> vector<8x16xf32>
    %c7_323 = arith.constant 7 : index
    %c0_324 = arith.constant 0 : index
    %c0_325 = arith.constant 0 : index
    %510 = vector.load %arg5[%c7_323, %c0_324, %c0_325] : memref<12x16x32xf32, #tpu.memory_space<vmem>>, vector<1x16x32xf32>
    %511 = vector.shape_cast %510 : vector<1x16x32xf32> to vector<16x32xf32>
    %cst_326 = arith.constant dense<0.000000e+00> : vector<8x32xf32>
    %512 = tpu.matmul %509, %511, %cst_326 {dimension_numbers = #tpu.dot_dimension_numbers<[1], [0], [0], [1], [0, 0, 1, 1], [], []>} : vector<8x16xf32>, vector<16x32xf32>, vector<8x32xf32> -> vector<8x32xf32>
    %513 = arith.addf %475, %512 : vector<8x32xf32>
    %c3_327 = arith.constant 3 : index
    %c0_328 = arith.constant 0 : index
    %c0_329 = arith.constant 0 : index
    %514 = vector.load %arg6[%c3_327, %c0_328, %c0_329] : memref<6x1x32xf32, #tpu.memory_space<vmem>>, vector<1x1x32xf32>
    %515 = vector.shape_cast %514 : vector<1x1x32xf32> to vector<1x32xf32>
    %516 = vector.broadcast %515 : vector<1x32xf32> to vector<8x32xf32>
    %517 = arith.addf %513, %516 : vector<8x32xf32>
    %518 = arith.addf %438, %517 : vector<8x32xf32>
    %cst_330 = arith.constant dense<0.000000e+00> : vector<8xf32>
    %519 = vector.multi_reduction <add>, %518, %cst_330 [1] : vector<8x32xf32> to vector<8xf32>
    %520 = vector.shape_cast %519 : vector<8xf32> to vector<8x1xf32>
    %cst_331 = arith.constant 3.200000e+01 : f32
    %521 = vector.broadcast %cst_331 : f32 to vector<8x1xf32>
    %522 = arith.divf %520, %521 : vector<8x1xf32>
    %523 = vector.broadcast %522 : vector<8x1xf32> to vector<8x32xf32>
    %524 = arith.subf %518, %523 : vector<8x32xf32>
    %525 = arith.mulf %524, %524 : vector<8x32xf32>
    %cst_332 = arith.constant dense<0.000000e+00> : vector<8xf32>
    %526 = vector.multi_reduction <add>, %525, %cst_332 [1] : vector<8x32xf32> to vector<8xf32>
    %527 = vector.shape_cast %526 : vector<8xf32> to vector<8x1xf32>
    %cst_333 = arith.constant 3.200000e+01 : f32
    %528 = vector.broadcast %cst_333 : f32 to vector<8x1xf32>
    %529 = arith.divf %527, %528 : vector<8x1xf32>
    %530 = vector.broadcast %522 : vector<8x1xf32> to vector<8x32xf32>
    %531 = arith.subf %518, %530 : vector<8x32xf32>
    %cst_334 = arith.constant 9.99999974E-6 : f32
    %532 = vector.broadcast %cst_334 : f32 to vector<8x1xf32>
    %533 = arith.addf %529, %532 : vector<8x1xf32>
    %534 = math.rsqrt %533 : vector<8x1xf32>
    %535 = vector.broadcast %534 : vector<8x1xf32> to vector<8x32xf32>
    %536 = arith.mulf %531, %535 : vector<8x32xf32>
    %c6_335 = arith.constant 6 : index
    %c0_336 = arith.constant 0 : index
    %c0_337 = arith.constant 0 : index
    %537 = vector.load %arg11[%c6_335, %c0_336, %c0_337] : memref<12x1x32xf32, #tpu.memory_space<vmem>>, vector<1x1x32xf32>
    %538 = vector.shape_cast %537 : vector<1x1x32xf32> to vector<1x32xf32>
    %539 = vector.broadcast %538 : vector<1x32xf32> to vector<8x32xf32>
    %540 = arith.mulf %536, %539 : vector<8x32xf32>
    %c6_338 = arith.constant 6 : index
    %c0_339 = arith.constant 0 : index
    %c0_340 = arith.constant 0 : index
    %541 = vector.load %arg12[%c6_338, %c0_339, %c0_340] : memref<12x1x32xf32, #tpu.memory_space<vmem>>, vector<1x1x32xf32>
    %542 = vector.shape_cast %541 : vector<1x1x32xf32> to vector<1x32xf32>
    %543 = vector.broadcast %542 : vector<1x32xf32> to vector<8x32xf32>
    %544 = arith.addf %540, %543 : vector<8x32xf32>
    %c2_341 = arith.constant 2 : index
    %c0_342 = arith.constant 0 : index
    %c0_343 = arith.constant 0 : index
    %545 = vector.load %arg7[%c2_341, %c0_342, %c0_343] : memref<4x32x64xf32, #tpu.memory_space<vmem>>, vector<1x32x64xf32>
    %546 = vector.shape_cast %545 : vector<1x32x64xf32> to vector<32x64xf32>
    %cst_344 = arith.constant dense<0.000000e+00> : vector<8x64xf32>
    %547 = tpu.matmul %544, %546, %cst_344 {dimension_numbers = #tpu.dot_dimension_numbers<[1], [0], [0], [1], [0, 0, 1, 1], [], []>} : vector<8x32xf32>, vector<32x64xf32>, vector<8x64xf32> -> vector<8x64xf32>
    %c2_345 = arith.constant 2 : index
    %c0_346 = arith.constant 0 : index
    %c0_347 = arith.constant 0 : index
    %548 = vector.load %arg8[%c2_345, %c0_346, %c0_347] : memref<4x1x64xf32, #tpu.memory_space<vmem>>, vector<1x1x64xf32>
    %549 = vector.shape_cast %548 : vector<1x1x64xf32> to vector<1x64xf32>
    %550 = vector.broadcast %549 : vector<1x64xf32> to vector<8x64xf32>
    %551 = arith.addf %547, %550 : vector<8x64xf32>
    %cst_348 = arith.constant 0.000000e+00 : f32
    %552 = vector.broadcast %cst_348 : f32 to vector<8x64xf32>
    %553 = arith.maximumf %551, %552 : vector<8x64xf32>
    %c2_349 = arith.constant 2 : index
    %c0_350 = arith.constant 0 : index
    %c0_351 = arith.constant 0 : index
    %554 = vector.load %arg9[%c2_349, %c0_350, %c0_351] : memref<4x64x32xf32, #tpu.memory_space<vmem>>, vector<1x64x32xf32>
    %555 = vector.shape_cast %554 : vector<1x64x32xf32> to vector<64x32xf32>
    %cst_352 = arith.constant dense<0.000000e+00> : vector<8x32xf32>
    %556 = tpu.matmul %553, %555, %cst_352 {dimension_numbers = #tpu.dot_dimension_numbers<[1], [0], [0], [1], [0, 0, 1, 1], [], []>} : vector<8x64xf32>, vector<64x32xf32>, vector<8x32xf32> -> vector<8x32xf32>
    %c2_353 = arith.constant 2 : index
    %c0_354 = arith.constant 0 : index
    %c0_355 = arith.constant 0 : index
    %557 = vector.load %arg10[%c2_353, %c0_354, %c0_355] : memref<4x1x32xf32, #tpu.memory_space<vmem>>, vector<1x1x32xf32>
    %558 = vector.shape_cast %557 : vector<1x1x32xf32> to vector<1x32xf32>
    %559 = vector.broadcast %558 : vector<1x32xf32> to vector<8x32xf32>
    %560 = arith.addf %556, %559 : vector<8x32xf32>
    %561 = arith.addf %544, %560 : vector<8x32xf32>
    %cst_356 = arith.constant dense<0.000000e+00> : vector<8xf32>
    %562 = vector.multi_reduction <add>, %561, %cst_356 [1] : vector<8x32xf32> to vector<8xf32>
    %563 = vector.shape_cast %562 : vector<8xf32> to vector<8x1xf32>
    %cst_357 = arith.constant 3.200000e+01 : f32
    %564 = vector.broadcast %cst_357 : f32 to vector<8x1xf32>
    %565 = arith.divf %563, %564 : vector<8x1xf32>
    %566 = vector.broadcast %565 : vector<8x1xf32> to vector<8x32xf32>
    %567 = arith.subf %561, %566 : vector<8x32xf32>
    %568 = arith.mulf %567, %567 : vector<8x32xf32>
    %cst_358 = arith.constant dense<0.000000e+00> : vector<8xf32>
    %569 = vector.multi_reduction <add>, %568, %cst_358 [1] : vector<8x32xf32> to vector<8xf32>
    %570 = vector.shape_cast %569 : vector<8xf32> to vector<8x1xf32>
    %cst_359 = arith.constant 3.200000e+01 : f32
    %571 = vector.broadcast %cst_359 : f32 to vector<8x1xf32>
    %572 = arith.divf %570, %571 : vector<8x1xf32>
    %573 = vector.broadcast %565 : vector<8x1xf32> to vector<8x32xf32>
    %574 = arith.subf %561, %573 : vector<8x32xf32>
    %cst_360 = arith.constant 9.99999974E-6 : f32
    %575 = vector.broadcast %cst_360 : f32 to vector<8x1xf32>
    %576 = arith.addf %572, %575 : vector<8x1xf32>
    %577 = math.rsqrt %576 : vector<8x1xf32>
    %578 = vector.broadcast %577 : vector<8x1xf32> to vector<8x32xf32>
    %579 = arith.mulf %574, %578 : vector<8x32xf32>
    %c7_361 = arith.constant 7 : index
    %c0_362 = arith.constant 0 : index
    %c0_363 = arith.constant 0 : index
    %580 = vector.load %arg11[%c7_361, %c0_362, %c0_363] : memref<12x1x32xf32, #tpu.memory_space<vmem>>, vector<1x1x32xf32>
    %581 = vector.shape_cast %580 : vector<1x1x32xf32> to vector<1x32xf32>
    %582 = vector.broadcast %581 : vector<1x32xf32> to vector<8x32xf32>
    %583 = arith.mulf %579, %582 : vector<8x32xf32>
    %c7_364 = arith.constant 7 : index
    %c0_365 = arith.constant 0 : index
    %c0_366 = arith.constant 0 : index
    %584 = vector.load %arg12[%c7_364, %c0_365, %c0_366] : memref<12x1x32xf32, #tpu.memory_space<vmem>>, vector<1x1x32xf32>
    %585 = vector.shape_cast %584 : vector<1x1x32xf32> to vector<1x32xf32>
    %586 = vector.broadcast %585 : vector<1x32xf32> to vector<8x32xf32>
    %587 = arith.addf %583, %586 : vector<8x32xf32>
    %c24 = arith.constant 24 : index
    %c0_367 = arith.constant 0 : index
    %c0_368 = arith.constant 0 : index
    %588 = vector.load %arg3[%c24, %c0_367, %c0_368] : memref<36x32x16xf32, #tpu.memory_space<vmem>>, vector<1x32x16xf32>
    %589 = vector.shape_cast %588 : vector<1x32x16xf32> to vector<32x16xf32>
    %cst_369 = arith.constant dense<0.000000e+00> : vector<8x16xf32>
    %590 = tpu.matmul %587, %589, %cst_369 {dimension_numbers = #tpu.dot_dimension_numbers<[1], [0], [0], [1], [0, 0, 1, 1], [], []>} : vector<8x32xf32>, vector<32x16xf32>, vector<8x16xf32> -> vector<8x16xf32>
    %c24_370 = arith.constant 24 : index
    %c0_371 = arith.constant 0 : index
    %c0_372 = arith.constant 0 : index
    %591 = vector.load %arg4[%c24_370, %c0_371, %c0_372] : memref<36x1x16xf32, #tpu.memory_space<vmem>>, vector<1x1x16xf32>
    %592 = vector.shape_cast %591 : vector<1x1x16xf32> to vector<1x16xf32>
    %593 = vector.broadcast %592 : vector<1x16xf32> to vector<8x16xf32>
    %594 = arith.addf %590, %593 : vector<8x16xf32>
    %c25 = arith.constant 25 : index
    %c0_373 = arith.constant 0 : index
    %c0_374 = arith.constant 0 : index
    %595 = vector.load %arg3[%c25, %c0_373, %c0_374] : memref<36x32x16xf32, #tpu.memory_space<vmem>>, vector<1x32x16xf32>
    %596 = vector.shape_cast %595 : vector<1x32x16xf32> to vector<32x16xf32>
    %cst_375 = arith.constant dense<0.000000e+00> : vector<8x16xf32>
    %597 = tpu.matmul %587, %596, %cst_375 {dimension_numbers = #tpu.dot_dimension_numbers<[1], [0], [0], [1], [0, 0, 1, 1], [], []>} : vector<8x32xf32>, vector<32x16xf32>, vector<8x16xf32> -> vector<8x16xf32>
    %c25_376 = arith.constant 25 : index
    %c0_377 = arith.constant 0 : index
    %c0_378 = arith.constant 0 : index
    %598 = vector.load %arg4[%c25_376, %c0_377, %c0_378] : memref<36x1x16xf32, #tpu.memory_space<vmem>>, vector<1x1x16xf32>
    %599 = vector.shape_cast %598 : vector<1x1x16xf32> to vector<1x16xf32>
    %600 = vector.broadcast %599 : vector<1x16xf32> to vector<8x16xf32>
    %601 = arith.addf %597, %600 : vector<8x16xf32>
    %c26 = arith.constant 26 : index
    %c0_379 = arith.constant 0 : index
    %c0_380 = arith.constant 0 : index
    %602 = vector.load %arg3[%c26, %c0_379, %c0_380] : memref<36x32x16xf32, #tpu.memory_space<vmem>>, vector<1x32x16xf32>
    %603 = vector.shape_cast %602 : vector<1x32x16xf32> to vector<32x16xf32>
    %cst_381 = arith.constant dense<0.000000e+00> : vector<8x16xf32>
    %604 = tpu.matmul %587, %603, %cst_381 {dimension_numbers = #tpu.dot_dimension_numbers<[1], [0], [0], [1], [0, 0, 1, 1], [], []>} : vector<8x32xf32>, vector<32x16xf32>, vector<8x16xf32> -> vector<8x16xf32>
    %c26_382 = arith.constant 26 : index
    %c0_383 = arith.constant 0 : index
    %c0_384 = arith.constant 0 : index
    %605 = vector.load %arg4[%c26_382, %c0_383, %c0_384] : memref<36x1x16xf32, #tpu.memory_space<vmem>>, vector<1x1x16xf32>
    %606 = vector.shape_cast %605 : vector<1x1x16xf32> to vector<1x16xf32>
    %607 = vector.broadcast %606 : vector<1x16xf32> to vector<8x16xf32>
    %608 = arith.addf %604, %607 : vector<8x16xf32>
    %cst_385 = arith.constant dense<0.000000e+00> : vector<8x8xf32>
    %609 = tpu.matmul %594, %601, %cst_385 {dimension_numbers = #tpu.dot_dimension_numbers<[1], [1], [0], [0], [0, 0, 1, 0], [], []>} : vector<8x16xf32>, vector<8x16xf32>, vector<8x8xf32> -> vector<8x8xf32>
    %cst_386 = arith.constant 2.500000e-01 : f32
    %610 = vector.broadcast %cst_386 : f32 to vector<8x8xf32>
    %611 = arith.mulf %609, %610 : vector<8x8xf32>
    %cst_387 = arith.constant dense<0xFF800000> : vector<8xf32>
    %612 = vector.multi_reduction <maximumf>, %611, %cst_387 [1] : vector<8x8xf32> to vector<8xf32>
    %613 = vector.shape_cast %612 : vector<8xf32> to vector<8x1xf32>
    %614 = vector.broadcast %613 : vector<8x1xf32> to vector<8x8xf32>
    %615 = arith.subf %611, %614 : vector<8x8xf32>
    %616 = math.exp %615 : vector<8x8xf32>
    %cst_388 = arith.constant dense<0.000000e+00> : vector<8xf32>
    %617 = vector.multi_reduction <add>, %616, %cst_388 [1] : vector<8x8xf32> to vector<8xf32>
    %618 = vector.shape_cast %617 : vector<8xf32> to vector<8x1xf32>
    %619 = vector.broadcast %618 : vector<8x1xf32> to vector<8x8xf32>
    %620 = arith.divf %616, %619 : vector<8x8xf32>
    %cst_389 = arith.constant dense<0.000000e+00> : vector<8x16xf32>
    %621 = tpu.matmul %620, %608, %cst_389 {dimension_numbers = #tpu.dot_dimension_numbers<[1], [0], [0], [1], [0, 0, 1, 1], [], []>} : vector<8x8xf32>, vector<8x16xf32>, vector<8x16xf32> -> vector<8x16xf32>
    %c8_390 = arith.constant 8 : index
    %c0_391 = arith.constant 0 : index
    %c0_392 = arith.constant 0 : index
    %622 = vector.load %arg5[%c8_390, %c0_391, %c0_392] : memref<12x16x32xf32, #tpu.memory_space<vmem>>, vector<1x16x32xf32>
    %623 = vector.shape_cast %622 : vector<1x16x32xf32> to vector<16x32xf32>
    %cst_393 = arith.constant dense<0.000000e+00> : vector<8x32xf32>
    %624 = tpu.matmul %621, %623, %cst_393 {dimension_numbers = #tpu.dot_dimension_numbers<[1], [0], [0], [1], [0, 0, 1, 1], [], []>} : vector<8x16xf32>, vector<16x32xf32>, vector<8x32xf32> -> vector<8x32xf32>
    %c27 = arith.constant 27 : index
    %c0_394 = arith.constant 0 : index
    %c0_395 = arith.constant 0 : index
    %625 = vector.load %arg3[%c27, %c0_394, %c0_395] : memref<36x32x16xf32, #tpu.memory_space<vmem>>, vector<1x32x16xf32>
    %626 = vector.shape_cast %625 : vector<1x32x16xf32> to vector<32x16xf32>
    %cst_396 = arith.constant dense<0.000000e+00> : vector<8x16xf32>
    %627 = tpu.matmul %587, %626, %cst_396 {dimension_numbers = #tpu.dot_dimension_numbers<[1], [0], [0], [1], [0, 0, 1, 1], [], []>} : vector<8x32xf32>, vector<32x16xf32>, vector<8x16xf32> -> vector<8x16xf32>
    %c27_397 = arith.constant 27 : index
    %c0_398 = arith.constant 0 : index
    %c0_399 = arith.constant 0 : index
    %628 = vector.load %arg4[%c27_397, %c0_398, %c0_399] : memref<36x1x16xf32, #tpu.memory_space<vmem>>, vector<1x1x16xf32>
    %629 = vector.shape_cast %628 : vector<1x1x16xf32> to vector<1x16xf32>
    %630 = vector.broadcast %629 : vector<1x16xf32> to vector<8x16xf32>
    %631 = arith.addf %627, %630 : vector<8x16xf32>
    %c28 = arith.constant 28 : index
    %c0_400 = arith.constant 0 : index
    %c0_401 = arith.constant 0 : index
    %632 = vector.load %arg3[%c28, %c0_400, %c0_401] : memref<36x32x16xf32, #tpu.memory_space<vmem>>, vector<1x32x16xf32>
    %633 = vector.shape_cast %632 : vector<1x32x16xf32> to vector<32x16xf32>
    %cst_402 = arith.constant dense<0.000000e+00> : vector<8x16xf32>
    %634 = tpu.matmul %587, %633, %cst_402 {dimension_numbers = #tpu.dot_dimension_numbers<[1], [0], [0], [1], [0, 0, 1, 1], [], []>} : vector<8x32xf32>, vector<32x16xf32>, vector<8x16xf32> -> vector<8x16xf32>
    %c28_403 = arith.constant 28 : index
    %c0_404 = arith.constant 0 : index
    %c0_405 = arith.constant 0 : index
    %635 = vector.load %arg4[%c28_403, %c0_404, %c0_405] : memref<36x1x16xf32, #tpu.memory_space<vmem>>, vector<1x1x16xf32>
    %636 = vector.shape_cast %635 : vector<1x1x16xf32> to vector<1x16xf32>
    %637 = vector.broadcast %636 : vector<1x16xf32> to vector<8x16xf32>
    %638 = arith.addf %634, %637 : vector<8x16xf32>
    %c29 = arith.constant 29 : index
    %c0_406 = arith.constant 0 : index
    %c0_407 = arith.constant 0 : index
    %639 = vector.load %arg3[%c29, %c0_406, %c0_407] : memref<36x32x16xf32, #tpu.memory_space<vmem>>, vector<1x32x16xf32>
    %640 = vector.shape_cast %639 : vector<1x32x16xf32> to vector<32x16xf32>
    %cst_408 = arith.constant dense<0.000000e+00> : vector<8x16xf32>
    %641 = tpu.matmul %587, %640, %cst_408 {dimension_numbers = #tpu.dot_dimension_numbers<[1], [0], [0], [1], [0, 0, 1, 1], [], []>} : vector<8x32xf32>, vector<32x16xf32>, vector<8x16xf32> -> vector<8x16xf32>
    %c29_409 = arith.constant 29 : index
    %c0_410 = arith.constant 0 : index
    %c0_411 = arith.constant 0 : index
    %642 = vector.load %arg4[%c29_409, %c0_410, %c0_411] : memref<36x1x16xf32, #tpu.memory_space<vmem>>, vector<1x1x16xf32>
    %643 = vector.shape_cast %642 : vector<1x1x16xf32> to vector<1x16xf32>
    %644 = vector.broadcast %643 : vector<1x16xf32> to vector<8x16xf32>
    %645 = arith.addf %641, %644 : vector<8x16xf32>
    %cst_412 = arith.constant dense<0.000000e+00> : vector<8x8xf32>
    %646 = tpu.matmul %631, %638, %cst_412 {dimension_numbers = #tpu.dot_dimension_numbers<[1], [1], [0], [0], [0, 0, 1, 0], [], []>} : vector<8x16xf32>, vector<8x16xf32>, vector<8x8xf32> -> vector<8x8xf32>
    %cst_413 = arith.constant 2.500000e-01 : f32
    %647 = vector.broadcast %cst_413 : f32 to vector<8x8xf32>
    %648 = arith.mulf %646, %647 : vector<8x8xf32>
    %cst_414 = arith.constant dense<0xFF800000> : vector<8xf32>
    %649 = vector.multi_reduction <maximumf>, %648, %cst_414 [1] : vector<8x8xf32> to vector<8xf32>
    %650 = vector.shape_cast %649 : vector<8xf32> to vector<8x1xf32>
    %651 = vector.broadcast %650 : vector<8x1xf32> to vector<8x8xf32>
    %652 = arith.subf %648, %651 : vector<8x8xf32>
    %653 = math.exp %652 : vector<8x8xf32>
    %cst_415 = arith.constant dense<0.000000e+00> : vector<8xf32>
    %654 = vector.multi_reduction <add>, %653, %cst_415 [1] : vector<8x8xf32> to vector<8xf32>
    %655 = vector.shape_cast %654 : vector<8xf32> to vector<8x1xf32>
    %656 = vector.broadcast %655 : vector<8x1xf32> to vector<8x8xf32>
    %657 = arith.divf %653, %656 : vector<8x8xf32>
    %cst_416 = arith.constant dense<0.000000e+00> : vector<8x16xf32>
    %658 = tpu.matmul %657, %645, %cst_416 {dimension_numbers = #tpu.dot_dimension_numbers<[1], [0], [0], [1], [0, 0, 1, 1], [], []>} : vector<8x8xf32>, vector<8x16xf32>, vector<8x16xf32> -> vector<8x16xf32>
    %c9_417 = arith.constant 9 : index
    %c0_418 = arith.constant 0 : index
    %c0_419 = arith.constant 0 : index
    %659 = vector.load %arg5[%c9_417, %c0_418, %c0_419] : memref<12x16x32xf32, #tpu.memory_space<vmem>>, vector<1x16x32xf32>
    %660 = vector.shape_cast %659 : vector<1x16x32xf32> to vector<16x32xf32>
    %cst_420 = arith.constant dense<0.000000e+00> : vector<8x32xf32>
    %661 = tpu.matmul %658, %660, %cst_420 {dimension_numbers = #tpu.dot_dimension_numbers<[1], [0], [0], [1], [0, 0, 1, 1], [], []>} : vector<8x16xf32>, vector<16x32xf32>, vector<8x32xf32> -> vector<8x32xf32>
    %662 = arith.addf %624, %661 : vector<8x32xf32>
    %c4_421 = arith.constant 4 : index
    %c0_422 = arith.constant 0 : index
    %c0_423 = arith.constant 0 : index
    %663 = vector.load %arg6[%c4_421, %c0_422, %c0_423] : memref<6x1x32xf32, #tpu.memory_space<vmem>>, vector<1x1x32xf32>
    %664 = vector.shape_cast %663 : vector<1x1x32xf32> to vector<1x32xf32>
    %665 = vector.broadcast %664 : vector<1x32xf32> to vector<8x32xf32>
    %666 = arith.addf %662, %665 : vector<8x32xf32>
    %667 = arith.addf %587, %666 : vector<8x32xf32>
    %cst_424 = arith.constant dense<0.000000e+00> : vector<8xf32>
    %668 = vector.multi_reduction <add>, %667, %cst_424 [1] : vector<8x32xf32> to vector<8xf32>
    %669 = vector.shape_cast %668 : vector<8xf32> to vector<8x1xf32>
    %cst_425 = arith.constant 3.200000e+01 : f32
    %670 = vector.broadcast %cst_425 : f32 to vector<8x1xf32>
    %671 = arith.divf %669, %670 : vector<8x1xf32>
    %672 = vector.broadcast %671 : vector<8x1xf32> to vector<8x32xf32>
    %673 = arith.subf %667, %672 : vector<8x32xf32>
    %674 = arith.mulf %673, %673 : vector<8x32xf32>
    %cst_426 = arith.constant dense<0.000000e+00> : vector<8xf32>
    %675 = vector.multi_reduction <add>, %674, %cst_426 [1] : vector<8x32xf32> to vector<8xf32>
    %676 = vector.shape_cast %675 : vector<8xf32> to vector<8x1xf32>
    %cst_427 = arith.constant 3.200000e+01 : f32
    %677 = vector.broadcast %cst_427 : f32 to vector<8x1xf32>
    %678 = arith.divf %676, %677 : vector<8x1xf32>
    %679 = vector.broadcast %671 : vector<8x1xf32> to vector<8x32xf32>
    %680 = arith.subf %667, %679 : vector<8x32xf32>
    %cst_428 = arith.constant 9.99999974E-6 : f32
    %681 = vector.broadcast %cst_428 : f32 to vector<8x1xf32>
    %682 = arith.addf %678, %681 : vector<8x1xf32>
    %683 = math.rsqrt %682 : vector<8x1xf32>
    %684 = vector.broadcast %683 : vector<8x1xf32> to vector<8x32xf32>
    %685 = arith.mulf %680, %684 : vector<8x32xf32>
    %c8_429 = arith.constant 8 : index
    %c0_430 = arith.constant 0 : index
    %c0_431 = arith.constant 0 : index
    %686 = vector.load %arg11[%c8_429, %c0_430, %c0_431] : memref<12x1x32xf32, #tpu.memory_space<vmem>>, vector<1x1x32xf32>
    %687 = vector.shape_cast %686 : vector<1x1x32xf32> to vector<1x32xf32>
    %688 = vector.broadcast %687 : vector<1x32xf32> to vector<8x32xf32>
    %689 = arith.mulf %685, %688 : vector<8x32xf32>
    %c8_432 = arith.constant 8 : index
    %c0_433 = arith.constant 0 : index
    %c0_434 = arith.constant 0 : index
    %690 = vector.load %arg12[%c8_432, %c0_433, %c0_434] : memref<12x1x32xf32, #tpu.memory_space<vmem>>, vector<1x1x32xf32>
    %691 = vector.shape_cast %690 : vector<1x1x32xf32> to vector<1x32xf32>
    %692 = vector.broadcast %691 : vector<1x32xf32> to vector<8x32xf32>
    %693 = arith.addf %689, %692 : vector<8x32xf32>
    %c30 = arith.constant 30 : index
    %c0_435 = arith.constant 0 : index
    %c0_436 = arith.constant 0 : index
    %694 = vector.load %arg3[%c30, %c0_435, %c0_436] : memref<36x32x16xf32, #tpu.memory_space<vmem>>, vector<1x32x16xf32>
    %695 = vector.shape_cast %694 : vector<1x32x16xf32> to vector<32x16xf32>
    %cst_437 = arith.constant dense<0.000000e+00> : vector<8x16xf32>
    %696 = tpu.matmul %693, %695, %cst_437 {dimension_numbers = #tpu.dot_dimension_numbers<[1], [0], [0], [1], [0, 0, 1, 1], [], []>} : vector<8x32xf32>, vector<32x16xf32>, vector<8x16xf32> -> vector<8x16xf32>
    %c30_438 = arith.constant 30 : index
    %c0_439 = arith.constant 0 : index
    %c0_440 = arith.constant 0 : index
    %697 = vector.load %arg4[%c30_438, %c0_439, %c0_440] : memref<36x1x16xf32, #tpu.memory_space<vmem>>, vector<1x1x16xf32>
    %698 = vector.shape_cast %697 : vector<1x1x16xf32> to vector<1x16xf32>
    %699 = vector.broadcast %698 : vector<1x16xf32> to vector<8x16xf32>
    %700 = arith.addf %696, %699 : vector<8x16xf32>
    %c31 = arith.constant 31 : index
    %c0_441 = arith.constant 0 : index
    %c0_442 = arith.constant 0 : index
    %701 = vector.load %arg3[%c31, %c0_441, %c0_442] : memref<36x32x16xf32, #tpu.memory_space<vmem>>, vector<1x32x16xf32>
    %702 = vector.shape_cast %701 : vector<1x32x16xf32> to vector<32x16xf32>
    %cst_443 = arith.constant dense<0.000000e+00> : vector<8x16xf32>
    %703 = tpu.matmul %332, %702, %cst_443 {dimension_numbers = #tpu.dot_dimension_numbers<[1], [0], [0], [1], [0, 0, 1, 1], [], []>} : vector<8x32xf32>, vector<32x16xf32>, vector<8x16xf32> -> vector<8x16xf32>
    %c31_444 = arith.constant 31 : index
    %c0_445 = arith.constant 0 : index
    %c0_446 = arith.constant 0 : index
    %704 = vector.load %arg4[%c31_444, %c0_445, %c0_446] : memref<36x1x16xf32, #tpu.memory_space<vmem>>, vector<1x1x16xf32>
    %705 = vector.shape_cast %704 : vector<1x1x16xf32> to vector<1x16xf32>
    %706 = vector.broadcast %705 : vector<1x16xf32> to vector<8x16xf32>
    %707 = arith.addf %703, %706 : vector<8x16xf32>
    %c32 = arith.constant 32 : index
    %c0_447 = arith.constant 0 : index
    %c0_448 = arith.constant 0 : index
    %708 = vector.load %arg3[%c32, %c0_447, %c0_448] : memref<36x32x16xf32, #tpu.memory_space<vmem>>, vector<1x32x16xf32>
    %709 = vector.shape_cast %708 : vector<1x32x16xf32> to vector<32x16xf32>
    %cst_449 = arith.constant dense<0.000000e+00> : vector<8x16xf32>
    %710 = tpu.matmul %332, %709, %cst_449 {dimension_numbers = #tpu.dot_dimension_numbers<[1], [0], [0], [1], [0, 0, 1, 1], [], []>} : vector<8x32xf32>, vector<32x16xf32>, vector<8x16xf32> -> vector<8x16xf32>
    %c32_450 = arith.constant 32 : index
    %c0_451 = arith.constant 0 : index
    %c0_452 = arith.constant 0 : index
    %711 = vector.load %arg4[%c32_450, %c0_451, %c0_452] : memref<36x1x16xf32, #tpu.memory_space<vmem>>, vector<1x1x16xf32>
    %712 = vector.shape_cast %711 : vector<1x1x16xf32> to vector<1x16xf32>
    %713 = vector.broadcast %712 : vector<1x16xf32> to vector<8x16xf32>
    %714 = arith.addf %710, %713 : vector<8x16xf32>
    %cst_453 = arith.constant dense<0.000000e+00> : vector<8x8xf32>
    %715 = tpu.matmul %700, %707, %cst_453 {dimension_numbers = #tpu.dot_dimension_numbers<[1], [1], [0], [0], [0, 0, 1, 0], [], []>} : vector<8x16xf32>, vector<8x16xf32>, vector<8x8xf32> -> vector<8x8xf32>
    %cst_454 = arith.constant 2.500000e-01 : f32
    %716 = vector.broadcast %cst_454 : f32 to vector<8x8xf32>
    %717 = arith.mulf %715, %716 : vector<8x8xf32>
    %cst_455 = arith.constant dense<0xFF800000> : vector<8xf32>
    %718 = vector.multi_reduction <maximumf>, %717, %cst_455 [1] : vector<8x8xf32> to vector<8xf32>
    %719 = vector.shape_cast %718 : vector<8xf32> to vector<8x1xf32>
    %720 = vector.broadcast %719 : vector<8x1xf32> to vector<8x8xf32>
    %721 = arith.subf %717, %720 : vector<8x8xf32>
    %722 = math.exp %721 : vector<8x8xf32>
    %cst_456 = arith.constant dense<0.000000e+00> : vector<8xf32>
    %723 = vector.multi_reduction <add>, %722, %cst_456 [1] : vector<8x8xf32> to vector<8xf32>
    %724 = vector.shape_cast %723 : vector<8xf32> to vector<8x1xf32>
    %725 = vector.broadcast %724 : vector<8x1xf32> to vector<8x8xf32>
    %726 = arith.divf %722, %725 : vector<8x8xf32>
    %cst_457 = arith.constant dense<0.000000e+00> : vector<8x16xf32>
    %727 = tpu.matmul %726, %714, %cst_457 {dimension_numbers = #tpu.dot_dimension_numbers<[1], [0], [0], [1], [0, 0, 1, 1], [], []>} : vector<8x8xf32>, vector<8x16xf32>, vector<8x16xf32> -> vector<8x16xf32>
    %c10_458 = arith.constant 10 : index
    %c0_459 = arith.constant 0 : index
    %c0_460 = arith.constant 0 : index
    %728 = vector.load %arg5[%c10_458, %c0_459, %c0_460] : memref<12x16x32xf32, #tpu.memory_space<vmem>>, vector<1x16x32xf32>
    %729 = vector.shape_cast %728 : vector<1x16x32xf32> to vector<16x32xf32>
    %cst_461 = arith.constant dense<0.000000e+00> : vector<8x32xf32>
    %730 = tpu.matmul %727, %729, %cst_461 {dimension_numbers = #tpu.dot_dimension_numbers<[1], [0], [0], [1], [0, 0, 1, 1], [], []>} : vector<8x16xf32>, vector<16x32xf32>, vector<8x32xf32> -> vector<8x32xf32>
    %c33 = arith.constant 33 : index
    %c0_462 = arith.constant 0 : index
    %c0_463 = arith.constant 0 : index
    %731 = vector.load %arg3[%c33, %c0_462, %c0_463] : memref<36x32x16xf32, #tpu.memory_space<vmem>>, vector<1x32x16xf32>
    %732 = vector.shape_cast %731 : vector<1x32x16xf32> to vector<32x16xf32>
    %cst_464 = arith.constant dense<0.000000e+00> : vector<8x16xf32>
    %733 = tpu.matmul %693, %732, %cst_464 {dimension_numbers = #tpu.dot_dimension_numbers<[1], [0], [0], [1], [0, 0, 1, 1], [], []>} : vector<8x32xf32>, vector<32x16xf32>, vector<8x16xf32> -> vector<8x16xf32>
    %c33_465 = arith.constant 33 : index
    %c0_466 = arith.constant 0 : index
    %c0_467 = arith.constant 0 : index
    %734 = vector.load %arg4[%c33_465, %c0_466, %c0_467] : memref<36x1x16xf32, #tpu.memory_space<vmem>>, vector<1x1x16xf32>
    %735 = vector.shape_cast %734 : vector<1x1x16xf32> to vector<1x16xf32>
    %736 = vector.broadcast %735 : vector<1x16xf32> to vector<8x16xf32>
    %737 = arith.addf %733, %736 : vector<8x16xf32>
    %c34 = arith.constant 34 : index
    %c0_468 = arith.constant 0 : index
    %c0_469 = arith.constant 0 : index
    %738 = vector.load %arg3[%c34, %c0_468, %c0_469] : memref<36x32x16xf32, #tpu.memory_space<vmem>>, vector<1x32x16xf32>
    %739 = vector.shape_cast %738 : vector<1x32x16xf32> to vector<32x16xf32>
    %cst_470 = arith.constant dense<0.000000e+00> : vector<8x16xf32>
    %740 = tpu.matmul %332, %739, %cst_470 {dimension_numbers = #tpu.dot_dimension_numbers<[1], [0], [0], [1], [0, 0, 1, 1], [], []>} : vector<8x32xf32>, vector<32x16xf32>, vector<8x16xf32> -> vector<8x16xf32>
    %c34_471 = arith.constant 34 : index
    %c0_472 = arith.constant 0 : index
    %c0_473 = arith.constant 0 : index
    %741 = vector.load %arg4[%c34_471, %c0_472, %c0_473] : memref<36x1x16xf32, #tpu.memory_space<vmem>>, vector<1x1x16xf32>
    %742 = vector.shape_cast %741 : vector<1x1x16xf32> to vector<1x16xf32>
    %743 = vector.broadcast %742 : vector<1x16xf32> to vector<8x16xf32>
    %744 = arith.addf %740, %743 : vector<8x16xf32>
    %c35 = arith.constant 35 : index
    %c0_474 = arith.constant 0 : index
    %c0_475 = arith.constant 0 : index
    %745 = vector.load %arg3[%c35, %c0_474, %c0_475] : memref<36x32x16xf32, #tpu.memory_space<vmem>>, vector<1x32x16xf32>
    %746 = vector.shape_cast %745 : vector<1x32x16xf32> to vector<32x16xf32>
    %cst_476 = arith.constant dense<0.000000e+00> : vector<8x16xf32>
    %747 = tpu.matmul %332, %746, %cst_476 {dimension_numbers = #tpu.dot_dimension_numbers<[1], [0], [0], [1], [0, 0, 1, 1], [], []>} : vector<8x32xf32>, vector<32x16xf32>, vector<8x16xf32> -> vector<8x16xf32>
    %c35_477 = arith.constant 35 : index
    %c0_478 = arith.constant 0 : index
    %c0_479 = arith.constant 0 : index
    %748 = vector.load %arg4[%c35_477, %c0_478, %c0_479] : memref<36x1x16xf32, #tpu.memory_space<vmem>>, vector<1x1x16xf32>
    %749 = vector.shape_cast %748 : vector<1x1x16xf32> to vector<1x16xf32>
    %750 = vector.broadcast %749 : vector<1x16xf32> to vector<8x16xf32>
    %751 = arith.addf %747, %750 : vector<8x16xf32>
    %cst_480 = arith.constant dense<0.000000e+00> : vector<8x8xf32>
    %752 = tpu.matmul %737, %744, %cst_480 {dimension_numbers = #tpu.dot_dimension_numbers<[1], [1], [0], [0], [0, 0, 1, 0], [], []>} : vector<8x16xf32>, vector<8x16xf32>, vector<8x8xf32> -> vector<8x8xf32>
    %cst_481 = arith.constant 2.500000e-01 : f32
    %753 = vector.broadcast %cst_481 : f32 to vector<8x8xf32>
    %754 = arith.mulf %752, %753 : vector<8x8xf32>
    %cst_482 = arith.constant dense<0xFF800000> : vector<8xf32>
    %755 = vector.multi_reduction <maximumf>, %754, %cst_482 [1] : vector<8x8xf32> to vector<8xf32>
    %756 = vector.shape_cast %755 : vector<8xf32> to vector<8x1xf32>
    %757 = vector.broadcast %756 : vector<8x1xf32> to vector<8x8xf32>
    %758 = arith.subf %754, %757 : vector<8x8xf32>
    %759 = math.exp %758 : vector<8x8xf32>
    %cst_483 = arith.constant dense<0.000000e+00> : vector<8xf32>
    %760 = vector.multi_reduction <add>, %759, %cst_483 [1] : vector<8x8xf32> to vector<8xf32>
    %761 = vector.shape_cast %760 : vector<8xf32> to vector<8x1xf32>
    %762 = vector.broadcast %761 : vector<8x1xf32> to vector<8x8xf32>
    %763 = arith.divf %759, %762 : vector<8x8xf32>
    %cst_484 = arith.constant dense<0.000000e+00> : vector<8x16xf32>
    %764 = tpu.matmul %763, %751, %cst_484 {dimension_numbers = #tpu.dot_dimension_numbers<[1], [0], [0], [1], [0, 0, 1, 1], [], []>} : vector<8x8xf32>, vector<8x16xf32>, vector<8x16xf32> -> vector<8x16xf32>
    %c11_485 = arith.constant 11 : index
    %c0_486 = arith.constant 0 : index
    %c0_487 = arith.constant 0 : index
    %765 = vector.load %arg5[%c11_485, %c0_486, %c0_487] : memref<12x16x32xf32, #tpu.memory_space<vmem>>, vector<1x16x32xf32>
    %766 = vector.shape_cast %765 : vector<1x16x32xf32> to vector<16x32xf32>
    %cst_488 = arith.constant dense<0.000000e+00> : vector<8x32xf32>
    %767 = tpu.matmul %764, %766, %cst_488 {dimension_numbers = #tpu.dot_dimension_numbers<[1], [0], [0], [1], [0, 0, 1, 1], [], []>} : vector<8x16xf32>, vector<16x32xf32>, vector<8x32xf32> -> vector<8x32xf32>
    %768 = arith.addf %730, %767 : vector<8x32xf32>
    %c5_489 = arith.constant 5 : index
    %c0_490 = arith.constant 0 : index
    %c0_491 = arith.constant 0 : index
    %769 = vector.load %arg6[%c5_489, %c0_490, %c0_491] : memref<6x1x32xf32, #tpu.memory_space<vmem>>, vector<1x1x32xf32>
    %770 = vector.shape_cast %769 : vector<1x1x32xf32> to vector<1x32xf32>
    %771 = vector.broadcast %770 : vector<1x32xf32> to vector<8x32xf32>
    %772 = arith.addf %768, %771 : vector<8x32xf32>
    %773 = arith.addf %693, %772 : vector<8x32xf32>
    %cst_492 = arith.constant dense<0.000000e+00> : vector<8xf32>
    %774 = vector.multi_reduction <add>, %773, %cst_492 [1] : vector<8x32xf32> to vector<8xf32>
    %775 = vector.shape_cast %774 : vector<8xf32> to vector<8x1xf32>
    %cst_493 = arith.constant 3.200000e+01 : f32
    %776 = vector.broadcast %cst_493 : f32 to vector<8x1xf32>
    %777 = arith.divf %775, %776 : vector<8x1xf32>
    %778 = vector.broadcast %777 : vector<8x1xf32> to vector<8x32xf32>
    %779 = arith.subf %773, %778 : vector<8x32xf32>
    %780 = arith.mulf %779, %779 : vector<8x32xf32>
    %cst_494 = arith.constant dense<0.000000e+00> : vector<8xf32>
    %781 = vector.multi_reduction <add>, %780, %cst_494 [1] : vector<8x32xf32> to vector<8xf32>
    %782 = vector.shape_cast %781 : vector<8xf32> to vector<8x1xf32>
    %cst_495 = arith.constant 3.200000e+01 : f32
    %783 = vector.broadcast %cst_495 : f32 to vector<8x1xf32>
    %784 = arith.divf %782, %783 : vector<8x1xf32>
    %785 = vector.broadcast %777 : vector<8x1xf32> to vector<8x32xf32>
    %786 = arith.subf %773, %785 : vector<8x32xf32>
    %cst_496 = arith.constant 9.99999974E-6 : f32
    %787 = vector.broadcast %cst_496 : f32 to vector<8x1xf32>
    %788 = arith.addf %784, %787 : vector<8x1xf32>
    %789 = math.rsqrt %788 : vector<8x1xf32>
    %790 = vector.broadcast %789 : vector<8x1xf32> to vector<8x32xf32>
    %791 = arith.mulf %786, %790 : vector<8x32xf32>
    %c9_497 = arith.constant 9 : index
    %c0_498 = arith.constant 0 : index
    %c0_499 = arith.constant 0 : index
    %792 = vector.load %arg11[%c9_497, %c0_498, %c0_499] : memref<12x1x32xf32, #tpu.memory_space<vmem>>, vector<1x1x32xf32>
    %793 = vector.shape_cast %792 : vector<1x1x32xf32> to vector<1x32xf32>
    %794 = vector.broadcast %793 : vector<1x32xf32> to vector<8x32xf32>
    %795 = arith.mulf %791, %794 : vector<8x32xf32>
    %c9_500 = arith.constant 9 : index
    %c0_501 = arith.constant 0 : index
    %c0_502 = arith.constant 0 : index
    %796 = vector.load %arg12[%c9_500, %c0_501, %c0_502] : memref<12x1x32xf32, #tpu.memory_space<vmem>>, vector<1x1x32xf32>
    %797 = vector.shape_cast %796 : vector<1x1x32xf32> to vector<1x32xf32>
    %798 = vector.broadcast %797 : vector<1x32xf32> to vector<8x32xf32>
    %799 = arith.addf %795, %798 : vector<8x32xf32>
    %c3_503 = arith.constant 3 : index
    %c0_504 = arith.constant 0 : index
    %c0_505 = arith.constant 0 : index
    %800 = vector.load %arg7[%c3_503, %c0_504, %c0_505] : memref<4x32x64xf32, #tpu.memory_space<vmem>>, vector<1x32x64xf32>
    %801 = vector.shape_cast %800 : vector<1x32x64xf32> to vector<32x64xf32>
    %cst_506 = arith.constant dense<0.000000e+00> : vector<8x64xf32>
    %802 = tpu.matmul %799, %801, %cst_506 {dimension_numbers = #tpu.dot_dimension_numbers<[1], [0], [0], [1], [0, 0, 1, 1], [], []>} : vector<8x32xf32>, vector<32x64xf32>, vector<8x64xf32> -> vector<8x64xf32>
    %c3_507 = arith.constant 3 : index
    %c0_508 = arith.constant 0 : index
    %c0_509 = arith.constant 0 : index
    %803 = vector.load %arg8[%c3_507, %c0_508, %c0_509] : memref<4x1x64xf32, #tpu.memory_space<vmem>>, vector<1x1x64xf32>
    %804 = vector.shape_cast %803 : vector<1x1x64xf32> to vector<1x64xf32>
    %805 = vector.broadcast %804 : vector<1x64xf32> to vector<8x64xf32>
    %806 = arith.addf %802, %805 : vector<8x64xf32>
    %cst_510 = arith.constant 0.000000e+00 : f32
    %807 = vector.broadcast %cst_510 : f32 to vector<8x64xf32>
    %808 = arith.maximumf %806, %807 : vector<8x64xf32>
    %c3_511 = arith.constant 3 : index
    %c0_512 = arith.constant 0 : index
    %c0_513 = arith.constant 0 : index
    %809 = vector.load %arg9[%c3_511, %c0_512, %c0_513] : memref<4x64x32xf32, #tpu.memory_space<vmem>>, vector<1x64x32xf32>
    %810 = vector.shape_cast %809 : vector<1x64x32xf32> to vector<64x32xf32>
    %cst_514 = arith.constant dense<0.000000e+00> : vector<8x32xf32>
    %811 = tpu.matmul %808, %810, %cst_514 {dimension_numbers = #tpu.dot_dimension_numbers<[1], [0], [0], [1], [0, 0, 1, 1], [], []>} : vector<8x64xf32>, vector<64x32xf32>, vector<8x32xf32> -> vector<8x32xf32>
    %c3_515 = arith.constant 3 : index
    %c0_516 = arith.constant 0 : index
    %c0_517 = arith.constant 0 : index
    %812 = vector.load %arg10[%c3_515, %c0_516, %c0_517] : memref<4x1x32xf32, #tpu.memory_space<vmem>>, vector<1x1x32xf32>
    %813 = vector.shape_cast %812 : vector<1x1x32xf32> to vector<1x32xf32>
    %814 = vector.broadcast %813 : vector<1x32xf32> to vector<8x32xf32>
    %815 = arith.addf %811, %814 : vector<8x32xf32>
    %816 = arith.addf %799, %815 : vector<8x32xf32>
    %cst_518 = arith.constant dense<0.000000e+00> : vector<8xf32>
    %817 = vector.multi_reduction <add>, %816, %cst_518 [1] : vector<8x32xf32> to vector<8xf32>
    %818 = vector.shape_cast %817 : vector<8xf32> to vector<8x1xf32>
    %cst_519 = arith.constant 3.200000e+01 : f32
    %819 = vector.broadcast %cst_519 : f32 to vector<8x1xf32>
    %820 = arith.divf %818, %819 : vector<8x1xf32>
    %821 = vector.broadcast %820 : vector<8x1xf32> to vector<8x32xf32>
    %822 = arith.subf %816, %821 : vector<8x32xf32>
    %823 = arith.mulf %822, %822 : vector<8x32xf32>
    %cst_520 = arith.constant dense<0.000000e+00> : vector<8xf32>
    %824 = vector.multi_reduction <add>, %823, %cst_520 [1] : vector<8x32xf32> to vector<8xf32>
    %825 = vector.shape_cast %824 : vector<8xf32> to vector<8x1xf32>
    %cst_521 = arith.constant 3.200000e+01 : f32
    %826 = vector.broadcast %cst_521 : f32 to vector<8x1xf32>
    %827 = arith.divf %825, %826 : vector<8x1xf32>
    %828 = vector.broadcast %820 : vector<8x1xf32> to vector<8x32xf32>
    %829 = arith.subf %816, %828 : vector<8x32xf32>
    %cst_522 = arith.constant 9.99999974E-6 : f32
    %830 = vector.broadcast %cst_522 : f32 to vector<8x1xf32>
    %831 = arith.addf %827, %830 : vector<8x1xf32>
    %832 = math.rsqrt %831 : vector<8x1xf32>
    %833 = vector.broadcast %832 : vector<8x1xf32> to vector<8x32xf32>
    %834 = arith.mulf %829, %833 : vector<8x32xf32>
    %c10_523 = arith.constant 10 : index
    %c0_524 = arith.constant 0 : index
    %c0_525 = arith.constant 0 : index
    %835 = vector.load %arg11[%c10_523, %c0_524, %c0_525] : memref<12x1x32xf32, #tpu.memory_space<vmem>>, vector<1x1x32xf32>
    %836 = vector.shape_cast %835 : vector<1x1x32xf32> to vector<1x32xf32>
    %837 = vector.broadcast %836 : vector<1x32xf32> to vector<8x32xf32>
    %838 = arith.mulf %834, %837 : vector<8x32xf32>
    %c10_526 = arith.constant 10 : index
    %c0_527 = arith.constant 0 : index
    %c0_528 = arith.constant 0 : index
    %839 = vector.load %arg12[%c10_526, %c0_527, %c0_528] : memref<12x1x32xf32, #tpu.memory_space<vmem>>, vector<1x1x32xf32>
    %840 = vector.shape_cast %839 : vector<1x1x32xf32> to vector<1x32xf32>
    %841 = vector.broadcast %840 : vector<1x32xf32> to vector<8x32xf32>
    %842 = arith.addf %838, %841 : vector<8x32xf32>
    %cst_529 = arith.constant dense<0.000000e+00> : vector<8xf32>
    %843 = vector.multi_reduction <add>, %842, %cst_529 [1] : vector<8x32xf32> to vector<8xf32>
    %844 = vector.shape_cast %843 : vector<8xf32> to vector<8x1xf32>
    %cst_530 = arith.constant 3.200000e+01 : f32
    %845 = vector.broadcast %cst_530 : f32 to vector<8x1xf32>
    %846 = arith.divf %844, %845 : vector<8x1xf32>
    %847 = vector.broadcast %846 : vector<8x1xf32> to vector<8x32xf32>
    %848 = arith.subf %842, %847 : vector<8x32xf32>
    %849 = arith.mulf %848, %848 : vector<8x32xf32>
    %cst_531 = arith.constant dense<0.000000e+00> : vector<8xf32>
    %850 = vector.multi_reduction <add>, %849, %cst_531 [1] : vector<8x32xf32> to vector<8xf32>
    %851 = vector.shape_cast %850 : vector<8xf32> to vector<8x1xf32>
    %cst_532 = arith.constant 3.200000e+01 : f32
    %852 = vector.broadcast %cst_532 : f32 to vector<8x1xf32>
    %853 = arith.divf %851, %852 : vector<8x1xf32>
    %854 = vector.broadcast %846 : vector<8x1xf32> to vector<8x32xf32>
    %855 = arith.subf %842, %854 : vector<8x32xf32>
    %cst_533 = arith.constant 9.99999974E-6 : f32
    %856 = vector.broadcast %cst_533 : f32 to vector<8x1xf32>
    %857 = arith.addf %853, %856 : vector<8x1xf32>
    %858 = math.rsqrt %857 : vector<8x1xf32>
    %859 = vector.broadcast %858 : vector<8x1xf32> to vector<8x32xf32>
    %860 = arith.mulf %855, %859 : vector<8x32xf32>
    %c11_534 = arith.constant 11 : index
    %c0_535 = arith.constant 0 : index
    %c0_536 = arith.constant 0 : index
    %861 = vector.load %arg11[%c11_534, %c0_535, %c0_536] : memref<12x1x32xf32, #tpu.memory_space<vmem>>, vector<1x1x32xf32>
    %862 = vector.shape_cast %861 : vector<1x1x32xf32> to vector<1x32xf32>
    %863 = vector.broadcast %862 : vector<1x32xf32> to vector<8x32xf32>
    %864 = arith.mulf %860, %863 : vector<8x32xf32>
    %c11_537 = arith.constant 11 : index
    %c0_538 = arith.constant 0 : index
    %c0_539 = arith.constant 0 : index
    %865 = vector.load %arg12[%c11_537, %c0_538, %c0_539] : memref<12x1x32xf32, #tpu.memory_space<vmem>>, vector<1x1x32xf32>
    %866 = vector.shape_cast %865 : vector<1x1x32xf32> to vector<1x32xf32>
    %867 = vector.broadcast %866 : vector<1x32xf32> to vector<8x32xf32>
    %868 = arith.addf %864, %867 : vector<8x32xf32>
    %c0_540 = arith.constant 0 : index
    %c0_541 = arith.constant 0 : index
    %869 = vector.load %arg13[%c0_540, %c0_541] : memref<32x128xf32, #tpu.memory_space<vmem>>, vector<32x128xf32>
    %cst_542 = arith.constant dense<0.000000e+00> : vector<8x128xf32>
    %870 = tpu.matmul %868, %869, %cst_542 {dimension_numbers = #tpu.dot_dimension_numbers<[1], [0], [0], [1], [0, 0, 1, 1], [], []>} : vector<8x32xf32>, vector<32x128xf32>, vector<8x128xf32> -> vector<8x128xf32>
    %c0_543 = arith.constant 0 : index
    %c0_544 = arith.constant 0 : index
    %871 = vector.load %arg14[%c0_543, %c0_544] : memref<1x128xf32, #tpu.memory_space<vmem>>, vector<1x128xf32>
    %872 = vector.broadcast %871 : vector<1x128xf32> to vector<8x128xf32>
    %873 = arith.addf %870, %872 : vector<8x128xf32>
    %c0_545 = arith.constant 0 : index
    %c0_546 = arith.constant 0 : index
    %874 = vector.load %arg15[%c0_545, %c0_546] : memref<8x128xf32, #tpu.memory_space<vmem>>, vector<8x128xf32>
    tpu.vector_store %arg15[%c0_545, %c0_546], %873 {strides = array<i32>} : memref<8x128xf32, #tpu.memory_space<vmem>>, vector<8x128xf32>,
    return
  }
  func.func @transform_0(%arg0: i32) -> (i32, i32) {
    %c0_i32 = arith.constant 0 : i32
    %c0_i32_0 = arith.constant 0 : i32
    return %arg0, %c0_i32 : i32, i32
  }
  func.func @transform_1(%arg0: i32) -> (i32, i32) {
    %c0_i32 = arith.constant 0 : i32
    %c0_i32_0 = arith.constant 0 : i32
    %c0_i32_1 = arith.constant 0 : i32
    return %c0_i32, %c0_i32_0 : i32, i32
  }
  func.func @transform_2(%arg0: i32) -> (i32, i32, i32) {
    %c0_i32 = arith.constant 0 : i32
    %c0_i32_0 = arith.constant 0 : i32
    %c0_i32_1 = arith.constant 0 : i32
    %c0_i32_2 = arith.constant 0 : i32
    return %c0_i32, %c0_i32_0, %c0_i32_1 : i32, i32, i32
  }
  func.func @transform_3(%arg0: i32) -> (i32, i32, i32) {
    %c0_i32 = arith.constant 0 : i32
    %c0_i32_0 = arith.constant 0 : i32
    %c0_i32_1 = arith.constant 0 : i32
    %c0_i32_2 = arith.constant 0 : i32
    return %c0_i32, %c0_i32_0, %c0_i32_1 : i32, i32, i32
  }
  func.func @transform_4(%arg0: i32) -> (i32, i32, i32) {
    %c0_i32 = arith.constant 0 : i32
    %c0_i32_0 = arith.constant 0 : i32
    %c0_i32_1 = arith.constant 0 : i32
    %c0_i32_2 = arith.constant 0 : i32
    return %c0_i32, %c0_i32_0, %c0_i32_1 : i32, i32, i32
  }
  func.func @transform_5(%arg0: i32) -> (i32, i32, i32) {
    %c0_i32 = arith.constant 0 : i32
    %c0_i32_0 = arith.constant 0 : i32
    %c0_i32_1 = arith.constant 0 : i32
    %c0_i32_2 = arith.constant 0 : i32
    return %c0_i32, %c0_i32_0, %c0_i32_1 : i32, i32, i32
  }
  func.func @transform_6(%arg0: i32) -> (i32, i32, i32) {
    %c0_i32 = arith.constant 0 : i32
    %c0_i32_0 = arith.constant 0 : i32
    %c0_i32_1 = arith.constant 0 : i32
    %c0_i32_2 = arith.constant 0 : i32
    return %c0_i32, %c0_i32_0, %c0_i32_1 : i32, i32, i32
  }
  func.func @transform_7(%arg0: i32) -> (i32, i32, i32) {
    %c0_i32 = arith.constant 0 : i32
    %c0_i32_0 = arith.constant 0 : i32
    %c0_i32_1 = arith.constant 0 : i32
    %c0_i32_2 = arith.constant 0 : i32
    return %c0_i32, %c0_i32_0, %c0_i32_1 : i32, i32, i32
  }
  func.func @transform_8(%arg0: i32) -> (i32, i32, i32) {
    %c0_i32 = arith.constant 0 : i32
    %c0_i32_0 = arith.constant 0 : i32
    %c0_i32_1 = arith.constant 0 : i32
    %c0_i32_2 = arith.constant 0 : i32
    return %c0_i32, %c0_i32_0, %c0_i32_1 : i32, i32, i32
  }
  func.func @transform_9(%arg0: i32) -> (i32, i32, i32) {
    %c0_i32 = arith.constant 0 : i32
    %c0_i32_0 = arith.constant 0 : i32
    %c0_i32_1 = arith.constant 0 : i32
    %c0_i32_2 = arith.constant 0 : i32
    return %c0_i32, %c0_i32_0, %c0_i32_1 : i32, i32, i32
  }
  func.func @transform_10(%arg0: i32) -> (i32, i32, i32) {
    %c0_i32 = arith.constant 0 : i32
    %c0_i32_0 = arith.constant 0 : i32
    %c0_i32_1 = arith.constant 0 : i32
    %c0_i32_2 = arith.constant 0 : i32
    return %c0_i32, %c0_i32_0, %c0_i32_1 : i32, i32, i32
  }
  func.func @transform_11(%arg0: i32) -> (i32, i32, i32) {
    %c0_i32 = arith.constant 0 : i32
    %c0_i32_0 = arith.constant 0 : i32
    %c0_i32_1 = arith.constant 0 : i32
    %c0_i32_2 = arith.constant 0 : i32
    return %c0_i32, %c0_i32_0, %c0_i32_1 : i32, i32, i32
  }
  func.func @transform_12(%arg0: i32) -> (i32, i32) {
    %c0_i32 = arith.constant 0 : i32
    %c0_i32_0 = arith.constant 0 : i32
    %c0_i32_1 = arith.constant 0 : i32
    return %c0_i32, %c0_i32_0 : i32, i32
  }
  func.func @transform_13(%arg0: i32) -> (i32, i32) {
    %c0_i32 = arith.constant 0 : i32
    %c0_i32_0 = arith.constant 0 : i32
    %c0_i32_1 = arith.constant 0 : i32
    return %c0_i32, %c0_i32_0 : i32, i32
  }
  func.func @transform_14(%arg0: i32) -> (i32, i32) {
    %c0_i32 = arith.constant 0 : i32
    %c0_i32_0 = arith.constant 0 : i32
    return %arg0, %c0_i32 : i32, i32
  }
}

</mosaic_0001>

<llo_original>
// kernel: simple_transformer_forward.1
$region0: #{simple_transformer_forward.1}
  #allocation0 [shape = 'u32[]', space=smem, size = 0x4, offset = 0x4, fixed_abs, tag = 'smem constant byte address 0x4 - core index']
  #allocation1 [shape = 'u32[144,128]{1,0:T(1,128)}', space=vmem, size = 0x12000, scoped, tag = 'internal scratch']
  %s0 = inlined_call_operand.vmem [shape: s32[16,1], index: 0, kind: input, shape index: {}]
  %s1 = inlined_call_operand.vmem [shape: f32[128,32], index: 1, kind: input, shape index: {}]
  %s2 = inlined_call_operand.vmem [shape: f32[36,32,16], index: 2, kind: input, shape index: {}]
  %s3 = inlined_call_operand.vmem [shape: f32[36,1,16], index: 3, kind: input, shape index: {}]
  %s4 = inlined_call_operand.vmem [shape: f32[12,16,32], index: 4, kind: input, shape index: {}]
  %s5 = inlined_call_operand.vmem [shape: f32[6,1,32], index: 5, kind: input, shape index: {}]
  %s6 = inlined_call_operand.vmem [shape: f32[4,32,64], index: 6, kind: input, shape index: {}]
  %s7 = inlined_call_operand.vmem [shape: f32[4,1,64], index: 7, kind: input, shape index: {}]
  %s8 = inlined_call_operand.vmem [shape: f32[4,64,32], index: 8, kind: input, shape index: {}]
  %s9 = inlined_call_operand.vmem [shape: f32[4,1,32], index: 9, kind: input, shape index: {}]
  %s10 = inlined_call_operand.vmem [shape: f32[12,1,32], index: 10, kind: input, shape index: {}]
  %s11 = inlined_call_operand.vmem [shape: f32[12,1,32], index: 11, kind: input, shape index: {}]
  %s12 = inlined_call_operand.vmem [shape: f32[32,128], index: 12, kind: input, shape index: {}]
  %s13 = inlined_call_operand.vmem [shape: f32[1,128], index: 13, kind: input, shape index: {}]
  %s14 = inlined_call_operand.hbm [shape: f32[16,128], index: 14, kind: output, shape index: {}]
  %s15 = sld [smem:[#allocation0]]
  $region89: #{simple_transformer_forward.1} parent=0
    _
  %s17 = ssub.s32 1, %s15
  %s18 = scalar_select 0, %s17, %s15
  $region1: #{simple_transformer_forward.1} parent=0
    #allocation2 [shape = 'u8[8192]{0}', space=vmem, size = 0x2000, scoped, tag = 'output window, operand 0']
    #allocation3 [shape = 's32[2]{0}', space=sflag, size = 0x8, scoped, tag = 'scoped memory for simple_transformer_forward.1']
    %19 = vsyncpa [#allocation3], 0
    %s20 = scalar_lea.sflag [#allocation3], 1
    %21 = vsyncpa %s20, 0
    loop: start=0, step=1, limit=4
    $region2: #{simple_transformer_forward.1} parent=1 // loop_pre_header
      _
    $region3: #{simple_transformer_forward.1} parent=1 // loop_header
      %s23 = sphi 0, %s27
      %p24 = scmp.ge.s32.totalorder %s23, 4
      %s33 = sphi 0, %s35
      %s36 = sphi 0, %s33
      %s37 = sphi 0, %s36
      %s53 = sphi 0, %s37
      %s57 = sphi 0, %s57
      %s59 = sphi 0, %s57
      %s60 = sphi 0, %s59
      %s74 = sphi 0, %s60
      %s78 = sphi 0, %s78
      %s80 = sphi 0, %s78
      %s81 = sphi 0, %s80
      %s95 = sphi 0, %s81
      %s99 = sphi 0, %s99
      %s101 = sphi 0, %s99
      %s102 = sphi 0, %s101
      %s116 = sphi 0, %s102
      %s120 = sphi 0, %s120
      %s122 = sphi 0, %s120
      %s123 = sphi 0, %s122
      %s137 = sphi 0, %s123
      %s141 = sphi 0, %s141
      %s143 = sphi 0, %s141
      %s144 = sphi 0, %s143
      %s158 = sphi 0, %s144
      %s162 = sphi 0, %s162
      %s164 = sphi 0, %s162
      %s165 = sphi 0, %s164
      %s179 = sphi 0, %s165
      %s183 = sphi 0, %s183
      %s185 = sphi 0, %s183
      %s186 = sphi 0, %s185
      %s200 = sphi 0, %s186
      %s204 = sphi 0, %s204
      %s206 = sphi 0, %s204
      %s207 = sphi 0, %s206
      %s221 = sphi 0, %s207
      %s225 = sphi 0, %s225
      %s227 = sphi 0, %s225
      %s228 = sphi 0, %s227
      %s242 = sphi 0, %s228
      %s246 = sphi 0, %s246
      %s248 = sphi 0, %s246
      %s249 = sphi 0, %s248
      %s263 = sphi 0, %s249
      %s267 = sphi 0, %s267
      %s269 = sphi 0, %s267
      %s270 = sphi 0, %s269
      %s284 = sphi 0, %s270
      %s288 = sphi 0, %s288
      %s290 = sphi 0, %s288
      %s291 = sphi 0, %s290
      %s305 = sphi 0, %s291
      %s309 = sphi 0, %s309
      %s311 = sphi 0, %s309
      %s312 = sphi 0, %s311
      %s326 = sphi 0, %s312
      %s332 = sphi 0, %s334
      %s335 = sphi 0, %s332
      %s336 = sphi 0, %s335
      %s352 = sphi 0, %s336
    $region4: #{simple_transformer_forward.1} parent=1 // loop_header_branch
      %26 = sbr.rel (%p24) target = $region8
    $region5: #{simple_transformer_forward.1} parent=1 // loop_body
      %s28 = ssub.s32 %s23, 1
      %s29 = ssub.s32 %s23, 2
      %s30 = sadd.s32 %s23, 1
      %s31 = ssub.s32 %s23, %s30
      %p32 = scmp.eq.s32.totalorder %s31, 0
      %s34 = sadd.s32 %s33, 1
      %s35 = scalar_select %p32, %s33, %s34
      %p38 = pneg %p32
      %p39 = scmp.eq.s32.totalorder %s23, 1
      %p40 = por %p38, %p39
      %p41 = scmp.ne.s32.totalorder %s33, %s36
      %p42 = scmp.eq.s32.totalorder %s23, 0
      %p43 = por %p41, %p42
      %p44 = scmp.ne.s32.totalorder %s33, %s36
      %p45 = scmp.eq.s32.totalorder %s28, 1
      %p46 = por %p44, %p45
      %p47 = scmp.ne.s32.totalorder %s36, %s37
      %p48 = scmp.eq.s32.totalorder %s28, 0
      %p49 = por %p47, %p48
      %p50 = scmp.ne.s32.totalorder %s36, %s37
      %p51 = scmp.eq.s32.totalorder %s29, 1
      %p52 = por %p50, %p51
      %p54 = scmp.ne.s32.totalorder %s37, %s53
      %p55 = scmp.eq.s32.totalorder %s29, 0
      %p56 = por %p54, %p55
      %s58 = sadd.s32 %s57, 1
      %p61 = scmp.eq.s32.totalorder %s23, 1
      %p62 = scmp.ne.s32.totalorder %s57, %s59
      %p63 = scmp.eq.s32.totalorder %s23, 0
      %p64 = por %p62, %p63
      %p65 = scmp.ne.s32.totalorder %s57, %s59
      %p66 = scmp.eq.s32.totalorder %s28, 1
      %p67 = por %p65, %p66
      %p68 = scmp.ne.s32.totalorder %s59, %s60
      %p69 = scmp.eq.s32.totalorder %s28, 0
      %p70 = por %p68, %p69
      %p71 = scmp.ne.s32.totalorder %s59, %s60
      %p72 = scmp.eq.s32.totalorder %s29, 1
      %p73 = por %p71, %p72
      %p75 = scmp.ne.s32.totalorder %s60, %s74
      %p76 = scmp.eq.s32.totalorder %s29, 0
      %p77 = por %p75, %p76
      %s79 = sadd.s32 %s78, 1
      %p82 = scmp.eq.s32.totalorder %s23, 1
      %p83 = scmp.ne.s32.totalorder %s78, %s80
      %p84 = scmp.eq.s32.totalorder %s23, 0
      %p85 = por %p83, %p84
      %p86 = scmp.ne.s32.totalorder %s78, %s80
      %p87 = scmp.eq.s32.totalorder %s28, 1
      %p88 = por %p86, %p87
      %p89 = scmp.ne.s32.totalorder %s80, %s81
      %p90 = scmp.eq.s32.totalorder %s28, 0
      %p91 = por %p89, %p90
      %p92 = scmp.ne.s32.totalorder %s80, %s81
      %p93 = scmp.eq.s32.totalorder %s29, 1
      %p94 = por %p92, %p93
      %p96 = scmp.ne.s32.totalorder %s81, %s95
      %p97 = scmp.eq.s32.totalorder %s29, 0
      %p98 = por %p96, %p97
      %s100 = sadd.s32 %s99, 1
      %p103 = scmp.eq.s32.totalorder %s23, 1
      %p104 = scmp.ne.s32.totalorder %s99, %s101
      %p105 = scmp.eq.s32.totalorder %s23, 0
      %p106 = por %p104, %p105
      %p107 = scmp.ne.s32.totalorder %s99, %s101
      %p108 = scmp.eq.s32.totalorder %s28, 1
      %p109 = por %p107, %p108
      %p110 = scmp.ne.s32.totalorder %s101, %s102
      %p111 = scmp.eq.s32.totalorder %s28, 0
      %p112 = por %p110, %p111
      %p113 = scmp.ne.s32.totalorder %s101, %s102
      %p114 = scmp.eq.s32.totalorder %s29, 1
      %p115 = por %p113, %p114
      %p117 = scmp.ne.s32.totalorder %s102, %s116
      %p118 = scmp.eq.s32.totalorder %s29, 0
      %p119 = por %p117, %p118
      %s121 = sadd.s32 %s120, 1
      %p124 = scmp.eq.s32.totalorder %s23, 1
      %p125 = scmp.ne.s32.totalorder %s120, %s122
      %p126 = scmp.eq.s32.totalorder %s23, 0
      %p127 = por %p125, %p126
      %p128 = scmp.ne.s32.totalorder %s120, %s122
      %p129 = scmp.eq.s32.totalorder %s28, 1
      %p130 = por %p128, %p129
      %p131 = scmp.ne.s32.totalorder %s122, %s123
      %p132 = scmp.eq.s32.totalorder %s28, 0
      %p133 = por %p131, %p132
      %p134 = scmp.ne.s32.totalorder %s122, %s123
      %p135 = scmp.eq.s32.totalorder %s29, 1
      %p136 = por %p134, %p135
      %p138 = scmp.ne.s32.totalorder %s123, %s137
      %p139 = scmp.eq.s32.totalorder %s29, 0
      %p140 = por %p138, %p139
      %s142 = sadd.s32 %s141, 1
      %p145 = scmp.eq.s32.totalorder %s23, 1
      %p146 = scmp.ne.s32.totalorder %s141, %s143
      %p147 = scmp.eq.s32.totalorder %s23, 0
      %p148 = por %p146, %p147
      %p149 = scmp.ne.s32.totalorder %s141, %s143
      %p150 = scmp.eq.s32.totalorder %s28, 1
      %p151 = por %p149, %p150
      %p152 = scmp.ne.s32.totalorder %s143, %s144
      %p153 = scmp.eq.s32.totalorder %s28, 0
      %p154 = por %p152, %p153
      %p155 = scmp.ne.s32.totalorder %s143, %s144
      %p156 = scmp.eq.s32.totalorder %s29, 1
      %p157 = por %p155, %p156
      %p159 = scmp.ne.s32.totalorder %s144, %s158
      %p160 = scmp.eq.s32.totalorder %s29, 0
      %p161 = por %p159, %p160
      %s163 = sadd.s32 %s162, 1
      %p166 = scmp.eq.s32.totalorder %s23, 1
      %p167 = scmp.ne.s32.totalorder %s162, %s164
      %p168 = scmp.eq.s32.totalorder %s23, 0
      %p169 = por %p167, %p168
      %p170 = scmp.ne.s32.totalorder %s162, %s164
      %p171 = scmp.eq.s32.totalorder %s28, 1
      %p172 = por %p170, %p171
      %p173 = scmp.ne.s32.totalorder %s164, %s165
      %p174 = scmp.eq.s32.totalorder %s28, 0
      %p175 = por %p173, %p174
      %p176 = scmp.ne.s32.totalorder %s164, %s165
      %p177 = scmp.eq.s32.totalorder %s29, 1
      %p178 = por %p176, %p177
      %p180 = scmp.ne.s32.totalorder %s165, %s179
      %p181 = scmp.eq.s32.totalorder %s29, 0
      %p182 = por %p180, %p181
      %s184 = sadd.s32 %s183, 1
      %p187 = scmp.eq.s32.totalorder %s23, 1
      %p188 = scmp.ne.s32.totalorder %s183, %s185
      %p189 = scmp.eq.s32.totalorder %s23, 0
      %p190 = por %p188, %p189
      %p191 = scmp.ne.s32.totalorder %s183, %s185
      %p192 = scmp.eq.s32.totalorder %s28, 1
      %p193 = por %p191, %p192
      %p194 = scmp.ne.s32.totalorder %s185, %s186
      %p195 = scmp.eq.s32.totalorder %s28, 0
      %p196 = por %p194, %p195
      %p197 = scmp.ne.s32.totalorder %s185, %s186
      %p198 = scmp.eq.s32.totalorder %s29, 1
      %p199 = por %p197, %p198
      %p201 = scmp.ne.s32.totalorder %s186, %s200
      %p202 = scmp.eq.s32.totalorder %s29, 0
      %p203 = por %p201, %p202
      %s205 = sadd.s32 %s204, 1
      %p208 = scmp.eq.s32.totalorder %s23, 1
      %p209 = scmp.ne.s32.totalorder %s204, %s206
      %p210 = scmp.eq.s32.totalorder %s23, 0
      %p211 = por %p209, %p210
      %p212 = scmp.ne.s32.totalorder %s204, %s206
      %p213 = scmp.eq.s32.totalorder %s28, 1
      %p214 = por %p212, %p213
      %p215 = scmp.ne.s32.totalorder %s206, %s207
      %p216 = scmp.eq.s32.totalorder %s28, 0
      %p217 = por %p215, %p216
      %p218 = scmp.ne.s32.totalorder %s206, %s207
      %p219 = scmp.eq.s32.totalorder %s29, 1
      %p220 = por %p218, %p219
      %p222 = scmp.ne.s32.totalorder %s207, %s221
      %p223 = scmp.eq.s32.totalorder %s29, 0
      %p224 = por %p222, %p223
      %s226 = sadd.s32 %s225, 1
      %p229 = scmp.eq.s32.totalorder %s23, 1
      %p230 = scmp.ne.s32.totalorder %s225, %s227
      %p231 = scmp.eq.s32.totalorder %s23, 0
      %p232 = por %p230, %p231
      %p233 = scmp.ne.s32.totalorder %s225, %s227
      %p234 = scmp.eq.s32.totalorder %s28, 1
      %p235 = por %p233, %p234
      %p236 = scmp.ne.s32.totalorder %s227, %s228
      %p237 = scmp.eq.s32.totalorder %s28, 0
      %p238 = por %p236, %p237
      %p239 = scmp.ne.s32.totalorder %s227, %s228
      %p240 = scmp.eq.s32.totalorder %s29, 1
      %p241 = por %p239, %p240
      %p243 = scmp.ne.s32.totalorder %s228, %s242
      %p244 = scmp.eq.s32.totalorder %s29, 0
      %p245 = por %p243, %p244
      %s247 = sadd.s32 %s246, 1
      %p250 = scmp.eq.s32.totalorder %s23, 1
      %p251 = scmp.ne.s32.totalorder %s246, %s248
      %p252 = scmp.eq.s32.totalorder %s23, 0
      %p253 = por %p251, %p252
      %p254 = scmp.ne.s32.totalorder %s246, %s248
      %p255 = scmp.eq.s32.totalorder %s28, 1
      %p256 = por %p254, %p255
      %p257 = scmp.ne.s32.totalorder %s248, %s249
      %p258 = scmp.eq.s32.totalorder %s28, 0
      %p259 = por %p257, %p258
      %p260 = scmp.ne.s32.totalorder %s248, %s249
      %p261 = scmp.eq.s32.totalorder %s29, 1
      %p262 = por %p260, %p261
      %p264 = scmp.ne.s32.totalorder %s249, %s263
      %p265 = scmp.eq.s32.totalorder %s29, 0
      %p266 = por %p264, %p265
      %s268 = sadd.s32 %s267, 1
      %p271 = scmp.eq.s32.totalorder %s23, 1
      %p272 = scmp.ne.s32.totalorder %s267, %s269
      %p273 = scmp.eq.s32.totalorder %s23, 0
      %p274 = por %p272, %p273
      %p275 = scmp.ne.s32.totalorder %s267, %s269
      %p276 = scmp.eq.s32.totalorder %s28, 1
      %p277 = por %p275, %p276
      %p278 = scmp.ne.s32.totalorder %s269, %s270
      %p279 = scmp.eq.s32.totalorder %s28, 0
      %p280 = por %p278, %p279
      %p281 = scmp.ne.s32.totalorder %s269, %s270
      %p282 = scmp.eq.s32.totalorder %s29, 1
      %p283 = por %p281, %p282
      %p285 = scmp.ne.s32.totalorder %s270, %s284
      %p286 = scmp.eq.s32.totalorder %s29, 0
      %p287 = por %p285, %p286
      %s289 = sadd.s32 %s288, 1
      %p292 = scmp.eq.s32.totalorder %s23, 1
      %p293 = scmp.ne.s32.totalorder %s288, %s290
      %p294 = scmp.eq.s32.totalorder %s23, 0
      %p295 = por %p293, %p294
      %p296 = scmp.ne.s32.totalorder %s288, %s290
      %p297 = scmp.eq.s32.totalorder %s28, 1
      %p298 = por %p296, %p297
      %p299 = scmp.ne.s32.totalorder %s290, %s291
      %p300 = scmp.eq.s32.totalorder %s28, 0
      %p301 = por %p299, %p300
      %p302 = scmp.ne.s32.totalorder %s290, %s291
      %p303 = scmp.eq.s32.totalorder %s29, 1
      %p304 = por %p302, %p303
      %p306 = scmp.ne.s32.totalorder %s291, %s305
      %p307 = scmp.eq.s32.totalorder %s29, 0
      %p308 = por %p306, %p307
      %s310 = sadd.s32 %s309, 1
      %p313 = scmp.eq.s32.totalorder %s23, 1
      %p314 = scmp.ne.s32.totalorder %s309, %s311
      %p315 = scmp.eq.s32.totalorder %s23, 0
      %p316 = por %p314, %p315
      %p317 = scmp.ne.s32.totalorder %s309, %s311
      %p318 = scmp.eq.s32.totalorder %s28, 1
      %p319 = por %p317, %p318
      %p320 = scmp.ne.s32.totalorder %s311, %s312
      %p321 = scmp.eq.s32.totalorder %s28, 0
      %p322 = por %p320, %p321
      %p323 = scmp.ne.s32.totalorder %s311, %s312
      %p324 = scmp.eq.s32.totalorder %s29, 1
      %p325 = por %p323, %p324
      %p327 = scmp.ne.s32.totalorder %s312, %s326
      %p328 = scmp.eq.s32.totalorder %s29, 0
      %p329 = por %p327, %p328
      %s330 = ssub.s32 %s23, %s30
      %p331 = scmp.eq.s32.totalorder %s330, 0
      %s333 = sadd.s32 %s332, 1
      %s334 = scalar_select %p331, %s332, %s333
      %p337 = pneg %p331
      %p338 = scmp.eq.s32.totalorder %s23, 1
      %p339 = por %p337, %p338
      %p340 = scmp.ne.s32.totalorder %s332, %s335
      %p341 = scmp.eq.s32.totalorder %s23, 0
      %p342 = por %p340, %p341
      %p343 = scmp.ne.s32.totalorder %s332, %s335
      %p344 = scmp.eq.s32.totalorder %s28, 1
      %p345 = por %p343, %p344
      %p346 = scmp.ne.s32.totalorder %s335, %s336
      %p347 = scmp.eq.s32.totalorder %s28, 0
      %p348 = por %p346, %p347
      %p349 = scmp.ne.s32.totalorder %s335, %s336
      %p350 = scmp.eq.s32.totalorder %s29, 1
      %p351 = por %p349, %p350
      %p353 = scmp.ne.s32.totalorder %s336, %s352
      %p354 = scmp.eq.s32.totalorder %s29, 0
      %p355 = por %p353, %p354
      %p356 = scmp.le.s32.totalorder 1, %s23
      %p357 = scmp.lt.s32.totalorder %s23, 3
      %p358 = pnand %p356, %p357
      %p359 = pneg %p358
      // Predicated region
      $region9: #{simple_transformer_forward.1} parent=5 // pred_check
        _
      $region10: #{simple_transformer_forward.1} parent=5 // pred_check_branch
        %361 = sbr.rel (%p358) target = $region12
      $region11: #{simple_transformer_forward.1} parent=5 // pred_region
        %s362 = ssub.s32 %s23, 1
        // Predicated region
        $region13: #{simple_transformer_forward.1} parent=11 // pred_check
          %p363 = pneg %p70
        $region14: #{simple_transformer_forward.1} parent=11 // pred_check_branch
          %365 = sbr.rel (%p363) target = $region16
        $region15: #{simple_transformer_forward.1} parent=11 // pred_region
          _
        $region16: #{simple_transformer_forward.1} parent=11 // pred_fallthru
          _
        // Predicated region
        $region17: #{simple_transformer_forward.1} parent=11 // pred_check
          %p366 = pneg %p91
        $region18: #{simple_transformer_forward.1} parent=11 // pred_check_branch
          %368 = sbr.rel (%p366) target = $region20
        $region19: #{simple_transformer_forward.1} parent=11 // pred_region
          _
        $region20: #{simple_transformer_forward.1} parent=11 // pred_fallthru
          _
        // Predicated region
        $region21: #{simple_transformer_forward.1} parent=11 // pred_check
          %p369 = pneg %p112
        $region22: #{simple_transformer_forward.1} parent=11 // pred_check_branch
          %371 = sbr.rel (%p369) target = $region24
        $region23: #{simple_transformer_forward.1} parent=11 // pred_region
          _
        $region24: #{simple_transformer_forward.1} parent=11 // pred_fallthru
          _
        // Predicated region
        $region25: #{simple_transformer_forward.1} parent=11 // pred_check
          %p372 = pneg %p133
        $region26: #{simple_transformer_forward.1} parent=11 // pred_check_branch
          %374 = sbr.rel (%p372) target = $region28
        $region27: #{simple_transformer_forward.1} parent=11 // pred_region
          _
        $region28: #{simple_transformer_forward.1} parent=11 // pred_fallthru
          _
        // Predicated region
        $region29: #{simple_transformer_forward.1} parent=11 // pred_check
          %p375 = pneg %p154
        $region30: #{simple_transformer_forward.1} parent=11 // pred_check_branch
          %377 = sbr.rel (%p375) target = $region32
        $region31: #{simple_transformer_forward.1} parent=11 // pred_region
          _
        $region32: #{simple_transformer_forward.1} parent=11 // pred_fallthru
          _
        // Predicated region
        $region33: #{simple_transformer_forward.1} parent=11 // pred_check
          %p378 = pneg %p175
        $region34: #{simple_transformer_forward.1} parent=11 // pred_check_branch
          %380 = sbr.rel (%p378) target = $region36
        $region35: #{simple_transformer_forward.1} parent=11 // pred_region
          _
        $region36: #{simple_transformer_forward.1} parent=11 // pred_fallthru
          _
        // Predicated region
        $region37: #{simple_transformer_forward.1} parent=11 // pred_check
          %p381 = pneg %p196
        $region38: #{simple_transformer_forward.1} parent=11 // pred_check_branch
          %383 = sbr.rel (%p381) target = $region40
        $region39: #{simple_transformer_forward.1} parent=11 // pred_region
          _
        $region40: #{simple_transformer_forward.1} parent=11 // pred_fallthru
          _
        // Predicated region
        $region41: #{simple_transformer_forward.1} parent=11 // pred_check
          %p384 = pneg %p217
        $region42: #{simple_transformer_forward.1} parent=11 // pred_check_branch
          %386 = sbr.rel (%p384) target = $region44
        $region43: #{simple_transformer_forward.1} parent=11 // pred_region
          _
        $region44: #{simple_transformer_forward.1} parent=11 // pred_fallthru
          _
        // Predicated region
        $region45: #{simple_transformer_forward.1} parent=11 // pred_check
          %p387 = pneg %p238
        $region46: #{simple_transformer_forward.1} parent=11 // pred_check_branch
          %389 = sbr.rel (%p387) target = $region48
        $region47: #{simple_transformer_forward.1} parent=11 // pred_region
          _
        $region48: #{simple_transformer_forward.1} parent=11 // pred_fallthru
          _
        // Predicated region
        $region49: #{simple_transformer_forward.1} parent=11 // pred_check
          %p390 = pneg %p259
        $region50: #{simple_transformer_forward.1} parent=11 // pred_check_branch
          %392 = sbr.rel (%p390) target = $region52
        $region51: #{simple_transformer_forward.1} parent=11 // pred_region
          _
        $region52: #{simple_transformer_forward.1} parent=11 // pred_fallthru
          _
        // Predicated region
        $region53: #{simple_transformer_forward.1} parent=11 // pred_check
          %p393 = pneg %p280
        $region54: #{simple_transformer_forward.1} parent=11 // pred_check_branch
          %395 = sbr.rel (%p393) target = $region56
        $region55: #{simple_transformer_forward.1} parent=11 // pred_region
          _
        $region56: #{simple_transformer_forward.1} parent=11 // pred_fallthru
          _
        // Predicated region
        $region57: #{simple_transformer_forward.1} parent=11 // pred_check
          %p396 = pneg %p301
        $region58: #{simple_transformer_forward.1} parent=11 // pred_check_branch
          %398 = sbr.rel (%p396) target = $region60
        $region59: #{simple_transformer_forward.1} parent=11 // pred_region
          _
        $region60: #{simple_transformer_forward.1} parent=11 // pred_fallthru
          _
        // Predicated region
        $region61: #{simple_transformer_forward.1} parent=11 // pred_check
          %p399 = pneg %p322
        $region62: #{simple_transformer_forward.1} parent=11 // pred_check_branch
          %401 = sbr.rel (%p399) target = $region64
        $region63: #{simple_transformer_forward.1} parent=11 // pred_region
          _
        $region64: #{simple_transformer_forward.1} parent=11 // pred_fallthru
          _
      $region12: #{simple_transformer_forward.1} parent=5 // pred_fallthru
        _
      %p402 = scmp.lt.s32.totalorder %s23, 2
      // Predicated region
      $region65: #{simple_transformer_forward.1} parent=5 // pred_check
        %p403 = pneg %p402
      $region66: #{simple_transformer_forward.1} parent=5 // pred_check_branch
        %405 = sbr.rel (%p403) target = $region68
      $region67: #{simple_transformer_forward.1} parent=5 // pred_region
        // Predicated region
        $region69: #{simple_transformer_forward.1} parent=67 // pred_check
          %p406 = pneg %p43
        $region70: #{simple_transformer_forward.1} parent=67 // pred_check_branch
          %408 = sbr.rel (%p406) target = $region72
        $region71: #{simple_transformer_forward.1} parent=67 // pred_region
          %p409 = scmp.lt.s32.totalorder %s23, 1
          %s410 = scalar_select %p409, %s23, 1
          %s411 = smul.addr %s410, 8
          %s412 = scalar_lea.vmem %s0, %s411
        $region72: #{simple_transformer_forward.1} parent=67 // pred_fallthru
          _
      $region68: #{simple_transformer_forward.1} parent=5 // pred_fallthru
        _
      %p413 = scmp.le.s32.totalorder 1, %s23
      %p414 = scmp.lt.s32.totalorder %s23, 3
      %p415 = pnand %p413, %p414
      %p416 = pneg %p415
      // Predicated region
      $region73: #{simple_transformer_forward.1} parent=5 // pred_check
        _
      $region74: #{simple_transformer_forward.1} parent=5 // pred_check_branch
        %418 = sbr.rel (%p415) target = $region76
      $region75: #{simple_transformer_forward.1} parent=5 // pred_region
        %s419 = ssub.s32 %s23, 1
        %p420 = scmp.lt.s32.totalorder %s28, 1
        %s421 = scalar_select %p420, %s28, 1
        %s422 = smul.addr %s421, 8
        %s423 = scalar_lea.vmem %s0, %s422
        %p424 = pneg %p49
        %p425 = pneg %p46
        %p426 = pneg %p70
        %p427 = pneg %p67
        %p428 = pneg %p91
        %p429 = pneg %p88
        %p430 = pneg %p112
        %p431 = pneg %p109
        %p432 = pneg %p133
        %p433 = pneg %p130
        %p434 = pneg %p154
        %p435 = pneg %p151
        %p436 = pneg %p175
        %p437 = pneg %p172
        %p438 = pneg %p196
        %p439 = pneg %p193
        %p440 = pneg %p217
        %p441 = pneg %p214
        %p442 = pneg %p238
        %p443 = pneg %p235
        %p444 = pneg %p259
        %p445 = pneg %p256
        %p446 = pneg %p280
        %p447 = pneg %p277
        %p448 = pneg %p301
        %p449 = pneg %p298
        %p450 = pneg %p322
        %p451 = pneg %p319
        %p452 = pneg %p348
        %p453 = pneg %p345
        %s454 = sand.u32 %s335, 1
        %s455 = scalar_lea.sflag [#allocation3], %s454
        %s456 = sand.u32 %s335, 1
        %s457 = smul.addr %s456, 8
        %s458 = scalar_lea.vmem [#allocation2], %s457
        %p459 = scmp.lt.s32.totalorder %s28, 1
        %s460 = scalar_select %p459, %s28, 1
        %s461 = smul.addr %s460, 8
        %s462 = scalar_lea.vmem %s0, %s461
        %v463 = vld [vmem:[%s462] sm:$0xff]
        %v464 = vlaneseq
        %v465 = vand.u32 %v464, 127
        %466 = vset.pattern.permute.xlu0 0
        %467 = vperm.xlu0 %466, %v463
        %v468 = vpop.permute.xlu0 %467
        %vm469 = vcmp.eq.s32.totalorder %v465, %v468
        %v470 = vsel %vm469, 1.0, 0.0
        %v471 = vld [vmem:[%s1] sm:$0xff]
        %v472 = vld [vmem:[%s1 + $0x8] sm:$0xff]
        %v473 = vld [vmem:[%s1 + $0x10] sm:$0xff]
        %v474 = vld [vmem:[%s1 + $0x18] sm:$0xff]
        %v475 = vld [vmem:[%s1 + $0x20] sm:$0xff]
        %v476 = vld [vmem:[%s1 + $0x28] sm:$0xff]
        %v477 = vld [vmem:[%s1 + $0x30] sm:$0xff]
        %v478 = vld [vmem:[%s1 + $0x38] sm:$0xff]
        %v479 = vld [vmem:[%s1 + $0x40] sm:$0xff]
        %v480 = vld [vmem:[%s1 + $0x48] sm:$0xff]
        %v481 = vld [vmem:[%s1 + $0x50] sm:$0xff]
        %v482 = vld [vmem:[%s1 + $0x58] sm:$0xff]
        %v483 = vld [vmem:[%s1 + $0x60] sm:$0xff]
        %v484 = vld [vmem:[%s1 + $0x68] sm:$0xff]
        %v485 = vld [vmem:[%s1 + $0x70] sm:$0xff]
        %v486 = vld [vmem:[%s1 + $0x78] sm:$0xff]
        %487 = vmatprep.subr.mxu0 0.0
        %488 = vmatpush1.msra.mxu0 %v486
        %489 = vmatprep.subr.mxu0 0.0
        %490 = vmatpush1.msra.mxu0 %v485
        %491 = vmatprep.subr.mxu0 0.0
        %492 = vmatpush1.msra.mxu0 %v484
        %493 = vmatprep.subr.mxu0 0.0
        %494 = vmatpush1.msra.mxu0 %v483
        %495 = vmatprep.subr.mxu0 0.0
        %496 = vmatpush1.msra.mxu0 %v482
        %497 = vmatprep.subr.mxu0 0.0
        %498 = vmatpush1.msra.mxu0 %v481
        %499 = vmatprep.subr.mxu0 0.0
        %500 = vmatpush1.msra.mxu0 %v480
        %501 = vmatprep.subr.mxu0 0.0
        %502 = vmatpush1.msra.mxu0 %v479
        %503 = vmatprep.subr.mxu0 0.0
        %504 = vmatpush1.msra.mxu0 %v478
        %505 = vmatprep.subr.mxu0 0.0
        %506 = vmatpush1.msra.mxu0 %v477
        %507 = vmatprep.subr.mxu0 0.0
        %508 = vmatpush1.msra.mxu0 %v476
        %509 = vmatprep.subr.mxu0 0.0
        %510 = vmatpush1.msra.mxu0 %v475
        %511 = vmatprep.subr.mxu0 0.0
        %512 = vmatpush1.msra.mxu0 %v474
        %513 = vmatprep.subr.mxu0 0.0
        %514 = vmatpush1.msra.mxu0 %v473
        %515 = vmatprep.subr.mxu0 0.0
        %516 = vmatpush1.msra.mxu0 %v472
        %517 = vmatprep.subr.mxu0 0.0
        %518 = vmatpush1.msra.mxu0 %v471
        %519 = vmatprep.subr.mxu0 0.0
        %520 = vmatpush2.msra.mxu0 0.0
        %521 = vmatprep.subr.mxu0 0.0
        %522 = vmatpush2.msra.mxu0 0.0
        %523 = vmatprep.subr.mxu0 0.0
        %524 = vmatpush2.msra.mxu0 0.0
        %525 = vmatprep.subr.mxu0 0.0
        %526 = vmatpush2.msra.mxu0 0.0
        %527 = vmatprep.subr.mxu0 0.0
        %528 = vmatpush2.msra.mxu0 0.0
        %529 = vmatprep.subr.mxu0 0.0
        %530 = vmatpush2.msra.mxu0 0.0
        %531 = vmatprep.subr.mxu0 0.0
        %532 = vmatpush2.msra.mxu0 0.0
        %533 = vmatprep.subr.mxu0 0.0
        %534 = vmatpush2.msra.mxu0 0.0
        %535 = vmatprep.subr.mxu0 0.0
        %536 = vmatpush2.msra.mxu0 0.0
        %537 = vmatprep.subr.mxu0 0.0
        %538 = vmatpush2.msra.mxu0 0.0
        %539 = vmatprep.subr.mxu0 0.0
        %540 = vmatpush2.msra.mxu0 0.0
        %541 = vmatprep.subr.mxu0 0.0
        %542 = vmatpush2.msra.mxu0 0.0
        %543 = vmatprep.subr.mxu0 0.0
        %544 = vmatpush2.msra.mxu0 0.0
        %545 = vmatprep.subr.mxu0 0.0
        %546 = vmatpush2.msra.mxu0 0.0
        %547 = vmatprep.subr.mxu0 0.0
        %548 = vmatpush2.msra.mxu0 0.0
        %549 = vmatprep.subr.mxu0 0.0
        %550 = vmatpush2.msra.mxu0 0.0
        %551 = vmatprep.mubr.f32.mxu0 0.0
        %552 = vmatmul.mubr.f32.gmra.mxu0 %v470
        %v553 = vpop.f32.mrf.mxu0
        %v554 = vadd.f32 0.0, %v553
        %v555 = vpop.f32.mrf.mxu0
        %556 = vdwg.mxu0
        %v557 = vld [vmem:[%s2] sm:$0xff]
        %v558 = vld [vmem:[%s2 + $0x8] sm:$0xff]
        %v559 = vld [vmem:[%s2 + $0x10] sm:$0xff]
        %v560 = vld [vmem:[%s2 + $0x18] sm:$0xff]
        %v561 = vld [vmem:[%s3] sm:$0x1]
        %v563 = vlaneseq
        %v564 = vshrl.u32 %v563, 7
        %v565 = vsub.s32 0, %v564
        %v566 = vrot.slane %v561, %v565
        %vm568 = vcmask 261120
        %v570 = vsel %vm568, %v554, 0
        %572 = vmatprep.subr.mxu0 0.0
        %573 = vmatpush1.msra.mxu0 0.0
        %574 = vmatprep.subr.mxu0 0.0
        %575 = vmatpush1.msra.mxu0 0.0
        %576 = vmatprep.subr.mxu0 0.0
        %577 = vmatpush1.msra.mxu0 0.0
        %578 = vmatprep.subr.mxu0 0.0
        %579 = vmatpush1.msra.mxu0 0.0
        %580 = vmatprep.subr.mxu0 0.0
        %581 = vmatpush1.msra.mxu0 0.0
        %582 = vmatprep.subr.mxu0 0.0
        %583 = vmatpush1.msra.mxu0 0.0
        %584 = vmatprep.subr.mxu0 0.0
        %585 = vmatpush1.msra.mxu0 0.0
        %586 = vmatprep.subr.mxu0 0.0
        %587 = vmatpush1.msra.mxu0 0.0
        %588 = vmatprep.subr.mxu0 0.0
        %589 = vmatpush1.msra.mxu0 0.0
        %590 = vmatprep.subr.mxu0 0.0
        %591 = vmatpush1.msra.mxu0 0.0
        %592 = vmatprep.subr.mxu0 0.0
        %593 = vmatpush1.msra.mxu0 0.0
        %594 = vmatprep.subr.mxu0 0.0
        %595 = vmatpush1.msra.mxu0 0.0
        %596 = vmatprep.subr.mxu0 0.0
        %597 = vmatpush1.msra.mxu0 %v560
        %598 = vmatprep.subr.mxu0 0.0
        %599 = vmatpush1.msra.mxu0 %v559
        %600 = vmatprep.subr.mxu0 0.0
        %601 = vmatpush1.msra.mxu0 %v558
        %602 = vmatprep.subr.mxu0 0.0
        %603 = vmatpush1.msra.mxu0 %v557
        %604 = vmatprep.subr.mxu0 0.0
        %605 = vmatpush2.msra.mxu0 0.0
        %606 = vmatprep.subr.mxu0 0.0
        %607 = vmatpush2.msra.mxu0 0.0
        %608 = vmatprep.subr.mxu0 0.0
        %609 = vmatpush2.msra.mxu0 0.0
        %610 = vmatprep.subr.mxu0 0.0
        %611 = vmatpush2.msra.mxu0 0.0
        %612 = vmatprep.subr.mxu0 0.0
        %613 = vmatpush2.msra.mxu0 0.0
        %614 = vmatprep.subr.mxu0 0.0
        %615 = vmatpush2.msra.mxu0 0.0
        %616 = vmatprep.subr.mxu0 0.0
        %617 = vmatpush2.msra.mxu0 0.0
        %618 = vmatprep.subr.mxu0 0.0
        %619 = vmatpush2.msra.mxu0 0.0
        %620 = vmatprep.subr.mxu0 0.0
        %621 = vmatpush2.msra.mxu0 0.0
        %622 = vmatprep.subr.mxu0 0.0
        %623 = vmatpush2.msra.mxu0 0.0
        %624 = vmatprep.subr.mxu0 0.0
        %625 = vmatpush2.msra.mxu0 0.0
        %626 = vmatprep.subr.mxu0 0.0
        %627 = vmatpush2.msra.mxu0 0.0
        %628 = vmatprep.subr.mxu0 0.0
        %629 = vmatpush2.msra.mxu0 0.0
        %630 = vmatprep.subr.mxu0 0.0
        %631 = vmatpush2.msra.mxu0 0.0
        %632 = vmatprep.subr.mxu0 0.0
        %633 = vmatpush2.msra.mxu0 0.0
        %634 = vmatprep.subr.mxu0 0.0
        %635 = vmatpush2.msra.mxu0 0.0
        %636 = vmatprep.mubr.f32.mxu0 0.0
        %637 = vmatmul.mubr.f32.gmra.mxu0 %v570
        %v638 = vpop.f32.mrf.mxu0
        %v639 = vadd.f32 %v566, %v638
        %v640 = vpop.f32.mrf.mxu0
        %641 = vdwg.mxu0
        %s642 = scalar_lea.vmem %s2, 32
        %v643 = vld [vmem:[%s642] sm:$0xff]
        %v644 = vld [vmem:[%s642 + $0x8] sm:$0xff]
        %v645 = vld [vmem:[%s642 + $0x10] sm:$0xff]
        %v646 = vld [vmem:[%s642 + $0x18] sm:$0xff]
        %s647 = scalar_lea.vmem %s3, 1
        %v648 = vld [vmem:[%s647] sm:$0x1]
        %v650 = vlaneseq
        %v651 = vshrl.u32 %v650, 7
        %v652 = vsub.s32 0, %v651
        %v653 = vrot.slane %v648, %v652
        %655 = vmatprep.subr.mxu0 0.0
        %656 = vmatpush1.msra.mxu0 0.0
        %657 = vmatprep.subr.mxu0 0.0
        %658 = vmatpush1.msra.mxu0 0.0
        %659 = vmatprep.subr.mxu0 0.0
        %660 = vmatpush1.msra.mxu0 0.0
        %661 = vmatprep.subr.mxu0 0.0
        %662 = vmatpush1.msra.mxu0 0.0
        %663 = vmatprep.subr.mxu0 0.0
        %664 = vmatpush1.msra.mxu0 0.0
        %665 = vmatprep.subr.mxu0 0.0
        %666 = vmatpush1.msra.mxu0 0.0
        %667 = vmatprep.subr.mxu0 0.0
        %668 = vmatpush1.msra.mxu0 0.0
        %669 = vmatprep.subr.mxu0 0.0
        %670 = vmatpush1.msra.mxu0 0.0
        %671 = vmatprep.subr.mxu0 0.0
        %672 = vmatpush1.msra.mxu0 0.0
        %673 = vmatprep.subr.mxu0 0.0
        %674 = vmatpush1.msra.mxu0 0.0
        %675 = vmatprep.subr.mxu0 0.0
        %676 = vmatpush1.msra.mxu0 0.0
        %677 = vmatprep.subr.mxu0 0.0
        %678 = vmatpush1.msra.mxu0 0.0
        %679 = vmatprep.subr.mxu0 0.0
        %680 = vmatpush1.msra.mxu0 %v646
        %681 = vmatprep.subr.mxu0 0.0
        %682 = vmatpush1.msra.mxu0 %v645
        %683 = vmatprep.subr.mxu0 0.0
        %684 = vmatpush1.msra.mxu0 %v644
        %685 = vmatprep.subr.mxu0 0.0
        %686 = vmatpush1.msra.mxu0 %v643
        %687 = vmatprep.subr.mxu0 0.0
        %688 = vmatpush2.msra.mxu0 0.0
        %689 = vmatprep.subr.mxu0 0.0
        %690 = vmatpush2.msra.mxu0 0.0
        %691 = vmatprep.subr.mxu0 0.0
        %692 = vmatpush2.msra.mxu0 0.0
        %693 = vmatprep.subr.mxu0 0.0
        %694 = vmatpush2.msra.mxu0 0.0
        %695 = vmatprep.subr.mxu0 0.0
        %696 = vmatpush2.msra.mxu0 0.0
        %697 = vmatprep.subr.mxu0 0.0
        %698 = vmatpush2.msra.mxu0 0.0
        %699 = vmatprep.subr.mxu0 0.0
        %700 = vmatpush2.msra.mxu0 0.0
        %701 = vmatprep.subr.mxu0 0.0
        %702 = vmatpush2.msra.mxu0 0.0
        %703 = vmatprep.subr.mxu0 0.0
        %704 = vmatpush2.msra.mxu0 0.0
        %705 = vmatprep.subr.mxu0 0.0
        %706 = vmatpush2.msra.mxu0 0.0
        %707 = vmatprep.subr.mxu0 0.0
        %708 = vmatpush2.msra.mxu0 0.0
        %709 = vmatprep.subr.mxu0 0.0
        %710 = vmatpush2.msra.mxu0 0.0
        %711 = vmatprep.subr.mxu0 0.0
        %712 = vmatpush2.msra.mxu0 0.0
        %713 = vmatprep.subr.mxu0 0.0
        %714 = vmatpush2.msra.mxu0 0.0
        %715 = vmatprep.subr.mxu0 0.0
        %716 = vmatpush2.msra.mxu0 0.0
        %717 = vmatprep.subr.mxu0 0.0
        %718 = vmatpush2.msra.mxu0 0.0
        %719 = vmatprep.mubr.f32.mxu0 0.0
        %720 = vmatmul.mubr.f32.gmra.mxu0 %v570
        %v721 = vpop.f32.mrf.mxu0
        %v722 = vadd.f32 %v653, %v721
        %v723 = vpop.f32.mrf.mxu0
        %724 = vdwg.mxu0
        %s725 = scalar_lea.vmem %s2, 64
        %v726 = vld [vmem:[%s725] sm:$0xff]
        %v727 = vld [vmem:[%s725 + $0x8] sm:$0xff]
        %v728 = vld [vmem:[%s725 + $0x10] sm:$0xff]
        %v729 = vld [vmem:[%s725 + $0x18] sm:$0xff]
        %s730 = scalar_lea.vmem %s3, 2
        %v731 = vld [vmem:[%s730] sm:$0x1]
        %v733 = vlaneseq
        %v734 = vshrl.u32 %v733, 7
        %v735 = vsub.s32 0, %v734
        %v736 = vrot.slane %v731, %v735
        %738 = vmatprep.subr.mxu0 0.0
        %739 = vmatpush1.msra.mxu0 0.0
        %740 = vmatprep.subr.mxu0 0.0
        %741 = vmatpush1.msra.mxu0 0.0
        %742 = vmatprep.subr.mxu0 0.0
        %743 = vmatpush1.msra.mxu0 0.0
        %744 = vmatprep.subr.mxu0 0.0
        %745 = vmatpush1.msra.mxu0 0.0
        %746 = vmatprep.subr.mxu0 0.0
        %747 = vmatpush1.msra.mxu0 0.0
        %748 = vmatprep.subr.mxu0 0.0
        %749 = vmatpush1.msra.mxu0 0.0
        %750 = vmatprep.subr.mxu0 0.0
        %751 = vmatpush1.msra.mxu0 0.0
        %752 = vmatprep.subr.mxu0 0.0
        %753 = vmatpush1.msra.mxu0 0.0
        %754 = vmatprep.subr.mxu0 0.0
        %755 = vmatpush1.msra.mxu0 0.0
        %756 = vmatprep.subr.mxu0 0.0
        %757 = vmatpush1.msra.mxu0 0.0
        %758 = vmatprep.subr.mxu0 0.0
        %759 = vmatpush1.msra.mxu0 0.0
        %760 = vmatprep.subr.mxu0 0.0
        %761 = vmatpush1.msra.mxu0 0.0
        %762 = vmatprep.subr.mxu0 0.0
        %763 = vmatpush1.msra.mxu0 %v729
        %764 = vmatprep.subr.mxu0 0.0
        %765 = vmatpush1.msra.mxu0 %v728
        %766 = vmatprep.subr.mxu0 0.0
        %767 = vmatpush1.msra.mxu0 %v727
        %768 = vmatprep.subr.mxu0 0.0
        %769 = vmatpush1.msra.mxu0 %v726
        %770 = vmatprep.subr.mxu0 0.0
        %771 = vmatpush2.msra.mxu0 0.0
        %772 = vmatprep.subr.mxu0 0.0
        %773 = vmatpush2.msra.mxu0 0.0
        %774 = vmatprep.subr.mxu0 0.0
        %775 = vmatpush2.msra.mxu0 0.0
        %776 = vmatprep.subr.mxu0 0.0
        %777 = vmatpush2.msra.mxu0 0.0
        %778 = vmatprep.subr.mxu0 0.0
        %779 = vmatpush2.msra.mxu0 0.0
        %780 = vmatprep.subr.mxu0 0.0
        %781 = vmatpush2.msra.mxu0 0.0
        %782 = vmatprep.subr.mxu0 0.0
        %783 = vmatpush2.msra.mxu0 0.0
        %784 = vmatprep.subr.mxu0 0.0
        %785 = vmatpush2.msra.mxu0 0.0
        %786 = vmatprep.subr.mxu0 0.0
        %787 = vmatpush2.msra.mxu0 0.0
        %788 = vmatprep.subr.mxu0 0.0
        %789 = vmatpush2.msra.mxu0 0.0
        %790 = vmatprep.subr.mxu0 0.0
        %791 = vmatpush2.msra.mxu0 0.0
        %792 = vmatprep.subr.mxu0 0.0
        %793 = vmatpush2.msra.mxu0 0.0
        %794 = vmatprep.subr.mxu0 0.0
        %795 = vmatpush2.msra.mxu0 0.0
        %796 = vmatprep.subr.mxu0 0.0
        %797 = vmatpush2.msra.mxu0 0.0
        %798 = vmatprep.subr.mxu0 0.0
        %799 = vmatpush2.msra.mxu0 0.0
        %800 = vmatprep.subr.mxu0 0.0
        %801 = vmatpush2.msra.mxu0 0.0
        %802 = vmatprep.mubr.f32.mxu0 0.0
        %803 = vmatmul.mubr.f32.gmra.mxu0 %v570
        %v804 = vpop.f32.mrf.mxu0
        %v805 = vadd.f32 %v736, %v804
        %v806 = vpop.f32.mrf.mxu0
        %807 = vdwg.mxu0
        %vm808 = vcmask 130048
        %v810 = vsel %vm808, %v639, 0
        %v813 = vsel %vm808, %v722, 0
        %815 = vmatprep.subr.mxu0 0.0
        %816 = vmatpush1.xpose.msra.mxu0 0.0
        %817 = vmatprep.subr.mxu0 0.0
        %818 = vmatpush1.xpose.msra.mxu0 0.0
        %819 = vmatprep.subr.mxu0 0.0
        %820 = vmatpush1.xpose.msra.mxu0 0.0
        %821 = vmatprep.subr.mxu0 0.0
        %822 = vmatpush1.xpose.msra.mxu0 0.0
        %823 = vmatprep.subr.mxu0 0.0
        %824 = vmatpush1.xpose.msra.mxu0 0.0
        %825 = vmatprep.subr.mxu0 0.0
        %826 = vmatpush1.xpose.msra.mxu0 0.0
        %827 = vmatprep.subr.mxu0 0.0
        %828 = vmatpush1.xpose.msra.mxu0 0.0
        %829 = vmatprep.subr.mxu0 0.0
        %830 = vmatpush1.xpose.msra.mxu0 0.0
        %831 = vmatprep.subr.mxu0 0.0
        %832 = vmatpush1.xpose.msra.mxu0 0.0
        %833 = vmatprep.subr.mxu0 0.0
        %834 = vmatpush1.xpose.msra.mxu0 0.0
        %835 = vmatprep.subr.mxu0 0.0
        %836 = vmatpush1.xpose.msra.mxu0 0.0
        %837 = vmatprep.subr.mxu0 0.0
        %838 = vmatpush1.xpose.msra.mxu0 0.0
        %839 = vmatprep.subr.mxu0 0.0
        %840 = vmatpush1.xpose.msra.mxu0 0.0
        %841 = vmatprep.subr.mxu0 0.0
        %842 = vmatpush1.xpose.msra.mxu0 0.0
        %843 = vmatprep.subr.mxu0 0.0
        %844 = vmatpush1.xpose.msra.mxu0 0.0
        %845 = vmatprep.subr.mxu0 0.0
        %846 = vmatpush1.xpose.msra.mxu0 %v813
        %847 = vmatprep.subr.mxu0 0.0
        %848 = vmatpush2.xpose.msra.mxu0 0.0
        %849 = vmatprep.subr.mxu0 0.0
        %850 = vmatpush2.xpose.msra.mxu0 0.0
        %851 = vmatprep.subr.mxu0 0.0
        %852 = vmatpush2.xpose.msra.mxu0 0.0
        %853 = vmatprep.subr.mxu0 0.0
        %854 = vmatpush2.xpose.msra.mxu0 0.0
        %855 = vmatprep.subr.mxu0 0.0
        %856 = vmatpush2.xpose.msra.mxu0 0.0
        %857 = vmatprep.subr.mxu0 0.0
        %858 = vmatpush2.xpose.msra.mxu0 0.0
        %859 = vmatprep.subr.mxu0 0.0
        %860 = vmatpush2.xpose.msra.mxu0 0.0
        %861 = vmatprep.subr.mxu0 0.0
        %862 = vmatpush2.xpose.msra.mxu0 0.0
        %863 = vmatprep.subr.mxu0 0.0
        %864 = vmatpush2.xpose.msra.mxu0 0.0
        %865 = vmatprep.subr.mxu0 0.0
        %866 = vmatpush2.xpose.msra.mxu0 0.0
        %867 = vmatprep.subr.mxu0 0.0
        %868 = vmatpush2.xpose.msra.mxu0 0.0
        %869 = vmatprep.subr.mxu0 0.0
        %870 = vmatpush2.xpose.msra.mxu0 0.0
        %871 = vmatprep.subr.mxu0 0.0
        %872 = vmatpush2.xpose.msra.mxu0 0.0
        %873 = vmatprep.subr.mxu0 0.0
        %874 = vmatpush2.xpose.msra.mxu0 0.0
        %875 = vmatprep.subr.mxu0 0.0
        %876 = vmatpush2.xpose.msra.mxu0 0.0
        %877 = vmatprep.subr.mxu0 0.0
        %878 = vmatpush2.xpose.msra.mxu0 0.0
        %879 = vmatprep.mubr.f32.mxu0 0.0
        %880 = vmatmul.mubr.f32.gmra.mxu0 %v810
        %v881 = vpop.f32.mrf.mxu0
        %v882 = vadd.f32 0.0, %v881
        %v883 = vpop.f32.mrf.mxu0
        %884 = vdwg.mxu0
        %v885 = vmul.f32 %v882, 0.25
        %vm886 = vcmask 64512
        %v887 = vsel %vm886, %v885, -inf
        %888 = vmax.xlane.f32.xlu0 %v887
        %v889 = vpop.xlane.xlu0 %888
        %v890 = vsub.f32 %v885, %v889
        %v891 = vmul.f32 %v890, 1.442695
        %v892 = vpow.pop %v891
        %v893 = vsel %vm886, %v892, 0.0
        %894 = vadd.xlane.f32.xlu0 %v893
        %v895 = vpop.xlane.xlu0 %894
        %v896 = vrcp.pop %v895
        %v897 = vmul.f32 %v892, %v896
        %v899 = vsel %vm886, %v897, 0
        %901 = vmatprep.subr.mxu0 0.0
        %902 = vmatpush1.msra.mxu0 0.0
        %903 = vmatprep.subr.mxu0 0.0
        %904 = vmatpush1.msra.mxu0 0.0
        %905 = vmatprep.subr.mxu0 0.0
        %906 = vmatpush1.msra.mxu0 0.0
        %907 = vmatprep.subr.mxu0 0.0
        %908 = vmatpush1.msra.mxu0 0.0
        %909 = vmatprep.subr.mxu0 0.0
        %910 = vmatpush1.msra.mxu0 0.0
        %911 = vmatprep.subr.mxu0 0.0
        %912 = vmatpush1.msra.mxu0 0.0
        %913 = vmatprep.subr.mxu0 0.0
        %914 = vmatpush1.msra.mxu0 0.0
        %915 = vmatprep.subr.mxu0 0.0
        %916 = vmatpush1.msra.mxu0 0.0
        %917 = vmatprep.subr.mxu0 0.0
        %918 = vmatpush1.msra.mxu0 0.0
        %919 = vmatprep.subr.mxu0 0.0
        %920 = vmatpush1.msra.mxu0 0.0
        %921 = vmatprep.subr.mxu0 0.0
        %922 = vmatpush1.msra.mxu0 0.0
        %923 = vmatprep.subr.mxu0 0.0
        %924 = vmatpush1.msra.mxu0 0.0
        %925 = vmatprep.subr.mxu0 0.0
        %926 = vmatpush1.msra.mxu0 0.0
        %927 = vmatprep.subr.mxu0 0.0
        %928 = vmatpush1.msra.mxu0 0.0
        %929 = vmatprep.subr.mxu0 0.0
        %930 = vmatpush1.msra.mxu0 0.0
        %931 = vmatprep.subr.mxu0 0.0
        %932 = vmatpush1.msra.mxu0 %v805
        %933 = vmatprep.subr.mxu0 0.0
        %934 = vmatpush2.msra.mxu0 0.0
        %935 = vmatprep.subr.mxu0 0.0
        %936 = vmatpush2.msra.mxu0 0.0
        %937 = vmatprep.subr.mxu0 0.0
        %938 = vmatpush2.msra.mxu0 0.0
        %939 = vmatprep.subr.mxu0 0.0
        %940 = vmatpush2.msra.mxu0 0.0
        %941 = vmatprep.subr.mxu0 0.0
        %942 = vmatpush2.msra.mxu0 0.0
        %943 = vmatprep.subr.mxu0 0.0
        %944 = vmatpush2.msra.mxu0 0.0
        %945 = vmatprep.subr.mxu0 0.0
        %946 = vmatpush2.msra.mxu0 0.0
        %947 = vmatprep.subr.mxu0 0.0
        %948 = vmatpush2.msra.mxu0 0.0
        %949 = vmatprep.subr.mxu0 0.0
        %950 = vmatpush2.msra.mxu0 0.0
        %951 = vmatprep.subr.mxu0 0.0
        %952 = vmatpush2.msra.mxu0 0.0
        %953 = vmatprep.subr.mxu0 0.0
        %954 = vmatpush2.msra.mxu0 0.0
        %955 = vmatprep.subr.mxu0 0.0
        %956 = vmatpush2.msra.mxu0 0.0
        %957 = vmatprep.subr.mxu0 0.0
        %958 = vmatpush2.msra.mxu0 0.0
        %959 = vmatprep.subr.mxu0 0.0
        %960 = vmatpush2.msra.mxu0 0.0
        %961 = vmatprep.subr.mxu0 0.0
        %962 = vmatpush2.msra.mxu0 0.0
        %963 = vmatprep.subr.mxu0 0.0
        %964 = vmatpush2.msra.mxu0 0.0
        %965 = vmatprep.mubr.f32.mxu0 0.0
        %966 = vmatmul.mubr.f32.gmra.mxu0 %v899
        %v967 = vpop.f32.mrf.mxu0
        %v968 = vadd.f32 0.0, %v967
        %v969 = vpop.f32.mrf.mxu0
        %970 = vdwg.mxu0
        %v971 = vld [vmem:[%s4] sm:$0xff]
        %v972 = vld [vmem:[%s4 + $0x8] sm:$0xff]
        %s973 = scalar_lea.vmem %s2, 96
        %v974 = vld [vmem:[%s973] sm:$0xff]
        %v975 = vld [vmem:[%s973 + $0x8] sm:$0xff]
        %v976 = vld [vmem:[%s973 + $0x10] sm:$0xff]
        %v977 = vld [vmem:[%s973 + $0x18] sm:$0xff]
        %s978 = scalar_lea.vmem %s3, 3
        %v979 = vld [vmem:[%s978] sm:$0x1]
        %v981 = vlaneseq
        %v982 = vshrl.u32 %v981, 7
        %v983 = vsub.s32 0, %v982
        %v984 = vrot.slane %v979, %v983
        %986 = vmatprep.subr.mxu0 0.0
        %987 = vmatpush1.msra.mxu0 0.0
        %988 = vmatprep.subr.mxu0 0.0
        %989 = vmatpush1.msra.mxu0 0.0
        %990 = vmatprep.subr.mxu0 0.0
        %991 = vmatpush1.msra.mxu0 0.0
        %992 = vmatprep.subr.mxu0 0.0
        %993 = vmatpush1.msra.mxu0 0.0
        %994 = vmatprep.subr.mxu0 0.0
        %995 = vmatpush1.msra.mxu0 0.0
        %996 = vmatprep.subr.mxu0 0.0
        %997 = vmatpush1.msra.mxu0 0.0
        %998 = vmatprep.subr.mxu0 0.0
        %999 = vmatpush1.msra.mxu0 0.0
        %1000 = vmatprep.subr.mxu0 0.0
        %1001 = vmatpush1.msra.mxu0 0.0
        %1002 = vmatprep.subr.mxu0 0.0
        %1003 = vmatpush1.msra.mxu0 0.0
        %1004 = vmatprep.subr.mxu0 0.0
        %1005 = vmatpush1.msra.mxu0 0.0
        %1006 = vmatprep.subr.mxu0 0.0
        %1007 = vmatpush1.msra.mxu0 0.0
        %1008 = vmatprep.subr.mxu0 0.0
        %1009 = vmatpush1.msra.mxu0 0.0
        %1010 = vmatprep.subr.mxu0 0.0
        %1011 = vmatpush1.msra.mxu0 %v977
        %1012 = vmatprep.subr.mxu0 0.0
        %1013 = vmatpush1.msra.mxu0 %v976
        %1014 = vmatprep.subr.mxu0 0.0
        %1015 = vmatpush1.msra.mxu0 %v975
        %1016 = vmatprep.subr.mxu0 0.0
        %1017 = vmatpush1.msra.mxu0 %v974
        %1018 = vmatprep.subr.mxu0 0.0
        %1019 = vmatpush2.msra.mxu0 0.0
        %1020 = vmatprep.subr.mxu0 0.0
        %1021 = vmatpush2.msra.mxu0 0.0
        %1022 = vmatprep.subr.mxu0 0.0
        %1023 = vmatpush2.msra.mxu0 0.0
        %1024 = vmatprep.subr.mxu0 0.0
        %1025 = vmatpush2.msra.mxu0 0.0
        %1026 = vmatprep.subr.mxu0 0.0
        %1027 = vmatpush2.msra.mxu0 0.0
        %1028 = vmatprep.subr.mxu0 0.0
        %1029 = vmatpush2.msra.mxu0 0.0
        %1030 = vmatprep.subr.mxu0 0.0
        %1031 = vmatpush2.msra.mxu0 0.0
        %1032 = vmatprep.subr.mxu0 0.0
        %1033 = vmatpush2.msra.mxu0 0.0
        %1034 = vmatprep.subr.mxu0 0.0
        %1035 = vmatpush2.msra.mxu0 0.0
        %1036 = vmatprep.subr.mxu0 0.0
        %1037 = vmatpush2.msra.mxu0 0.0
        %1038 = vmatprep.subr.mxu0 0.0
        %1039 = vmatpush2.msra.mxu0 0.0
        %1040 = vmatprep.subr.mxu0 0.0
        %1041 = vmatpush2.msra.mxu0 0.0
        %1042 = vmatprep.subr.mxu0 0.0
        %1043 = vmatpush2.msra.mxu0 0.0
        %1044 = vmatprep.subr.mxu0 0.0
        %1045 = vmatpush2.msra.mxu0 0.0
        %1046 = vmatprep.subr.mxu0 0.0
        %1047 = vmatpush2.msra.mxu0 0.0
        %1048 = vmatprep.subr.mxu0 0.0
        %1049 = vmatpush2.msra.mxu0 0.0
        %1050 = vmatprep.mubr.f32.mxu0 0.0
        %1051 = vmatmul.mubr.f32.gmra.mxu0 %v570
        %v1052 = vpop.f32.mrf.mxu0
        %v1053 = vadd.f32 %v984, %v1052
        %v1054 = vpop.f32.mrf.mxu0
        %1055 = vdwg.mxu0
        %s1056 = scalar_lea.vmem %s2, 128
        %v1057 = vld [vmem:[%s1056] sm:$0xff]
        %v1058 = vld [vmem:[%s1056 + $0x8] sm:$0xff]
        %v1059 = vld [vmem:[%s1056 + $0x10] sm:$0xff]
        %v1060 = vld [vmem:[%s1056 + $0x18] sm:$0xff]
        %s1061 = scalar_lea.vmem %s3, 4
        %v1062 = vld [vmem:[%s1061] sm:$0x1]
        %v1064 = vlaneseq
        %v1065 = vshrl.u32 %v1064, 7
        %v1066 = vsub.s32 0, %v1065
        %v1067 = vrot.slane %v1062, %v1066
        %1069 = vmatprep.subr.mxu0 0.0
        %1070 = vmatpush1.msra.mxu0 0.0
        %1071 = vmatprep.subr.mxu0 0.0
        %1072 = vmatpush1.msra.mxu0 0.0
        %1073 = vmatprep.subr.mxu0 0.0
        %1074 = vmatpush1.msra.mxu0 0.0
        %1075 = vmatprep.subr.mxu0 0.0
        %1076 = vmatpush1.msra.mxu0 0.0
        %1077 = vmatprep.subr.mxu0 0.0
        %1078 = vmatpush1.msra.mxu0 0.0
        %1079 = vmatprep.subr.mxu0 0.0
        %1080 = vmatpush1.msra.mxu0 0.0
        %1081 = vmatprep.subr.mxu0 0.0
        %1082 = vmatpush1.msra.mxu0 0.0
        %1083 = vmatprep.subr.mxu0 0.0
        %1084 = vmatpush1.msra.mxu0 0.0
        %1085 = vmatprep.subr.mxu0 0.0
        %1086 = vmatpush1.msra.mxu0 0.0
        %1087 = vmatprep.subr.mxu0 0.0
        %1088 = vmatpush1.msra.mxu0 0.0
        %1089 = vmatprep.subr.mxu0 0.0
        %1090 = vmatpush1.msra.mxu0 0.0
        %1091 = vmatprep.subr.mxu0 0.0
        %1092 = vmatpush1.msra.mxu0 0.0
        %1093 = vmatprep.subr.mxu0 0.0
        %1094 = vmatpush1.msra.mxu0 %v1060
        %1095 = vmatprep.subr.mxu0 0.0
        %1096 = vmatpush1.msra.mxu0 %v1059
        %1097 = vmatprep.subr.mxu0 0.0
        %1098 = vmatpush1.msra.mxu0 %v1058
        %1099 = vmatprep.subr.mxu0 0.0
        %1100 = vmatpush1.msra.mxu0 %v1057
        %1101 = vmatprep.subr.mxu0 0.0
        %1102 = vmatpush2.msra.mxu0 0.0
        %1103 = vmatprep.subr.mxu0 0.0
        %1104 = vmatpush2.msra.mxu0 0.0
        %1105 = vmatprep.subr.mxu0 0.0
        %1106 = vmatpush2.msra.mxu0 0.0
        %1107 = vmatprep.subr.mxu0 0.0
        %1108 = vmatpush2.msra.mxu0 0.0
        %1109 = vmatprep.subr.mxu0 0.0
        %1110 = vmatpush2.msra.mxu0 0.0
        %1111 = vmatprep.subr.mxu0 0.0
        %1112 = vmatpush2.msra.mxu0 0.0
        %1113 = vmatprep.subr.mxu0 0.0
        %1114 = vmatpush2.msra.mxu0 0.0
        %1115 = vmatprep.subr.mxu0 0.0
        %1116 = vmatpush2.msra.mxu0 0.0
        %1117 = vmatprep.subr.mxu0 0.0
        %1118 = vmatpush2.msra.mxu0 0.0
        %1119 = vmatprep.subr.mxu0 0.0
        %1120 = vmatpush2.msra.mxu0 0.0
        %1121 = vmatprep.subr.mxu0 0.0
        %1122 = vmatpush2.msra.mxu0 0.0
        %1123 = vmatprep.subr.mxu0 0.0
        %1124 = vmatpush2.msra.mxu0 0.0
        %1125 = vmatprep.subr.mxu0 0.0
        %1126 = vmatpush2.msra.mxu0 0.0
        %1127 = vmatprep.subr.mxu0 0.0
        %1128 = vmatpush2.msra.mxu0 0.0
        %1129 = vmatprep.subr.mxu0 0.0
        %1130 = vmatpush2.msra.mxu0 0.0
        %1131 = vmatprep.subr.mxu0 0.0
        %1132 = vmatpush2.msra.mxu0 0.0
        %1133 = vmatprep.mubr.f32.mxu0 0.0
        %1134 = vmatmul.mubr.f32.gmra.mxu0 %v570
        %v1135 = vpop.f32.mrf.mxu0
        %v1136 = vadd.f32 %v1067, %v1135
        %v1137 = vpop.f32.mrf.mxu0
        %1138 = vdwg.mxu0
        %s1139 = scalar_lea.vmem %s2, 160
        %v1140 = vld [vmem:[%s1139] sm:$0xff]
        %v1141 = vld [vmem:[%s1139 + $0x8] sm:$0xff]
        %v1142 = vld [vmem:[%s1139 + $0x10] sm:$0xff]
        %v1143 = vld [vmem:[%s1139 + $0x18] sm:$0xff]
        %s1144 = scalar_lea.vmem %s3, 5
        %v1145 = vld [vmem:[%s1144] sm:$0x1]
        %v1147 = vlaneseq
        %v1148 = vshrl.u32 %v1147, 7
        %v1149 = vsub.s32 0, %v1148
        %v1150 = vrot.slane %v1145, %v1149
        %1152 = vmatprep.subr.mxu0 0.0
        %1153 = vmatpush1.msra.mxu0 0.0
        %1154 = vmatprep.subr.mxu0 0.0
        %1155 = vmatpush1.msra.mxu0 0.0
        %1156 = vmatprep.subr.mxu0 0.0
        %1157 = vmatpush1.msra.mxu0 0.0
        %1158 = vmatprep.subr.mxu0 0.0
        %1159 = vmatpush1.msra.mxu0 0.0
        %1160 = vmatprep.subr.mxu0 0.0
        %1161 = vmatpush1.msra.mxu0 0.0
        %1162 = vmatprep.subr.mxu0 0.0
        %1163 = vmatpush1.msra.mxu0 0.0
        %1164 = vmatprep.subr.mxu0 0.0
        %1165 = vmatpush1.msra.mxu0 0.0
        %1166 = vmatprep.subr.mxu0 0.0
        %1167 = vmatpush1.msra.mxu0 0.0
        %1168 = vmatprep.subr.mxu0 0.0
        %1169 = vmatpush1.msra.mxu0 0.0
        %1170 = vmatprep.subr.mxu0 0.0
        %1171 = vmatpush1.msra.mxu0 0.0
        %1172 = vmatprep.subr.mxu0 0.0
        %1173 = vmatpush1.msra.mxu0 0.0
        %1174 = vmatprep.subr.mxu0 0.0
        %1175 = vmatpush1.msra.mxu0 0.0
        %1176 = vmatprep.subr.mxu0 0.0
        %1177 = vmatpush1.msra.mxu0 %v1143
        %1178 = vmatprep.subr.mxu0 0.0
        %1179 = vmatpush1.msra.mxu0 %v1142
        %1180 = vmatprep.subr.mxu0 0.0
        %1181 = vmatpush1.msra.mxu0 %v1141
        %1182 = vmatprep.subr.mxu0 0.0
        %1183 = vmatpush1.msra.mxu0 %v1140
        %1184 = vmatprep.subr.mxu0 0.0
        %1185 = vmatpush2.msra.mxu0 0.0
        %1186 = vmatprep.subr.mxu0 0.0
        %1187 = vmatpush2.msra.mxu0 0.0
        %1188 = vmatprep.subr.mxu0 0.0
        %1189 = vmatpush2.msra.mxu0 0.0
        %1190 = vmatprep.subr.mxu0 0.0
        %1191 = vmatpush2.msra.mxu0 0.0
        %1192 = vmatprep.subr.mxu0 0.0
        %1193 = vmatpush2.msra.mxu0 0.0
        %1194 = vmatprep.subr.mxu0 0.0
        %1195 = vmatpush2.msra.mxu0 0.0
        %1196 = vmatprep.subr.mxu0 0.0
        %1197 = vmatpush2.msra.mxu0 0.0
        %1198 = vmatprep.subr.mxu0 0.0
        %1199 = vmatpush2.msra.mxu0 0.0
        %1200 = vmatprep.subr.mxu0 0.0
        %1201 = vmatpush2.msra.mxu0 0.0
        %1202 = vmatprep.subr.mxu0 0.0
        %1203 = vmatpush2.msra.mxu0 0.0
        %1204 = vmatprep.subr.mxu0 0.0
        %1205 = vmatpush2.msra.mxu0 0.0
        %1206 = vmatprep.subr.mxu0 0.0
        %1207 = vmatpush2.msra.mxu0 0.0
        %1208 = vmatprep.subr.mxu0 0.0
        %1209 = vmatpush2.msra.mxu0 0.0
        %1210 = vmatprep.subr.mxu0 0.0
        %1211 = vmatpush2.msra.mxu0 0.0
        %1212 = vmatprep.subr.mxu0 0.0
        %1213 = vmatpush2.msra.mxu0 0.0
        %1214 = vmatprep.subr.mxu0 0.0
        %1215 = vmatpush2.msra.mxu0 0.0
        %1216 = vmatprep.mubr.f32.mxu0 0.0
        %1217 = vmatmul.mubr.f32.gmra.mxu0 %v570
        %v1218 = vpop.f32.mrf.mxu0
        %v1219 = vadd.f32 %v1150, %v1218
        %v1220 = vpop.f32.mrf.mxu0
        %1221 = vdwg.mxu0
        %v1223 = vsel %vm808, %v1053, 0
        %v1226 = vsel %vm808, %v1136, 0
        %1228 = vmatprep.subr.mxu0 0.0
        %1229 = vmatpush1.xpose.msra.mxu0 0.0
        %1230 = vmatprep.subr.mxu0 0.0
        %1231 = vmatpush1.xpose.msra.mxu0 0.0
        %1232 = vmatprep.subr.mxu0 0.0
        %1233 = vmatpush1.xpose.msra.mxu0 0.0
        %1234 = vmatprep.subr.mxu0 0.0
        %1235 = vmatpush1.xpose.msra.mxu0 0.0
        %1236 = vmatprep.subr.mxu0 0.0
        %1237 = vmatpush1.xpose.msra.mxu0 0.0
        %1238 = vmatprep.subr.mxu0 0.0
        %1239 = vmatpush1.xpose.msra.mxu0 0.0
        %1240 = vmatprep.subr.mxu0 0.0
        %1241 = vmatpush1.xpose.msra.mxu0 0.0
        %1242 = vmatprep.subr.mxu0 0.0
        %1243 = vmatpush1.xpose.msra.mxu0 0.0
        %1244 = vmatprep.subr.mxu0 0.0
        %1245 = vmatpush1.xpose.msra.mxu0 0.0
        %1246 = vmatprep.subr.mxu0 0.0
        %1247 = vmatpush1.xpose.msra.mxu0 0.0
        %1248 = vmatprep.subr.mxu0 0.0
        %1249 = vmatpush1.xpose.msra.mxu0 0.0
        %1250 = vmatprep.subr.mxu0 0.0
        %1251 = vmatpush1.xpose.msra.mxu0 0.0
        %1252 = vmatprep.subr.mxu0 0.0
        %1253 = vmatpush1.xpose.msra.mxu0 0.0
        %1254 = vmatprep.subr.mxu0 0.0
        %1255 = vmatpush1.xpose.msra.mxu0 0.0
        %1256 = vmatprep.subr.mxu0 0.0
        %1257 = vmatpush1.xpose.msra.mxu0 0.0
        %1258 = vmatprep.subr.mxu0 0.0
        %1259 = vmatpush1.xpose.msra.mxu0 %v1226
        %1260 = vmatprep.subr.mxu0 0.0
        %1261 = vmatpush2.xpose.msra.mxu0 0.0
        %1262 = vmatprep.subr.mxu0 0.0
        %1263 = vmatpush2.xpose.msra.mxu0 0.0
        %1264 = vmatprep.subr.mxu0 0.0
        %1265 = vmatpush2.xpose.msra.mxu0 0.0
        %1266 = vmatprep.subr.mxu0 0.0
        %1267 = vmatpush2.xpose.msra.mxu0 0.0
        %1268 = vmatprep.subr.mxu0 0.0
        %1269 = vmatpush2.xpose.msra.mxu0 0.0
        %1270 = vmatprep.subr.mxu0 0.0
        %1271 = vmatpush2.xpose.msra.mxu0 0.0
        %1272 = vmatprep.subr.mxu0 0.0
        %1273 = vmatpush2.xpose.msra.mxu0 0.0
        %1274 = vmatprep.subr.mxu0 0.0
        %1275 = vmatpush2.xpose.msra.mxu0 0.0
        %1276 = vmatprep.subr.mxu0 0.0
        %1277 = vmatpush2.xpose.msra.mxu0 0.0
        %1278 = vmatprep.subr.mxu0 0.0
        %1279 = vmatpush2.xpose.msra.mxu0 0.0
        %1280 = vmatprep.subr.mxu0 0.0
        %1281 = vmatpush2.xpose.msra.mxu0 0.0
        %1282 = vmatprep.subr.mxu0 0.0
        %1283 = vmatpush2.xpose.msra.mxu0 0.0
        %1284 = vmatprep.subr.mxu0 0.0
        %1285 = vmatpush2.xpose.msra.mxu0 0.0
        %1286 = vmatprep.subr.mxu0 0.0
        %1287 = vmatpush2.xpose.msra.mxu0 0.0
        %1288 = vmatprep.subr.mxu0 0.0
        %1289 = vmatpush2.xpose.msra.mxu0 0.0
        %1290 = vmatprep.subr.mxu0 0.0
        %1291 = vmatpush2.xpose.msra.mxu0 0.0
        %1292 = vmatprep.mubr.f32.mxu0 0.0
        %1293 = vmatmul.mubr.f32.gmra.mxu0 %v1223
        %v1294 = vpop.f32.mrf.mxu0
        %v1295 = vadd.f32 0.0, %v1294
        %v1296 = vpop.f32.mrf.mxu0
        %1297 = vdwg.mxu0
        %v1298 = vmul.f32 %v1295, 0.25
        %v1299 = vsel %vm886, %v1298, -inf
        %1300 = vmax.xlane.f32.xlu0 %v1299
        %v1301 = vpop.xlane.xlu0 %1300
        %v1302 = vsub.f32 %v1298, %v1301
        %v1303 = vmul.f32 %v1302, 1.442695
        %v1304 = vpow.pop %v1303
        %v1305 = vsel %vm886, %v1304, 0.0
        %1306 = vadd.xlane.f32.xlu0 %v1305
        %v1307 = vpop.xlane.xlu0 %1306
        %v1308 = vrcp.pop %v1307
        %v1309 = vmul.f32 %v1304, %v1308
        %v1311 = vsel %vm886, %v1309, 0
        %1313 = vmatprep.subr.mxu0 0.0
        %1314 = vmatpush1.msra.mxu0 0.0
        %1315 = vmatprep.subr.mxu0 0.0
        %1316 = vmatpush1.msra.mxu0 0.0
        %1317 = vmatprep.subr.mxu0 0.0
        %1318 = vmatpush1.msra.mxu0 0.0
        %1319 = vmatprep.subr.mxu0 0.0
        %1320 = vmatpush1.msra.mxu0 0.0
        %1321 = vmatprep.subr.mxu0 0.0
        %1322 = vmatpush1.msra.mxu0 0.0
        %1323 = vmatprep.subr.mxu0 0.0
        %1324 = vmatpush1.msra.mxu0 0.0
        %1325 = vmatprep.subr.mxu0 0.0
        %1326 = vmatpush1.msra.mxu0 0.0
        %1327 = vmatprep.subr.mxu0 0.0
        %1328 = vmatpush1.msra.mxu0 0.0
        %1329 = vmatprep.subr.mxu0 0.0
        %1330 = vmatpush1.msra.mxu0 0.0
        %1331 = vmatprep.subr.mxu0 0.0
        %1332 = vmatpush1.msra.mxu0 0.0
        %1333 = vmatprep.subr.mxu0 0.0
        %1334 = vmatpush1.msra.mxu0 0.0
        %1335 = vmatprep.subr.mxu0 0.0
        %1336 = vmatpush1.msra.mxu0 0.0
        %1337 = vmatprep.subr.mxu0 0.0
        %1338 = vmatpush1.msra.mxu0 0.0
        %1339 = vmatprep.subr.mxu0 0.0
        %1340 = vmatpush1.msra.mxu0 0.0
        %1341 = vmatprep.subr.mxu0 0.0
        %1342 = vmatpush1.msra.mxu0 0.0
        %1343 = vmatprep.subr.mxu0 0.0
        %1344 = vmatpush1.msra.mxu0 %v1219
        %1345 = vmatprep.subr.mxu0 0.0
        %1346 = vmatpush2.msra.mxu0 0.0
        %1347 = vmatprep.subr.mxu0 0.0
        %1348 = vmatpush2.msra.mxu0 0.0
        %1349 = vmatprep.subr.mxu0 0.0
        %1350 = vmatpush2.msra.mxu0 0.0
        %1351 = vmatprep.subr.mxu0 0.0
        %1352 = vmatpush2.msra.mxu0 0.0
        %1353 = vmatprep.subr.mxu0 0.0
        %1354 = vmatpush2.msra.mxu0 0.0
        %1355 = vmatprep.subr.mxu0 0.0
        %1356 = vmatpush2.msra.mxu0 0.0
        %1357 = vmatprep.subr.mxu0 0.0
        %1358 = vmatpush2.msra.mxu0 0.0
        %1359 = vmatprep.subr.mxu0 0.0
        %1360 = vmatpush2.msra.mxu0 0.0
        %1361 = vmatprep.subr.mxu0 0.0
        %1362 = vmatpush2.msra.mxu0 0.0
        %1363 = vmatprep.subr.mxu0 0.0
        %1364 = vmatpush2.msra.mxu0 0.0
        %1365 = vmatprep.subr.mxu0 0.0
        %1366 = vmatpush2.msra.mxu0 0.0
        %1367 = vmatprep.subr.mxu0 0.0
        %1368 = vmatpush2.msra.mxu0 0.0
        %1369 = vmatprep.subr.mxu0 0.0
        %1370 = vmatpush2.msra.mxu0 0.0
        %1371 = vmatprep.subr.mxu0 0.0
        %1372 = vmatpush2.msra.mxu0 0.0
        %1373 = vmatprep.subr.mxu0 0.0
        %1374 = vmatpush2.msra.mxu0 0.0
        %1375 = vmatprep.subr.mxu0 0.0
        %1376 = vmatpush2.msra.mxu0 0.0
        %1377 = vmatprep.mubr.f32.mxu0 0.0
        %1378 = vmatmul.mubr.f32.gmra.mxu0 %v1311
        %v1379 = vpop.f32.mrf.mxu0
        %v1380 = vadd.f32 0.0, %v1379
        %v1381 = vpop.f32.mrf.mxu0
        %1382 = vdwg.mxu0
        %s1383 = scalar_lea.vmem %s4, 16
        %v1384 = vld [vmem:[%s1383] sm:$0xff]
        %v1385 = vld [vmem:[%s1383 + $0x8] sm:$0xff]
        %v1387 = vsel %vm808, %v1380, 0
        %1389 = vmatprep.subr.mxu0 0.0
        %1390 = vmatpush1.msra.mxu0 0.0
        %1391 = vmatprep.subr.mxu0 0.0
        %1392 = vmatpush1.msra.mxu0 0.0
        %1393 = vmatprep.subr.mxu0 0.0
        %1394 = vmatpush1.msra.mxu0 0.0
        %1395 = vmatprep.subr.mxu0 0.0
        %1396 = vmatpush1.msra.mxu0 0.0
        %1397 = vmatprep.subr.mxu0 0.0
        %1398 = vmatpush1.msra.mxu0 0.0
        %1399 = vmatprep.subr.mxu0 0.0
        %1400 = vmatpush1.msra.mxu0 0.0
        %1401 = vmatprep.subr.mxu0 0.0
        %1402 = vmatpush1.msra.mxu0 0.0
        %1403 = vmatprep.subr.mxu0 0.0
        %1404 = vmatpush1.msra.mxu0 0.0
        %1405 = vmatprep.subr.mxu0 0.0
        %1406 = vmatpush1.msra.mxu0 0.0
        %1407 = vmatprep.subr.mxu0 0.0
        %1408 = vmatpush1.msra.mxu0 0.0
        %1409 = vmatprep.subr.mxu0 0.0
        %1410 = vmatpush1.msra.mxu0 0.0
        %1411 = vmatprep.subr.mxu0 0.0
        %1412 = vmatpush1.msra.mxu0 0.0
        %1413 = vmatprep.subr.mxu0 0.0
        %1414 = vmatpush1.msra.mxu0 0.0
        %1415 = vmatprep.subr.mxu0 0.0
        %1416 = vmatpush1.msra.mxu0 0.0
        %1417 = vmatprep.subr.mxu0 0.0
        %1418 = vmatpush1.msra.mxu0 %v1385
        %1419 = vmatprep.subr.mxu0 0.0
        %1420 = vmatpush1.msra.mxu0 %v1384
        %1421 = vmatprep.subr.mxu0 0.0
        %1422 = vmatpush2.msra.mxu0 0.0
        %1423 = vmatprep.subr.mxu0 0.0
        %1424 = vmatpush2.msra.mxu0 0.0
        %1425 = vmatprep.subr.mxu0 0.0
        %1426 = vmatpush2.msra.mxu0 0.0
        %1427 = vmatprep.subr.mxu0 0.0
        %1428 = vmatpush2.msra.mxu0 0.0
        %1429 = vmatprep.subr.mxu0 0.0
        %1430 = vmatpush2.msra.mxu0 0.0
        %1431 = vmatprep.subr.mxu0 0.0
        %1432 = vmatpush2.msra.mxu0 0.0
        %1433 = vmatprep.subr.mxu0 0.0
        %1434 = vmatpush2.msra.mxu0 0.0
        %1435 = vmatprep.subr.mxu0 0.0
        %1436 = vmatpush2.msra.mxu0 0.0
        %1437 = vmatprep.subr.mxu0 0.0
        %1438 = vmatpush2.msra.mxu0 0.0
        %1439 = vmatprep.subr.mxu0 0.0
        %1440 = vmatpush2.msra.mxu0 0.0
        %1441 = vmatprep.subr.mxu0 0.0
        %1442 = vmatpush2.msra.mxu0 0.0
        %1443 = vmatprep.subr.mxu0 0.0
        %1444 = vmatpush2.msra.mxu0 0.0
        %1445 = vmatprep.subr.mxu0 0.0
        %1446 = vmatpush2.msra.mxu0 0.0
        %1447 = vmatprep.subr.mxu0 0.0
        %1448 = vmatpush2.msra.mxu0 0.0
        %1449 = vmatprep.subr.mxu0 0.0
        %1450 = vmatpush2.msra.mxu0 0.0
        %1451 = vmatprep.subr.mxu0 0.0
        %1452 = vmatpush2.msra.mxu0 0.0
        %1453 = vmatprep.mubr.f32.mxu0 0.0
        %1454 = vmatmul.mubr.f32.gmra.mxu0 %v1387
        %v1455 = vpop.f32.mrf.mxu0
        %v1456 = vadd.f32 0.0, %v1455
        %v1457 = vpop.f32.mrf.mxu0
        %1458 = vdwg.mxu0
        %v1460 = vsel %vm808, %v968, 0
        %1462 = vmatprep.subr.mxu0 0.0
        %1463 = vmatpush1.msra.mxu0 0.0
        %1464 = vmatprep.subr.mxu0 0.0
        %1465 = vmatpush1.msra.mxu0 0.0
        %1466 = vmatprep.subr.mxu0 0.0
        %1467 = vmatpush1.msra.mxu0 0.0
        %1468 = vmatprep.subr.mxu0 0.0
        %1469 = vmatpush1.msra.mxu0 0.0
        %1470 = vmatprep.subr.mxu0 0.0
        %1471 = vmatpush1.msra.mxu0 0.0
        %1472 = vmatprep.subr.mxu0 0.0
        %1473 = vmatpush1.msra.mxu0 0.0
        %1474 = vmatprep.subr.mxu0 0.0
        %1475 = vmatpush1.msra.mxu0 0.0
        %1476 = vmatprep.subr.mxu0 0.0
        %1477 = vmatpush1.msra.mxu0 0.0
        %1478 = vmatprep.subr.mxu0 0.0
        %1479 = vmatpush1.msra.mxu0 0.0
        %1480 = vmatprep.subr.mxu0 0.0
        %1481 = vmatpush1.msra.mxu0 0.0
        %1482 = vmatprep.subr.mxu0 0.0
        %1483 = vmatpush1.msra.mxu0 0.0
        %1484 = vmatprep.subr.mxu0 0.0
        %1485 = vmatpush1.msra.mxu0 0.0
        %1486 = vmatprep.subr.mxu0 0.0
        %1487 = vmatpush1.msra.mxu0 0.0
        %1488 = vmatprep.subr.mxu0 0.0
        %1489 = vmatpush1.msra.mxu0 0.0
        %1490 = vmatprep.subr.mxu0 0.0
        %1491 = vmatpush1.msra.mxu0 %v972
        %1492 = vmatprep.subr.mxu0 0.0
        %1493 = vmatpush1.msra.mxu0 %v971
        %1494 = vmatprep.subr.mxu0 0.0
        %1495 = vmatpush2.msra.mxu0 0.0
        %1496 = vmatprep.subr.mxu0 0.0
        %1497 = vmatpush2.msra.mxu0 0.0
        %1498 = vmatprep.subr.mxu0 0.0
        %1499 = vmatpush2.msra.mxu0 0.0
        %1500 = vmatprep.subr.mxu0 0.0
        %1501 = vmatpush2.msra.mxu0 0.0
        %1502 = vmatprep.subr.mxu0 0.0
        %1503 = vmatpush2.msra.mxu0 0.0
        %1504 = vmatprep.subr.mxu0 0.0
        %1505 = vmatpush2.msra.mxu0 0.0
        %1506 = vmatprep.subr.mxu0 0.0
        %1507 = vmatpush2.msra.mxu0 0.0
        %1508 = vmatprep.subr.mxu0 0.0
        %1509 = vmatpush2.msra.mxu0 0.0
        %1510 = vmatprep.subr.mxu0 0.0
        %1511 = vmatpush2.msra.mxu0 0.0
        %1512 = vmatprep.subr.mxu0 0.0
        %1513 = vmatpush2.msra.mxu0 0.0
        %1514 = vmatprep.subr.mxu0 0.0
        %1515 = vmatpush2.msra.mxu0 0.0
        %1516 = vmatprep.subr.mxu0 0.0
        %1517 = vmatpush2.msra.mxu0 0.0
        %1518 = vmatprep.subr.mxu0 0.0
        %1519 = vmatpush2.msra.mxu0 0.0
        %1520 = vmatprep.subr.mxu0 0.0
        %1521 = vmatpush2.msra.mxu0 0.0
        %1522 = vmatprep.subr.mxu0 0.0
        %1523 = vmatpush2.msra.mxu0 0.0
        %1524 = vmatprep.subr.mxu0 0.0
        %1525 = vmatpush2.msra.mxu0 0.0
        %1526 = vmatprep.mubr.f32.mxu0 0.0
        %1527 = vmatmul.mubr.f32.gmra.mxu0 %v1460
        %v1528 = vpop.f32.mrf.mxu0
        %v1529 = vadd.f32 %v1456, %v1528
        %v1530 = vpop.f32.mrf.mxu0
        %1531 = vdwg.mxu0
        %v1532 = vld [vmem:[%s5] sm:$0x1]
        %v1534 = vlaneseq
        %v1535 = vshrl.u32 %v1534, 7
        %v1536 = vsub.s32 0, %v1535
        %v1537 = vrot.slane %v1532, %v1536
        %v1539 = vadd.f32 %v1529, %v1537
        %v1540 = vadd.f32 %v554, %v1539
        %v1541 = vsel %vm568, %v1540, 0.0
        %1542 = vadd.xlane.f32.xlu0 %v1541
        %v1543 = vpop.xlane.xlu0 %1542
        %v1544 = vrcp.pop 32.0
        %v1545 = vmul.f32 %v1543, %v1544
        %v1546 = vsub.f32 %v1540, %v1545
        %v1547 = vmul.f32 %v1546, %v1546
        %v1548 = vsel %vm568, %v1547, 0.0
        %1549 = vadd.xlane.f32.xlu0 %v1548
        %v1550 = vpop.xlane.xlu0 %1549
        %v1551 = vmul.f32 %v1550, %v1544
        %v1552 = vadd.f32 %v1551, 1e-05
        %v1553 = vrsqrt.pop %v1552
        %v1554 = vmul.f32 %v1546, %v1553
        %v1555 = vld [vmem:[%s10] sm:$0x1]
        %v1557 = vlaneseq
        %v1558 = vshrl.u32 %v1557, 7
        %v1559 = vsub.s32 0, %v1558
        %v1560 = vrot.slane %v1555, %v1559
        %v1562 = vmul.f32 %v1554, %v1560
        %v1563 = vld [vmem:[%s11] sm:$0x1]
        %v1565 = vlaneseq
        %v1566 = vshrl.u32 %v1565, 7
        %v1567 = vsub.s32 0, %v1566
        %v1568 = vrot.slane %v1563, %v1567
        %v1570 = vadd.f32 %v1562, %v1568
        %v1571 = vld [vmem:[%s6] sm:$0xff]
        %v1572 = vld [vmem:[%s6 + $0x8] sm:$0xff]
        %v1573 = vld [vmem:[%s6 + $0x10] sm:$0xff]
        %v1574 = vld [vmem:[%s6 + $0x18] sm:$0xff]
        %v1575 = vld [vmem:[%s7] sm:$0x1]
        %v1577 = vlaneseq
        %v1578 = vshrl.u32 %v1577, 7
        %v1579 = vsub.s32 0, %v1578
        %v1580 = vrot.slane %v1575, %v1579
        %v1583 = vsel %vm568, %v1570, 0
        %1585 = vmatprep.subr.mxu0 0.0
        %1586 = vmatpush1.msra.mxu0 0.0
        %1587 = vmatprep.subr.mxu0 0.0
        %1588 = vmatpush1.msra.mxu0 0.0
        %1589 = vmatprep.subr.mxu0 0.0
        %1590 = vmatpush1.msra.mxu0 0.0
        %1591 = vmatprep.subr.mxu0 0.0
        %1592 = vmatpush1.msra.mxu0 0.0
        %1593 = vmatprep.subr.mxu0 0.0
        %1594 = vmatpush1.msra.mxu0 0.0
        %1595 = vmatprep.subr.mxu0 0.0
        %1596 = vmatpush1.msra.mxu0 0.0
        %1597 = vmatprep.subr.mxu0 0.0
        %1598 = vmatpush1.msra.mxu0 0.0
        %1599 = vmatprep.subr.mxu0 0.0
        %1600 = vmatpush1.msra.mxu0 0.0
        %1601 = vmatprep.subr.mxu0 0.0
        %1602 = vmatpush1.msra.mxu0 0.0
        %1603 = vmatprep.subr.mxu0 0.0
        %1604 = vmatpush1.msra.mxu0 0.0
        %1605 = vmatprep.subr.mxu0 0.0
        %1606 = vmatpush1.msra.mxu0 0.0
        %1607 = vmatprep.subr.mxu0 0.0
        %1608 = vmatpush1.msra.mxu0 0.0
        %1609 = vmatprep.subr.mxu0 0.0
        %1610 = vmatpush1.msra.mxu0 %v1574
        %1611 = vmatprep.subr.mxu0 0.0
        %1612 = vmatpush1.msra.mxu0 %v1573
        %1613 = vmatprep.subr.mxu0 0.0
        %1614 = vmatpush1.msra.mxu0 %v1572
        %1615 = vmatprep.subr.mxu0 0.0
        %1616 = vmatpush1.msra.mxu0 %v1571
        %1617 = vmatprep.subr.mxu0 0.0
        %1618 = vmatpush2.msra.mxu0 0.0
        %1619 = vmatprep.subr.mxu0 0.0
        %1620 = vmatpush2.msra.mxu0 0.0
        %1621 = vmatprep.subr.mxu0 0.0
        %1622 = vmatpush2.msra.mxu0 0.0
        %1623 = vmatprep.subr.mxu0 0.0
        %1624 = vmatpush2.msra.mxu0 0.0
        %1625 = vmatprep.subr.mxu0 0.0
        %1626 = vmatpush2.msra.mxu0 0.0
        %1627 = vmatprep.subr.mxu0 0.0
        %1628 = vmatpush2.msra.mxu0 0.0
        %1629 = vmatprep.subr.mxu0 0.0
        %1630 = vmatpush2.msra.mxu0 0.0
        %1631 = vmatprep.subr.mxu0 0.0
        %1632 = vmatpush2.msra.mxu0 0.0
        %1633 = vmatprep.subr.mxu0 0.0
        %1634 = vmatpush2.msra.mxu0 0.0
        %1635 = vmatprep.subr.mxu0 0.0
        %1636 = vmatpush2.msra.mxu0 0.0
        %1637 = vmatprep.subr.mxu0 0.0
        %1638 = vmatpush2.msra.mxu0 0.0
        %1639 = vmatprep.subr.mxu0 0.0
        %1640 = vmatpush2.msra.mxu0 0.0
        %1641 = vmatprep.subr.mxu0 0.0
        %1642 = vmatpush2.msra.mxu0 0.0
        %1643 = vmatprep.subr.mxu0 0.0
        %1644 = vmatpush2.msra.mxu0 0.0
        %1645 = vmatprep.subr.mxu0 0.0
        %1646 = vmatpush2.msra.mxu0 0.0
        %1647 = vmatprep.subr.mxu0 0.0
        %1648 = vmatpush2.msra.mxu0 0.0
        %1649 = vmatprep.mubr.f32.mxu0 0.0
        %1650 = vmatmul.mubr.f32.gmra.mxu0 %v1583
        %v1651 = vpop.f32.mrf.mxu0
        %v1652 = vadd.f32 %v1580, %v1651
        %v1653 = vpop.f32.mrf.mxu0
        %1654 = vdwg.mxu0
        %v1655 = vmax.f32 %v1652, 0.0
        %v1656 = vld [vmem:[%s8] sm:$0xff]
        %v1657 = vld [vmem:[%s8 + $0x8] sm:$0xff]
        %v1658 = vld [vmem:[%s8 + $0x10] sm:$0xff]
        %v1659 = vld [vmem:[%s8 + $0x18] sm:$0xff]
        %v1660 = vld [vmem:[%s8 + $0x20] sm:$0xff]
        %v1661 = vld [vmem:[%s8 + $0x28] sm:$0xff]
        %v1662 = vld [vmem:[%s8 + $0x30] sm:$0xff]
        %v1663 = vld [vmem:[%s8 + $0x38] sm:$0xff]
        %v1664 = vld [vmem:[%s9] sm:$0x1]
        %v1666 = vlaneseq
        %v1667 = vshrl.u32 %v1666, 7
        %v1668 = vsub.s32 0, %v1667
        %v1669 = vrot.slane %v1664, %v1668
        %vm1671 = vcmask 523264
        %v1673 = vsel %vm1671, %v1655, 0
        %1675 = vmatprep.subr.mxu0 0.0
        %1676 = vmatpush1.msra.mxu0 0.0
        %1677 = vmatprep.subr.mxu0 0.0
        %1678 = vmatpush1.msra.mxu0 0.0
        %1679 = vmatprep.subr.mxu0 0.0
        %1680 = vmatpush1.msra.mxu0 0.0
        %1681 = vmatprep.subr.mxu0 0.0
        %1682 = vmatpush1.msra.mxu0 0.0
        %1683 = vmatprep.subr.mxu0 0.0
        %1684 = vmatpush1.msra.mxu0 0.0
        %1685 = vmatprep.subr.mxu0 0.0
        %1686 = vmatpush1.msra.mxu0 0.0
        %1687 = vmatprep.subr.mxu0 0.0
        %1688 = vmatpush1.msra.mxu0 0.0
        %1689 = vmatprep.subr.mxu0 0.0
        %1690 = vmatpush1.msra.mxu0 0.0
        %1691 = vmatprep.subr.mxu0 0.0
        %1692 = vmatpush1.msra.mxu0 %v1663
        %1693 = vmatprep.subr.mxu0 0.0
        %1694 = vmatpush1.msra.mxu0 %v1662
        %1695 = vmatprep.subr.mxu0 0.0
        %1696 = vmatpush1.msra.mxu0 %v1661
        %1697 = vmatprep.subr.mxu0 0.0
        %1698 = vmatpush1.msra.mxu0 %v1660
        %1699 = vmatprep.subr.mxu0 0.0
        %1700 = vmatpush1.msra.mxu0 %v1659
        %1701 = vmatprep.subr.mxu0 0.0
        %1702 = vmatpush1.msra.mxu0 %v1658
        %1703 = vmatprep.subr.mxu0 0.0
        %1704 = vmatpush1.msra.mxu0 %v1657
        %1705 = vmatprep.subr.mxu0 0.0
        %1706 = vmatpush1.msra.mxu0 %v1656
        %1707 = vmatprep.subr.mxu0 0.0
        %1708 = vmatpush2.msra.mxu0 0.0
        %1709 = vmatprep.subr.mxu0 0.0
        %1710 = vmatpush2.msra.mxu0 0.0
        %1711 = vmatprep.subr.mxu0 0.0
        %1712 = vmatpush2.msra.mxu0 0.0
        %1713 = vmatprep.subr.mxu0 0.0
        %1714 = vmatpush2.msra.mxu0 0.0
        %1715 = vmatprep.subr.mxu0 0.0
        %1716 = vmatpush2.msra.mxu0 0.0
        %1717 = vmatprep.subr.mxu0 0.0
        %1718 = vmatpush2.msra.mxu0 0.0
        %1719 = vmatprep.subr.mxu0 0.0
        %1720 = vmatpush2.msra.mxu0 0.0
        %1721 = vmatprep.subr.mxu0 0.0
        %1722 = vmatpush2.msra.mxu0 0.0
        %1723 = vmatprep.subr.mxu0 0.0
        %1724 = vmatpush2.msra.mxu0 0.0
        %1725 = vmatprep.subr.mxu0 0.0
        %1726 = vmatpush2.msra.mxu0 0.0
        %1727 = vmatprep.subr.mxu0 0.0
        %1728 = vmatpush2.msra.mxu0 0.0
        %1729 = vmatprep.subr.mxu0 0.0
        %1730 = vmatpush2.msra.mxu0 0.0
        %1731 = vmatprep.subr.mxu0 0.0
        %1732 = vmatpush2.msra.mxu0 0.0
        %1733 = vmatprep.subr.mxu0 0.0
        %1734 = vmatpush2.msra.mxu0 0.0
        %1735 = vmatprep.subr.mxu0 0.0
        %1736 = vmatpush2.msra.mxu0 0.0
        %1737 = vmatprep.subr.mxu0 0.0
        %1738 = vmatpush2.msra.mxu0 0.0
        %1739 = vmatprep.mubr.f32.mxu0 0.0
        %1740 = vmatmul.mubr.f32.gmra.mxu0 %v1673
        %v1741 = vpop.f32.mrf.mxu0
        %v1742 = vadd.f32 %v1669, %v1741
        %v1743 = vpop.f32.mrf.mxu0
        %1744 = vdwg.mxu0
        %v1745 = vadd.f32 %v1570, %v1742
        %v1746 = vsel %vm568, %v1745, 0.0
        %1747 = vadd.xlane.f32.xlu0 %v1746
        %v1748 = vpop.xlane.xlu0 %1747
        %v1749 = vmul.f32 %v1748, %v1544
        %v1750 = vsub.f32 %v1745, %v1749
        %v1751 = vmul.f32 %v1750, %v1750
        %v1752 = vsel %vm568, %v1751, 0.0
        %1753 = vadd.xlane.f32.xlu0 %v1752
        %v1754 = vpop.xlane.xlu0 %1753
        %v1755 = vmul.f32 %v1754, %v1544
        %v1756 = vadd.f32 %v1755, 1e-05
        %v1757 = vrsqrt.pop %v1756
        %v1758 = vmul.f32 %v1750, %v1757
        %s1759 = scalar_lea.vmem %s10, 1
        %v1760 = vld [vmem:[%s1759] sm:$0x1]
        %v1762 = vlaneseq
        %v1763 = vshrl.u32 %v1762, 7
        %v1764 = vsub.s32 0, %v1763
        %v1765 = vrot.slane %v1760, %v1764
        %v1767 = vmul.f32 %v1758, %v1765
        %s1768 = scalar_lea.vmem %s11, 1
        %v1769 = vld [vmem:[%s1768] sm:$0x1]
        %v1771 = vlaneseq
        %v1772 = vshrl.u32 %v1771, 7
        %v1773 = vsub.s32 0, %v1772
        %v1774 = vrot.slane %v1769, %v1773
        %v1776 = vadd.f32 %v1767, %v1774
        %s1777 = scalar_lea.vmem %s2, 192
        %v1778 = vld [vmem:[%s1777] sm:$0xff]
        %v1779 = vld [vmem:[%s1777 + $0x8] sm:$0xff]
        %v1780 = vld [vmem:[%s1777 + $0x10] sm:$0xff]
        %v1781 = vld [vmem:[%s1777 + $0x18] sm:$0xff]
        %s1782 = scalar_lea.vmem %s3, 6
        %v1783 = vld [vmem:[%s1782] sm:$0x1]
        %v1785 = vlaneseq
        %v1786 = vshrl.u32 %v1785, 7
        %v1787 = vsub.s32 0, %v1786
        %v1788 = vrot.slane %v1783, %v1787
        %v1791 = vsel %vm568, %v1776, 0
        %1793 = vmatprep.subr.mxu0 0.0
        %1794 = vmatpush1.msra.mxu0 0.0
        %1795 = vmatprep.subr.mxu0 0.0
        %1796 = vmatpush1.msra.mxu0 0.0
        %1797 = vmatprep.subr.mxu0 0.0
        %1798 = vmatpush1.msra.mxu0 0.0
        %1799 = vmatprep.subr.mxu0 0.0
        %1800 = vmatpush1.msra.mxu0 0.0
        %1801 = vmatprep.subr.mxu0 0.0
        %1802 = vmatpush1.msra.mxu0 0.0
        %1803 = vmatprep.subr.mxu0 0.0
        %1804 = vmatpush1.msra.mxu0 0.0
        %1805 = vmatprep.subr.mxu0 0.0
        %1806 = vmatpush1.msra.mxu0 0.0
        %1807 = vmatprep.subr.mxu0 0.0
        %1808 = vmatpush1.msra.mxu0 0.0
        %1809 = vmatprep.subr.mxu0 0.0
        %1810 = vmatpush1.msra.mxu0 0.0
        %1811 = vmatprep.subr.mxu0 0.0
        %1812 = vmatpush1.msra.mxu0 0.0
        %1813 = vmatprep.subr.mxu0 0.0
        %1814 = vmatpush1.msra.mxu0 0.0
        %1815 = vmatprep.subr.mxu0 0.0
        %1816 = vmatpush1.msra.mxu0 0.0
        %1817 = vmatprep.subr.mxu0 0.0
        %1818 = vmatpush1.msra.mxu0 %v1781
        %1819 = vmatprep.subr.mxu0 0.0
        %1820 = vmatpush1.msra.mxu0 %v1780
        %1821 = vmatprep.subr.mxu0 0.0
        %1822 = vmatpush1.msra.mxu0 %v1779
        %1823 = vmatprep.subr.mxu0 0.0
        %1824 = vmatpush1.msra.mxu0 %v1778
        %1825 = vmatprep.subr.mxu0 0.0
        %1826 = vmatpush2.msra.mxu0 0.0
        %1827 = vmatprep.subr.mxu0 0.0
        %1828 = vmatpush2.msra.mxu0 0.0
        %1829 = vmatprep.subr.mxu0 0.0
        %1830 = vmatpush2.msra.mxu0 0.0
        %1831 = vmatprep.subr.mxu0 0.0
        %1832 = vmatpush2.msra.mxu0 0.0
        %1833 = vmatprep.subr.mxu0 0.0
        %1834 = vmatpush2.msra.mxu0 0.0
        %1835 = vmatprep.subr.mxu0 0.0
        %1836 = vmatpush2.msra.mxu0 0.0
        %1837 = vmatprep.subr.mxu0 0.0
        %1838 = vmatpush2.msra.mxu0 0.0
        %1839 = vmatprep.subr.mxu0 0.0
        %1840 = vmatpush2.msra.mxu0 0.0
        %1841 = vmatprep.subr.mxu0 0.0
        %1842 = vmatpush2.msra.mxu0 0.0
        %1843 = vmatprep.subr.mxu0 0.0
        %1844 = vmatpush2.msra.mxu0 0.0
        %1845 = vmatprep.subr.mxu0 0.0
        %1846 = vmatpush2.msra.mxu0 0.0
        %1847 = vmatprep.subr.mxu0 0.0
        %1848 = vmatpush2.msra.mxu0 0.0
        %1849 = vmatprep.subr.mxu0 0.0
        %1850 = vmatpush2.msra.mxu0 0.0
        %1851 = vmatprep.subr.mxu0 0.0
        %1852 = vmatpush2.msra.mxu0 0.0
        %1853 = vmatprep.subr.mxu0 0.0
        %1854 = vmatpush2.msra.mxu0 0.0
        %1855 = vmatprep.subr.mxu0 0.0
        %1856 = vmatpush2.msra.mxu0 0.0
        %1857 = vmatprep.mubr.f32.mxu0 0.0
        %1858 = vmatmul.mubr.f32.gmra.mxu0 %v1791
        %v1859 = vpop.f32.mrf.mxu0
        %v1860 = vadd.f32 %v1788, %v1859
        %v1861 = vpop.f32.mrf.mxu0
        %1862 = vdwg.mxu0
        %s1863 = scalar_lea.vmem %s2, 224
        %v1864 = vld [vmem:[%s1863] sm:$0xff]
        %v1865 = vld [vmem:[%s1863 + $0x8] sm:$0xff]
        %v1866 = vld [vmem:[%s1863 + $0x10] sm:$0xff]
        %v1867 = vld [vmem:[%s1863 + $0x18] sm:$0xff]
        %s1868 = scalar_lea.vmem %s3, 7
        %v1869 = vld [vmem:[%s1868] sm:$0x1]
        %v1871 = vlaneseq
        %v1872 = vshrl.u32 %v1871, 7
        %v1873 = vsub.s32 0, %v1872
        %v1874 = vrot.slane %v1869, %v1873
        %1876 = vmatprep.subr.mxu0 0.0
        %1877 = vmatpush1.msra.mxu0 0.0
        %1878 = vmatprep.subr.mxu0 0.0
        %1879 = vmatpush1.msra.mxu0 0.0
        %1880 = vmatprep.subr.mxu0 0.0
        %1881 = vmatpush1.msra.mxu0 0.0
        %1882 = vmatprep.subr.mxu0 0.0
        %1883 = vmatpush1.msra.mxu0 0.0
        %1884 = vmatprep.subr.mxu0 0.0
        %1885 = vmatpush1.msra.mxu0 0.0
        %1886 = vmatprep.subr.mxu0 0.0
        %1887 = vmatpush1.msra.mxu0 0.0
        %1888 = vmatprep.subr.mxu0 0.0
        %1889 = vmatpush1.msra.mxu0 0.0
        %1890 = vmatprep.subr.mxu0 0.0
        %1891 = vmatpush1.msra.mxu0 0.0
        %1892 = vmatprep.subr.mxu0 0.0
        %1893 = vmatpush1.msra.mxu0 0.0
        %1894 = vmatprep.subr.mxu0 0.0
        %1895 = vmatpush1.msra.mxu0 0.0
        %1896 = vmatprep.subr.mxu0 0.0
        %1897 = vmatpush1.msra.mxu0 0.0
        %1898 = vmatprep.subr.mxu0 0.0
        %1899 = vmatpush1.msra.mxu0 0.0
        %1900 = vmatprep.subr.mxu0 0.0
        %1901 = vmatpush1.msra.mxu0 %v1867
        %1902 = vmatprep.subr.mxu0 0.0
        %1903 = vmatpush1.msra.mxu0 %v1866
        %1904 = vmatprep.subr.mxu0 0.0
        %1905 = vmatpush1.msra.mxu0 %v1865
        %1906 = vmatprep.subr.mxu0 0.0
        %1907 = vmatpush1.msra.mxu0 %v1864
        %1908 = vmatprep.subr.mxu0 0.0
        %1909 = vmatpush2.msra.mxu0 0.0
        %1910 = vmatprep.subr.mxu0 0.0
        %1911 = vmatpush2.msra.mxu0 0.0
        %1912 = vmatprep.subr.mxu0 0.0
        %1913 = vmatpush2.msra.mxu0 0.0
        %1914 = vmatprep.subr.mxu0 0.0
        %1915 = vmatpush2.msra.mxu0 0.0
        %1916 = vmatprep.subr.mxu0 0.0
        %1917 = vmatpush2.msra.mxu0 0.0
        %1918 = vmatprep.subr.mxu0 0.0
        %1919 = vmatpush2.msra.mxu0 0.0
        %1920 = vmatprep.subr.mxu0 0.0
        %1921 = vmatpush2.msra.mxu0 0.0
        %1922 = vmatprep.subr.mxu0 0.0
        %1923 = vmatpush2.msra.mxu0 0.0
        %1924 = vmatprep.subr.mxu0 0.0
        %1925 = vmatpush2.msra.mxu0 0.0
        %1926 = vmatprep.subr.mxu0 0.0
        %1927 = vmatpush2.msra.mxu0 0.0
        %1928 = vmatprep.subr.mxu0 0.0
        %1929 = vmatpush2.msra.mxu0 0.0
        %1930 = vmatprep.subr.mxu0 0.0
        %1931 = vmatpush2.msra.mxu0 0.0
        %1932 = vmatprep.subr.mxu0 0.0
        %1933 = vmatpush2.msra.mxu0 0.0
        %1934 = vmatprep.subr.mxu0 0.0
        %1935 = vmatpush2.msra.mxu0 0.0
        %1936 = vmatprep.subr.mxu0 0.0
        %1937 = vmatpush2.msra.mxu0 0.0
        %1938 = vmatprep.subr.mxu0 0.0
        %1939 = vmatpush2.msra.mxu0 0.0
        %1940 = vmatprep.mubr.f32.mxu0 0.0
        %1941 = vmatmul.mubr.f32.gmra.mxu0 %v1791
        %v1942 = vpop.f32.mrf.mxu0
        %v1943 = vadd.f32 %v1874, %v1942
        %v1944 = vpop.f32.mrf.mxu0
        %1945 = vdwg.mxu0
        %s1946 = scalar_lea.vmem %s2, 256
        %v1947 = vld [vmem:[%s1946] sm:$0xff]
        %v1948 = vld [vmem:[%s1946 + $0x8] sm:$0xff]
        %v1949 = vld [vmem:[%s1946 + $0x10] sm:$0xff]
        %v1950 = vld [vmem:[%s1946 + $0x18] sm:$0xff]
        %s1951 = scalar_lea.vmem %s3, 8
        %v1952 = vld [vmem:[%s1951] sm:$0x1]
        %v1954 = vlaneseq
        %v1955 = vshrl.u32 %v1954, 7
        %v1956 = vsub.s32 0, %v1955
        %v1957 = vrot.slane %v1952, %v1956
        %1959 = vmatprep.subr.mxu0 0.0
        %1960 = vmatpush1.msra.mxu0 0.0
        %1961 = vmatprep.subr.mxu0 0.0
        %1962 = vmatpush1.msra.mxu0 0.0
        %1963 = vmatprep.subr.mxu0 0.0
        %1964 = vmatpush1.msra.mxu0 0.0
        %1965 = vmatprep.subr.mxu0 0.0
        %1966 = vmatpush1.msra.mxu0 0.0
        %1967 = vmatprep.subr.mxu0 0.0
        %1968 = vmatpush1.msra.mxu0 0.0
        %1969 = vmatprep.subr.mxu0 0.0
        %1970 = vmatpush1.msra.mxu0 0.0
        %1971 = vmatprep.subr.mxu0 0.0
        %1972 = vmatpush1.msra.mxu0 0.0
        %1973 = vmatprep.subr.mxu0 0.0
        %1974 = vmatpush1.msra.mxu0 0.0
        %1975 = vmatprep.subr.mxu0 0.0
        %1976 = vmatpush1.msra.mxu0 0.0
        %1977 = vmatprep.subr.mxu0 0.0
        %1978 = vmatpush1.msra.mxu0 0.0
        %1979 = vmatprep.subr.mxu0 0.0
        %1980 = vmatpush1.msra.mxu0 0.0
        %1981 = vmatprep.subr.mxu0 0.0
        %1982 = vmatpush1.msra.mxu0 0.0
        %1983 = vmatprep.subr.mxu0 0.0
        %1984 = vmatpush1.msra.mxu0 %v1950
        %1985 = vmatprep.subr.mxu0 0.0
        %1986 = vmatpush1.msra.mxu0 %v1949
        %1987 = vmatprep.subr.mxu0 0.0
        %1988 = vmatpush1.msra.mxu0 %v1948
        %1989 = vmatprep.subr.mxu0 0.0
        %1990 = vmatpush1.msra.mxu0 %v1947
        %1991 = vmatprep.subr.mxu0 0.0
        %1992 = vmatpush2.msra.mxu0 0.0
        %1993 = vmatprep.subr.mxu0 0.0
        %1994 = vmatpush2.msra.mxu0 0.0
        %1995 = vmatprep.subr.mxu0 0.0
        %1996 = vmatpush2.msra.mxu0 0.0
        %1997 = vmatprep.subr.mxu0 0.0
        %1998 = vmatpush2.msra.mxu0 0.0
        %1999 = vmatprep.subr.mxu0 0.0
        %2000 = vmatpush2.msra.mxu0 0.0
        %2001 = vmatprep.subr.mxu0 0.0
        %2002 = vmatpush2.msra.mxu0 0.0
        %2003 = vmatprep.subr.mxu0 0.0
        %2004 = vmatpush2.msra.mxu0 0.0
        %2005 = vmatprep.subr.mxu0 0.0
        %2006 = vmatpush2.msra.mxu0 0.0
        %2007 = vmatprep.subr.mxu0 0.0
        %2008 = vmatpush2.msra.mxu0 0.0
        %2009 = vmatprep.subr.mxu0 0.0
        %2010 = vmatpush2.msra.mxu0 0.0
        %2011 = vmatprep.subr.mxu0 0.0
        %2012 = vmatpush2.msra.mxu0 0.0
        %2013 = vmatprep.subr.mxu0 0.0
        %2014 = vmatpush2.msra.mxu0 0.0
        %2015 = vmatprep.subr.mxu0 0.0
        %2016 = vmatpush2.msra.mxu0 0.0
        %2017 = vmatprep.subr.mxu0 0.0
        %2018 = vmatpush2.msra.mxu0 0.0
        %2019 = vmatprep.subr.mxu0 0.0
        %2020 = vmatpush2.msra.mxu0 0.0
        %2021 = vmatprep.subr.mxu0 0.0
        %2022 = vmatpush2.msra.mxu0 0.0
        %2023 = vmatprep.mubr.f32.mxu0 0.0
        %2024 = vmatmul.mubr.f32.gmra.mxu0 %v1791
        %v2025 = vpop.f32.mrf.mxu0
        %v2026 = vadd.f32 %v1957, %v2025
        %v2027 = vpop.f32.mrf.mxu0
        %2028 = vdwg.mxu0
        %v2030 = vsel %vm808, %v1860, 0
        %v2033 = vsel %vm808, %v1943, 0
        %2035 = vmatprep.subr.mxu0 0.0
        %2036 = vmatpush1.xpose.msra.mxu0 0.0
        %2037 = vmatprep.subr.mxu0 0.0
        %2038 = vmatpush1.xpose.msra.mxu0 0.0
        %2039 = vmatprep.subr.mxu0 0.0
        %2040 = vmatpush1.xpose.msra.mxu0 0.0
        %2041 = vmatprep.subr.mxu0 0.0
        %2042 = vmatpush1.xpose.msra.mxu0 0.0
        %2043 = vmatprep.subr.mxu0 0.0
        %2044 = vmatpush1.xpose.msra.mxu0 0.0
        %2045 = vmatprep.subr.mxu0 0.0
        %2046 = vmatpush1.xpose.msra.mxu0 0.0
        %2047 = vmatprep.subr.mxu0 0.0
        %2048 = vmatpush1.xpose.msra.mxu0 0.0
        %2049 = vmatprep.subr.mxu0 0.0
        %2050 = vmatpush1.xpose.msra.mxu0 0.0
        %2051 = vmatprep.subr.mxu0 0.0
        %2052 = vmatpush1.xpose.msra.mxu0 0.0
        %2053 = vmatprep.subr.mxu0 0.0
        %2054 = vmatpush1.xpose.msra.mxu0 0.0
        %2055 = vmatprep.subr.mxu0 0.0
        %2056 = vmatpush1.xpose.msra.mxu0 0.0
        %2057 = vmatprep.subr.mxu0 0.0
        %2058 = vmatpush1.xpose.msra.mxu0 0.0
        %2059 = vmatprep.subr.mxu0 0.0
        %2060 = vmatpush1.xpose.msra.mxu0 0.0
        %2061 = vmatprep.subr.mxu0 0.0
        %2062 = vmatpush1.xpose.msra.mxu0 0.0
        %2063 = vmatprep.subr.mxu0 0.0
        %2064 = vmatpush1.xpose.msra.mxu0 0.0
        %2065 = vmatprep.subr.mxu0 0.0
        %2066 = vmatpush1.xpose.msra.mxu0 %v2033
        %2067 = vmatprep.subr.mxu0 0.0
        %2068 = vmatpush2.xpose.msra.mxu0 0.0
        %2069 = vmatprep.subr.mxu0 0.0
        %2070 = vmatpush2.xpose.msra.mxu0 0.0
        %2071 = vmatprep.subr.mxu0 0.0
        %2072 = vmatpush2.xpose.msra.mxu0 0.0
        %2073 = vmatprep.subr.mxu0 0.0
        %2074 = vmatpush2.xpose.msra.mxu0 0.0
        %2075 = vmatprep.subr.mxu0 0.0
        %2076 = vmatpush2.xpose.msra.mxu0 0.0
        %2077 = vmatprep.subr.mxu0 0.0
        %2078 = vmatpush2.xpose.msra.mxu0 0.0
        %2079 = vmatprep.subr.mxu0 0.0
        %2080 = vmatpush2.xpose.msra.mxu0 0.0
        %2081 = vmatprep.subr.mxu0 0.0
        %2082 = vmatpush2.xpose.msra.mxu0 0.0
        %2083 = vmatprep.subr.mxu0 0.0
        %2084 = vmatpush2.xpose.msra.mxu0 0.0
        %2085 = vmatprep.subr.mxu0 0.0
        %2086 = vmatpush2.xpose.msra.mxu0 0.0
        %2087 = vmatprep.subr.mxu0 0.0
        %2088 = vmatpush2.xpose.msra.mxu0 0.0
        %2089 = vmatprep.subr.mxu0 0.0
        %2090 = vmatpush2.xpose.msra.mxu0 0.0
        %2091 = vmatprep.subr.mxu0 0.0
        %2092 = vmatpush2.xpose.msra.mxu0 0.0
        %2093 = vmatprep.subr.mxu0 0.0
        %2094 = vmatpush2.xpose.msra.mxu0 0.0
        %2095 = vmatprep.subr.mxu0 0.0
        %2096 = vmatpush2.xpose.msra.mxu0 0.0
        %2097 = vmatprep.subr.mxu0 0.0
        %2098 = vmatpush2.xpose.msra.mxu0 0.0
        %2099 = vmatprep.mubr.f32.mxu0 0.0
        %2100 = vmatmul.mubr.f32.gmra.mxu0 %v2030
        %v2101 = vpop.f32.mrf.mxu0
        %v2102 = vadd.f32 0.0, %v2101
        %v2103 = vpop.f32.mrf.mxu0
        %2104 = vdwg.mxu0
        %v2105 = vmul.f32 %v2102, 0.25
        %v2106 = vsel %vm886, %v2105, -inf
        %2107 = vmax.xlane.f32.xlu0 %v2106
        %v2108 = vpop.xlane.xlu0 %2107
        %v2109 = vsub.f32 %v2105, %v2108
        %v2110 = vmul.f32 %v2109, 1.442695
        %v2111 = vpow.pop %v2110
        %v2112 = vsel %vm886, %v2111, 0.0
        %2113 = vadd.xlane.f32.xlu0 %v2112
        %v2114 = vpop.xlane.xlu0 %2113
        %v2115 = vrcp.pop %v2114
        %v2116 = vmul.f32 %v2111, %v2115
        %v2118 = vsel %vm886, %v2116, 0
        %2120 = vmatprep.subr.mxu0 0.0
        %2121 = vmatpush1.msra.mxu0 0.0
        %2122 = vmatprep.subr.mxu0 0.0
        %2123 = vmatpush1.msra.mxu0 0.0
        %2124 = vmatprep.subr.mxu0 0.0
        %2125 = vmatpush1.msra.mxu0 0.0
        %2126 = vmatprep.subr.mxu0 0.0
        %2127 = vmatpush1.msra.mxu0 0.0
        %2128 = vmatprep.subr.mxu0 0.0
        %2129 = vmatpush1.msra.mxu0 0.0
        %2130 = vmatprep.subr.mxu0 0.0
        %2131 = vmatpush1.msra.mxu0 0.0
        %2132 = vmatprep.subr.mxu0 0.0
        %2133 = vmatpush1.msra.mxu0 0.0
        %2134 = vmatprep.subr.mxu0 0.0
        %2135 = vmatpush1.msra.mxu0 0.0
        %2136 = vmatprep.subr.mxu0 0.0
        %2137 = vmatpush1.msra.mxu0 0.0
        %2138 = vmatprep.subr.mxu0 0.0
        %2139 = vmatpush1.msra.mxu0 0.0
        %2140 = vmatprep.subr.mxu0 0.0
        %2141 = vmatpush1.msra.mxu0 0.0
        %2142 = vmatprep.subr.mxu0 0.0
        %2143 = vmatpush1.msra.mxu0 0.0
        %2144 = vmatprep.subr.mxu0 0.0
        %2145 = vmatpush1.msra.mxu0 0.0
        %2146 = vmatprep.subr.mxu0 0.0
        %2147 = vmatpush1.msra.mxu0 0.0
        %2148 = vmatprep.subr.mxu0 0.0
        %2149 = vmatpush1.msra.mxu0 0.0
        %2150 = vmatprep.subr.mxu0 0.0
        %2151 = vmatpush1.msra.mxu0 %v2026
        %2152 = vmatprep.subr.mxu0 0.0
        %2153 = vmatpush2.msra.mxu0 0.0
        %2154 = vmatprep.subr.mxu0 0.0
        %2155 = vmatpush2.msra.mxu0 0.0
        %2156 = vmatprep.subr.mxu0 0.0
        %2157 = vmatpush2.msra.mxu0 0.0
        %2158 = vmatprep.subr.mxu0 0.0
        %2159 = vmatpush2.msra.mxu0 0.0
        %2160 = vmatprep.subr.mxu0 0.0
        %2161 = vmatpush2.msra.mxu0 0.0
        %2162 = vmatprep.subr.mxu0 0.0
        %2163 = vmatpush2.msra.mxu0 0.0
        %2164 = vmatprep.subr.mxu0 0.0
        %2165 = vmatpush2.msra.mxu0 0.0
        %2166 = vmatprep.subr.mxu0 0.0
        %2167 = vmatpush2.msra.mxu0 0.0
        %2168 = vmatprep.subr.mxu0 0.0
        %2169 = vmatpush2.msra.mxu0 0.0
        %2170 = vmatprep.subr.mxu0 0.0
        %2171 = vmatpush2.msra.mxu0 0.0
        %2172 = vmatprep.subr.mxu0 0.0
        %2173 = vmatpush2.msra.mxu0 0.0
        %2174 = vmatprep.subr.mxu0 0.0
        %2175 = vmatpush2.msra.mxu0 0.0
        %2176 = vmatprep.subr.mxu0 0.0
        %2177 = vmatpush2.msra.mxu0 0.0
        %2178 = vmatprep.subr.mxu0 0.0
        %2179 = vmatpush2.msra.mxu0 0.0
        %2180 = vmatprep.subr.mxu0 0.0
        %2181 = vmatpush2.msra.mxu0 0.0
        %2182 = vmatprep.subr.mxu0 0.0
        %2183 = vmatpush2.msra.mxu0 0.0
        %2184 = vmatprep.mubr.f32.mxu0 0.0
        %2185 = vmatmul.mubr.f32.gmra.mxu0 %v2118
        %v2186 = vpop.f32.mrf.mxu0
        %v2187 = vadd.f32 0.0, %v2186
        %v2188 = vpop.f32.mrf.mxu0
        %2189 = vdwg.mxu0
        %s2190 = scalar_lea.vmem %s4, 32
        %v2191 = vld [vmem:[%s2190] sm:$0xff]
        %v2192 = vld [vmem:[%s2190 + $0x8] sm:$0xff]
        %s2193 = scalar_lea.vmem %s2, 288
        %v2194 = vld [vmem:[%s2193] sm:$0xff]
        %v2195 = vld [vmem:[%s2193 + $0x8] sm:$0xff]
        %v2196 = vld [vmem:[%s2193 + $0x10] sm:$0xff]
        %v2197 = vld [vmem:[%s2193 + $0x18] sm:$0xff]
        %s2198 = scalar_lea.vmem %s3, 9
        %v2199 = vld [vmem:[%s2198] sm:$0x1]
        %v2201 = vlaneseq
        %v2202 = vshrl.u32 %v2201, 7
        %v2203 = vsub.s32 0, %v2202
        %v2204 = vrot.slane %v2199, %v2203
        %2206 = vmatprep.subr.mxu0 0.0
        %2207 = vmatpush1.msra.mxu0 0.0
        %2208 = vmatprep.subr.mxu0 0.0
        %2209 = vmatpush1.msra.mxu0 0.0
        %2210 = vmatprep.subr.mxu0 0.0
        %2211 = vmatpush1.msra.mxu0 0.0
        %2212 = vmatprep.subr.mxu0 0.0
        %2213 = vmatpush1.msra.mxu0 0.0
        %2214 = vmatprep.subr.mxu0 0.0
        %2215 = vmatpush1.msra.mxu0 0.0
        %2216 = vmatprep.subr.mxu0 0.0
        %2217 = vmatpush1.msra.mxu0 0.0
        %2218 = vmatprep.subr.mxu0 0.0
        %2219 = vmatpush1.msra.mxu0 0.0
        %2220 = vmatprep.subr.mxu0 0.0
        %2221 = vmatpush1.msra.mxu0 0.0
        %2222 = vmatprep.subr.mxu0 0.0
        %2223 = vmatpush1.msra.mxu0 0.0
        %2224 = vmatprep.subr.mxu0 0.0
        %2225 = vmatpush1.msra.mxu0 0.0
        %2226 = vmatprep.subr.mxu0 0.0
        %2227 = vmatpush1.msra.mxu0 0.0
        %2228 = vmatprep.subr.mxu0 0.0
        %2229 = vmatpush1.msra.mxu0 0.0
        %2230 = vmatprep.subr.mxu0 0.0
        %2231 = vmatpush1.msra.mxu0 %v2197
        %2232 = vmatprep.subr.mxu0 0.0
        %2233 = vmatpush1.msra.mxu0 %v2196
        %2234 = vmatprep.subr.mxu0 0.0
        %2235 = vmatpush1.msra.mxu0 %v2195
        %2236 = vmatprep.subr.mxu0 0.0
        %2237 = vmatpush1.msra.mxu0 %v2194
        %2238 = vmatprep.subr.mxu0 0.0
        %2239 = vmatpush2.msra.mxu0 0.0
        %2240 = vmatprep.subr.mxu0 0.0
        %2241 = vmatpush2.msra.mxu0 0.0
        %2242 = vmatprep.subr.mxu0 0.0
        %2243 = vmatpush2.msra.mxu0 0.0
        %2244 = vmatprep.subr.mxu0 0.0
        %2245 = vmatpush2.msra.mxu0 0.0
        %2246 = vmatprep.subr.mxu0 0.0
        %2247 = vmatpush2.msra.mxu0 0.0
        %2248 = vmatprep.subr.mxu0 0.0
        %2249 = vmatpush2.msra.mxu0 0.0
        %2250 = vmatprep.subr.mxu0 0.0
        %2251 = vmatpush2.msra.mxu0 0.0
        %2252 = vmatprep.subr.mxu0 0.0
        %2253 = vmatpush2.msra.mxu0 0.0
        %2254 = vmatprep.subr.mxu0 0.0
        %2255 = vmatpush2.msra.mxu0 0.0
        %2256 = vmatprep.subr.mxu0 0.0
        %2257 = vmatpush2.msra.mxu0 0.0
        %2258 = vmatprep.subr.mxu0 0.0
        %2259 = vmatpush2.msra.mxu0 0.0
        %2260 = vmatprep.subr.mxu0 0.0
        %2261 = vmatpush2.msra.mxu0 0.0
        %2262 = vmatprep.subr.mxu0 0.0
        %2263 = vmatpush2.msra.mxu0 0.0
        %2264 = vmatprep.subr.mxu0 0.0
        %2265 = vmatpush2.msra.mxu0 0.0
        %2266 = vmatprep.subr.mxu0 0.0
        %2267 = vmatpush2.msra.mxu0 0.0
        %2268 = vmatprep.subr.mxu0 0.0
        %2269 = vmatpush2.msra.mxu0 0.0
        %2270 = vmatprep.mubr.f32.mxu0 0.0
        %2271 = vmatmul.mubr.f32.gmra.mxu0 %v1791
        %v2272 = vpop.f32.mrf.mxu0
        %v2273 = vadd.f32 %v2204, %v2272
        %v2274 = vpop.f32.mrf.mxu0
        %2275 = vdwg.mxu0
        %s2276 = scalar_lea.vmem %s2, 320
        %v2277 = vld [vmem:[%s2276] sm:$0xff]
        %v2278 = vld [vmem:[%s2276 + $0x8] sm:$0xff]
        %v2279 = vld [vmem:[%s2276 + $0x10] sm:$0xff]
        %v2280 = vld [vmem:[%s2276 + $0x18] sm:$0xff]
        %s2281 = scalar_lea.vmem %s3, 10
        %v2282 = vld [vmem:[%s2281] sm:$0x1]
        %v2284 = vlaneseq
        %v2285 = vshrl.u32 %v2284, 7
        %v2286 = vsub.s32 0, %v2285
        %v2287 = vrot.slane %v2282, %v2286
        %2289 = vmatprep.subr.mxu0 0.0
        %2290 = vmatpush1.msra.mxu0 0.0
        %2291 = vmatprep.subr.mxu0 0.0
        %2292 = vmatpush1.msra.mxu0 0.0
        %2293 = vmatprep.subr.mxu0 0.0
        %2294 = vmatpush1.msra.mxu0 0.0
        %2295 = vmatprep.subr.mxu0 0.0
        %2296 = vmatpush1.msra.mxu0 0.0
        %2297 = vmatprep.subr.mxu0 0.0
        %2298 = vmatpush1.msra.mxu0 0.0
        %2299 = vmatprep.subr.mxu0 0.0
        %2300 = vmatpush1.msra.mxu0 0.0
        %2301 = vmatprep.subr.mxu0 0.0
        %2302 = vmatpush1.msra.mxu0 0.0
        %2303 = vmatprep.subr.mxu0 0.0
        %2304 = vmatpush1.msra.mxu0 0.0
        %2305 = vmatprep.subr.mxu0 0.0
        %2306 = vmatpush1.msra.mxu0 0.0
        %2307 = vmatprep.subr.mxu0 0.0
        %2308 = vmatpush1.msra.mxu0 0.0
        %2309 = vmatprep.subr.mxu0 0.0
        %2310 = vmatpush1.msra.mxu0 0.0
        %2311 = vmatprep.subr.mxu0 0.0
        %2312 = vmatpush1.msra.mxu0 0.0
        %2313 = vmatprep.subr.mxu0 0.0
        %2314 = vmatpush1.msra.mxu0 %v2280
        %2315 = vmatprep.subr.mxu0 0.0
        %2316 = vmatpush1.msra.mxu0 %v2279
        %2317 = vmatprep.subr.mxu0 0.0
        %2318 = vmatpush1.msra.mxu0 %v2278
        %2319 = vmatprep.subr.mxu0 0.0
        %2320 = vmatpush1.msra.mxu0 %v2277
        %2321 = vmatprep.subr.mxu0 0.0
        %2322 = vmatpush2.msra.mxu0 0.0
        %2323 = vmatprep.subr.mxu0 0.0
        %2324 = vmatpush2.msra.mxu0 0.0
        %2325 = vmatprep.subr.mxu0 0.0
        %2326 = vmatpush2.msra.mxu0 0.0
        %2327 = vmatprep.subr.mxu0 0.0
        %2328 = vmatpush2.msra.mxu0 0.0
        %2329 = vmatprep.subr.mxu0 0.0
        %2330 = vmatpush2.msra.mxu0 0.0
        %2331 = vmatprep.subr.mxu0 0.0
        %2332 = vmatpush2.msra.mxu0 0.0
        %2333 = vmatprep.subr.mxu0 0.0
        %2334 = vmatpush2.msra.mxu0 0.0
        %2335 = vmatprep.subr.mxu0 0.0
        %2336 = vmatpush2.msra.mxu0 0.0
        %2337 = vmatprep.subr.mxu0 0.0
        %2338 = vmatpush2.msra.mxu0 0.0
        %2339 = vmatprep.subr.mxu0 0.0
        %2340 = vmatpush2.msra.mxu0 0.0
        %2341 = vmatprep.subr.mxu0 0.0
        %2342 = vmatpush2.msra.mxu0 0.0
        %2343 = vmatprep.subr.mxu0 0.0
        %2344 = vmatpush2.msra.mxu0 0.0
        %2345 = vmatprep.subr.mxu0 0.0
        %2346 = vmatpush2.msra.mxu0 0.0
        %2347 = vmatprep.subr.mxu0 0.0
        %2348 = vmatpush2.msra.mxu0 0.0
        %2349 = vmatprep.subr.mxu0 0.0
        %2350 = vmatpush2.msra.mxu0 0.0
        %2351 = vmatprep.subr.mxu0 0.0
        %2352 = vmatpush2.msra.mxu0 0.0
        %2353 = vmatprep.mubr.f32.mxu0 0.0
        %2354 = vmatmul.mubr.f32.gmra.mxu0 %v1791
        %v2355 = vpop.f32.mrf.mxu0
        %v2356 = vadd.f32 %v2287, %v2355
        %v2357 = vpop.f32.mrf.mxu0
        %2358 = vdwg.mxu0
        %s2359 = scalar_lea.vmem %s2, 352
        %v2360 = vld [vmem:[%s2359] sm:$0xff]
        %v2361 = vld [vmem:[%s2359 + $0x8] sm:$0xff]
        %v2362 = vld [vmem:[%s2359 + $0x10] sm:$0xff]
        %v2363 = vld [vmem:[%s2359 + $0x18] sm:$0xff]
        %s2364 = scalar_lea.vmem %s3, 11
        %v2365 = vld [vmem:[%s2364] sm:$0x1]
        %v2367 = vlaneseq
        %v2368 = vshrl.u32 %v2367, 7
        %v2369 = vsub.s32 0, %v2368
        %v2370 = vrot.slane %v2365, %v2369
        %2372 = vmatprep.subr.mxu0 0.0
        %2373 = vmatpush1.msra.mxu0 0.0
        %2374 = vmatprep.subr.mxu0 0.0
        %2375 = vmatpush1.msra.mxu0 0.0
        %2376 = vmatprep.subr.mxu0 0.0
        %2377 = vmatpush1.msra.mxu0 0.0
        %2378 = vmatprep.subr.mxu0 0.0
        %2379 = vmatpush1.msra.mxu0 0.0
        %2380 = vmatprep.subr.mxu0 0.0
        %2381 = vmatpush1.msra.mxu0 0.0
        %2382 = vmatprep.subr.mxu0 0.0
        %2383 = vmatpush1.msra.mxu0 0.0
        %2384 = vmatprep.subr.mxu0 0.0
        %2385 = vmatpush1.msra.mxu0 0.0
        %2386 = vmatprep.subr.mxu0 0.0
        %2387 = vmatpush1.msra.mxu0 0.0
        %2388 = vmatprep.subr.mxu0 0.0
        %2389 = vmatpush1.msra.mxu0 0.0
        %2390 = vmatprep.subr.mxu0 0.0
        %2391 = vmatpush1.msra.mxu0 0.0
        %2392 = vmatprep.subr.mxu0 0.0
        %2393 = vmatpush1.msra.mxu0 0.0
        %2394 = vmatprep.subr.mxu0 0.0
        %2395 = vmatpush1.msra.mxu0 0.0
        %2396 = vmatprep.subr.mxu0 0.0
        %2397 = vmatpush1.msra.mxu0 %v2363
        %2398 = vmatprep.subr.mxu0 0.0
        %2399 = vmatpush1.msra.mxu0 %v2362
        %2400 = vmatprep.subr.mxu0 0.0
        %2401 = vmatpush1.msra.mxu0 %v2361
        %2402 = vmatprep.subr.mxu0 0.0
        %2403 = vmatpush1.msra.mxu0 %v2360
        %2404 = vmatprep.subr.mxu0 0.0
        %2405 = vmatpush2.msra.mxu0 0.0
        %2406 = vmatprep.subr.mxu0 0.0
        %2407 = vmatpush2.msra.mxu0 0.0
        %2408 = vmatprep.subr.mxu0 0.0
        %2409 = vmatpush2.msra.mxu0 0.0
        %2410 = vmatprep.subr.mxu0 0.0
        %2411 = vmatpush2.msra.mxu0 0.0
        %2412 = vmatprep.subr.mxu0 0.0
        %2413 = vmatpush2.msra.mxu0 0.0
        %2414 = vmatprep.subr.mxu0 0.0
        %2415 = vmatpush2.msra.mxu0 0.0
        %2416 = vmatprep.subr.mxu0 0.0
        %2417 = vmatpush2.msra.mxu0 0.0
        %2418 = vmatprep.subr.mxu0 0.0
        %2419 = vmatpush2.msra.mxu0 0.0
        %2420 = vmatprep.subr.mxu0 0.0
        %2421 = vmatpush2.msra.mxu0 0.0
        %2422 = vmatprep.subr.mxu0 0.0
        %2423 = vmatpush2.msra.mxu0 0.0
        %2424 = vmatprep.subr.mxu0 0.0
        %2425 = vmatpush2.msra.mxu0 0.0
        %2426 = vmatprep.subr.mxu0 0.0
        %2427 = vmatpush2.msra.mxu0 0.0
        %2428 = vmatprep.subr.mxu0 0.0
        %2429 = vmatpush2.msra.mxu0 0.0
        %2430 = vmatprep.subr.mxu0 0.0
        %2431 = vmatpush2.msra.mxu0 0.0
        %2432 = vmatprep.subr.mxu0 0.0
        %2433 = vmatpush2.msra.mxu0 0.0
        %2434 = vmatprep.subr.mxu0 0.0
        %2435 = vmatpush2.msra.mxu0 0.0
        %2436 = vmatprep.mubr.f32.mxu0 0.0
        %2437 = vmatmul.mubr.f32.gmra.mxu0 %v1791
        %v2438 = vpop.f32.mrf.mxu0
        %v2439 = vadd.f32 %v2370, %v2438
        %v2440 = vpop.f32.mrf.mxu0
        %2441 = vdwg.mxu0
        %v2443 = vsel %vm808, %v2273, 0
        %v2446 = vsel %vm808, %v2356, 0
        %2448 = vmatprep.subr.mxu0 0.0
        %2449 = vmatpush1.xpose.msra.mxu0 0.0
        %2450 = vmatprep.subr.mxu0 0.0
        %2451 = vmatpush1.xpose.msra.mxu0 0.0
        %2452 = vmatprep.subr.mxu0 0.0
        %2453 = vmatpush1.xpose.msra.mxu0 0.0
        %2454 = vmatprep.subr.mxu0 0.0
        %2455 = vmatpush1.xpose.msra.mxu0 0.0
        %2456 = vmatprep.subr.mxu0 0.0
        %2457 = vmatpush1.xpose.msra.mxu0 0.0
        %2458 = vmatprep.subr.mxu0 0.0
        %2459 = vmatpush1.xpose.msra.mxu0 0.0
        %2460 = vmatprep.subr.mxu0 0.0
        %2461 = vmatpush1.xpose.msra.mxu0 0.0
        %2462 = vmatprep.subr.mxu0 0.0
        %2463 = vmatpush1.xpose.msra.mxu0 0.0
        %2464 = vmatprep.subr.mxu0 0.0
        %2465 = vmatpush1.xpose.msra.mxu0 0.0
        %2466 = vmatprep.subr.mxu0 0.0
        %2467 = vmatpush1.xpose.msra.mxu0 0.0
        %2468 = vmatprep.subr.mxu0 0.0
        %2469 = vmatpush1.xpose.msra.mxu0 0.0
        %2470 = vmatprep.subr.mxu0 0.0
        %2471 = vmatpush1.xpose.msra.mxu0 0.0
        %2472 = vmatprep.subr.mxu0 0.0
        %2473 = vmatpush1.xpose.msra.mxu0 0.0
        %2474 = vmatprep.subr.mxu0 0.0
        %2475 = vmatpush1.xpose.msra.mxu0 0.0
        %2476 = vmatprep.subr.mxu0 0.0
        %2477 = vmatpush1.xpose.msra.mxu0 0.0
        %2478 = vmatprep.subr.mxu0 0.0
        %2479 = vmatpush1.xpose.msra.mxu0 %v2446
        %2480 = vmatprep.subr.mxu0 0.0
        %2481 = vmatpush2.xpose.msra.mxu0 0.0
        %2482 = vmatprep.subr.mxu0 0.0
        %2483 = vmatpush2.xpose.msra.mxu0 0.0
        %2484 = vmatprep.subr.mxu0 0.0
        %2485 = vmatpush2.xpose.msra.mxu0 0.0
        %2486 = vmatprep.subr.mxu0 0.0
        %2487 = vmatpush2.xpose.msra.mxu0 0.0
        %2488 = vmatprep.subr.mxu0 0.0
        %2489 = vmatpush2.xpose.msra.mxu0 0.0
        %2490 = vmatprep.subr.mxu0 0.0
        %2491 = vmatpush2.xpose.msra.mxu0 0.0
        %2492 = vmatprep.subr.mxu0 0.0
        %2493 = vmatpush2.xpose.msra.mxu0 0.0
        %2494 = vmatprep.subr.mxu0 0.0
        %2495 = vmatpush2.xpose.msra.mxu0 0.0
        %2496 = vmatprep.subr.mxu0 0.0
        %2497 = vmatpush2.xpose.msra.mxu0 0.0
        %2498 = vmatprep.subr.mxu0 0.0
        %2499 = vmatpush2.xpose.msra.mxu0 0.0
        %2500 = vmatprep.subr.mxu0 0.0
        %2501 = vmatpush2.xpose.msra.mxu0 0.0
        %2502 = vmatprep.subr.mxu0 0.0
        %2503 = vmatpush2.xpose.msra.mxu0 0.0
        %2504 = vmatprep.subr.mxu0 0.0
        %2505 = vmatpush2.xpose.msra.mxu0 0.0
        %2506 = vmatprep.subr.mxu0 0.0
        %2507 = vmatpush2.xpose.msra.mxu0 0.0
        %2508 = vmatprep.subr.mxu0 0.0
        %2509 = vmatpush2.xpose.msra.mxu0 0.0
        %2510 = vmatprep.subr.mxu0 0.0
        %2511 = vmatpush2.xpose.msra.mxu0 0.0
        %2512 = vmatprep.mubr.f32.mxu0 0.0
        %2513 = vmatmul.mubr.f32.gmra.mxu0 %v2443
        %v2514 = vpop.f32.mrf.mxu0
        %v2515 = vadd.f32 0.0, %v2514
        %v2516 = vpop.f32.mrf.mxu0
        %2517 = vdwg.mxu0
        %v2518 = vmul.f32 %v2515, 0.25
        %v2519 = vsel %vm886, %v2518, -inf
        %2520 = vmax.xlane.f32.xlu0 %v2519
        %v2521 = vpop.xlane.xlu0 %2520
        %v2522 = vsub.f32 %v2518, %v2521
        %v2523 = vmul.f32 %v2522, 1.442695
        %v2524 = vpow.pop %v2523
        %v2525 = vsel %vm886, %v2524, 0.0
        %2526 = vadd.xlane.f32.xlu0 %v2525
        %v2527 = vpop.xlane.xlu0 %2526
        %v2528 = vrcp.pop %v2527
        %v2529 = vmul.f32 %v2524, %v2528
        %v2531 = vsel %vm886, %v2529, 0
        %2533 = vmatprep.subr.mxu0 0.0
        %2534 = vmatpush1.msra.mxu0 0.0
        %2535 = vmatprep.subr.mxu0 0.0
        %2536 = vmatpush1.msra.mxu0 0.0
        %2537 = vmatprep.subr.mxu0 0.0
        %2538 = vmatpush1.msra.mxu0 0.0
        %2539 = vmatprep.subr.mxu0 0.0
        %2540 = vmatpush1.msra.mxu0 0.0
        %2541 = vmatprep.subr.mxu0 0.0
        %2542 = vmatpush1.msra.mxu0 0.0
        %2543 = vmatprep.subr.mxu0 0.0
        %2544 = vmatpush1.msra.mxu0 0.0
        %2545 = vmatprep.subr.mxu0 0.0
        %2546 = vmatpush1.msra.mxu0 0.0
        %2547 = vmatprep.subr.mxu0 0.0
        %2548 = vmatpush1.msra.mxu0 0.0
        %2549 = vmatprep.subr.mxu0 0.0
        %2550 = vmatpush1.msra.mxu0 0.0
        %2551 = vmatprep.subr.mxu0 0.0
        %2552 = vmatpush1.msra.mxu0 0.0
        %2553 = vmatprep.subr.mxu0 0.0
        %2554 = vmatpush1.msra.mxu0 0.0
        %2555 = vmatprep.subr.mxu0 0.0
        %2556 = vmatpush1.msra.mxu0 0.0
        %2557 = vmatprep.subr.mxu0 0.0
        %2558 = vmatpush1.msra.mxu0 0.0
        %2559 = vmatprep.subr.mxu0 0.0
        %2560 = vmatpush1.msra.mxu0 0.0
        %2561 = vmatprep.subr.mxu0 0.0
        %2562 = vmatpush1.msra.mxu0 0.0
        %2563 = vmatprep.subr.mxu0 0.0
        %2564 = vmatpush1.msra.mxu0 %v2439
        %2565 = vmatprep.subr.mxu0 0.0
        %2566 = vmatpush2.msra.mxu0 0.0
        %2567 = vmatprep.subr.mxu0 0.0
        %2568 = vmatpush2.msra.mxu0 0.0
        %2569 = vmatprep.subr.mxu0 0.0
        %2570 = vmatpush2.msra.mxu0 0.0
        %2571 = vmatprep.subr.mxu0 0.0
        %2572 = vmatpush2.msra.mxu0 0.0
        %2573 = vmatprep.subr.mxu0 0.0
        %2574 = vmatpush2.msra.mxu0 0.0
        %2575 = vmatprep.subr.mxu0 0.0
        %2576 = vmatpush2.msra.mxu0 0.0
        %2577 = vmatprep.subr.mxu0 0.0
        %2578 = vmatpush2.msra.mxu0 0.0
        %2579 = vmatprep.subr.mxu0 0.0
        %2580 = vmatpush2.msra.mxu0 0.0
        %2581 = vmatprep.subr.mxu0 0.0
        %2582 = vmatpush2.msra.mxu0 0.0
        %2583 = vmatprep.subr.mxu0 0.0
        %2584 = vmatpush2.msra.mxu0 0.0
        %2585 = vmatprep.subr.mxu0 0.0
        %2586 = vmatpush2.msra.mxu0 0.0
        %2587 = vmatprep.subr.mxu0 0.0
        %2588 = vmatpush2.msra.mxu0 0.0
        %2589 = vmatprep.subr.mxu0 0.0
        %2590 = vmatpush2.msra.mxu0 0.0
        %2591 = vmatprep.subr.mxu0 0.0
        %2592 = vmatpush2.msra.mxu0 0.0
        %2593 = vmatprep.subr.mxu0 0.0
        %2594 = vmatpush2.msra.mxu0 0.0
        %2595 = vmatprep.subr.mxu0 0.0
        %2596 = vmatpush2.msra.mxu0 0.0
        %2597 = vmatprep.mubr.f32.mxu0 0.0
        %2598 = vmatmul.mubr.f32.gmra.mxu0 %v2531
        %v2599 = vpop.f32.mrf.mxu0
        %v2600 = vadd.f32 0.0, %v2599
        %v2601 = vpop.f32.mrf.mxu0
        %2602 = vdwg.mxu0
        %s2603 = scalar_lea.vmem %s4, 48
        %v2604 = vld [vmem:[%s2603] sm:$0xff]
        %v2605 = vld [vmem:[%s2603 + $0x8] sm:$0xff]
        %v2607 = vsel %vm808, %v2600, 0
        %2609 = vmatprep.subr.mxu0 0.0
        %2610 = vmatpush1.msra.mxu0 0.0
        %2611 = vmatprep.subr.mxu0 0.0
        %2612 = vmatpush1.msra.mxu0 0.0
        %2613 = vmatprep.subr.mxu0 0.0
        %2614 = vmatpush1.msra.mxu0 0.0
        %2615 = vmatprep.subr.mxu0 0.0
        %2616 = vmatpush1.msra.mxu0 0.0
        %2617 = vmatprep.subr.mxu0 0.0
        %2618 = vmatpush1.msra.mxu0 0.0
        %2619 = vmatprep.subr.mxu0 0.0
        %2620 = vmatpush1.msra.mxu0 0.0
        %2621 = vmatprep.subr.mxu0 0.0
        %2622 = vmatpush1.msra.mxu0 0.0
        %2623 = vmatprep.subr.mxu0 0.0
        %2624 = vmatpush1.msra.mxu0 0.0
        %2625 = vmatprep.subr.mxu0 0.0
        %2626 = vmatpush1.msra.mxu0 0.0
        %2627 = vmatprep.subr.mxu0 0.0
        %2628 = vmatpush1.msra.mxu0 0.0
        %2629 = vmatprep.subr.mxu0 0.0
        %2630 = vmatpush1.msra.mxu0 0.0
        %2631 = vmatprep.subr.mxu0 0.0
        %2632 = vmatpush1.msra.mxu0 0.0
        %2633 = vmatprep.subr.mxu0 0.0
        %2634 = vmatpush1.msra.mxu0 0.0
        %2635 = vmatprep.subr.mxu0 0.0
        %2636 = vmatpush1.msra.mxu0 0.0
        %2637 = vmatprep.subr.mxu0 0.0
        %2638 = vmatpush1.msra.mxu0 %v2605
        %2639 = vmatprep.subr.mxu0 0.0
        %2640 = vmatpush1.msra.mxu0 %v2604
        %2641 = vmatprep.subr.mxu0 0.0
        %2642 = vmatpush2.msra.mxu0 0.0
        %2643 = vmatprep.subr.mxu0 0.0
        %2644 = vmatpush2.msra.mxu0 0.0
        %2645 = vmatprep.subr.mxu0 0.0
        %2646 = vmatpush2.msra.mxu0 0.0
        %2647 = vmatprep.subr.mxu0 0.0
        %2648 = vmatpush2.msra.mxu0 0.0
        %2649 = vmatprep.subr.mxu0 0.0
        %2650 = vmatpush2.msra.mxu0 0.0
        %2651 = vmatprep.subr.mxu0 0.0
        %2652 = vmatpush2.msra.mxu0 0.0
        %2653 = vmatprep.subr.mxu0 0.0
        %2654 = vmatpush2.msra.mxu0 0.0
        %2655 = vmatprep.subr.mxu0 0.0
        %2656 = vmatpush2.msra.mxu0 0.0
        %2657 = vmatprep.subr.mxu0 0.0
        %2658 = vmatpush2.msra.mxu0 0.0
        %2659 = vmatprep.subr.mxu0 0.0
        %2660 = vmatpush2.msra.mxu0 0.0
        %2661 = vmatprep.subr.mxu0 0.0
        %2662 = vmatpush2.msra.mxu0 0.0
        %2663 = vmatprep.subr.mxu0 0.0
        %2664 = vmatpush2.msra.mxu0 0.0
        %2665 = vmatprep.subr.mxu0 0.0
        %2666 = vmatpush2.msra.mxu0 0.0
        %2667 = vmatprep.subr.mxu0 0.0
        %2668 = vmatpush2.msra.mxu0 0.0
        %2669 = vmatprep.subr.mxu0 0.0
        %2670 = vmatpush2.msra.mxu0 0.0
        %2671 = vmatprep.subr.mxu0 0.0
        %2672 = vmatpush2.msra.mxu0 0.0
        %2673 = vmatprep.mubr.f32.mxu0 0.0
        %2674 = vmatmul.mubr.f32.gmra.mxu0 %v2607
        %v2675 = vpop.f32.mrf.mxu0
        %v2676 = vadd.f32 0.0, %v2675
        %v2677 = vpop.f32.mrf.mxu0
        %2678 = vdwg.mxu0
        %v2680 = vsel %vm808, %v2187, 0
        %2682 = vmatprep.subr.mxu0 0.0
        %2683 = vmatpush1.msra.mxu0 0.0
        %2684 = vmatprep.subr.mxu0 0.0
        %2685 = vmatpush1.msra.mxu0 0.0
        %2686 = vmatprep.subr.mxu0 0.0
        %2687 = vmatpush1.msra.mxu0 0.0
        %2688 = vmatprep.subr.mxu0 0.0
        %2689 = vmatpush1.msra.mxu0 0.0
        %2690 = vmatprep.subr.mxu0 0.0
        %2691 = vmatpush1.msra.mxu0 0.0
        %2692 = vmatprep.subr.mxu0 0.0
        %2693 = vmatpush1.msra.mxu0 0.0
        %2694 = vmatprep.subr.mxu0 0.0
        %2695 = vmatpush1.msra.mxu0 0.0
        %2696 = vmatprep.subr.mxu0 0.0
        %2697 = vmatpush1.msra.mxu0 0.0
        %2698 = vmatprep.subr.mxu0 0.0
        %2699 = vmatpush1.msra.mxu0 0.0
        %2700 = vmatprep.subr.mxu0 0.0
        %2701 = vmatpush1.msra.mxu0 0.0
        %2702 = vmatprep.subr.mxu0 0.0
        %2703 = vmatpush1.msra.mxu0 0.0
        %2704 = vmatprep.subr.mxu0 0.0
        %2705 = vmatpush1.msra.mxu0 0.0
        %2706 = vmatprep.subr.mxu0 0.0
        %2707 = vmatpush1.msra.mxu0 0.0
        %2708 = vmatprep.subr.mxu0 0.0
        %2709 = vmatpush1.msra.mxu0 0.0
        %2710 = vmatprep.subr.mxu0 0.0
        %2711 = vmatpush1.msra.mxu0 %v2192
        %2712 = vmatprep.subr.mxu0 0.0
        %2713 = vmatpush1.msra.mxu0 %v2191
        %2714 = vmatprep.subr.mxu0 0.0
        %2715 = vmatpush2.msra.mxu0 0.0
        %2716 = vmatprep.subr.mxu0 0.0
        %2717 = vmatpush2.msra.mxu0 0.0
        %2718 = vmatprep.subr.mxu0 0.0
        %2719 = vmatpush2.msra.mxu0 0.0
        %2720 = vmatprep.subr.mxu0 0.0
        %2721 = vmatpush2.msra.mxu0 0.0
        %2722 = vmatprep.subr.mxu0 0.0
        %2723 = vmatpush2.msra.mxu0 0.0
        %2724 = vmatprep.subr.mxu0 0.0
        %2725 = vmatpush2.msra.mxu0 0.0
        %2726 = vmatprep.subr.mxu0 0.0
        %2727 = vmatpush2.msra.mxu0 0.0
        %2728 = vmatprep.subr.mxu0 0.0
        %2729 = vmatpush2.msra.mxu0 0.0
        %2730 = vmatprep.subr.mxu0 0.0
        %2731 = vmatpush2.msra.mxu0 0.0
        %2732 = vmatprep.subr.mxu0 0.0
        %2733 = vmatpush2.msra.mxu0 0.0
        %2734 = vmatprep.subr.mxu0 0.0
        %2735 = vmatpush2.msra.mxu0 0.0
        %2736 = vmatprep.subr.mxu0 0.0
        %2737 = vmatpush2.msra.mxu0 0.0
        %2738 = vmatprep.subr.mxu0 0.0
        %2739 = vmatpush2.msra.mxu0 0.0
        %2740 = vmatprep.subr.mxu0 0.0
        %2741 = vmatpush2.msra.mxu0 0.0
        %2742 = vmatprep.subr.mxu0 0.0
        %2743 = vmatpush2.msra.mxu0 0.0
        %2744 = vmatprep.subr.mxu0 0.0
        %2745 = vmatpush2.msra.mxu0 0.0
        %2746 = vmatprep.mubr.f32.mxu0 0.0
        %2747 = vmatmul.mubr.f32.gmra.mxu0 %v2680
        %v2748 = vpop.f32.mrf.mxu0
        %v2749 = vadd.f32 %v2676, %v2748
        %v2750 = vpop.f32.mrf.mxu0
        %2751 = vdwg.mxu0
        %s2752 = scalar_lea.vmem %s5, 1
        %v2753 = vld [vmem:[%s2752] sm:$0x1]
        %v2755 = vlaneseq
        %v2756 = vshrl.u32 %v2755, 7
        %v2757 = vsub.s32 0, %v2756
        %v2758 = vrot.slane %v2753, %v2757
        %v2760 = vadd.f32 %v2749, %v2758
        %v2761 = vadd.f32 %v1776, %v2760
        %v2762 = vsel %vm568, %v2761, 0.0
        %2763 = vadd.xlane.f32.xlu0 %v2762
        %v2764 = vpop.xlane.xlu0 %2763
        %v2765 = vmul.f32 %v2764, %v1544
        %v2766 = vsub.f32 %v2761, %v2765
        %v2767 = vmul.f32 %v2766, %v2766
        %v2768 = vsel %vm568, %v2767, 0.0
        %2769 = vadd.xlane.f32.xlu0 %v2768
        %v2770 = vpop.xlane.xlu0 %2769
        %v2771 = vmul.f32 %v2770, %v1544
        %v2772 = vadd.f32 %v2771, 1e-05
        %v2773 = vrsqrt.pop %v2772
        %v2774 = vmul.f32 %v2766, %v2773
        %s2775 = scalar_lea.vmem %s10, 2
        %v2776 = vld [vmem:[%s2775] sm:$0x1]
        %v2778 = vlaneseq
        %v2779 = vshrl.u32 %v2778, 7
        %v2780 = vsub.s32 0, %v2779
        %v2781 = vrot.slane %v2776, %v2780
        %v2783 = vmul.f32 %v2774, %v2781
        %s2784 = scalar_lea.vmem %s11, 2
        %v2785 = vld [vmem:[%s2784] sm:$0x1]
        %v2787 = vlaneseq
        %v2788 = vshrl.u32 %v2787, 7
        %v2789 = vsub.s32 0, %v2788
        %v2790 = vrot.slane %v2785, %v2789
        %v2792 = vadd.f32 %v2783, %v2790
        %s2793 = scalar_lea.vmem %s6, 32
        %v2794 = vld [vmem:[%s2793] sm:$0xff]
        %v2795 = vld [vmem:[%s2793 + $0x8] sm:$0xff]
        %v2796 = vld [vmem:[%s2793 + $0x10] sm:$0xff]
        %v2797 = vld [vmem:[%s2793 + $0x18] sm:$0xff]
        %s2798 = scalar_lea.vmem %s7, 1
        %v2799 = vld [vmem:[%s2798] sm:$0x1]
        %v2801 = vlaneseq
        %v2802 = vshrl.u32 %v2801, 7
        %v2803 = vsub.s32 0, %v2802
        %v2804 = vrot.slane %v2799, %v2803
        %v2807 = vsel %vm568, %v2792, 0
        %2809 = vmatprep.subr.mxu0 0.0
        %2810 = vmatpush1.msra.mxu0 0.0
        %2811 = vmatprep.subr.mxu0 0.0
        %2812 = vmatpush1.msra.mxu0 0.0
        %2813 = vmatprep.subr.mxu0 0.0
        %2814 = vmatpush1.msra.mxu0 0.0
        %2815 = vmatprep.subr.mxu0 0.0
        %2816 = vmatpush1.msra.mxu0 0.0
        %2817 = vmatprep.subr.mxu0 0.0
        %2818 = vmatpush1.msra.mxu0 0.0
        %2819 = vmatprep.subr.mxu0 0.0
        %2820 = vmatpush1.msra.mxu0 0.0
        %2821 = vmatprep.subr.mxu0 0.0
        %2822 = vmatpush1.msra.mxu0 0.0
        %2823 = vmatprep.subr.mxu0 0.0
        %2824 = vmatpush1.msra.mxu0 0.0
        %2825 = vmatprep.subr.mxu0 0.0
        %2826 = vmatpush1.msra.mxu0 0.0
        %2827 = vmatprep.subr.mxu0 0.0
        %2828 = vmatpush1.msra.mxu0 0.0
        %2829 = vmatprep.subr.mxu0 0.0
        %2830 = vmatpush1.msra.mxu0 0.0
        %2831 = vmatprep.subr.mxu0 0.0
        %2832 = vmatpush1.msra.mxu0 0.0
        %2833 = vmatprep.subr.mxu0 0.0
        %2834 = vmatpush1.msra.mxu0 %v2797
        %2835 = vmatprep.subr.mxu0 0.0
        %2836 = vmatpush1.msra.mxu0 %v2796
        %2837 = vmatprep.subr.mxu0 0.0
        %2838 = vmatpush1.msra.mxu0 %v2795
        %2839 = vmatprep.subr.mxu0 0.0
        %2840 = vmatpush1.msra.mxu0 %v2794
        %2841 = vmatprep.subr.mxu0 0.0
        %2842 = vmatpush2.msra.mxu0 0.0
        %2843 = vmatprep.subr.mxu0 0.0
        %2844 = vmatpush2.msra.mxu0 0.0
        %2845 = vmatprep.subr.mxu0 0.0
        %2846 = vmatpush2.msra.mxu0 0.0
        %2847 = vmatprep.subr.mxu0 0.0
        %2848 = vmatpush2.msra.mxu0 0.0
        %2849 = vmatprep.subr.mxu0 0.0
        %2850 = vmatpush2.msra.mxu0 0.0
        %2851 = vmatprep.subr.mxu0 0.0
        %2852 = vmatpush2.msra.mxu0 0.0
        %2853 = vmatprep.subr.mxu0 0.0
        %2854 = vmatpush2.msra.mxu0 0.0
        %2855 = vmatprep.subr.mxu0 0.0
        %2856 = vmatpush2.msra.mxu0 0.0
        %2857 = vmatprep.subr.mxu0 0.0
        %2858 = vmatpush2.msra.mxu0 0.0
        %2859 = vmatprep.subr.mxu0 0.0
        %2860 = vmatpush2.msra.mxu0 0.0
        %2861 = vmatprep.subr.mxu0 0.0
        %2862 = vmatpush2.msra.mxu0 0.0
        %2863 = vmatprep.subr.mxu0 0.0
        %2864 = vmatpush2.msra.mxu0 0.0
        %2865 = vmatprep.subr.mxu0 0.0
        %2866 = vmatpush2.msra.mxu0 0.0
        %2867 = vmatprep.subr.mxu0 0.0
        %2868 = vmatpush2.msra.mxu0 0.0
        %2869 = vmatprep.subr.mxu0 0.0
        %2870 = vmatpush2.msra.mxu0 0.0
        %2871 = vmatprep.subr.mxu0 0.0
        %2872 = vmatpush2.msra.mxu0 0.0
        %2873 = vmatprep.mubr.f32.mxu0 0.0
        %2874 = vmatmul.mubr.f32.gmra.mxu0 %v2807
        %v2875 = vpop.f32.mrf.mxu0
        %v2876 = vadd.f32 %v2804, %v2875
        %v2877 = vpop.f32.mrf.mxu0
        %2878 = vdwg.mxu0
        %v2879 = vmax.f32 %v2876, 0.0
        %s2880 = scalar_lea.vmem %s8, 64
        %v2881 = vld [vmem:[%s2880] sm:$0xff]
        %v2882 = vld [vmem:[%s2880 + $0x8] sm:$0xff]
        %v2883 = vld [vmem:[%s2880 + $0x10] sm:$0xff]
        %v2884 = vld [vmem:[%s2880 + $0x18] sm:$0xff]
        %v2885 = vld [vmem:[%s2880 + $0x20] sm:$0xff]
        %v2886 = vld [vmem:[%s2880 + $0x28] sm:$0xff]
        %v2887 = vld [vmem:[%s2880 + $0x30] sm:$0xff]
        %v2888 = vld [vmem:[%s2880 + $0x38] sm:$0xff]
        %s2889 = scalar_lea.vmem %s9, 1
        %v2890 = vld [vmem:[%s2889] sm:$0x1]
        %v2892 = vlaneseq
        %v2893 = vshrl.u32 %v2892, 7
        %v2894 = vsub.s32 0, %v2893
        %v2895 = vrot.slane %v2890, %v2894
        %v2898 = vsel %vm1671, %v2879, 0
        %2900 = vmatprep.subr.mxu0 0.0
        %2901 = vmatpush1.msra.mxu0 0.0
        %2902 = vmatprep.subr.mxu0 0.0
        %2903 = vmatpush1.msra.mxu0 0.0
        %2904 = vmatprep.subr.mxu0 0.0
        %2905 = vmatpush1.msra.mxu0 0.0
        %2906 = vmatprep.subr.mxu0 0.0
        %2907 = vmatpush1.msra.mxu0 0.0
        %2908 = vmatprep.subr.mxu0 0.0
        %2909 = vmatpush1.msra.mxu0 0.0
        %2910 = vmatprep.subr.mxu0 0.0
        %2911 = vmatpush1.msra.mxu0 0.0
        %2912 = vmatprep.subr.mxu0 0.0
        %2913 = vmatpush1.msra.mxu0 0.0
        %2914 = vmatprep.subr.mxu0 0.0
        %2915 = vmatpush1.msra.mxu0 0.0
        %2916 = vmatprep.subr.mxu0 0.0
        %2917 = vmatpush1.msra.mxu0 %v2888
        %2918 = vmatprep.subr.mxu0 0.0
        %2919 = vmatpush1.msra.mxu0 %v2887
        %2920 = vmatprep.subr.mxu0 0.0
        %2921 = vmatpush1.msra.mxu0 %v2886
        %2922 = vmatprep.subr.mxu0 0.0
        %2923 = vmatpush1.msra.mxu0 %v2885
        %2924 = vmatprep.subr.mxu0 0.0
        %2925 = vmatpush1.msra.mxu0 %v2884
        %2926 = vmatprep.subr.mxu0 0.0
        %2927 = vmatpush1.msra.mxu0 %v2883
        %2928 = vmatprep.subr.mxu0 0.0
        %2929 = vmatpush1.msra.mxu0 %v2882
        %2930 = vmatprep.subr.mxu0 0.0
        %2931 = vmatpush1.msra.mxu0 %v2881
        %2932 = vmatprep.subr.mxu0 0.0
        %2933 = vmatpush2.msra.mxu0 0.0
        %2934 = vmatprep.subr.mxu0 0.0
        %2935 = vmatpush2.msra.mxu0 0.0
        %2936 = vmatprep.subr.mxu0 0.0
        %2937 = vmatpush2.msra.mxu0 0.0
        %2938 = vmatprep.subr.mxu0 0.0
        %2939 = vmatpush2.msra.mxu0 0.0
        %2940 = vmatprep.subr.mxu0 0.0
        %2941 = vmatpush2.msra.mxu0 0.0
        %2942 = vmatprep.subr.mxu0 0.0
        %2943 = vmatpush2.msra.mxu0 0.0
        %2944 = vmatprep.subr.mxu0 0.0
        %2945 = vmatpush2.msra.mxu0 0.0
        %2946 = vmatprep.subr.mxu0 0.0
        %2947 = vmatpush2.msra.mxu0 0.0
        %2948 = vmatprep.subr.mxu0 0.0
        %2949 = vmatpush2.msra.mxu0 0.0
        %2950 = vmatprep.subr.mxu0 0.0
        %2951 = vmatpush2.msra.mxu0 0.0
        %2952 = vmatprep.subr.mxu0 0.0
        %2953 = vmatpush2.msra.mxu0 0.0
        %2954 = vmatprep.subr.mxu0 0.0
        %2955 = vmatpush2.msra.mxu0 0.0
        %2956 = vmatprep.subr.mxu0 0.0
        %2957 = vmatpush2.msra.mxu0 0.0
        %2958 = vmatprep.subr.mxu0 0.0
        %2959 = vmatpush2.msra.mxu0 0.0
        %2960 = vmatprep.subr.mxu0 0.0
        %2961 = vmatpush2.msra.mxu0 0.0
        %2962 = vmatprep.subr.mxu0 0.0
        %2963 = vmatpush2.msra.mxu0 0.0
        %2964 = vmatprep.mubr.f32.mxu0 0.0
        %2965 = vmatmul.mubr.f32.gmra.mxu0 %v2898
        %v2966 = vpop.f32.mrf.mxu0
        %v2967 = vadd.f32 %v2895, %v2966
        %v2968 = vpop.f32.mrf.mxu0
        %2969 = vdwg.mxu0
        %v2970 = vadd.f32 %v2792, %v2967
        %v2971 = vsel %vm568, %v2970, 0.0
        %2972 = vadd.xlane.f32.xlu0 %v2971
        %v2973 = vpop.xlane.xlu0 %2972
        %v2974 = vmul.f32 %v2973, %v1544
        %v2975 = vsub.f32 %v2970, %v2974
        %v2976 = vmul.f32 %v2975, %v2975
        %v2977 = vsel %vm568, %v2976, 0.0
        %2978 = vadd.xlane.f32.xlu0 %v2977
        %v2979 = vpop.xlane.xlu0 %2978
        %v2980 = vmul.f32 %v2979, %v1544
        %v2981 = vadd.f32 %v2980, 1e-05
        %v2982 = vrsqrt.pop %v2981
        %v2983 = vmul.f32 %v2975, %v2982
        %s2984 = scalar_lea.vmem %s10, 3
        %v2985 = vld [vmem:[%s2984] sm:$0x1]
        %v2987 = vlaneseq
        %v2988 = vshrl.u32 %v2987, 7
        %v2989 = vsub.s32 0, %v2988
        %v2990 = vrot.slane %v2985, %v2989
        %v2992 = vmul.f32 %v2983, %v2990
        %s2993 = scalar_lea.vmem %s11, 3
        %v2994 = vld [vmem:[%s2993] sm:$0x1]
        %v2996 = vlaneseq
        %v2997 = vshrl.u32 %v2996, 7
        %v2998 = vsub.s32 0, %v2997
        %v2999 = vrot.slane %v2994, %v2998
        %v3001 = vadd.f32 %v2992, %v2999
        %v3002 = vsel %vm568, %v3001, 0.0
        %3003 = vadd.xlane.f32.xlu0 %v3002
        %v3004 = vpop.xlane.xlu0 %3003
        %v3005 = vmul.f32 %v3004, %v1544
        %v3006 = vsub.f32 %v3001, %v3005
        %v3007 = vmul.f32 %v3006, %v3006
        %v3008 = vsel %vm568, %v3007, 0.0
        %3009 = vadd.xlane.f32.xlu0 %v3008
        %v3010 = vpop.xlane.xlu0 %3009
        %v3011 = vmul.f32 %v3010, %v1544
        %v3012 = vadd.f32 %v3011, 1e-05
        %v3013 = vrsqrt.pop %v3012
        %v3014 = vmul.f32 %v3006, %v3013
        %s3015 = scalar_lea.vmem %s10, 4
        %v3016 = vld [vmem:[%s3015] sm:$0x1]
        %v3018 = vlaneseq
        %v3019 = vshrl.u32 %v3018, 7
        %v3020 = vsub.s32 0, %v3019
        %v3021 = vrot.slane %v3016, %v3020
        %v3023 = vmul.f32 %v3014, %v3021
        %s3024 = scalar_lea.vmem %s11, 4
        %v3025 = vld [vmem:[%s3024] sm:$0x1]
        %v3027 = vlaneseq
        %v3028 = vshrl.u32 %v3027, 7
        %v3029 = vsub.s32 0, %v3028
        %v3030 = vrot.slane %v3025, %v3029
        %v3032 = vadd.f32 %v3023, %v3030
        %s3033 = scalar_lea.vmem %s2, 384
        %v3034 = vld [vmem:[%s3033] sm:$0xff]
        %v3035 = vld [vmem:[%s3033 + $0x8] sm:$0xff]
        %v3036 = vld [vmem:[%s3033 + $0x10] sm:$0xff]
        %v3037 = vld [vmem:[%s3033 + $0x18] sm:$0xff]
        %s3038 = scalar_lea.vmem %s3, 12
        %v3039 = vld [vmem:[%s3038] sm:$0x1]
        %v3041 = vlaneseq
        %v3042 = vshrl.u32 %v3041, 7
        %v3043 = vsub.s32 0, %v3042
        %v3044 = vrot.slane %v3039, %v3043
        %3046 = vmatprep.subr.mxu0 0.0
        %3047 = vmatpush1.msra.mxu0 0.0
        %3048 = vmatprep.subr.mxu0 0.0
        %3049 = vmatpush1.msra.mxu0 0.0
        %3050 = vmatprep.subr.mxu0 0.0
        %3051 = vmatpush1.msra.mxu0 0.0
        %3052 = vmatprep.subr.mxu0 0.0
        %3053 = vmatpush1.msra.mxu0 0.0
        %3054 = vmatprep.subr.mxu0 0.0
        %3055 = vmatpush1.msra.mxu0 0.0
        %3056 = vmatprep.subr.mxu0 0.0
        %3057 = vmatpush1.msra.mxu0 0.0
        %3058 = vmatprep.subr.mxu0 0.0
        %3059 = vmatpush1.msra.mxu0 0.0
        %3060 = vmatprep.subr.mxu0 0.0
        %3061 = vmatpush1.msra.mxu0 0.0
        %3062 = vmatprep.subr.mxu0 0.0
        %3063 = vmatpush1.msra.mxu0 0.0
        %3064 = vmatprep.subr.mxu0 0.0
        %3065 = vmatpush1.msra.mxu0 0.0
        %3066 = vmatprep.subr.mxu0 0.0
        %3067 = vmatpush1.msra.mxu0 0.0
        %3068 = vmatprep.subr.mxu0 0.0
        %3069 = vmatpush1.msra.mxu0 0.0
        %3070 = vmatprep.subr.mxu0 0.0
        %3071 = vmatpush1.msra.mxu0 %v3037
        %3072 = vmatprep.subr.mxu0 0.0
        %3073 = vmatpush1.msra.mxu0 %v3036
        %3074 = vmatprep.subr.mxu0 0.0
        %3075 = vmatpush1.msra.mxu0 %v3035
        %3076 = vmatprep.subr.mxu0 0.0
        %3077 = vmatpush1.msra.mxu0 %v3034
        %3078 = vmatprep.subr.mxu0 0.0
        %3079 = vmatpush2.msra.mxu0 0.0
        %3080 = vmatprep.subr.mxu0 0.0
        %3081 = vmatpush2.msra.mxu0 0.0
        %3082 = vmatprep.subr.mxu0 0.0
        %3083 = vmatpush2.msra.mxu0 0.0
        %3084 = vmatprep.subr.mxu0 0.0
        %3085 = vmatpush2.msra.mxu0 0.0
        %3086 = vmatprep.subr.mxu0 0.0
        %3087 = vmatpush2.msra.mxu0 0.0
        %3088 = vmatprep.subr.mxu0 0.0
        %3089 = vmatpush2.msra.mxu0 0.0
        %3090 = vmatprep.subr.mxu0 0.0
        %3091 = vmatpush2.msra.mxu0 0.0
        %3092 = vmatprep.subr.mxu0 0.0
        %3093 = vmatpush2.msra.mxu0 0.0
        %3094 = vmatprep.subr.mxu0 0.0
        %3095 = vmatpush2.msra.mxu0 0.0
        %3096 = vmatprep.subr.mxu0 0.0
        %3097 = vmatpush2.msra.mxu0 0.0
        %3098 = vmatprep.subr.mxu0 0.0
        %3099 = vmatpush2.msra.mxu0 0.0
        %3100 = vmatprep.subr.mxu0 0.0
        %3101 = vmatpush2.msra.mxu0 0.0
        %3102 = vmatprep.subr.mxu0 0.0
        %3103 = vmatpush2.msra.mxu0 0.0
        %3104 = vmatprep.subr.mxu0 0.0
        %3105 = vmatpush2.msra.mxu0 0.0
        %3106 = vmatprep.subr.mxu0 0.0
        %3107 = vmatpush2.msra.mxu0 0.0
        %3108 = vmatprep.subr.mxu0 0.0
        %3109 = vmatpush2.msra.mxu0 0.0
        %3110 = vmatprep.mubr.f32.mxu0 0.0
        %3111 = vmatmul.mubr.f32.gmra.mxu0 %v570
        %v3112 = vpop.f32.mrf.mxu0
        %v3113 = vadd.f32 %v3044, %v3112
        %v3114 = vpop.f32.mrf.mxu0
        %3115 = vdwg.mxu0
        %s3116 = scalar_lea.vmem %s2, 416
        %v3117 = vld [vmem:[%s3116] sm:$0xff]
        %v3118 = vld [vmem:[%s3116 + $0x8] sm:$0xff]
        %v3119 = vld [vmem:[%s3116 + $0x10] sm:$0xff]
        %v3120 = vld [vmem:[%s3116 + $0x18] sm:$0xff]
        %s3121 = scalar_lea.vmem %s3, 13
        %v3122 = vld [vmem:[%s3121] sm:$0x1]
        %v3124 = vlaneseq
        %v3125 = vshrl.u32 %v3124, 7
        %v3126 = vsub.s32 0, %v3125
        %v3127 = vrot.slane %v3122, %v3126
        %3129 = vmatprep.subr.mxu0 0.0
        %3130 = vmatpush1.msra.mxu0 0.0
        %3131 = vmatprep.subr.mxu0 0.0
        %3132 = vmatpush1.msra.mxu0 0.0
        %3133 = vmatprep.subr.mxu0 0.0
        %3134 = vmatpush1.msra.mxu0 0.0
        %3135 = vmatprep.subr.mxu0 0.0
        %3136 = vmatpush1.msra.mxu0 0.0
        %3137 = vmatprep.subr.mxu0 0.0
        %3138 = vmatpush1.msra.mxu0 0.0
        %3139 = vmatprep.subr.mxu0 0.0
        %3140 = vmatpush1.msra.mxu0 0.0
        %3141 = vmatprep.subr.mxu0 0.0
        %3142 = vmatpush1.msra.mxu0 0.0
        %3143 = vmatprep.subr.mxu0 0.0
        %3144 = vmatpush1.msra.mxu0 0.0
        %3145 = vmatprep.subr.mxu0 0.0
        %3146 = vmatpush1.msra.mxu0 0.0
        %3147 = vmatprep.subr.mxu0 0.0
        %3148 = vmatpush1.msra.mxu0 0.0
        %3149 = vmatprep.subr.mxu0 0.0
        %3150 = vmatpush1.msra.mxu0 0.0
        %3151 = vmatprep.subr.mxu0 0.0
        %3152 = vmatpush1.msra.mxu0 0.0
        %3153 = vmatprep.subr.mxu0 0.0
        %3154 = vmatpush1.msra.mxu0 %v3120
        %3155 = vmatprep.subr.mxu0 0.0
        %3156 = vmatpush1.msra.mxu0 %v3119
        %3157 = vmatprep.subr.mxu0 0.0
        %3158 = vmatpush1.msra.mxu0 %v3118
        %3159 = vmatprep.subr.mxu0 0.0
        %3160 = vmatpush1.msra.mxu0 %v3117
        %3161 = vmatprep.subr.mxu0 0.0
        %3162 = vmatpush2.msra.mxu0 0.0
        %3163 = vmatprep.subr.mxu0 0.0
        %3164 = vmatpush2.msra.mxu0 0.0
        %3165 = vmatprep.subr.mxu0 0.0
        %3166 = vmatpush2.msra.mxu0 0.0
        %3167 = vmatprep.subr.mxu0 0.0
        %3168 = vmatpush2.msra.mxu0 0.0
        %3169 = vmatprep.subr.mxu0 0.0
        %3170 = vmatpush2.msra.mxu0 0.0
        %3171 = vmatprep.subr.mxu0 0.0
        %3172 = vmatpush2.msra.mxu0 0.0
        %3173 = vmatprep.subr.mxu0 0.0
        %3174 = vmatpush2.msra.mxu0 0.0
        %3175 = vmatprep.subr.mxu0 0.0
        %3176 = vmatpush2.msra.mxu0 0.0
        %3177 = vmatprep.subr.mxu0 0.0
        %3178 = vmatpush2.msra.mxu0 0.0
        %3179 = vmatprep.subr.mxu0 0.0
        %3180 = vmatpush2.msra.mxu0 0.0
        %3181 = vmatprep.subr.mxu0 0.0
        %3182 = vmatpush2.msra.mxu0 0.0
        %3183 = vmatprep.subr.mxu0 0.0
        %3184 = vmatpush2.msra.mxu0 0.0
        %3185 = vmatprep.subr.mxu0 0.0
        %3186 = vmatpush2.msra.mxu0 0.0
        %3187 = vmatprep.subr.mxu0 0.0
        %3188 = vmatpush2.msra.mxu0 0.0
        %3189 = vmatprep.subr.mxu0 0.0
        %3190 = vmatpush2.msra.mxu0 0.0
        %3191 = vmatprep.subr.mxu0 0.0
        %3192 = vmatpush2.msra.mxu0 0.0
        %3193 = vmatprep.mubr.f32.mxu0 0.0
        %3194 = vmatmul.mubr.f32.gmra.mxu0 %v570
        %v3195 = vpop.f32.mrf.mxu0
        %v3196 = vadd.f32 %v3127, %v3195
        %v3197 = vpop.f32.mrf.mxu0
        %3198 = vdwg.mxu0
        %s3199 = scalar_lea.vmem %s2, 448
        %v3200 = vld [vmem:[%s3199] sm:$0xff]
        %v3201 = vld [vmem:[%s3199 + $0x8] sm:$0xff]
        %v3202 = vld [vmem:[%s3199 + $0x10] sm:$0xff]
        %v3203 = vld [vmem:[%s3199 + $0x18] sm:$0xff]
        %s3204 = scalar_lea.vmem %s3, 14
        %v3205 = vld [vmem:[%s3204] sm:$0x1]
        %v3207 = vlaneseq
        %v3208 = vshrl.u32 %v3207, 7
        %v3209 = vsub.s32 0, %v3208
        %v3210 = vrot.slane %v3205, %v3209
        %3212 = vmatprep.subr.mxu0 0.0
        %3213 = vmatpush1.msra.mxu0 0.0
        %3214 = vmatprep.subr.mxu0 0.0
        %3215 = vmatpush1.msra.mxu0 0.0
        %3216 = vmatprep.subr.mxu0 0.0
        %3217 = vmatpush1.msra.mxu0 0.0
        %3218 = vmatprep.subr.mxu0 0.0
        %3219 = vmatpush1.msra.mxu0 0.0
        %3220 = vmatprep.subr.mxu0 0.0
        %3221 = vmatpush1.msra.mxu0 0.0
        %3222 = vmatprep.subr.mxu0 0.0
        %3223 = vmatpush1.msra.mxu0 0.0
        %3224 = vmatprep.subr.mxu0 0.0
        %3225 = vmatpush1.msra.mxu0 0.0
        %3226 = vmatprep.subr.mxu0 0.0
        %3227 = vmatpush1.msra.mxu0 0.0
        %3228 = vmatprep.subr.mxu0 0.0
        %3229 = vmatpush1.msra.mxu0 0.0
        %3230 = vmatprep.subr.mxu0 0.0
        %3231 = vmatpush1.msra.mxu0 0.0
        %3232 = vmatprep.subr.mxu0 0.0
        %3233 = vmatpush1.msra.mxu0 0.0
        %3234 = vmatprep.subr.mxu0 0.0
        %3235 = vmatpush1.msra.mxu0 0.0
        %3236 = vmatprep.subr.mxu0 0.0
        %3237 = vmatpush1.msra.mxu0 %v3203
        %3238 = vmatprep.subr.mxu0 0.0
        %3239 = vmatpush1.msra.mxu0 %v3202
        %3240 = vmatprep.subr.mxu0 0.0
        %3241 = vmatpush1.msra.mxu0 %v3201
        %3242 = vmatprep.subr.mxu0 0.0
        %3243 = vmatpush1.msra.mxu0 %v3200
        %3244 = vmatprep.subr.mxu0 0.0
        %3245 = vmatpush2.msra.mxu0 0.0
        %3246 = vmatprep.subr.mxu0 0.0
        %3247 = vmatpush2.msra.mxu0 0.0
        %3248 = vmatprep.subr.mxu0 0.0
        %3249 = vmatpush2.msra.mxu0 0.0
        %3250 = vmatprep.subr.mxu0 0.0
        %3251 = vmatpush2.msra.mxu0 0.0
        %3252 = vmatprep.subr.mxu0 0.0
        %3253 = vmatpush2.msra.mxu0 0.0
        %3254 = vmatprep.subr.mxu0 0.0
        %3255 = vmatpush2.msra.mxu0 0.0
        %3256 = vmatprep.subr.mxu0 0.0
        %3257 = vmatpush2.msra.mxu0 0.0
        %3258 = vmatprep.subr.mxu0 0.0
        %3259 = vmatpush2.msra.mxu0 0.0
        %3260 = vmatprep.subr.mxu0 0.0
        %3261 = vmatpush2.msra.mxu0 0.0
        %3262 = vmatprep.subr.mxu0 0.0
        %3263 = vmatpush2.msra.mxu0 0.0
        %3264 = vmatprep.subr.mxu0 0.0
        %3265 = vmatpush2.msra.mxu0 0.0
        %3266 = vmatprep.subr.mxu0 0.0
        %3267 = vmatpush2.msra.mxu0 0.0
        %3268 = vmatprep.subr.mxu0 0.0
        %3269 = vmatpush2.msra.mxu0 0.0
        %3270 = vmatprep.subr.mxu0 0.0
        %3271 = vmatpush2.msra.mxu0 0.0
        %3272 = vmatprep.subr.mxu0 0.0
        %3273 = vmatpush2.msra.mxu0 0.0
        %3274 = vmatprep.subr.mxu0 0.0
        %3275 = vmatpush2.msra.mxu0 0.0
        %3276 = vmatprep.mubr.f32.mxu0 0.0
        %3277 = vmatmul.mubr.f32.gmra.mxu0 %v570
        %v3278 = vpop.f32.mrf.mxu0
        %v3279 = vadd.f32 %v3210, %v3278
        %v3280 = vpop.f32.mrf.mxu0
        %3281 = vdwg.mxu0
        %v3283 = vsel %vm808, %v3113, 0
        %v3286 = vsel %vm808, %v3196, 0
        %3288 = vmatprep.subr.mxu0 0.0
        %3289 = vmatpush1.xpose.msra.mxu0 0.0
        %3290 = vmatprep.subr.mxu0 0.0
        %3291 = vmatpush1.xpose.msra.mxu0 0.0
        %3292 = vmatprep.subr.mxu0 0.0
        %3293 = vmatpush1.xpose.msra.mxu0 0.0
        %3294 = vmatprep.subr.mxu0 0.0
        %3295 = vmatpush1.xpose.msra.mxu0 0.0
        %3296 = vmatprep.subr.mxu0 0.0
        %3297 = vmatpush1.xpose.msra.mxu0 0.0
        %3298 = vmatprep.subr.mxu0 0.0
        %3299 = vmatpush1.xpose.msra.mxu0 0.0
        %3300 = vmatprep.subr.mxu0 0.0
        %3301 = vmatpush1.xpose.msra.mxu0 0.0
        %3302 = vmatprep.subr.mxu0 0.0
        %3303 = vmatpush1.xpose.msra.mxu0 0.0
        %3304 = vmatprep.subr.mxu0 0.0
        %3305 = vmatpush1.xpose.msra.mxu0 0.0
        %3306 = vmatprep.subr.mxu0 0.0
        %3307 = vmatpush1.xpose.msra.mxu0 0.0
        %3308 = vmatprep.subr.mxu0 0.0
        %3309 = vmatpush1.xpose.msra.mxu0 0.0
        %3310 = vmatprep.subr.mxu0 0.0
        %3311 = vmatpush1.xpose.msra.mxu0 0.0
        %3312 = vmatprep.subr.mxu0 0.0
        %3313 = vmatpush1.xpose.msra.mxu0 0.0
        %3314 = vmatprep.subr.mxu0 0.0
        %3315 = vmatpush1.xpose.msra.mxu0 0.0
        %3316 = vmatprep.subr.mxu0 0.0
        %3317 = vmatpush1.xpose.msra.mxu0 0.0
        %3318 = vmatprep.subr.mxu0 0.0
        %3319 = vmatpush1.xpose.msra.mxu0 %v3286
        %3320 = vmatprep.subr.mxu0 0.0
        %3321 = vmatpush2.xpose.msra.mxu0 0.0
        %3322 = vmatprep.subr.mxu0 0.0
        %3323 = vmatpush2.xpose.msra.mxu0 0.0
        %3324 = vmatprep.subr.mxu0 0.0
        %3325 = vmatpush2.xpose.msra.mxu0 0.0
        %3326 = vmatprep.subr.mxu0 0.0
        %3327 = vmatpush2.xpose.msra.mxu0 0.0
        %3328 = vmatprep.subr.mxu0 0.0
        %3329 = vmatpush2.xpose.msra.mxu0 0.0
        %3330 = vmatprep.subr.mxu0 0.0
        %3331 = vmatpush2.xpose.msra.mxu0 0.0
        %3332 = vmatprep.subr.mxu0 0.0
        %3333 = vmatpush2.xpose.msra.mxu0 0.0
        %3334 = vmatprep.subr.mxu0 0.0
        %3335 = vmatpush2.xpose.msra.mxu0 0.0
        %3336 = vmatprep.subr.mxu0 0.0
        %3337 = vmatpush2.xpose.msra.mxu0 0.0
        %3338 = vmatprep.subr.mxu0 0.0
        %3339 = vmatpush2.xpose.msra.mxu0 0.0
        %3340 = vmatprep.subr.mxu0 0.0
        %3341 = vmatpush2.xpose.msra.mxu0 0.0
        %3342 = vmatprep.subr.mxu0 0.0
        %3343 = vmatpush2.xpose.msra.mxu0 0.0
        %3344 = vmatprep.subr.mxu0 0.0
        %3345 = vmatpush2.xpose.msra.mxu0 0.0
        %3346 = vmatprep.subr.mxu0 0.0
        %3347 = vmatpush2.xpose.msra.mxu0 0.0
        %3348 = vmatprep.subr.mxu0 0.0
        %3349 = vmatpush2.xpose.msra.mxu0 0.0
        %3350 = vmatprep.subr.mxu0 0.0
        %3351 = vmatpush2.xpose.msra.mxu0 0.0
        %3352 = vmatprep.mubr.f32.mxu0 0.0
        %3353 = vmatmul.mubr.f32.gmra.mxu0 %v3283
        %v3354 = vpop.f32.mrf.mxu0
        %v3355 = vadd.f32 0.0, %v3354
        %v3356 = vpop.f32.mrf.mxu0
        %3357 = vdwg.mxu0
        %v3358 = vmul.f32 %v3355, 0.25
        %v3359 = vsel %vm886, %v3358, -inf
        %3360 = vmax.xlane.f32.xlu0 %v3359
        %v3361 = vpop.xlane.xlu0 %3360
        %v3362 = vsub.f32 %v3358, %v3361
        %v3363 = vmul.f32 %v3362, 1.442695
        %v3364 = vpow.pop %v3363
        %v3365 = vsel %vm886, %v3364, 0.0
        %3366 = vadd.xlane.f32.xlu0 %v3365
        %v3367 = vpop.xlane.xlu0 %3366
        %v3368 = vrcp.pop %v3367
        %v3369 = vmul.f32 %v3364, %v3368
        %v3371 = vsel %vm886, %v3369, 0
        %3373 = vmatprep.subr.mxu0 0.0
        %3374 = vmatpush1.msra.mxu0 0.0
        %3375 = vmatprep.subr.mxu0 0.0
        %3376 = vmatpush1.msra.mxu0 0.0
        %3377 = vmatprep.subr.mxu0 0.0
        %3378 = vmatpush1.msra.mxu0 0.0
        %3379 = vmatprep.subr.mxu0 0.0
        %3380 = vmatpush1.msra.mxu0 0.0
        %3381 = vmatprep.subr.mxu0 0.0
        %3382 = vmatpush1.msra.mxu0 0.0
        %3383 = vmatprep.subr.mxu0 0.0
        %3384 = vmatpush1.msra.mxu0 0.0
        %3385 = vmatprep.subr.mxu0 0.0
        %3386 = vmatpush1.msra.mxu0 0.0
        %3387 = vmatprep.subr.mxu0 0.0
        %3388 = vmatpush1.msra.mxu0 0.0
        %3389 = vmatprep.subr.mxu0 0.0
        %3390 = vmatpush1.msra.mxu0 0.0
        %3391 = vmatprep.subr.mxu0 0.0
        %3392 = vmatpush1.msra.mxu0 0.0
        %3393 = vmatprep.subr.mxu0 0.0
        %3394 = vmatpush1.msra.mxu0 0.0
        %3395 = vmatprep.subr.mxu0 0.0
        %3396 = vmatpush1.msra.mxu0 0.0
        %3397 = vmatprep.subr.mxu0 0.0
        %3398 = vmatpush1.msra.mxu0 0.0
        %3399 = vmatprep.subr.mxu0 0.0
        %3400 = vmatpush1.msra.mxu0 0.0
        %3401 = vmatprep.subr.mxu0 0.0
        %3402 = vmatpush1.msra.mxu0 0.0
        %3403 = vmatprep.subr.mxu0 0.0
        %3404 = vmatpush1.msra.mxu0 %v3279
        %3405 = vmatprep.subr.mxu0 0.0
        %3406 = vmatpush2.msra.mxu0 0.0
        %3407 = vmatprep.subr.mxu0 0.0
        %3408 = vmatpush2.msra.mxu0 0.0
        %3409 = vmatprep.subr.mxu0 0.0
        %3410 = vmatpush2.msra.mxu0 0.0
        %3411 = vmatprep.subr.mxu0 0.0
        %3412 = vmatpush2.msra.mxu0 0.0
        %3413 = vmatprep.subr.mxu0 0.0
        %3414 = vmatpush2.msra.mxu0 0.0
        %3415 = vmatprep.subr.mxu0 0.0
        %3416 = vmatpush2.msra.mxu0 0.0
        %3417 = vmatprep.subr.mxu0 0.0
        %3418 = vmatpush2.msra.mxu0 0.0
        %3419 = vmatprep.subr.mxu0 0.0
        %3420 = vmatpush2.msra.mxu0 0.0
        %3421 = vmatprep.subr.mxu0 0.0
        %3422 = vmatpush2.msra.mxu0 0.0
        %3423 = vmatprep.subr.mxu0 0.0
        %3424 = vmatpush2.msra.mxu0 0.0
        %3425 = vmatprep.subr.mxu0 0.0
        %3426 = vmatpush2.msra.mxu0 0.0
        %3427 = vmatprep.subr.mxu0 0.0
        %3428 = vmatpush2.msra.mxu0 0.0
        %3429 = vmatprep.subr.mxu0 0.0
        %3430 = vmatpush2.msra.mxu0 0.0
        %3431 = vmatprep.subr.mxu0 0.0
        %3432 = vmatpush2.msra.mxu0 0.0
        %3433 = vmatprep.subr.mxu0 0.0
        %3434 = vmatpush2.msra.mxu0 0.0
        %3435 = vmatprep.subr.mxu0 0.0
        %3436 = vmatpush2.msra.mxu0 0.0
        %3437 = vmatprep.mubr.f32.mxu0 0.0
        %3438 = vmatmul.mubr.f32.gmra.mxu0 %v3371
        %v3439 = vpop.f32.mrf.mxu0
        %v3440 = vadd.f32 0.0, %v3439
        %v3441 = vpop.f32.mrf.mxu0
        %3442 = vdwg.mxu0
        %s3443 = scalar_lea.vmem %s4, 64
        %v3444 = vld [vmem:[%s3443] sm:$0xff]
        %v3445 = vld [vmem:[%s3443 + $0x8] sm:$0xff]
        %s3446 = scalar_lea.vmem %s2, 480
        %v3447 = vld [vmem:[%s3446] sm:$0xff]
        %v3448 = vld [vmem:[%s3446 + $0x8] sm:$0xff]
        %v3449 = vld [vmem:[%s3446 + $0x10] sm:$0xff]
        %v3450 = vld [vmem:[%s3446 + $0x18] sm:$0xff]
        %s3451 = scalar_lea.vmem %s3, 15
        %v3452 = vld [vmem:[%s3451] sm:$0x1]
        %v3454 = vlaneseq
        %v3455 = vshrl.u32 %v3454, 7
        %v3456 = vsub.s32 0, %v3455
        %v3457 = vrot.slane %v3452, %v3456
        %3459 = vmatprep.subr.mxu0 0.0
        %3460 = vmatpush1.msra.mxu0 0.0
        %3461 = vmatprep.subr.mxu0 0.0
        %3462 = vmatpush1.msra.mxu0 0.0
        %3463 = vmatprep.subr.mxu0 0.0
        %3464 = vmatpush1.msra.mxu0 0.0
        %3465 = vmatprep.subr.mxu0 0.0
        %3466 = vmatpush1.msra.mxu0 0.0
        %3467 = vmatprep.subr.mxu0 0.0
        %3468 = vmatpush1.msra.mxu0 0.0
        %3469 = vmatprep.subr.mxu0 0.0
        %3470 = vmatpush1.msra.mxu0 0.0
        %3471 = vmatprep.subr.mxu0 0.0
        %3472 = vmatpush1.msra.mxu0 0.0
        %3473 = vmatprep.subr.mxu0 0.0
        %3474 = vmatpush1.msra.mxu0 0.0
        %3475 = vmatprep.subr.mxu0 0.0
        %3476 = vmatpush1.msra.mxu0 0.0
        %3477 = vmatprep.subr.mxu0 0.0
        %3478 = vmatpush1.msra.mxu0 0.0
        %3479 = vmatprep.subr.mxu0 0.0
        %3480 = vmatpush1.msra.mxu0 0.0
        %3481 = vmatprep.subr.mxu0 0.0
        %3482 = vmatpush1.msra.mxu0 0.0
        %3483 = vmatprep.subr.mxu0 0.0
        %3484 = vmatpush1.msra.mxu0 %v3450
        %3485 = vmatprep.subr.mxu0 0.0
        %3486 = vmatpush1.msra.mxu0 %v3449
        %3487 = vmatprep.subr.mxu0 0.0
        %3488 = vmatpush1.msra.mxu0 %v3448
        %3489 = vmatprep.subr.mxu0 0.0
        %3490 = vmatpush1.msra.mxu0 %v3447
        %3491 = vmatprep.subr.mxu0 0.0
        %3492 = vmatpush2.msra.mxu0 0.0
        %3493 = vmatprep.subr.mxu0 0.0
        %3494 = vmatpush2.msra.mxu0 0.0
        %3495 = vmatprep.subr.mxu0 0.0
        %3496 = vmatpush2.msra.mxu0 0.0
        %3497 = vmatprep.subr.mxu0 0.0
        %3498 = vmatpush2.msra.mxu0 0.0
        %3499 = vmatprep.subr.mxu0 0.0
        %3500 = vmatpush2.msra.mxu0 0.0
        %3501 = vmatprep.subr.mxu0 0.0
        %3502 = vmatpush2.msra.mxu0 0.0
        %3503 = vmatprep.subr.mxu0 0.0
        %3504 = vmatpush2.msra.mxu0 0.0
        %3505 = vmatprep.subr.mxu0 0.0
        %3506 = vmatpush2.msra.mxu0 0.0
        %3507 = vmatprep.subr.mxu0 0.0
        %3508 = vmatpush2.msra.mxu0 0.0
        %3509 = vmatprep.subr.mxu0 0.0
        %3510 = vmatpush2.msra.mxu0 0.0
        %3511 = vmatprep.subr.mxu0 0.0
        %3512 = vmatpush2.msra.mxu0 0.0
        %3513 = vmatprep.subr.mxu0 0.0
        %3514 = vmatpush2.msra.mxu0 0.0
        %3515 = vmatprep.subr.mxu0 0.0
        %3516 = vmatpush2.msra.mxu0 0.0
        %3517 = vmatprep.subr.mxu0 0.0
        %3518 = vmatpush2.msra.mxu0 0.0
        %3519 = vmatprep.subr.mxu0 0.0
        %3520 = vmatpush2.msra.mxu0 0.0
        %3521 = vmatprep.subr.mxu0 0.0
        %3522 = vmatpush2.msra.mxu0 0.0
        %3523 = vmatprep.mubr.f32.mxu0 0.0
        %3524 = vmatmul.mubr.f32.gmra.mxu0 %v570
        %v3525 = vpop.f32.mrf.mxu0
        %v3526 = vadd.f32 %v3457, %v3525
        %v3527 = vpop.f32.mrf.mxu0
        %3528 = vdwg.mxu0
        %s3529 = scalar_lea.vmem %s2, 512
        %v3530 = vld [vmem:[%s3529] sm:$0xff]
        %v3531 = vld [vmem:[%s3529 + $0x8] sm:$0xff]
        %v3532 = vld [vmem:[%s3529 + $0x10] sm:$0xff]
        %v3533 = vld [vmem:[%s3529 + $0x18] sm:$0xff]
        %s3534 = scalar_lea.vmem %s3, 16
        %v3535 = vld [vmem:[%s3534] sm:$0x1]
        %v3537 = vlaneseq
        %v3538 = vshrl.u32 %v3537, 7
        %v3539 = vsub.s32 0, %v3538
        %v3540 = vrot.slane %v3535, %v3539
        %3542 = vmatprep.subr.mxu0 0.0
        %3543 = vmatpush1.msra.mxu0 0.0
        %3544 = vmatprep.subr.mxu0 0.0
        %3545 = vmatpush1.msra.mxu0 0.0
        %3546 = vmatprep.subr.mxu0 0.0
        %3547 = vmatpush1.msra.mxu0 0.0
        %3548 = vmatprep.subr.mxu0 0.0
        %3549 = vmatpush1.msra.mxu0 0.0
        %3550 = vmatprep.subr.mxu0 0.0
        %3551 = vmatpush1.msra.mxu0 0.0
        %3552 = vmatprep.subr.mxu0 0.0
        %3553 = vmatpush1.msra.mxu0 0.0
        %3554 = vmatprep.subr.mxu0 0.0
        %3555 = vmatpush1.msra.mxu0 0.0
        %3556 = vmatprep.subr.mxu0 0.0
        %3557 = vmatpush1.msra.mxu0 0.0
        %3558 = vmatprep.subr.mxu0 0.0
        %3559 = vmatpush1.msra.mxu0 0.0
        %3560 = vmatprep.subr.mxu0 0.0
        %3561 = vmatpush1.msra.mxu0 0.0
        %3562 = vmatprep.subr.mxu0 0.0
        %3563 = vmatpush1.msra.mxu0 0.0
        %3564 = vmatprep.subr.mxu0 0.0
        %3565 = vmatpush1.msra.mxu0 0.0
        %3566 = vmatprep.subr.mxu0 0.0
        %3567 = vmatpush1.msra.mxu0 %v3533
        %3568 = vmatprep.subr.mxu0 0.0
        %3569 = vmatpush1.msra.mxu0 %v3532
        %3570 = vmatprep.subr.mxu0 0.0
        %3571 = vmatpush1.msra.mxu0 %v3531
        %3572 = vmatprep.subr.mxu0 0.0
        %3573 = vmatpush1.msra.mxu0 %v3530
        %3574 = vmatprep.subr.mxu0 0.0
        %3575 = vmatpush2.msra.mxu0 0.0
        %3576 = vmatprep.subr.mxu0 0.0
        %3577 = vmatpush2.msra.mxu0 0.0
        %3578 = vmatprep.subr.mxu0 0.0
        %3579 = vmatpush2.msra.mxu0 0.0
        %3580 = vmatprep.subr.mxu0 0.0
        %3581 = vmatpush2.msra.mxu0 0.0
        %3582 = vmatprep.subr.mxu0 0.0
        %3583 = vmatpush2.msra.mxu0 0.0
        %3584 = vmatprep.subr.mxu0 0.0
        %3585 = vmatpush2.msra.mxu0 0.0
        %3586 = vmatprep.subr.mxu0 0.0
        %3587 = vmatpush2.msra.mxu0 0.0
        %3588 = vmatprep.subr.mxu0 0.0
        %3589 = vmatpush2.msra.mxu0 0.0
        %3590 = vmatprep.subr.mxu0 0.0
        %3591 = vmatpush2.msra.mxu0 0.0
        %3592 = vmatprep.subr.mxu0 0.0
        %3593 = vmatpush2.msra.mxu0 0.0
        %3594 = vmatprep.subr.mxu0 0.0
        %3595 = vmatpush2.msra.mxu0 0.0
        %3596 = vmatprep.subr.mxu0 0.0
        %3597 = vmatpush2.msra.mxu0 0.0
        %3598 = vmatprep.subr.mxu0 0.0
        %3599 = vmatpush2.msra.mxu0 0.0
        %3600 = vmatprep.subr.mxu0 0.0
        %3601 = vmatpush2.msra.mxu0 0.0
        %3602 = vmatprep.subr.mxu0 0.0
        %3603 = vmatpush2.msra.mxu0 0.0
        %3604 = vmatprep.subr.mxu0 0.0
        %3605 = vmatpush2.msra.mxu0 0.0
        %3606 = vmatprep.mubr.f32.mxu0 0.0
        %3607 = vmatmul.mubr.f32.gmra.mxu0 %v570
        %v3608 = vpop.f32.mrf.mxu0
        %v3609 = vadd.f32 %v3540, %v3608
        %v3610 = vpop.f32.mrf.mxu0
        %3611 = vdwg.mxu0
        %s3612 = scalar_lea.vmem %s2, 544
        %v3613 = vld [vmem:[%s3612] sm:$0xff]
        %v3614 = vld [vmem:[%s3612 + $0x8] sm:$0xff]
        %v3615 = vld [vmem:[%s3612 + $0x10] sm:$0xff]
        %v3616 = vld [vmem:[%s3612 + $0x18] sm:$0xff]
        %s3617 = scalar_lea.vmem %s3, 17
        %v3618 = vld [vmem:[%s3617] sm:$0x1]
        %v3620 = vlaneseq
        %v3621 = vshrl.u32 %v3620, 7
        %v3622 = vsub.s32 0, %v3621
        %v3623 = vrot.slane %v3618, %v3622
        %3625 = vmatprep.subr.mxu0 0.0
        %3626 = vmatpush1.msra.mxu0 0.0
        %3627 = vmatprep.subr.mxu0 0.0
        %3628 = vmatpush1.msra.mxu0 0.0
        %3629 = vmatprep.subr.mxu0 0.0
        %3630 = vmatpush1.msra.mxu0 0.0
        %3631 = vmatprep.subr.mxu0 0.0
        %3632 = vmatpush1.msra.mxu0 0.0
        %3633 = vmatprep.subr.mxu0 0.0
        %3634 = vmatpush1.msra.mxu0 0.0
        %3635 = vmatprep.subr.mxu0 0.0
        %3636 = vmatpush1.msra.mxu0 0.0
        %3637 = vmatprep.subr.mxu0 0.0
        %3638 = vmatpush1.msra.mxu0 0.0
        %3639 = vmatprep.subr.mxu0 0.0
        %3640 = vmatpush1.msra.mxu0 0.0
        %3641 = vmatprep.subr.mxu0 0.0
        %3642 = vmatpush1.msra.mxu0 0.0
        %3643 = vmatprep.subr.mxu0 0.0
        %3644 = vmatpush1.msra.mxu0 0.0
        %3645 = vmatprep.subr.mxu0 0.0
        %3646 = vmatpush1.msra.mxu0 0.0
        %3647 = vmatprep.subr.mxu0 0.0
        %3648 = vmatpush1.msra.mxu0 0.0
        %3649 = vmatprep.subr.mxu0 0.0
        %3650 = vmatpush1.msra.mxu0 %v3616
        %3651 = vmatprep.subr.mxu0 0.0
        %3652 = vmatpush1.msra.mxu0 %v3615
        %3653 = vmatprep.subr.mxu0 0.0
        %3654 = vmatpush1.msra.mxu0 %v3614
        %3655 = vmatprep.subr.mxu0 0.0
        %3656 = vmatpush1.msra.mxu0 %v3613
        %3657 = vmatprep.subr.mxu0 0.0
        %3658 = vmatpush2.msra.mxu0 0.0
        %3659 = vmatprep.subr.mxu0 0.0
        %3660 = vmatpush2.msra.mxu0 0.0
        %3661 = vmatprep.subr.mxu0 0.0
        %3662 = vmatpush2.msra.mxu0 0.0
        %3663 = vmatprep.subr.mxu0 0.0
        %3664 = vmatpush2.msra.mxu0 0.0
        %3665 = vmatprep.subr.mxu0 0.0
        %3666 = vmatpush2.msra.mxu0 0.0
        %3667 = vmatprep.subr.mxu0 0.0
        %3668 = vmatpush2.msra.mxu0 0.0
        %3669 = vmatprep.subr.mxu0 0.0
        %3670 = vmatpush2.msra.mxu0 0.0
        %3671 = vmatprep.subr.mxu0 0.0
        %3672 = vmatpush2.msra.mxu0 0.0
        %3673 = vmatprep.subr.mxu0 0.0
        %3674 = vmatpush2.msra.mxu0 0.0
        %3675 = vmatprep.subr.mxu0 0.0
        %3676 = vmatpush2.msra.mxu0 0.0
        %3677 = vmatprep.subr.mxu0 0.0
        %3678 = vmatpush2.msra.mxu0 0.0
        %3679 = vmatprep.subr.mxu0 0.0
        %3680 = vmatpush2.msra.mxu0 0.0
        %3681 = vmatprep.subr.mxu0 0.0
        %3682 = vmatpush2.msra.mxu0 0.0
        %3683 = vmatprep.subr.mxu0 0.0
        %3684 = vmatpush2.msra.mxu0 0.0
        %3685 = vmatprep.subr.mxu0 0.0
        %3686 = vmatpush2.msra.mxu0 0.0
        %3687 = vmatprep.subr.mxu0 0.0
        %3688 = vmatpush2.msra.mxu0 0.0
        %3689 = vmatprep.mubr.f32.mxu0 0.0
        %3690 = vmatmul.mubr.f32.gmra.mxu0 %v570
        %v3691 = vpop.f32.mrf.mxu0
        %v3692 = vadd.f32 %v3623, %v3691
        %v3693 = vpop.f32.mrf.mxu0
        %3694 = vdwg.mxu0
        %v3696 = vsel %vm808, %v3526, 0
        %v3699 = vsel %vm808, %v3609, 0
        %3701 = vmatprep.subr.mxu0 0.0
        %3702 = vmatpush1.xpose.msra.mxu0 0.0
        %3703 = vmatprep.subr.mxu0 0.0
        %3704 = vmatpush1.xpose.msra.mxu0 0.0
        %3705 = vmatprep.subr.mxu0 0.0
        %3706 = vmatpush1.xpose.msra.mxu0 0.0
        %3707 = vmatprep.subr.mxu0 0.0
        %3708 = vmatpush1.xpose.msra.mxu0 0.0
        %3709 = vmatprep.subr.mxu0 0.0
        %3710 = vmatpush1.xpose.msra.mxu0 0.0
        %3711 = vmatprep.subr.mxu0 0.0
        %3712 = vmatpush1.xpose.msra.mxu0 0.0
        %3713 = vmatprep.subr.mxu0 0.0
        %3714 = vmatpush1.xpose.msra.mxu0 0.0
        %3715 = vmatprep.subr.mxu0 0.0
        %3716 = vmatpush1.xpose.msra.mxu0 0.0
        %3717 = vmatprep.subr.mxu0 0.0
        %3718 = vmatpush1.xpose.msra.mxu0 0.0
        %3719 = vmatprep.subr.mxu0 0.0
        %3720 = vmatpush1.xpose.msra.mxu0 0.0
        %3721 = vmatprep.subr.mxu0 0.0
        %3722 = vmatpush1.xpose.msra.mxu0 0.0
        %3723 = vmatprep.subr.mxu0 0.0
        %3724 = vmatpush1.xpose.msra.mxu0 0.0
        %3725 = vmatprep.subr.mxu0 0.0
        %3726 = vmatpush1.xpose.msra.mxu0 0.0
        %3727 = vmatprep.subr.mxu0 0.0
        %3728 = vmatpush1.xpose.msra.mxu0 0.0
        %3729 = vmatprep.subr.mxu0 0.0
        %3730 = vmatpush1.xpose.msra.mxu0 0.0
        %3731 = vmatprep.subr.mxu0 0.0
        %3732 = vmatpush1.xpose.msra.mxu0 %v3699
        %3733 = vmatprep.subr.mxu0 0.0
        %3734 = vmatpush2.xpose.msra.mxu0 0.0
        %3735 = vmatprep.subr.mxu0 0.0
        %3736 = vmatpush2.xpose.msra.mxu0 0.0
        %3737 = vmatprep.subr.mxu0 0.0
        %3738 = vmatpush2.xpose.msra.mxu0 0.0
        %3739 = vmatprep.subr.mxu0 0.0
        %3740 = vmatpush2.xpose.msra.mxu0 0.0
        %3741 = vmatprep.subr.mxu0 0.0
        %3742 = vmatpush2.xpose.msra.mxu0 0.0
        %3743 = vmatprep.subr.mxu0 0.0
        %3744 = vmatpush2.xpose.msra.mxu0 0.0
        %3745 = vmatprep.subr.mxu0 0.0
        %3746 = vmatpush2.xpose.msra.mxu0 0.0
        %3747 = vmatprep.subr.mxu0 0.0
        %3748 = vmatpush2.xpose.msra.mxu0 0.0
        %3749 = vmatprep.subr.mxu0 0.0
        %3750 = vmatpush2.xpose.msra.mxu0 0.0
        %3751 = vmatprep.subr.mxu0 0.0
        %3752 = vmatpush2.xpose.msra.mxu0 0.0
        %3753 = vmatprep.subr.mxu0 0.0
        %3754 = vmatpush2.xpose.msra.mxu0 0.0
        %3755 = vmatprep.subr.mxu0 0.0
        %3756 = vmatpush2.xpose.msra.mxu0 0.0
        %3757 = vmatprep.subr.mxu0 0.0
        %3758 = vmatpush2.xpose.msra.mxu0 0.0
        %3759 = vmatprep.subr.mxu0 0.0
        %3760 = vmatpush2.xpose.msra.mxu0 0.0
        %3761 = vmatprep.subr.mxu0 0.0
        %3762 = vmatpush2.xpose.msra.mxu0 0.0
        %3763 = vmatprep.subr.mxu0 0.0
        %3764 = vmatpush2.xpose.msra.mxu0 0.0
        %3765 = vmatprep.mubr.f32.mxu0 0.0
        %3766 = vmatmul.mubr.f32.gmra.mxu0 %v3696
        %v3767 = vpop.f32.mrf.mxu0
        %v3768 = vadd.f32 0.0, %v3767
        %v3769 = vpop.f32.mrf.mxu0
        %3770 = vdwg.mxu0
        %v3771 = vmul.f32 %v3768, 0.25
        %v3772 = vsel %vm886, %v3771, -inf
        %3773 = vmax.xlane.f32.xlu0 %v3772
        %v3774 = vpop.xlane.xlu0 %3773
        %v3775 = vsub.f32 %v3771, %v3774
        %v3776 = vmul.f32 %v3775, 1.442695
        %v3777 = vpow.pop %v3776
        %v3778 = vsel %vm886, %v3777, 0.0
        %3779 = vadd.xlane.f32.xlu0 %v3778
        %v3780 = vpop.xlane.xlu0 %3779
        %v3781 = vrcp.pop %v3780
        %v3782 = vmul.f32 %v3777, %v3781
        %v3784 = vsel %vm886, %v3782, 0
        %3786 = vmatprep.subr.mxu0 0.0
        %3787 = vmatpush1.msra.mxu0 0.0
        %3788 = vmatprep.subr.mxu0 0.0
        %3789 = vmatpush1.msra.mxu0 0.0
        %3790 = vmatprep.subr.mxu0 0.0
        %3791 = vmatpush1.msra.mxu0 0.0
        %3792 = vmatprep.subr.mxu0 0.0
        %3793 = vmatpush1.msra.mxu0 0.0
        %3794 = vmatprep.subr.mxu0 0.0
        %3795 = vmatpush1.msra.mxu0 0.0
        %3796 = vmatprep.subr.mxu0 0.0
        %3797 = vmatpush1.msra.mxu0 0.0
        %3798 = vmatprep.subr.mxu0 0.0
        %3799 = vmatpush1.msra.mxu0 0.0
        %3800 = vmatprep.subr.mxu0 0.0
        %3801 = vmatpush1.msra.mxu0 0.0
        %3802 = vmatprep.subr.mxu0 0.0
        %3803 = vmatpush1.msra.mxu0 0.0
        %3804 = vmatprep.subr.mxu0 0.0
        %3805 = vmatpush1.msra.mxu0 0.0
        %3806 = vmatprep.subr.mxu0 0.0
        %3807 = vmatpush1.msra.mxu0 0.0
        %3808 = vmatprep.subr.mxu0 0.0
        %3809 = vmatpush1.msra.mxu0 0.0
        %3810 = vmatprep.subr.mxu0 0.0
        %3811 = vmatpush1.msra.mxu0 0.0
        %3812 = vmatprep.subr.mxu0 0.0
        %3813 = vmatpush1.msra.mxu0 0.0
        %3814 = vmatprep.subr.mxu0 0.0
        %3815 = vmatpush1.msra.mxu0 0.0
        %3816 = vmatprep.subr.mxu0 0.0
        %3817 = vmatpush1.msra.mxu0 %v3692
        %3818 = vmatprep.subr.mxu0 0.0
        %3819 = vmatpush2.msra.mxu0 0.0
        %3820 = vmatprep.subr.mxu0 0.0
        %3821 = vmatpush2.msra.mxu0 0.0
        %3822 = vmatprep.subr.mxu0 0.0
        %3823 = vmatpush2.msra.mxu0 0.0
        %3824 = vmatprep.subr.mxu0 0.0
        %3825 = vmatpush2.msra.mxu0 0.0
        %3826 = vmatprep.subr.mxu0 0.0
        %3827 = vmatpush2.msra.mxu0 0.0
        %3828 = vmatprep.subr.mxu0 0.0
        %3829 = vmatpush2.msra.mxu0 0.0
        %3830 = vmatprep.subr.mxu0 0.0
        %3831 = vmatpush2.msra.mxu0 0.0
        %3832 = vmatprep.subr.mxu0 0.0
        %3833 = vmatpush2.msra.mxu0 0.0
        %3834 = vmatprep.subr.mxu0 0.0
        %3835 = vmatpush2.msra.mxu0 0.0
        %3836 = vmatprep.subr.mxu0 0.0
        %3837 = vmatpush2.msra.mxu0 0.0
        %3838 = vmatprep.subr.mxu0 0.0
        %3839 = vmatpush2.msra.mxu0 0.0
        %3840 = vmatprep.subr.mxu0 0.0
        %3841 = vmatpush2.msra.mxu0 0.0
        %3842 = vmatprep.subr.mxu0 0.0
        %3843 = vmatpush2.msra.mxu0 0.0
        %3844 = vmatprep.subr.mxu0 0.0
        %3845 = vmatpush2.msra.mxu0 0.0
        %3846 = vmatprep.subr.mxu0 0.0
        %3847 = vmatpush2.msra.mxu0 0.0
        %3848 = vmatprep.subr.mxu0 0.0
        %3849 = vmatpush2.msra.mxu0 0.0
        %3850 = vmatprep.mubr.f32.mxu0 0.0
        %3851 = vmatmul.mubr.f32.gmra.mxu0 %v3784
        %v3852 = vpop.f32.mrf.mxu0
        %v3853 = vadd.f32 0.0, %v3852
        %v3854 = vpop.f32.mrf.mxu0
        %3855 = vdwg.mxu0
        %s3856 = scalar_lea.vmem %s4, 80
        %v3857 = vld [vmem:[%s3856] sm:$0xff]
        %v3858 = vld [vmem:[%s3856 + $0x8] sm:$0xff]
        %v3860 = vsel %vm808, %v3853, 0
        %3862 = vmatprep.subr.mxu0 0.0
        %3863 = vmatpush1.msra.mxu0 0.0
        %3864 = vmatprep.subr.mxu0 0.0
        %3865 = vmatpush1.msra.mxu0 0.0
        %3866 = vmatprep.subr.mxu0 0.0
        %3867 = vmatpush1.msra.mxu0 0.0
        %3868 = vmatprep.subr.mxu0 0.0
        %3869 = vmatpush1.msra.mxu0 0.0
        %3870 = vmatprep.subr.mxu0 0.0
        %3871 = vmatpush1.msra.mxu0 0.0
        %3872 = vmatprep.subr.mxu0 0.0
        %3873 = vmatpush1.msra.mxu0 0.0
        %3874 = vmatprep.subr.mxu0 0.0
        %3875 = vmatpush1.msra.mxu0 0.0
        %3876 = vmatprep.subr.mxu0 0.0
        %3877 = vmatpush1.msra.mxu0 0.0
        %3878 = vmatprep.subr.mxu0 0.0
        %3879 = vmatpush1.msra.mxu0 0.0
        %3880 = vmatprep.subr.mxu0 0.0
        %3881 = vmatpush1.msra.mxu0 0.0
        %3882 = vmatprep.subr.mxu0 0.0
        %3883 = vmatpush1.msra.mxu0 0.0
        %3884 = vmatprep.subr.mxu0 0.0
        %3885 = vmatpush1.msra.mxu0 0.0
        %3886 = vmatprep.subr.mxu0 0.0
        %3887 = vmatpush1.msra.mxu0 0.0
        %3888 = vmatprep.subr.mxu0 0.0
        %3889 = vmatpush1.msra.mxu0 0.0
        %3890 = vmatprep.subr.mxu0 0.0
        %3891 = vmatpush1.msra.mxu0 %v3858
        %3892 = vmatprep.subr.mxu0 0.0
        %3893 = vmatpush1.msra.mxu0 %v3857
        %3894 = vmatprep.subr.mxu0 0.0
        %3895 = vmatpush2.msra.mxu0 0.0
        %3896 = vmatprep.subr.mxu0 0.0
        %3897 = vmatpush2.msra.mxu0 0.0
        %3898 = vmatprep.subr.mxu0 0.0
        %3899 = vmatpush2.msra.mxu0 0.0
        %3900 = vmatprep.subr.mxu0 0.0
        %3901 = vmatpush2.msra.mxu0 0.0
        %3902 = vmatprep.subr.mxu0 0.0
        %3903 = vmatpush2.msra.mxu0 0.0
        %3904 = vmatprep.subr.mxu0 0.0
        %3905 = vmatpush2.msra.mxu0 0.0
        %3906 = vmatprep.subr.mxu0 0.0
        %3907 = vmatpush2.msra.mxu0 0.0
        %3908 = vmatprep.subr.mxu0 0.0
        %3909 = vmatpush2.msra.mxu0 0.0
        %3910 = vmatprep.subr.mxu0 0.0
        %3911 = vmatpush2.msra.mxu0 0.0
        %3912 = vmatprep.subr.mxu0 0.0
        %3913 = vmatpush2.msra.mxu0 0.0
        %3914 = vmatprep.subr.mxu0 0.0
        %3915 = vmatpush2.msra.mxu0 0.0
        %3916 = vmatprep.subr.mxu0 0.0
        %3917 = vmatpush2.msra.mxu0 0.0
        %3918 = vmatprep.subr.mxu0 0.0
        %3919 = vmatpush2.msra.mxu0 0.0
        %3920 = vmatprep.subr.mxu0 0.0
        %3921 = vmatpush2.msra.mxu0 0.0
        %3922 = vmatprep.subr.mxu0 0.0
        %3923 = vmatpush2.msra.mxu0 0.0
        %3924 = vmatprep.subr.mxu0 0.0
        %3925 = vmatpush2.msra.mxu0 0.0
        %3926 = vmatprep.mubr.f32.mxu0 0.0
        %3927 = vmatmul.mubr.f32.gmra.mxu0 %v3860
        %v3928 = vpop.f32.mrf.mxu0
        %v3929 = vadd.f32 0.0, %v3928
        %v3930 = vpop.f32.mrf.mxu0
        %3931 = vdwg.mxu0
        %v3933 = vsel %vm808, %v3440, 0
        %3935 = vmatprep.subr.mxu0 0.0
        %3936 = vmatpush1.msra.mxu0 0.0
        %3937 = vmatprep.subr.mxu0 0.0
        %3938 = vmatpush1.msra.mxu0 0.0
        %3939 = vmatprep.subr.mxu0 0.0
        %3940 = vmatpush1.msra.mxu0 0.0
        %3941 = vmatprep.subr.mxu0 0.0
        %3942 = vmatpush1.msra.mxu0 0.0
        %3943 = vmatprep.subr.mxu0 0.0
        %3944 = vmatpush1.msra.mxu0 0.0
        %3945 = vmatprep.subr.mxu0 0.0
        %3946 = vmatpush1.msra.mxu0 0.0
        %3947 = vmatprep.subr.mxu0 0.0
        %3948 = vmatpush1.msra.mxu0 0.0
        %3949 = vmatprep.subr.mxu0 0.0
        %3950 = vmatpush1.msra.mxu0 0.0
        %3951 = vmatprep.subr.mxu0 0.0
        %3952 = vmatpush1.msra.mxu0 0.0
        %3953 = vmatprep.subr.mxu0 0.0
        %3954 = vmatpush1.msra.mxu0 0.0
        %3955 = vmatprep.subr.mxu0 0.0
        %3956 = vmatpush1.msra.mxu0 0.0
        %3957 = vmatprep.subr.mxu0 0.0
        %3958 = vmatpush1.msra.mxu0 0.0
        %3959 = vmatprep.subr.mxu0 0.0
        %3960 = vmatpush1.msra.mxu0 0.0
        %3961 = vmatprep.subr.mxu0 0.0
        %3962 = vmatpush1.msra.mxu0 0.0
        %3963 = vmatprep.subr.mxu0 0.0
        %3964 = vmatpush1.msra.mxu0 %v3445
        %3965 = vmatprep.subr.mxu0 0.0
        %3966 = vmatpush1.msra.mxu0 %v3444
        %3967 = vmatprep.subr.mxu0 0.0
        %3968 = vmatpush2.msra.mxu0 0.0
        %3969 = vmatprep.subr.mxu0 0.0
        %3970 = vmatpush2.msra.mxu0 0.0
        %3971 = vmatprep.subr.mxu0 0.0
        %3972 = vmatpush2.msra.mxu0 0.0
        %3973 = vmatprep.subr.mxu0 0.0
        %3974 = vmatpush2.msra.mxu0 0.0
        %3975 = vmatprep.subr.mxu0 0.0
        %3976 = vmatpush2.msra.mxu0 0.0
        %3977 = vmatprep.subr.mxu0 0.0
        %3978 = vmatpush2.msra.mxu0 0.0
        %3979 = vmatprep.subr.mxu0 0.0
        %3980 = vmatpush2.msra.mxu0 0.0
        %3981 = vmatprep.subr.mxu0 0.0
        %3982 = vmatpush2.msra.mxu0 0.0
        %3983 = vmatprep.subr.mxu0 0.0
        %3984 = vmatpush2.msra.mxu0 0.0
        %3985 = vmatprep.subr.mxu0 0.0
        %3986 = vmatpush2.msra.mxu0 0.0
        %3987 = vmatprep.subr.mxu0 0.0
        %3988 = vmatpush2.msra.mxu0 0.0
        %3989 = vmatprep.subr.mxu0 0.0
        %3990 = vmatpush2.msra.mxu0 0.0
        %3991 = vmatprep.subr.mxu0 0.0
        %3992 = vmatpush2.msra.mxu0 0.0
        %3993 = vmatprep.subr.mxu0 0.0
        %3994 = vmatpush2.msra.mxu0 0.0
        %3995 = vmatprep.subr.mxu0 0.0
        %3996 = vmatpush2.msra.mxu0 0.0
        %3997 = vmatprep.subr.mxu0 0.0
        %3998 = vmatpush2.msra.mxu0 0.0
        %3999 = vmatprep.mubr.f32.mxu0 0.0
        %4000 = vmatmul.mubr.f32.gmra.mxu0 %v3933
        %v4001 = vpop.f32.mrf.mxu0
        %v4002 = vadd.f32 %v3929, %v4001
        %v4003 = vpop.f32.mrf.mxu0
        %4004 = vdwg.mxu0
        %s4005 = scalar_lea.vmem %s5, 2
        %v4006 = vld [vmem:[%s4005] sm:$0x1]
        %v4008 = vlaneseq
        %v4009 = vshrl.u32 %v4008, 7
        %v4010 = vsub.s32 0, %v4009
        %v4011 = vrot.slane %v4006, %v4010
        %v4013 = vadd.f32 %v4002, %v4011
        %v4014 = vadd.f32 %v554, %v4013
        %v4015 = vsel %vm568, %v4014, 0.0
        %4016 = vadd.xlane.f32.xlu0 %v4015
        %v4017 = vpop.xlane.xlu0 %4016
        %v4018 = vmul.f32 %v4017, %v1544
        %v4019 = vsub.f32 %v4014, %v4018
        %v4020 = vmul.f32 %v4019, %v4019
        %v4021 = vsel %vm568, %v4020, 0.0
        %4022 = vadd.xlane.f32.xlu0 %v4021
        %v4023 = vpop.xlane.xlu0 %4022
        %v4024 = vmul.f32 %v4023, %v1544
        %v4025 = vadd.f32 %v4024, 1e-05
        %v4026 = vrsqrt.pop %v4025
        %v4027 = vmul.f32 %v4019, %v4026
        %s4028 = scalar_lea.vmem %s10, 5
        %v4029 = vld [vmem:[%s4028] sm:$0x1]
        %v4031 = vlaneseq
        %v4032 = vshrl.u32 %v4031, 7
        %v4033 = vsub.s32 0, %v4032
        %v4034 = vrot.slane %v4029, %v4033
        %v4036 = vmul.f32 %v4027, %v4034
        %s4037 = scalar_lea.vmem %s11, 5
        %v4038 = vld [vmem:[%s4037] sm:$0x1]
        %v4040 = vlaneseq
        %v4041 = vshrl.u32 %v4040, 7
        %v4042 = vsub.s32 0, %v4041
        %v4043 = vrot.slane %v4038, %v4042
        %v4045 = vadd.f32 %v4036, %v4043
        %s4046 = scalar_lea.vmem %s2, 576
        %v4047 = vld [vmem:[%s4046] sm:$0xff]
        %v4048 = vld [vmem:[%s4046 + $0x8] sm:$0xff]
        %v4049 = vld [vmem:[%s4046 + $0x10] sm:$0xff]
        %v4050 = vld [vmem:[%s4046 + $0x18] sm:$0xff]
        %s4051 = scalar_lea.vmem %s3, 18
        %v4052 = vld [vmem:[%s4051] sm:$0x1]
        %v4054 = vlaneseq
        %v4055 = vshrl.u32 %v4054, 7
        %v4056 = vsub.s32 0, %v4055
        %v4057 = vrot.slane %v4052, %v4056
        %v4060 = vsel %vm568, %v4045, 0
        %4062 = vmatprep.subr.mxu0 0.0
        %4063 = vmatpush1.msra.mxu0 0.0
        %4064 = vmatprep.subr.mxu0 0.0
        %4065 = vmatpush1.msra.mxu0 0.0
        %4066 = vmatprep.subr.mxu0 0.0
        %4067 = vmatpush1.msra.mxu0 0.0
        %4068 = vmatprep.subr.mxu0 0.0
        %4069 = vmatpush1.msra.mxu0 0.0
        %4070 = vmatprep.subr.mxu0 0.0
        %4071 = vmatpush1.msra.mxu0 0.0
        %4072 = vmatprep.subr.mxu0 0.0
        %4073 = vmatpush1.msra.mxu0 0.0
        %4074 = vmatprep.subr.mxu0 0.0
        %4075 = vmatpush1.msra.mxu0 0.0
        %4076 = vmatprep.subr.mxu0 0.0
        %4077 = vmatpush1.msra.mxu0 0.0
        %4078 = vmatprep.subr.mxu0 0.0
        %4079 = vmatpush1.msra.mxu0 0.0
        %4080 = vmatprep.subr.mxu0 0.0
        %4081 = vmatpush1.msra.mxu0 0.0
        %4082 = vmatprep.subr.mxu0 0.0
        %4083 = vmatpush1.msra.mxu0 0.0
        %4084 = vmatprep.subr.mxu0 0.0
        %4085 = vmatpush1.msra.mxu0 0.0
        %4086 = vmatprep.subr.mxu0 0.0
        %4087 = vmatpush1.msra.mxu0 %v4050
        %4088 = vmatprep.subr.mxu0 0.0
        %4089 = vmatpush1.msra.mxu0 %v4049
        %4090 = vmatprep.subr.mxu0 0.0
        %4091 = vmatpush1.msra.mxu0 %v4048
        %4092 = vmatprep.subr.mxu0 0.0
        %4093 = vmatpush1.msra.mxu0 %v4047
        %4094 = vmatprep.subr.mxu0 0.0
        %4095 = vmatpush2.msra.mxu0 0.0
        %4096 = vmatprep.subr.mxu0 0.0
        %4097 = vmatpush2.msra.mxu0 0.0
        %4098 = vmatprep.subr.mxu0 0.0
        %4099 = vmatpush2.msra.mxu0 0.0
        %4100 = vmatprep.subr.mxu0 0.0
        %4101 = vmatpush2.msra.mxu0 0.0
        %4102 = vmatprep.subr.mxu0 0.0
        %4103 = vmatpush2.msra.mxu0 0.0
        %4104 = vmatprep.subr.mxu0 0.0
        %4105 = vmatpush2.msra.mxu0 0.0
        %4106 = vmatprep.subr.mxu0 0.0
        %4107 = vmatpush2.msra.mxu0 0.0
        %4108 = vmatprep.subr.mxu0 0.0
        %4109 = vmatpush2.msra.mxu0 0.0
        %4110 = vmatprep.subr.mxu0 0.0
        %4111 = vmatpush2.msra.mxu0 0.0
        %4112 = vmatprep.subr.mxu0 0.0
        %4113 = vmatpush2.msra.mxu0 0.0
        %4114 = vmatprep.subr.mxu0 0.0
        %4115 = vmatpush2.msra.mxu0 0.0
        %4116 = vmatprep.subr.mxu0 0.0
        %4117 = vmatpush2.msra.mxu0 0.0
        %4118 = vmatprep.subr.mxu0 0.0
        %4119 = vmatpush2.msra.mxu0 0.0
        %4120 = vmatprep.subr.mxu0 0.0
        %4121 = vmatpush2.msra.mxu0 0.0
        %4122 = vmatprep.subr.mxu0 0.0
        %4123 = vmatpush2.msra.mxu0 0.0
        %4124 = vmatprep.subr.mxu0 0.0
        %4125 = vmatpush2.msra.mxu0 0.0
        %4126 = vmatprep.mubr.f32.mxu0 0.0
        %4127 = vmatmul.mubr.f32.gmra.mxu0 %v4060
        %v4128 = vpop.f32.mrf.mxu0
        %v4129 = vadd.f32 %v4057, %v4128
        %v4130 = vpop.f32.mrf.mxu0
        %4131 = vdwg.mxu0
        %s4132 = scalar_lea.vmem %s2, 608
        %v4133 = vld [vmem:[%s4132] sm:$0xff]
        %v4134 = vld [vmem:[%s4132 + $0x8] sm:$0xff]
        %v4135 = vld [vmem:[%s4132 + $0x10] sm:$0xff]
        %v4136 = vld [vmem:[%s4132 + $0x18] sm:$0xff]
        %s4137 = scalar_lea.vmem %s3, 19
        %v4138 = vld [vmem:[%s4137] sm:$0x1]
        %v4140 = vlaneseq
        %v4141 = vshrl.u32 %v4140, 7
        %v4142 = vsub.s32 0, %v4141
        %v4143 = vrot.slane %v4138, %v4142
        %v4146 = vsel %vm568, %v3032, 0
        %4148 = vmatprep.subr.mxu0 0.0
        %4149 = vmatpush1.msra.mxu0 0.0
        %4150 = vmatprep.subr.mxu0 0.0
        %4151 = vmatpush1.msra.mxu0 0.0
        %4152 = vmatprep.subr.mxu0 0.0
        %4153 = vmatpush1.msra.mxu0 0.0
        %4154 = vmatprep.subr.mxu0 0.0
        %4155 = vmatpush1.msra.mxu0 0.0
        %4156 = vmatprep.subr.mxu0 0.0
        %4157 = vmatpush1.msra.mxu0 0.0
        %4158 = vmatprep.subr.mxu0 0.0
        %4159 = vmatpush1.msra.mxu0 0.0
        %4160 = vmatprep.subr.mxu0 0.0
        %4161 = vmatpush1.msra.mxu0 0.0
        %4162 = vmatprep.subr.mxu0 0.0
        %4163 = vmatpush1.msra.mxu0 0.0
        %4164 = vmatprep.subr.mxu0 0.0
        %4165 = vmatpush1.msra.mxu0 0.0
        %4166 = vmatprep.subr.mxu0 0.0
        %4167 = vmatpush1.msra.mxu0 0.0
        %4168 = vmatprep.subr.mxu0 0.0
        %4169 = vmatpush1.msra.mxu0 0.0
        %4170 = vmatprep.subr.mxu0 0.0
        %4171 = vmatpush1.msra.mxu0 0.0
        %4172 = vmatprep.subr.mxu0 0.0
        %4173 = vmatpush1.msra.mxu0 %v4136
        %4174 = vmatprep.subr.mxu0 0.0
        %4175 = vmatpush1.msra.mxu0 %v4135
        %4176 = vmatprep.subr.mxu0 0.0
        %4177 = vmatpush1.msra.mxu0 %v4134
        %4178 = vmatprep.subr.mxu0 0.0
        %4179 = vmatpush1.msra.mxu0 %v4133
        %4180 = vmatprep.subr.mxu0 0.0
        %4181 = vmatpush2.msra.mxu0 0.0
        %4182 = vmatprep.subr.mxu0 0.0
        %4183 = vmatpush2.msra.mxu0 0.0
        %4184 = vmatprep.subr.mxu0 0.0
        %4185 = vmatpush2.msra.mxu0 0.0
        %4186 = vmatprep.subr.mxu0 0.0
        %4187 = vmatpush2.msra.mxu0 0.0
        %4188 = vmatprep.subr.mxu0 0.0
        %4189 = vmatpush2.msra.mxu0 0.0
        %4190 = vmatprep.subr.mxu0 0.0
        %4191 = vmatpush2.msra.mxu0 0.0
        %4192 = vmatprep.subr.mxu0 0.0
        %4193 = vmatpush2.msra.mxu0 0.0
        %4194 = vmatprep.subr.mxu0 0.0
        %4195 = vmatpush2.msra.mxu0 0.0
        %4196 = vmatprep.subr.mxu0 0.0
        %4197 = vmatpush2.msra.mxu0 0.0
        %4198 = vmatprep.subr.mxu0 0.0
        %4199 = vmatpush2.msra.mxu0 0.0
        %4200 = vmatprep.subr.mxu0 0.0
        %4201 = vmatpush2.msra.mxu0 0.0
        %4202 = vmatprep.subr.mxu0 0.0
        %4203 = vmatpush2.msra.mxu0 0.0
        %4204 = vmatprep.subr.mxu0 0.0
        %4205 = vmatpush2.msra.mxu0 0.0
        %4206 = vmatprep.subr.mxu0 0.0
        %4207 = vmatpush2.msra.mxu0 0.0
        %4208 = vmatprep.subr.mxu0 0.0
        %4209 = vmatpush2.msra.mxu0 0.0
        %4210 = vmatprep.subr.mxu0 0.0
        %4211 = vmatpush2.msra.mxu0 0.0
        %4212 = vmatprep.mubr.f32.mxu0 0.0
        %4213 = vmatmul.mubr.f32.gmra.mxu0 %v4146
        %v4214 = vpop.f32.mrf.mxu0
        %v4215 = vadd.f32 %v4143, %v4214
        %v4216 = vpop.f32.mrf.mxu0
        %4217 = vdwg.mxu0
        %s4218 = scalar_lea.vmem %s2, 640
        %v4219 = vld [vmem:[%s4218] sm:$0xff]
        %v4220 = vld [vmem:[%s4218 + $0x8] sm:$0xff]
        %v4221 = vld [vmem:[%s4218 + $0x10] sm:$0xff]
        %v4222 = vld [vmem:[%s4218 + $0x18] sm:$0xff]
        %s4223 = scalar_lea.vmem %s3, 20
        %v4224 = vld [vmem:[%s4223] sm:$0x1]
        %v4226 = vlaneseq
        %v4227 = vshrl.u32 %v4226, 7
        %v4228 = vsub.s32 0, %v4227
        %v4229 = vrot.slane %v4224, %v4228
        %4231 = vmatprep.subr.mxu0 0.0
        %4232 = vmatpush1.msra.mxu0 0.0
        %4233 = vmatprep.subr.mxu0 0.0
        %4234 = vmatpush1.msra.mxu0 0.0
        %4235 = vmatprep.subr.mxu0 0.0
        %4236 = vmatpush1.msra.mxu0 0.0
        %4237 = vmatprep.subr.mxu0 0.0
        %4238 = vmatpush1.msra.mxu0 0.0
        %4239 = vmatprep.subr.mxu0 0.0
        %4240 = vmatpush1.msra.mxu0 0.0
        %4241 = vmatprep.subr.mxu0 0.0
        %4242 = vmatpush1.msra.mxu0 0.0
        %4243 = vmatprep.subr.mxu0 0.0
        %4244 = vmatpush1.msra.mxu0 0.0
        %4245 = vmatprep.subr.mxu0 0.0
        %4246 = vmatpush1.msra.mxu0 0.0
        %4247 = vmatprep.subr.mxu0 0.0
        %4248 = vmatpush1.msra.mxu0 0.0
        %4249 = vmatprep.subr.mxu0 0.0
        %4250 = vmatpush1.msra.mxu0 0.0
        %4251 = vmatprep.subr.mxu0 0.0
        %4252 = vmatpush1.msra.mxu0 0.0
        %4253 = vmatprep.subr.mxu0 0.0
        %4254 = vmatpush1.msra.mxu0 0.0
        %4255 = vmatprep.subr.mxu0 0.0
        %4256 = vmatpush1.msra.mxu0 %v4222
        %4257 = vmatprep.subr.mxu0 0.0
        %4258 = vmatpush1.msra.mxu0 %v4221
        %4259 = vmatprep.subr.mxu0 0.0
        %4260 = vmatpush1.msra.mxu0 %v4220
        %4261 = vmatprep.subr.mxu0 0.0
        %4262 = vmatpush1.msra.mxu0 %v4219
        %4263 = vmatprep.subr.mxu0 0.0
        %4264 = vmatpush2.msra.mxu0 0.0
        %4265 = vmatprep.subr.mxu0 0.0
        %4266 = vmatpush2.msra.mxu0 0.0
        %4267 = vmatprep.subr.mxu0 0.0
        %4268 = vmatpush2.msra.mxu0 0.0
        %4269 = vmatprep.subr.mxu0 0.0
        %4270 = vmatpush2.msra.mxu0 0.0
        %4271 = vmatprep.subr.mxu0 0.0
        %4272 = vmatpush2.msra.mxu0 0.0
        %4273 = vmatprep.subr.mxu0 0.0
        %4274 = vmatpush2.msra.mxu0 0.0
        %4275 = vmatprep.subr.mxu0 0.0
        %4276 = vmatpush2.msra.mxu0 0.0
        %4277 = vmatprep.subr.mxu0 0.0
        %4278 = vmatpush2.msra.mxu0 0.0
        %4279 = vmatprep.subr.mxu0 0.0
        %4280 = vmatpush2.msra.mxu0 0.0
        %4281 = vmatprep.subr.mxu0 0.0
        %4282 = vmatpush2.msra.mxu0 0.0
        %4283 = vmatprep.subr.mxu0 0.0
        %4284 = vmatpush2.msra.mxu0 0.0
        %4285 = vmatprep.subr.mxu0 0.0
        %4286 = vmatpush2.msra.mxu0 0.0
        %4287 = vmatprep.subr.mxu0 0.0
        %4288 = vmatpush2.msra.mxu0 0.0
        %4289 = vmatprep.subr.mxu0 0.0
        %4290 = vmatpush2.msra.mxu0 0.0
        %4291 = vmatprep.subr.mxu0 0.0
        %4292 = vmatpush2.msra.mxu0 0.0
        %4293 = vmatprep.subr.mxu0 0.0
        %4294 = vmatpush2.msra.mxu0 0.0
        %4295 = vmatprep.mubr.f32.mxu0 0.0
        %4296 = vmatmul.mubr.f32.gmra.mxu0 %v4146
        %v4297 = vpop.f32.mrf.mxu0
        %v4298 = vadd.f32 %v4229, %v4297
        %v4299 = vpop.f32.mrf.mxu0
        %4300 = vdwg.mxu0
        %v4302 = vsel %vm808, %v4129, 0
        %v4305 = vsel %vm808, %v4215, 0
        %4307 = vmatprep.subr.mxu0 0.0
        %4308 = vmatpush1.xpose.msra.mxu0 0.0
        %4309 = vmatprep.subr.mxu0 0.0
        %4310 = vmatpush1.xpose.msra.mxu0 0.0
        %4311 = vmatprep.subr.mxu0 0.0
        %4312 = vmatpush1.xpose.msra.mxu0 0.0
        %4313 = vmatprep.subr.mxu0 0.0
        %4314 = vmatpush1.xpose.msra.mxu0 0.0
        %4315 = vmatprep.subr.mxu0 0.0
        %4316 = vmatpush1.xpose.msra.mxu0 0.0
        %4317 = vmatprep.subr.mxu0 0.0
        %4318 = vmatpush1.xpose.msra.mxu0 0.0
        %4319 = vmatprep.subr.mxu0 0.0
        %4320 = vmatpush1.xpose.msra.mxu0 0.0
        %4321 = vmatprep.subr.mxu0 0.0
        %4322 = vmatpush1.xpose.msra.mxu0 0.0
        %4323 = vmatprep.subr.mxu0 0.0
        %4324 = vmatpush1.xpose.msra.mxu0 0.0
        %4325 = vmatprep.subr.mxu0 0.0
        %4326 = vmatpush1.xpose.msra.mxu0 0.0
        %4327 = vmatprep.subr.mxu0 0.0
        %4328 = vmatpush1.xpose.msra.mxu0 0.0
        %4329 = vmatprep.subr.mxu0 0.0
        %4330 = vmatpush1.xpose.msra.mxu0 0.0
        %4331 = vmatprep.subr.mxu0 0.0
        %4332 = vmatpush1.xpose.msra.mxu0 0.0
        %4333 = vmatprep.subr.mxu0 0.0
        %4334 = vmatpush1.xpose.msra.mxu0 0.0
        %4335 = vmatprep.subr.mxu0 0.0
        %4336 = vmatpush1.xpose.msra.mxu0 0.0
        %4337 = vmatprep.subr.mxu0 0.0
        %4338 = vmatpush1.xpose.msra.mxu0 %v4305
        %4339 = vmatprep.subr.mxu0 0.0
        %4340 = vmatpush2.xpose.msra.mxu0 0.0
        %4341 = vmatprep.subr.mxu0 0.0
        %4342 = vmatpush2.xpose.msra.mxu0 0.0
        %4343 = vmatprep.subr.mxu0 0.0
        %4344 = vmatpush2.xpose.msra.mxu0 0.0
        %4345 = vmatprep.subr.mxu0 0.0
        %4346 = vmatpush2.xpose.msra.mxu0 0.0
        %4347 = vmatprep.subr.mxu0 0.0
        %4348 = vmatpush2.xpose.msra.mxu0 0.0
        %4349 = vmatprep.subr.mxu0 0.0
        %4350 = vmatpush2.xpose.msra.mxu0 0.0
        %4351 = vmatprep.subr.mxu0 0.0
        %4352 = vmatpush2.xpose.msra.mxu0 0.0
        %4353 = vmatprep.subr.mxu0 0.0
        %4354 = vmatpush2.xpose.msra.mxu0 0.0
        %4355 = vmatprep.subr.mxu0 0.0
        %4356 = vmatpush2.xpose.msra.mxu0 0.0
        %4357 = vmatprep.subr.mxu0 0.0
        %4358 = vmatpush2.xpose.msra.mxu0 0.0
        %4359 = vmatprep.subr.mxu0 0.0
        %4360 = vmatpush2.xpose.msra.mxu0 0.0
        %4361 = vmatprep.subr.mxu0 0.0
        %4362 = vmatpush2.xpose.msra.mxu0 0.0
        %4363 = vmatprep.subr.mxu0 0.0
        %4364 = vmatpush2.xpose.msra.mxu0 0.0
        %4365 = vmatprep.subr.mxu0 0.0
        %4366 = vmatpush2.xpose.msra.mxu0 0.0
        %4367 = vmatprep.subr.mxu0 0.0
        %4368 = vmatpush2.xpose.msra.mxu0 0.0
        %4369 = vmatprep.subr.mxu0 0.0
        %4370 = vmatpush2.xpose.msra.mxu0 0.0
        %4371 = vmatprep.mubr.f32.mxu0 0.0
        %4372 = vmatmul.mubr.f32.gmra.mxu0 %v4302
        %v4373 = vpop.f32.mrf.mxu0
        %v4374 = vadd.f32 0.0, %v4373
        %v4375 = vpop.f32.mrf.mxu0
        %4376 = vdwg.mxu0
        %v4377 = vmul.f32 %v4374, 0.25
        %v4378 = vsel %vm886, %v4377, -inf
        %4379 = vmax.xlane.f32.xlu0 %v4378
        %v4380 = vpop.xlane.xlu0 %4379
        %v4381 = vsub.f32 %v4377, %v4380
        %v4382 = vmul.f32 %v4381, 1.442695
        %v4383 = vpow.pop %v4382
        %v4384 = vsel %vm886, %v4383, 0.0
        %4385 = vadd.xlane.f32.xlu0 %v4384
        %v4386 = vpop.xlane.xlu0 %4385
        %v4387 = vrcp.pop %v4386
        %v4388 = vmul.f32 %v4383, %v4387
        %v4390 = vsel %vm886, %v4388, 0
        %4392 = vmatprep.subr.mxu0 0.0
        %4393 = vmatpush1.msra.mxu0 0.0
        %4394 = vmatprep.subr.mxu0 0.0
        %4395 = vmatpush1.msra.mxu0 0.0
        %4396 = vmatprep.subr.mxu0 0.0
        %4397 = vmatpush1.msra.mxu0 0.0
        %4398 = vmatprep.subr.mxu0 0.0
        %4399 = vmatpush1.msra.mxu0 0.0
        %4400 = vmatprep.subr.mxu0 0.0
        %4401 = vmatpush1.msra.mxu0 0.0
        %4402 = vmatprep.subr.mxu0 0.0
        %4403 = vmatpush1.msra.mxu0 0.0
        %4404 = vmatprep.subr.mxu0 0.0
        %4405 = vmatpush1.msra.mxu0 0.0
        %4406 = vmatprep.subr.mxu0 0.0
        %4407 = vmatpush1.msra.mxu0 0.0
        %4408 = vmatprep.subr.mxu0 0.0
        %4409 = vmatpush1.msra.mxu0 0.0
        %4410 = vmatprep.subr.mxu0 0.0
        %4411 = vmatpush1.msra.mxu0 0.0
        %4412 = vmatprep.subr.mxu0 0.0
        %4413 = vmatpush1.msra.mxu0 0.0
        %4414 = vmatprep.subr.mxu0 0.0
        %4415 = vmatpush1.msra.mxu0 0.0
        %4416 = vmatprep.subr.mxu0 0.0
        %4417 = vmatpush1.msra.mxu0 0.0
        %4418 = vmatprep.subr.mxu0 0.0
        %4419 = vmatpush1.msra.mxu0 0.0
        %4420 = vmatprep.subr.mxu0 0.0
        %4421 = vmatpush1.msra.mxu0 0.0
        %4422 = vmatprep.subr.mxu0 0.0
        %4423 = vmatpush1.msra.mxu0 %v4298
        %4424 = vmatprep.subr.mxu0 0.0
        %4425 = vmatpush2.msra.mxu0 0.0
        %4426 = vmatprep.subr.mxu0 0.0
        %4427 = vmatpush2.msra.mxu0 0.0
        %4428 = vmatprep.subr.mxu0 0.0
        %4429 = vmatpush2.msra.mxu0 0.0
        %4430 = vmatprep.subr.mxu0 0.0
        %4431 = vmatpush2.msra.mxu0 0.0
        %4432 = vmatprep.subr.mxu0 0.0
        %4433 = vmatpush2.msra.mxu0 0.0
        %4434 = vmatprep.subr.mxu0 0.0
        %4435 = vmatpush2.msra.mxu0 0.0
        %4436 = vmatprep.subr.mxu0 0.0
        %4437 = vmatpush2.msra.mxu0 0.0
        %4438 = vmatprep.subr.mxu0 0.0
        %4439 = vmatpush2.msra.mxu0 0.0
        %4440 = vmatprep.subr.mxu0 0.0
        %4441 = vmatpush2.msra.mxu0 0.0
        %4442 = vmatprep.subr.mxu0 0.0
        %4443 = vmatpush2.msra.mxu0 0.0
        %4444 = vmatprep.subr.mxu0 0.0
        %4445 = vmatpush2.msra.mxu0 0.0
        %4446 = vmatprep.subr.mxu0 0.0
        %4447 = vmatpush2.msra.mxu0 0.0
        %4448 = vmatprep.subr.mxu0 0.0
        %4449 = vmatpush2.msra.mxu0 0.0
        %4450 = vmatprep.subr.mxu0 0.0
        %4451 = vmatpush2.msra.mxu0 0.0
        %4452 = vmatprep.subr.mxu0 0.0
        %4453 = vmatpush2.msra.mxu0 0.0
        %4454 = vmatprep.subr.mxu0 0.0
        %4455 = vmatpush2.msra.mxu0 0.0
        %4456 = vmatprep.mubr.f32.mxu0 0.0
        %4457 = vmatmul.mubr.f32.gmra.mxu0 %v4390
        %v4458 = vpop.f32.mrf.mxu0
        %v4459 = vadd.f32 0.0, %v4458
        %v4460 = vpop.f32.mrf.mxu0
        %4461 = vdwg.mxu0
        %s4462 = scalar_lea.vmem %s4, 96
        %v4463 = vld [vmem:[%s4462] sm:$0xff]
        %v4464 = vld [vmem:[%s4462 + $0x8] sm:$0xff]
        %s4465 = scalar_lea.vmem %s2, 672
        %v4466 = vld [vmem:[%s4465] sm:$0xff]
        %v4467 = vld [vmem:[%s4465 + $0x8] sm:$0xff]
        %v4468 = vld [vmem:[%s4465 + $0x10] sm:$0xff]
        %v4469 = vld [vmem:[%s4465 + $0x18] sm:$0xff]
        %s4470 = scalar_lea.vmem %s3, 21
        %v4471 = vld [vmem:[%s4470] sm:$0x1]
        %v4473 = vlaneseq
        %v4474 = vshrl.u32 %v4473, 7
        %v4475 = vsub.s32 0, %v4474
        %v4476 = vrot.slane %v4471, %v4475
        %4478 = vmatprep.subr.mxu0 0.0
        %4479 = vmatpush1.msra.mxu0 0.0
        %4480 = vmatprep.subr.mxu0 0.0
        %4481 = vmatpush1.msra.mxu0 0.0
        %4482 = vmatprep.subr.mxu0 0.0
        %4483 = vmatpush1.msra.mxu0 0.0
        %4484 = vmatprep.subr.mxu0 0.0
        %4485 = vmatpush1.msra.mxu0 0.0
        %4486 = vmatprep.subr.mxu0 0.0
        %4487 = vmatpush1.msra.mxu0 0.0
        %4488 = vmatprep.subr.mxu0 0.0
        %4489 = vmatpush1.msra.mxu0 0.0
        %4490 = vmatprep.subr.mxu0 0.0
        %4491 = vmatpush1.msra.mxu0 0.0
        %4492 = vmatprep.subr.mxu0 0.0
        %4493 = vmatpush1.msra.mxu0 0.0
        %4494 = vmatprep.subr.mxu0 0.0
        %4495 = vmatpush1.msra.mxu0 0.0
        %4496 = vmatprep.subr.mxu0 0.0
        %4497 = vmatpush1.msra.mxu0 0.0
        %4498 = vmatprep.subr.mxu0 0.0
        %4499 = vmatpush1.msra.mxu0 0.0
        %4500 = vmatprep.subr.mxu0 0.0
        %4501 = vmatpush1.msra.mxu0 0.0
        %4502 = vmatprep.subr.mxu0 0.0
        %4503 = vmatpush1.msra.mxu0 %v4469
        %4504 = vmatprep.subr.mxu0 0.0
        %4505 = vmatpush1.msra.mxu0 %v4468
        %4506 = vmatprep.subr.mxu0 0.0
        %4507 = vmatpush1.msra.mxu0 %v4467
        %4508 = vmatprep.subr.mxu0 0.0
        %4509 = vmatpush1.msra.mxu0 %v4466
        %4510 = vmatprep.subr.mxu0 0.0
        %4511 = vmatpush2.msra.mxu0 0.0
        %4512 = vmatprep.subr.mxu0 0.0
        %4513 = vmatpush2.msra.mxu0 0.0
        %4514 = vmatprep.subr.mxu0 0.0
        %4515 = vmatpush2.msra.mxu0 0.0
        %4516 = vmatprep.subr.mxu0 0.0
        %4517 = vmatpush2.msra.mxu0 0.0
        %4518 = vmatprep.subr.mxu0 0.0
        %4519 = vmatpush2.msra.mxu0 0.0
        %4520 = vmatprep.subr.mxu0 0.0
        %4521 = vmatpush2.msra.mxu0 0.0
        %4522 = vmatprep.subr.mxu0 0.0
        %4523 = vmatpush2.msra.mxu0 0.0
        %4524 = vmatprep.subr.mxu0 0.0
        %4525 = vmatpush2.msra.mxu0 0.0
        %4526 = vmatprep.subr.mxu0 0.0
        %4527 = vmatpush2.msra.mxu0 0.0
        %4528 = vmatprep.subr.mxu0 0.0
        %4529 = vmatpush2.msra.mxu0 0.0
        %4530 = vmatprep.subr.mxu0 0.0
        %4531 = vmatpush2.msra.mxu0 0.0
        %4532 = vmatprep.subr.mxu0 0.0
        %4533 = vmatpush2.msra.mxu0 0.0
        %4534 = vmatprep.subr.mxu0 0.0
        %4535 = vmatpush2.msra.mxu0 0.0
        %4536 = vmatprep.subr.mxu0 0.0
        %4537 = vmatpush2.msra.mxu0 0.0
        %4538 = vmatprep.subr.mxu0 0.0
        %4539 = vmatpush2.msra.mxu0 0.0
        %4540 = vmatprep.subr.mxu0 0.0
        %4541 = vmatpush2.msra.mxu0 0.0
        %4542 = vmatprep.mubr.f32.mxu0 0.0
        %4543 = vmatmul.mubr.f32.gmra.mxu0 %v4060
        %v4544 = vpop.f32.mrf.mxu0
        %v4545 = vadd.f32 %v4476, %v4544
        %v4546 = vpop.f32.mrf.mxu0
        %4547 = vdwg.mxu0
        %s4548 = scalar_lea.vmem %s2, 704
        %v4549 = vld [vmem:[%s4548] sm:$0xff]
        %v4550 = vld [vmem:[%s4548 + $0x8] sm:$0xff]
        %v4551 = vld [vmem:[%s4548 + $0x10] sm:$0xff]
        %v4552 = vld [vmem:[%s4548 + $0x18] sm:$0xff]
        %s4553 = scalar_lea.vmem %s3, 22
        %v4554 = vld [vmem:[%s4553] sm:$0x1]
        %v4556 = vlaneseq
        %v4557 = vshrl.u32 %v4556, 7
        %v4558 = vsub.s32 0, %v4557
        %v4559 = vrot.slane %v4554, %v4558
        %4561 = vmatprep.subr.mxu0 0.0
        %4562 = vmatpush1.msra.mxu0 0.0
        %4563 = vmatprep.subr.mxu0 0.0
        %4564 = vmatpush1.msra.mxu0 0.0
        %4565 = vmatprep.subr.mxu0 0.0
        %4566 = vmatpush1.msra.mxu0 0.0
        %4567 = vmatprep.subr.mxu0 0.0
        %4568 = vmatpush1.msra.mxu0 0.0
        %4569 = vmatprep.subr.mxu0 0.0
        %4570 = vmatpush1.msra.mxu0 0.0
        %4571 = vmatprep.subr.mxu0 0.0
        %4572 = vmatpush1.msra.mxu0 0.0
        %4573 = vmatprep.subr.mxu0 0.0
        %4574 = vmatpush1.msra.mxu0 0.0
        %4575 = vmatprep.subr.mxu0 0.0
        %4576 = vmatpush1.msra.mxu0 0.0
        %4577 = vmatprep.subr.mxu0 0.0
        %4578 = vmatpush1.msra.mxu0 0.0
        %4579 = vmatprep.subr.mxu0 0.0
        %4580 = vmatpush1.msra.mxu0 0.0
        %4581 = vmatprep.subr.mxu0 0.0
        %4582 = vmatpush1.msra.mxu0 0.0
        %4583 = vmatprep.subr.mxu0 0.0
        %4584 = vmatpush1.msra.mxu0 0.0
        %4585 = vmatprep.subr.mxu0 0.0
        %4586 = vmatpush1.msra.mxu0 %v4552
        %4587 = vmatprep.subr.mxu0 0.0
        %4588 = vmatpush1.msra.mxu0 %v4551
        %4589 = vmatprep.subr.mxu0 0.0
        %4590 = vmatpush1.msra.mxu0 %v4550
        %4591 = vmatprep.subr.mxu0 0.0
        %4592 = vmatpush1.msra.mxu0 %v4549
        %4593 = vmatprep.subr.mxu0 0.0
        %4594 = vmatpush2.msra.mxu0 0.0
        %4595 = vmatprep.subr.mxu0 0.0
        %4596 = vmatpush2.msra.mxu0 0.0
        %4597 = vmatprep.subr.mxu0 0.0
        %4598 = vmatpush2.msra.mxu0 0.0
        %4599 = vmatprep.subr.mxu0 0.0
        %4600 = vmatpush2.msra.mxu0 0.0
        %4601 = vmatprep.subr.mxu0 0.0
        %4602 = vmatpush2.msra.mxu0 0.0
        %4603 = vmatprep.subr.mxu0 0.0
        %4604 = vmatpush2.msra.mxu0 0.0
        %4605 = vmatprep.subr.mxu0 0.0
        %4606 = vmatpush2.msra.mxu0 0.0
        %4607 = vmatprep.subr.mxu0 0.0
        %4608 = vmatpush2.msra.mxu0 0.0
        %4609 = vmatprep.subr.mxu0 0.0
        %4610 = vmatpush2.msra.mxu0 0.0
        %4611 = vmatprep.subr.mxu0 0.0
        %4612 = vmatpush2.msra.mxu0 0.0
        %4613 = vmatprep.subr.mxu0 0.0
        %4614 = vmatpush2.msra.mxu0 0.0
        %4615 = vmatprep.subr.mxu0 0.0
        %4616 = vmatpush2.msra.mxu0 0.0
        %4617 = vmatprep.subr.mxu0 0.0
        %4618 = vmatpush2.msra.mxu0 0.0
        %4619 = vmatprep.subr.mxu0 0.0
        %4620 = vmatpush2.msra.mxu0 0.0
        %4621 = vmatprep.subr.mxu0 0.0
        %4622 = vmatpush2.msra.mxu0 0.0
        %4623 = vmatprep.subr.mxu0 0.0
        %4624 = vmatpush2.msra.mxu0 0.0
        %4625 = vmatprep.mubr.f32.mxu0 0.0
        %4626 = vmatmul.mubr.f32.gmra.mxu0 %v4146
        %v4627 = vpop.f32.mrf.mxu0
        %v4628 = vadd.f32 %v4559, %v4627
        %v4629 = vpop.f32.mrf.mxu0
        %4630 = vdwg.mxu0
        %s4631 = scalar_lea.vmem %s2, 736
        %v4632 = vld [vmem:[%s4631] sm:$0xff]
        %v4633 = vld [vmem:[%s4631 + $0x8] sm:$0xff]
        %v4634 = vld [vmem:[%s4631 + $0x10] sm:$0xff]
        %v4635 = vld [vmem:[%s4631 + $0x18] sm:$0xff]
        %s4636 = scalar_lea.vmem %s3, 23
        %v4637 = vld [vmem:[%s4636] sm:$0x1]
        %v4639 = vlaneseq
        %v4640 = vshrl.u32 %v4639, 7
        %v4641 = vsub.s32 0, %v4640
        %v4642 = vrot.slane %v4637, %v4641
        %4644 = vmatprep.subr.mxu0 0.0
        %4645 = vmatpush1.msra.mxu0 0.0
        %4646 = vmatprep.subr.mxu0 0.0
        %4647 = vmatpush1.msra.mxu0 0.0
        %4648 = vmatprep.subr.mxu0 0.0
        %4649 = vmatpush1.msra.mxu0 0.0
        %4650 = vmatprep.subr.mxu0 0.0
        %4651 = vmatpush1.msra.mxu0 0.0
        %4652 = vmatprep.subr.mxu0 0.0
        %4653 = vmatpush1.msra.mxu0 0.0
        %4654 = vmatprep.subr.mxu0 0.0
        %4655 = vmatpush1.msra.mxu0 0.0
        %4656 = vmatprep.subr.mxu0 0.0
        %4657 = vmatpush1.msra.mxu0 0.0
        %4658 = vmatprep.subr.mxu0 0.0
        %4659 = vmatpush1.msra.mxu0 0.0
        %4660 = vmatprep.subr.mxu0 0.0
        %4661 = vmatpush1.msra.mxu0 0.0
        %4662 = vmatprep.subr.mxu0 0.0
        %4663 = vmatpush1.msra.mxu0 0.0
        %4664 = vmatprep.subr.mxu0 0.0
        %4665 = vmatpush1.msra.mxu0 0.0
        %4666 = vmatprep.subr.mxu0 0.0
        %4667 = vmatpush1.msra.mxu0 0.0
        %4668 = vmatprep.subr.mxu0 0.0
        %4669 = vmatpush1.msra.mxu0 %v4635
        %4670 = vmatprep.subr.mxu0 0.0
        %4671 = vmatpush1.msra.mxu0 %v4634
        %4672 = vmatprep.subr.mxu0 0.0
        %4673 = vmatpush1.msra.mxu0 %v4633
        %4674 = vmatprep.subr.mxu0 0.0
        %4675 = vmatpush1.msra.mxu0 %v4632
        %4676 = vmatprep.subr.mxu0 0.0
        %4677 = vmatpush2.msra.mxu0 0.0
        %4678 = vmatprep.subr.mxu0 0.0
        %4679 = vmatpush2.msra.mxu0 0.0
        %4680 = vmatprep.subr.mxu0 0.0
        %4681 = vmatpush2.msra.mxu0 0.0
        %4682 = vmatprep.subr.mxu0 0.0
        %4683 = vmatpush2.msra.mxu0 0.0
        %4684 = vmatprep.subr.mxu0 0.0
        %4685 = vmatpush2.msra.mxu0 0.0
        %4686 = vmatprep.subr.mxu0 0.0
        %4687 = vmatpush2.msra.mxu0 0.0
        %4688 = vmatprep.subr.mxu0 0.0
        %4689 = vmatpush2.msra.mxu0 0.0
        %4690 = vmatprep.subr.mxu0 0.0
        %4691 = vmatpush2.msra.mxu0 0.0
        %4692 = vmatprep.subr.mxu0 0.0
        %4693 = vmatpush2.msra.mxu0 0.0
        %4694 = vmatprep.subr.mxu0 0.0
        %4695 = vmatpush2.msra.mxu0 0.0
        %4696 = vmatprep.subr.mxu0 0.0
        %4697 = vmatpush2.msra.mxu0 0.0
        %4698 = vmatprep.subr.mxu0 0.0
        %4699 = vmatpush2.msra.mxu0 0.0
        %4700 = vmatprep.subr.mxu0 0.0
        %4701 = vmatpush2.msra.mxu0 0.0
        %4702 = vmatprep.subr.mxu0 0.0
        %4703 = vmatpush2.msra.mxu0 0.0
        %4704 = vmatprep.subr.mxu0 0.0
        %4705 = vmatpush2.msra.mxu0 0.0
        %4706 = vmatprep.subr.mxu0 0.0
        %4707 = vmatpush2.msra.mxu0 0.0
        %4708 = vmatprep.mubr.f32.mxu0 0.0
        %4709 = vmatmul.mubr.f32.gmra.mxu0 %v4146
        %v4710 = vpop.f32.mrf.mxu0
        %v4711 = vadd.f32 %v4642, %v4710
        %v4712 = vpop.f32.mrf.mxu0
        %4713 = vdwg.mxu0
        %v4715 = vsel %vm808, %v4545, 0
        %v4718 = vsel %vm808, %v4628, 0
        %4720 = vmatprep.subr.mxu0 0.0
        %4721 = vmatpush1.xpose.msra.mxu0 0.0
        %4722 = vmatprep.subr.mxu0 0.0
        %4723 = vmatpush1.xpose.msra.mxu0 0.0
        %4724 = vmatprep.subr.mxu0 0.0
        %4725 = vmatpush1.xpose.msra.mxu0 0.0
        %4726 = vmatprep.subr.mxu0 0.0
        %4727 = vmatpush1.xpose.msra.mxu0 0.0
        %4728 = vmatprep.subr.mxu0 0.0
        %4729 = vmatpush1.xpose.msra.mxu0 0.0
        %4730 = vmatprep.subr.mxu0 0.0
        %4731 = vmatpush1.xpose.msra.mxu0 0.0
        %4732 = vmatprep.subr.mxu0 0.0
        %4733 = vmatpush1.xpose.msra.mxu0 0.0
        %4734 = vmatprep.subr.mxu0 0.0
        %4735 = vmatpush1.xpose.msra.mxu0 0.0
        %4736 = vmatprep.subr.mxu0 0.0
        %4737 = vmatpush1.xpose.msra.mxu0 0.0
        %4738 = vmatprep.subr.mxu0 0.0
        %4739 = vmatpush1.xpose.msra.mxu0 0.0
        %4740 = vmatprep.subr.mxu0 0.0
        %4741 = vmatpush1.xpose.msra.mxu0 0.0
        %4742 = vmatprep.subr.mxu0 0.0
        %4743 = vmatpush1.xpose.msra.mxu0 0.0
        %4744 = vmatprep.subr.mxu0 0.0
        %4745 = vmatpush1.xpose.msra.mxu0 0.0
        %4746 = vmatprep.subr.mxu0 0.0
        %4747 = vmatpush1.xpose.msra.mxu0 0.0
        %4748 = vmatprep.subr.mxu0 0.0
        %4749 = vmatpush1.xpose.msra.mxu0 0.0
        %4750 = vmatprep.subr.mxu0 0.0
        %4751 = vmatpush1.xpose.msra.mxu0 %v4718
        %4752 = vmatprep.subr.mxu0 0.0
        %4753 = vmatpush2.xpose.msra.mxu0 0.0
        %4754 = vmatprep.subr.mxu0 0.0
        %4755 = vmatpush2.xpose.msra.mxu0 0.0
        %4756 = vmatprep.subr.mxu0 0.0
        %4757 = vmatpush2.xpose.msra.mxu0 0.0
        %4758 = vmatprep.subr.mxu0 0.0
        %4759 = vmatpush2.xpose.msra.mxu0 0.0
        %4760 = vmatprep.subr.mxu0 0.0
        %4761 = vmatpush2.xpose.msra.mxu0 0.0
        %4762 = vmatprep.subr.mxu0 0.0
        %4763 = vmatpush2.xpose.msra.mxu0 0.0
        %4764 = vmatprep.subr.mxu0 0.0
        %4765 = vmatpush2.xpose.msra.mxu0 0.0
        %4766 = vmatprep.subr.mxu0 0.0
        %4767 = vmatpush2.xpose.msra.mxu0 0.0
        %4768 = vmatprep.subr.mxu0 0.0
        %4769 = vmatpush2.xpose.msra.mxu0 0.0
        %4770 = vmatprep.subr.mxu0 0.0
        %4771 = vmatpush2.xpose.msra.mxu0 0.0
        %4772 = vmatprep.subr.mxu0 0.0
        %4773 = vmatpush2.xpose.msra.mxu0 0.0
        %4774 = vmatprep.subr.mxu0 0.0
        %4775 = vmatpush2.xpose.msra.mxu0 0.0
        %4776 = vmatprep.subr.mxu0 0.0
        %4777 = vmatpush2.xpose.msra.mxu0 0.0
        %4778 = vmatprep.subr.mxu0 0.0
        %4779 = vmatpush2.xpose.msra.mxu0 0.0
        %4780 = vmatprep.subr.mxu0 0.0
        %4781 = vmatpush2.xpose.msra.mxu0 0.0
        %4782 = vmatprep.subr.mxu0 0.0
        %4783 = vmatpush2.xpose.msra.mxu0 0.0
        %4784 = vmatprep.mubr.f32.mxu0 0.0
        %4785 = vmatmul.mubr.f32.gmra.mxu0 %v4715
        %v4786 = vpop.f32.mrf.mxu0
        %v4787 = vadd.f32 0.0, %v4786
        %v4788 = vpop.f32.mrf.mxu0
        %4789 = vdwg.mxu0
        %v4790 = vmul.f32 %v4787, 0.25
        %v4791 = vsel %vm886, %v4790, -inf
        %4792 = vmax.xlane.f32.xlu0 %v4791
        %v4793 = vpop.xlane.xlu0 %4792
        %v4794 = vsub.f32 %v4790, %v4793
        %v4795 = vmul.f32 %v4794, 1.442695
        %v4796 = vpow.pop %v4795
        %v4797 = vsel %vm886, %v4796, 0.0
        %4798 = vadd.xlane.f32.xlu0 %v4797
        %v4799 = vpop.xlane.xlu0 %4798
        %v4800 = vrcp.pop %v4799
        %v4801 = vmul.f32 %v4796, %v4800
        %v4803 = vsel %vm886, %v4801, 0
        %4805 = vmatprep.subr.mxu0 0.0
        %4806 = vmatpush1.msra.mxu0 0.0
        %4807 = vmatprep.subr.mxu0 0.0
        %4808 = vmatpush1.msra.mxu0 0.0
        %4809 = vmatprep.subr.mxu0 0.0
        %4810 = vmatpush1.msra.mxu0 0.0
        %4811 = vmatprep.subr.mxu0 0.0
        %4812 = vmatpush1.msra.mxu0 0.0
        %4813 = vmatprep.subr.mxu0 0.0
        %4814 = vmatpush1.msra.mxu0 0.0
        %4815 = vmatprep.subr.mxu0 0.0
        %4816 = vmatpush1.msra.mxu0 0.0
        %4817 = vmatprep.subr.mxu0 0.0
        %4818 = vmatpush1.msra.mxu0 0.0
        %4819 = vmatprep.subr.mxu0 0.0
        %4820 = vmatpush1.msra.mxu0 0.0
        %4821 = vmatprep.subr.mxu0 0.0
        %4822 = vmatpush1.msra.mxu0 0.0
        %4823 = vmatprep.subr.mxu0 0.0
        %4824 = vmatpush1.msra.mxu0 0.0
        %4825 = vmatprep.subr.mxu0 0.0
        %4826 = vmatpush1.msra.mxu0 0.0
        %4827 = vmatprep.subr.mxu0 0.0
        %4828 = vmatpush1.msra.mxu0 0.0
        %4829 = vmatprep.subr.mxu0 0.0
        %4830 = vmatpush1.msra.mxu0 0.0
        %4831 = vmatprep.subr.mxu0 0.0
        %4832 = vmatpush1.msra.mxu0 0.0
        %4833 = vmatprep.subr.mxu0 0.0
        %4834 = vmatpush1.msra.mxu0 0.0
        %4835 = vmatprep.subr.mxu0 0.0
        %4836 = vmatpush1.msra.mxu0 %v4711
        %4837 = vmatprep.subr.mxu0 0.0
        %4838 = vmatpush2.msra.mxu0 0.0
        %4839 = vmatprep.subr.mxu0 0.0
        %4840 = vmatpush2.msra.mxu0 0.0
        %4841 = vmatprep.subr.mxu0 0.0
        %4842 = vmatpush2.msra.mxu0 0.0
        %4843 = vmatprep.subr.mxu0 0.0
        %4844 = vmatpush2.msra.mxu0 0.0
        %4845 = vmatprep.subr.mxu0 0.0
        %4846 = vmatpush2.msra.mxu0 0.0
        %4847 = vmatprep.subr.mxu0 0.0
        %4848 = vmatpush2.msra.mxu0 0.0
        %4849 = vmatprep.subr.mxu0 0.0
        %4850 = vmatpush2.msra.mxu0 0.0
        %4851 = vmatprep.subr.mxu0 0.0
        %4852 = vmatpush2.msra.mxu0 0.0
        %4853 = vmatprep.subr.mxu0 0.0
        %4854 = vmatpush2.msra.mxu0 0.0
        %4855 = vmatprep.subr.mxu0 0.0
        %4856 = vmatpush2.msra.mxu0 0.0
        %4857 = vmatprep.subr.mxu0 0.0
        %4858 = vmatpush2.msra.mxu0 0.0
        %4859 = vmatprep.subr.mxu0 0.0
        %4860 = vmatpush2.msra.mxu0 0.0
        %4861 = vmatprep.subr.mxu0 0.0
        %4862 = vmatpush2.msra.mxu0 0.0
        %4863 = vmatprep.subr.mxu0 0.0
        %4864 = vmatpush2.msra.mxu0 0.0
        %4865 = vmatprep.subr.mxu0 0.0
        %4866 = vmatpush2.msra.mxu0 0.0
        %4867 = vmatprep.subr.mxu0 0.0
        %4868 = vmatpush2.msra.mxu0 0.0
        %4869 = vmatprep.mubr.f32.mxu0 0.0
        %4870 = vmatmul.mubr.f32.gmra.mxu0 %v4803
        %v4871 = vpop.f32.mrf.mxu0
        %v4872 = vadd.f32 0.0, %v4871
        %v4873 = vpop.f32.mrf.mxu0
        %4874 = vdwg.mxu0
        %s4875 = scalar_lea.vmem %s4, 112
        %v4876 = vld [vmem:[%s4875] sm:$0xff]
        %v4877 = vld [vmem:[%s4875 + $0x8] sm:$0xff]
        %v4879 = vsel %vm808, %v4872, 0
        %4881 = vmatprep.subr.mxu0 0.0
        %4882 = vmatpush1.msra.mxu0 0.0
        %4883 = vmatprep.subr.mxu0 0.0
        %4884 = vmatpush1.msra.mxu0 0.0
        %4885 = vmatprep.subr.mxu0 0.0
        %4886 = vmatpush1.msra.mxu0 0.0
        %4887 = vmatprep.subr.mxu0 0.0
        %4888 = vmatpush1.msra.mxu0 0.0
        %4889 = vmatprep.subr.mxu0 0.0
        %4890 = vmatpush1.msra.mxu0 0.0
        %4891 = vmatprep.subr.mxu0 0.0
        %4892 = vmatpush1.msra.mxu0 0.0
        %4893 = vmatprep.subr.mxu0 0.0
        %4894 = vmatpush1.msra.mxu0 0.0
        %4895 = vmatprep.subr.mxu0 0.0
        %4896 = vmatpush1.msra.mxu0 0.0
        %4897 = vmatprep.subr.mxu0 0.0
        %4898 = vmatpush1.msra.mxu0 0.0
        %4899 = vmatprep.subr.mxu0 0.0
        %4900 = vmatpush1.msra.mxu0 0.0
        %4901 = vmatprep.subr.mxu0 0.0
        %4902 = vmatpush1.msra.mxu0 0.0
        %4903 = vmatprep.subr.mxu0 0.0
        %4904 = vmatpush1.msra.mxu0 0.0
        %4905 = vmatprep.subr.mxu0 0.0
        %4906 = vmatpush1.msra.mxu0 0.0
        %4907 = vmatprep.subr.mxu0 0.0
        %4908 = vmatpush1.msra.mxu0 0.0
        %4909 = vmatprep.subr.mxu0 0.0
        %4910 = vmatpush1.msra.mxu0 %v4877
        %4911 = vmatprep.subr.mxu0 0.0
        %4912 = vmatpush1.msra.mxu0 %v4876
        %4913 = vmatprep.subr.mxu0 0.0
        %4914 = vmatpush2.msra.mxu0 0.0
        %4915 = vmatprep.subr.mxu0 0.0
        %4916 = vmatpush2.msra.mxu0 0.0
        %4917 = vmatprep.subr.mxu0 0.0
        %4918 = vmatpush2.msra.mxu0 0.0
        %4919 = vmatprep.subr.mxu0 0.0
        %4920 = vmatpush2.msra.mxu0 0.0
        %4921 = vmatprep.subr.mxu0 0.0
        %4922 = vmatpush2.msra.mxu0 0.0
        %4923 = vmatprep.subr.mxu0 0.0
        %4924 = vmatpush2.msra.mxu0 0.0
        %4925 = vmatprep.subr.mxu0 0.0
        %4926 = vmatpush2.msra.mxu0 0.0
        %4927 = vmatprep.subr.mxu0 0.0
        %4928 = vmatpush2.msra.mxu0 0.0
        %4929 = vmatprep.subr.mxu0 0.0
        %4930 = vmatpush2.msra.mxu0 0.0
        %4931 = vmatprep.subr.mxu0 0.0
        %4932 = vmatpush2.msra.mxu0 0.0
        %4933 = vmatprep.subr.mxu0 0.0
        %4934 = vmatpush2.msra.mxu0 0.0
        %4935 = vmatprep.subr.mxu0 0.0
        %4936 = vmatpush2.msra.mxu0 0.0
        %4937 = vmatprep.subr.mxu0 0.0
        %4938 = vmatpush2.msra.mxu0 0.0
        %4939 = vmatprep.subr.mxu0 0.0
        %4940 = vmatpush2.msra.mxu0 0.0
        %4941 = vmatprep.subr.mxu0 0.0
        %4942 = vmatpush2.msra.mxu0 0.0
        %4943 = vmatprep.subr.mxu0 0.0
        %4944 = vmatpush2.msra.mxu0 0.0
        %4945 = vmatprep.mubr.f32.mxu0 0.0
        %4946 = vmatmul.mubr.f32.gmra.mxu0 %v4879
        %v4947 = vpop.f32.mrf.mxu0
        %v4948 = vadd.f32 0.0, %v4947
        %v4949 = vpop.f32.mrf.mxu0
        %4950 = vdwg.mxu0
        %v4952 = vsel %vm808, %v4459, 0
        %4954 = vmatprep.subr.mxu0 0.0
        %4955 = vmatpush1.msra.mxu0 0.0
        %4956 = vmatprep.subr.mxu0 0.0
        %4957 = vmatpush1.msra.mxu0 0.0
        %4958 = vmatprep.subr.mxu0 0.0
        %4959 = vmatpush1.msra.mxu0 0.0
        %4960 = vmatprep.subr.mxu0 0.0
        %4961 = vmatpush1.msra.mxu0 0.0
        %4962 = vmatprep.subr.mxu0 0.0
        %4963 = vmatpush1.msra.mxu0 0.0
        %4964 = vmatprep.subr.mxu0 0.0
        %4965 = vmatpush1.msra.mxu0 0.0
        %4966 = vmatprep.subr.mxu0 0.0
        %4967 = vmatpush1.msra.mxu0 0.0
        %4968 = vmatprep.subr.mxu0 0.0
        %4969 = vmatpush1.msra.mxu0 0.0
        %4970 = vmatprep.subr.mxu0 0.0
        %4971 = vmatpush1.msra.mxu0 0.0
        %4972 = vmatprep.subr.mxu0 0.0
        %4973 = vmatpush1.msra.mxu0 0.0
        %4974 = vmatprep.subr.mxu0 0.0
        %4975 = vmatpush1.msra.mxu0 0.0
        %4976 = vmatprep.subr.mxu0 0.0
        %4977 = vmatpush1.msra.mxu0 0.0
        %4978 = vmatprep.subr.mxu0 0.0
        %4979 = vmatpush1.msra.mxu0 0.0
        %4980 = vmatprep.subr.mxu0 0.0
        %4981 = vmatpush1.msra.mxu0 0.0
        %4982 = vmatprep.subr.mxu0 0.0
        %4983 = vmatpush1.msra.mxu0 %v4464
        %4984 = vmatprep.subr.mxu0 0.0
        %4985 = vmatpush1.msra.mxu0 %v4463
        %4986 = vmatprep.subr.mxu0 0.0
        %4987 = vmatpush2.msra.mxu0 0.0
        %4988 = vmatprep.subr.mxu0 0.0
        %4989 = vmatpush2.msra.mxu0 0.0
        %4990 = vmatprep.subr.mxu0 0.0
        %4991 = vmatpush2.msra.mxu0 0.0
        %4992 = vmatprep.subr.mxu0 0.0
        %4993 = vmatpush2.msra.mxu0 0.0
        %4994 = vmatprep.subr.mxu0 0.0
        %4995 = vmatpush2.msra.mxu0 0.0
        %4996 = vmatprep.subr.mxu0 0.0
        %4997 = vmatpush2.msra.mxu0 0.0
        %4998 = vmatprep.subr.mxu0 0.0
        %4999 = vmatpush2.msra.mxu0 0.0
        %5000 = vmatprep.subr.mxu0 0.0
        %5001 = vmatpush2.msra.mxu0 0.0
        %5002 = vmatprep.subr.mxu0 0.0
        %5003 = vmatpush2.msra.mxu0 0.0
        %5004 = vmatprep.subr.mxu0 0.0
        %5005 = vmatpush2.msra.mxu0 0.0
        %5006 = vmatprep.subr.mxu0 0.0
        %5007 = vmatpush2.msra.mxu0 0.0
        %5008 = vmatprep.subr.mxu0 0.0
        %5009 = vmatpush2.msra.mxu0 0.0
        %5010 = vmatprep.subr.mxu0 0.0
        %5011 = vmatpush2.msra.mxu0 0.0
        %5012 = vmatprep.subr.mxu0 0.0
        %5013 = vmatpush2.msra.mxu0 0.0
        %5014 = vmatprep.subr.mxu0 0.0
        %5015 = vmatpush2.msra.mxu0 0.0
        %5016 = vmatprep.subr.mxu0 0.0
        %5017 = vmatpush2.msra.mxu0 0.0
        %5018 = vmatprep.mubr.f32.mxu0 0.0
        %5019 = vmatmul.mubr.f32.gmra.mxu0 %v4952
        %v5020 = vpop.f32.mrf.mxu0
        %v5021 = vadd.f32 %v4948, %v5020
        %v5022 = vpop.f32.mrf.mxu0
        %5023 = vdwg.mxu0
        %s5024 = scalar_lea.vmem %s5, 3
        %v5025 = vld [vmem:[%s5024] sm:$0x1]
        %v5027 = vlaneseq
        %v5028 = vshrl.u32 %v5027, 7
        %v5029 = vsub.s32 0, %v5028
        %v5030 = vrot.slane %v5025, %v5029
        %v5032 = vadd.f32 %v5021, %v5030
        %v5033 = vadd.f32 %v4045, %v5032
        %v5034 = vsel %vm568, %v5033, 0.0
        %5035 = vadd.xlane.f32.xlu0 %v5034
        %v5036 = vpop.xlane.xlu0 %5035
        %v5037 = vmul.f32 %v5036, %v1544
        %v5038 = vsub.f32 %v5033, %v5037
        %v5039 = vmul.f32 %v5038, %v5038
        %v5040 = vsel %vm568, %v5039, 0.0
        %5041 = vadd.xlane.f32.xlu0 %v5040
        %v5042 = vpop.xlane.xlu0 %5041
        %v5043 = vmul.f32 %v5042, %v1544
        %v5044 = vadd.f32 %v5043, 1e-05
        %v5045 = vrsqrt.pop %v5044
        %v5046 = vmul.f32 %v5038, %v5045
        %s5047 = scalar_lea.vmem %s10, 6
        %v5048 = vld [vmem:[%s5047] sm:$0x1]
        %v5050 = vlaneseq
        %v5051 = vshrl.u32 %v5050, 7
        %v5052 = vsub.s32 0, %v5051
        %v5053 = vrot.slane %v5048, %v5052
        %v5055 = vmul.f32 %v5046, %v5053
        %s5056 = scalar_lea.vmem %s11, 6
        %v5057 = vld [vmem:[%s5056] sm:$0x1]
        %v5059 = vlaneseq
        %v5060 = vshrl.u32 %v5059, 7
        %v5061 = vsub.s32 0, %v5060
        %v5062 = vrot.slane %v5057, %v5061
        %v5064 = vadd.f32 %v5055, %v5062
        %s5065 = scalar_lea.vmem %s6, 64
        %v5066 = vld [vmem:[%s5065] sm:$0xff]
        %v5067 = vld [vmem:[%s5065 + $0x8] sm:$0xff]
        %v5068 = vld [vmem:[%s5065 + $0x10] sm:$0xff]
        %v5069 = vld [vmem:[%s5065 + $0x18] sm:$0xff]
        %s5070 = scalar_lea.vmem %s7, 2
        %v5071 = vld [vmem:[%s5070] sm:$0x1]
        %v5073 = vlaneseq
        %v5074 = vshrl.u32 %v5073, 7
        %v5075 = vsub.s32 0, %v5074
        %v5076 = vrot.slane %v5071, %v5075
        %v5079 = vsel %vm568, %v5064, 0
        %5081 = vmatprep.subr.mxu0 0.0
        %5082 = vmatpush1.msra.mxu0 0.0
        %5083 = vmatprep.subr.mxu0 0.0
        %5084 = vmatpush1.msra.mxu0 0.0
        %5085 = vmatprep.subr.mxu0 0.0
        %5086 = vmatpush1.msra.mxu0 0.0
        %5087 = vmatprep.subr.mxu0 0.0
        %5088 = vmatpush1.msra.mxu0 0.0
        %5089 = vmatprep.subr.mxu0 0.0
        %5090 = vmatpush1.msra.mxu0 0.0
        %5091 = vmatprep.subr.mxu0 0.0
        %5092 = vmatpush1.msra.mxu0 0.0
        %5093 = vmatprep.subr.mxu0 0.0
        %5094 = vmatpush1.msra.mxu0 0.0
        %5095 = vmatprep.subr.mxu0 0.0
        %5096 = vmatpush1.msra.mxu0 0.0
        %5097 = vmatprep.subr.mxu0 0.0
        %5098 = vmatpush1.msra.mxu0 0.0
        %5099 = vmatprep.subr.mxu0 0.0
        %5100 = vmatpush1.msra.mxu0 0.0
        %5101 = vmatprep.subr.mxu0 0.0
        %5102 = vmatpush1.msra.mxu0 0.0
        %5103 = vmatprep.subr.mxu0 0.0
        %5104 = vmatpush1.msra.mxu0 0.0
        %5105 = vmatprep.subr.mxu0 0.0
        %5106 = vmatpush1.msra.mxu0 %v5069
        %5107 = vmatprep.subr.mxu0 0.0
        %5108 = vmatpush1.msra.mxu0 %v5068
        %5109 = vmatprep.subr.mxu0 0.0
        %5110 = vmatpush1.msra.mxu0 %v5067
        %5111 = vmatprep.subr.mxu0 0.0
        %5112 = vmatpush1.msra.mxu0 %v5066
        %5113 = vmatprep.subr.mxu0 0.0
        %5114 = vmatpush2.msra.mxu0 0.0
        %5115 = vmatprep.subr.mxu0 0.0
        %5116 = vmatpush2.msra.mxu0 0.0
        %5117 = vmatprep.subr.mxu0 0.0
        %5118 = vmatpush2.msra.mxu0 0.0
        %5119 = vmatprep.subr.mxu0 0.0
        %5120 = vmatpush2.msra.mxu0 0.0
        %5121 = vmatprep.subr.mxu0 0.0
        %5122 = vmatpush2.msra.mxu0 0.0
        %5123 = vmatprep.subr.mxu0 0.0
        %5124 = vmatpush2.msra.mxu0 0.0
        %5125 = vmatprep.subr.mxu0 0.0
        %5126 = vmatpush2.msra.mxu0 0.0
        %5127 = vmatprep.subr.mxu0 0.0
        %5128 = vmatpush2.msra.mxu0 0.0
        %5129 = vmatprep.subr.mxu0 0.0
        %5130 = vmatpush2.msra.mxu0 0.0
        %5131 = vmatprep.subr.mxu0 0.0
        %5132 = vmatpush2.msra.mxu0 0.0
        %5133 = vmatprep.subr.mxu0 0.0
        %5134 = vmatpush2.msra.mxu0 0.0
        %5135 = vmatprep.subr.mxu0 0.0
        %5136 = vmatpush2.msra.mxu0 0.0
        %5137 = vmatprep.subr.mxu0 0.0
        %5138 = vmatpush2.msra.mxu0 0.0
        %5139 = vmatprep.subr.mxu0 0.0
        %5140 = vmatpush2.msra.mxu0 0.0
        %5141 = vmatprep.subr.mxu0 0.0
        %5142 = vmatpush2.msra.mxu0 0.0
        %5143 = vmatprep.subr.mxu0 0.0
        %5144 = vmatpush2.msra.mxu0 0.0
        %5145 = vmatprep.mubr.f32.mxu0 0.0
        %5146 = vmatmul.mubr.f32.gmra.mxu0 %v5079
        %v5147 = vpop.f32.mrf.mxu0
        %v5148 = vadd.f32 %v5076, %v5147
        %v5149 = vpop.f32.mrf.mxu0
        %5150 = vdwg.mxu0
        %v5151 = vmax.f32 %v5148, 0.0
        %s5152 = scalar_lea.vmem %s8, 128
        %v5153 = vld [vmem:[%s5152] sm:$0xff]
        %v5154 = vld [vmem:[%s5152 + $0x8] sm:$0xff]
        %v5155 = vld [vmem:[%s5152 + $0x10] sm:$0xff]
        %v5156 = vld [vmem:[%s5152 + $0x18] sm:$0xff]
        %v5157 = vld [vmem:[%s5152 + $0x20] sm:$0xff]
        %v5158 = vld [vmem:[%s5152 + $0x28] sm:$0xff]
        %v5159 = vld [vmem:[%s5152 + $0x30] sm:$0xff]
        %v5160 = vld [vmem:[%s5152 + $0x38] sm:$0xff]
        %s5161 = scalar_lea.vmem %s9, 2
        %v5162 = vld [vmem:[%s5161] sm:$0x1]
        %v5164 = vlaneseq
        %v5165 = vshrl.u32 %v5164, 7
        %v5166 = vsub.s32 0, %v5165
        %v5167 = vrot.slane %v5162, %v5166
        %v5170 = vsel %vm1671, %v5151, 0
        %5172 = vmatprep.subr.mxu0 0.0
        %5173 = vmatpush1.msra.mxu0 0.0
        %5174 = vmatprep.subr.mxu0 0.0
        %5175 = vmatpush1.msra.mxu0 0.0
        %5176 = vmatprep.subr.mxu0 0.0
        %5177 = vmatpush1.msra.mxu0 0.0
        %5178 = vmatprep.subr.mxu0 0.0
        %5179 = vmatpush1.msra.mxu0 0.0
        %5180 = vmatprep.subr.mxu0 0.0
        %5181 = vmatpush1.msra.mxu0 0.0
        %5182 = vmatprep.subr.mxu0 0.0
        %5183 = vmatpush1.msra.mxu0 0.0
        %5184 = vmatprep.subr.mxu0 0.0
        %5185 = vmatpush1.msra.mxu0 0.0
        %5186 = vmatprep.subr.mxu0 0.0
        %5187 = vmatpush1.msra.mxu0 0.0
        %5188 = vmatprep.subr.mxu0 0.0
        %5189 = vmatpush1.msra.mxu0 %v5160
        %5190 = vmatprep.subr.mxu0 0.0
        %5191 = vmatpush1.msra.mxu0 %v5159
        %5192 = vmatprep.subr.mxu0 0.0
        %5193 = vmatpush1.msra.mxu0 %v5158
        %5194 = vmatprep.subr.mxu0 0.0
        %5195 = vmatpush1.msra.mxu0 %v5157
        %5196 = vmatprep.subr.mxu0 0.0
        %5197 = vmatpush1.msra.mxu0 %v5156
        %5198 = vmatprep.subr.mxu0 0.0
        %5199 = vmatpush1.msra.mxu0 %v5155
        %5200 = vmatprep.subr.mxu0 0.0
        %5201 = vmatpush1.msra.mxu0 %v5154
        %5202 = vmatprep.subr.mxu0 0.0
        %5203 = vmatpush1.msra.mxu0 %v5153
        %5204 = vmatprep.subr.mxu0 0.0
        %5205 = vmatpush2.msra.mxu0 0.0
        %5206 = vmatprep.subr.mxu0 0.0
        %5207 = vmatpush2.msra.mxu0 0.0
        %5208 = vmatprep.subr.mxu0 0.0
        %5209 = vmatpush2.msra.mxu0 0.0
        %5210 = vmatprep.subr.mxu0 0.0
        %5211 = vmatpush2.msra.mxu0 0.0
        %5212 = vmatprep.subr.mxu0 0.0
        %5213 = vmatpush2.msra.mxu0 0.0
        %5214 = vmatprep.subr.mxu0 0.0
        %5215 = vmatpush2.msra.mxu0 0.0
        %5216 = vmatprep.subr.mxu0 0.0
        %5217 = vmatpush2.msra.mxu0 0.0
        %5218 = vmatprep.subr.mxu0 0.0
        %5219 = vmatpush2.msra.mxu0 0.0
        %5220 = vmatprep.subr.mxu0 0.0
        %5221 = vmatpush2.msra.mxu0 0.0
        %5222 = vmatprep.subr.mxu0 0.0
        %5223 = vmatpush2.msra.mxu0 0.0
        %5224 = vmatprep.subr.mxu0 0.0
        %5225 = vmatpush2.msra.mxu0 0.0
        %5226 = vmatprep.subr.mxu0 0.0
        %5227 = vmatpush2.msra.mxu0 0.0
        %5228 = vmatprep.subr.mxu0 0.0
        %5229 = vmatpush2.msra.mxu0 0.0
        %5230 = vmatprep.subr.mxu0 0.0
        %5231 = vmatpush2.msra.mxu0 0.0
        %5232 = vmatprep.subr.mxu0 0.0
        %5233 = vmatpush2.msra.mxu0 0.0
        %5234 = vmatprep.subr.mxu0 0.0
        %5235 = vmatpush2.msra.mxu0 0.0
        %5236 = vmatprep.mubr.f32.mxu0 0.0
        %5237 = vmatmul.mubr.f32.gmra.mxu0 %v5170
        %v5238 = vpop.f32.mrf.mxu0
        %v5239 = vadd.f32 %v5167, %v5238
        %v5240 = vpop.f32.mrf.mxu0
        %5241 = vdwg.mxu0
        %v5242 = vadd.f32 %v5064, %v5239
        %v5243 = vsel %vm568, %v5242, 0.0
        %5244 = vadd.xlane.f32.xlu0 %v5243
        %v5245 = vpop.xlane.xlu0 %5244
        %v5246 = vmul.f32 %v5245, %v1544
        %v5247 = vsub.f32 %v5242, %v5246
        %v5248 = vmul.f32 %v5247, %v5247
        %v5249 = vsel %vm568, %v5248, 0.0
        %5250 = vadd.xlane.f32.xlu0 %v5249
        %v5251 = vpop.xlane.xlu0 %5250
        %v5252 = vmul.f32 %v5251, %v1544
        %v5253 = vadd.f32 %v5252, 1e-05
        %v5254 = vrsqrt.pop %v5253
        %v5255 = vmul.f32 %v5247, %v5254
        %s5256 = scalar_lea.vmem %s10, 7
        %v5257 = vld [vmem:[%s5256] sm:$0x1]
        %v5259 = vlaneseq
        %v5260 = vshrl.u32 %v5259, 7
        %v5261 = vsub.s32 0, %v5260
        %v5262 = vrot.slane %v5257, %v5261
        %v5264 = vmul.f32 %v5255, %v5262
        %s5265 = scalar_lea.vmem %s11, 7
        %v5266 = vld [vmem:[%s5265] sm:$0x1]
        %v5268 = vlaneseq
        %v5269 = vshrl.u32 %v5268, 7
        %v5270 = vsub.s32 0, %v5269
        %v5271 = vrot.slane %v5266, %v5270
        %v5273 = vadd.f32 %v5264, %v5271
        %s5274 = scalar_lea.vmem %s2, 768
        %v5275 = vld [vmem:[%s5274] sm:$0xff]
        %v5276 = vld [vmem:[%s5274 + $0x8] sm:$0xff]
        %v5277 = vld [vmem:[%s5274 + $0x10] sm:$0xff]
        %v5278 = vld [vmem:[%s5274 + $0x18] sm:$0xff]
        %s5279 = scalar_lea.vmem %s3, 24
        %v5280 = vld [vmem:[%s5279] sm:$0x1]
        %v5282 = vlaneseq
        %v5283 = vshrl.u32 %v5282, 7
        %v5284 = vsub.s32 0, %v5283
        %v5285 = vrot.slane %v5280, %v5284
        %v5288 = vsel %vm568, %v5273, 0
        %5290 = vmatprep.subr.mxu0 0.0
        %5291 = vmatpush1.msra.mxu0 0.0
        %5292 = vmatprep.subr.mxu0 0.0
        %5293 = vmatpush1.msra.mxu0 0.0
        %5294 = vmatprep.subr.mxu0 0.0
        %5295 = vmatpush1.msra.mxu0 0.0
        %5296 = vmatprep.subr.mxu0 0.0
        %5297 = vmatpush1.msra.mxu0 0.0
        %5298 = vmatprep.subr.mxu0 0.0
        %5299 = vmatpush1.msra.mxu0 0.0
        %5300 = vmatprep.subr.mxu0 0.0
        %5301 = vmatpush1.msra.mxu0 0.0
        %5302 = vmatprep.subr.mxu0 0.0
        %5303 = vmatpush1.msra.mxu0 0.0
        %5304 = vmatprep.subr.mxu0 0.0
        %5305 = vmatpush1.msra.mxu0 0.0
        %5306 = vmatprep.subr.mxu0 0.0
        %5307 = vmatpush1.msra.mxu0 0.0
        %5308 = vmatprep.subr.mxu0 0.0
        %5309 = vmatpush1.msra.mxu0 0.0
        %5310 = vmatprep.subr.mxu0 0.0
        %5311 = vmatpush1.msra.mxu0 0.0
        %5312 = vmatprep.subr.mxu0 0.0
        %5313 = vmatpush1.msra.mxu0 0.0
        %5314 = vmatprep.subr.mxu0 0.0
        %5315 = vmatpush1.msra.mxu0 %v5278
        %5316 = vmatprep.subr.mxu0 0.0
        %5317 = vmatpush1.msra.mxu0 %v5277
        %5318 = vmatprep.subr.mxu0 0.0
        %5319 = vmatpush1.msra.mxu0 %v5276
        %5320 = vmatprep.subr.mxu0 0.0
        %5321 = vmatpush1.msra.mxu0 %v5275
        %5322 = vmatprep.subr.mxu0 0.0
        %5323 = vmatpush2.msra.mxu0 0.0
        %5324 = vmatprep.subr.mxu0 0.0
        %5325 = vmatpush2.msra.mxu0 0.0
        %5326 = vmatprep.subr.mxu0 0.0
        %5327 = vmatpush2.msra.mxu0 0.0
        %5328 = vmatprep.subr.mxu0 0.0
        %5329 = vmatpush2.msra.mxu0 0.0
        %5330 = vmatprep.subr.mxu0 0.0
        %5331 = vmatpush2.msra.mxu0 0.0
        %5332 = vmatprep.subr.mxu0 0.0
        %5333 = vmatpush2.msra.mxu0 0.0
        %5334 = vmatprep.subr.mxu0 0.0
        %5335 = vmatpush2.msra.mxu0 0.0
        %5336 = vmatprep.subr.mxu0 0.0
        %5337 = vmatpush2.msra.mxu0 0.0
        %5338 = vmatprep.subr.mxu0 0.0
        %5339 = vmatpush2.msra.mxu0 0.0
        %5340 = vmatprep.subr.mxu0 0.0
        %5341 = vmatpush2.msra.mxu0 0.0
        %5342 = vmatprep.subr.mxu0 0.0
        %5343 = vmatpush2.msra.mxu0 0.0
        %5344 = vmatprep.subr.mxu0 0.0
        %5345 = vmatpush2.msra.mxu0 0.0
        %5346 = vmatprep.subr.mxu0 0.0
        %5347 = vmatpush2.msra.mxu0 0.0
        %5348 = vmatprep.subr.mxu0 0.0
        %5349 = vmatpush2.msra.mxu0 0.0
        %5350 = vmatprep.subr.mxu0 0.0
        %5351 = vmatpush2.msra.mxu0 0.0
        %5352 = vmatprep.subr.mxu0 0.0
        %5353 = vmatpush2.msra.mxu0 0.0
        %5354 = vmatprep.mubr.f32.mxu0 0.0
        %5355 = vmatmul.mubr.f32.gmra.mxu0 %v5288
        %v5356 = vpop.f32.mrf.mxu0
        %v5357 = vadd.f32 %v5285, %v5356
        %v5358 = vpop.f32.mrf.mxu0
        %5359 = vdwg.mxu0
        %s5360 = scalar_lea.vmem %s2, 800
        %v5361 = vld [vmem:[%s5360] sm:$0xff]
        %v5362 = vld [vmem:[%s5360 + $0x8] sm:$0xff]
        %v5363 = vld [vmem:[%s5360 + $0x10] sm:$0xff]
        %v5364 = vld [vmem:[%s5360 + $0x18] sm:$0xff]
        %s5365 = scalar_lea.vmem %s3, 25
        %v5366 = vld [vmem:[%s5365] sm:$0x1]
        %v5368 = vlaneseq
        %v5369 = vshrl.u32 %v5368, 7
        %v5370 = vsub.s32 0, %v5369
        %v5371 = vrot.slane %v5366, %v5370
        %5373 = vmatprep.subr.mxu0 0.0
        %5374 = vmatpush1.msra.mxu0 0.0
        %5375 = vmatprep.subr.mxu0 0.0
        %5376 = vmatpush1.msra.mxu0 0.0
        %5377 = vmatprep.subr.mxu0 0.0
        %5378 = vmatpush1.msra.mxu0 0.0
        %5379 = vmatprep.subr.mxu0 0.0
        %5380 = vmatpush1.msra.mxu0 0.0
        %5381 = vmatprep.subr.mxu0 0.0
        %5382 = vmatpush1.msra.mxu0 0.0
        %5383 = vmatprep.subr.mxu0 0.0
        %5384 = vmatpush1.msra.mxu0 0.0
        %5385 = vmatprep.subr.mxu0 0.0
        %5386 = vmatpush1.msra.mxu0 0.0
        %5387 = vmatprep.subr.mxu0 0.0
        %5388 = vmatpush1.msra.mxu0 0.0
        %5389 = vmatprep.subr.mxu0 0.0
        %5390 = vmatpush1.msra.mxu0 0.0
        %5391 = vmatprep.subr.mxu0 0.0
        %5392 = vmatpush1.msra.mxu0 0.0
        %5393 = vmatprep.subr.mxu0 0.0
        %5394 = vmatpush1.msra.mxu0 0.0
        %5395 = vmatprep.subr.mxu0 0.0
        %5396 = vmatpush1.msra.mxu0 0.0
        %5397 = vmatprep.subr.mxu0 0.0
        %5398 = vmatpush1.msra.mxu0 %v5364
        %5399 = vmatprep.subr.mxu0 0.0
        %5400 = vmatpush1.msra.mxu0 %v5363
        %5401 = vmatprep.subr.mxu0 0.0
        %5402 = vmatpush1.msra.mxu0 %v5362
        %5403 = vmatprep.subr.mxu0 0.0
        %5404 = vmatpush1.msra.mxu0 %v5361
        %5405 = vmatprep.subr.mxu0 0.0
        %5406 = vmatpush2.msra.mxu0 0.0
        %5407 = vmatprep.subr.mxu0 0.0
        %5408 = vmatpush2.msra.mxu0 0.0
        %5409 = vmatprep.subr.mxu0 0.0
        %5410 = vmatpush2.msra.mxu0 0.0
        %5411 = vmatprep.subr.mxu0 0.0
        %5412 = vmatpush2.msra.mxu0 0.0
        %5413 = vmatprep.subr.mxu0 0.0
        %5414 = vmatpush2.msra.mxu0 0.0
        %5415 = vmatprep.subr.mxu0 0.0
        %5416 = vmatpush2.msra.mxu0 0.0
        %5417 = vmatprep.subr.mxu0 0.0
        %5418 = vmatpush2.msra.mxu0 0.0
        %5419 = vmatprep.subr.mxu0 0.0
        %5420 = vmatpush2.msra.mxu0 0.0
        %5421 = vmatprep.subr.mxu0 0.0
        %5422 = vmatpush2.msra.mxu0 0.0
        %5423 = vmatprep.subr.mxu0 0.0
        %5424 = vmatpush2.msra.mxu0 0.0
        %5425 = vmatprep.subr.mxu0 0.0
        %5426 = vmatpush2.msra.mxu0 0.0
        %5427 = vmatprep.subr.mxu0 0.0
        %5428 = vmatpush2.msra.mxu0 0.0
        %5429 = vmatprep.subr.mxu0 0.0
        %5430 = vmatpush2.msra.mxu0 0.0
        %5431 = vmatprep.subr.mxu0 0.0
        %5432 = vmatpush2.msra.mxu0 0.0
        %5433 = vmatprep.subr.mxu0 0.0
        %5434 = vmatpush2.msra.mxu0 0.0
        %5435 = vmatprep.subr.mxu0 0.0
        %5436 = vmatpush2.msra.mxu0 0.0
        %5437 = vmatprep.mubr.f32.mxu0 0.0
        %5438 = vmatmul.mubr.f32.gmra.mxu0 %v5288
        %v5439 = vpop.f32.mrf.mxu0
        %v5440 = vadd.f32 %v5371, %v5439
        %v5441 = vpop.f32.mrf.mxu0
        %5442 = vdwg.mxu0
        %s5443 = scalar_lea.vmem %s2, 832
        %v5444 = vld [vmem:[%s5443] sm:$0xff]
        %v5445 = vld [vmem:[%s5443 + $0x8] sm:$0xff]
        %v5446 = vld [vmem:[%s5443 + $0x10] sm:$0xff]
        %v5447 = vld [vmem:[%s5443 + $0x18] sm:$0xff]
        %s5448 = scalar_lea.vmem %s3, 26
        %v5449 = vld [vmem:[%s5448] sm:$0x1]
        %v5451 = vlaneseq
        %v5452 = vshrl.u32 %v5451, 7
        %v5453 = vsub.s32 0, %v5452
        %v5454 = vrot.slane %v5449, %v5453
        %5456 = vmatprep.subr.mxu0 0.0
        %5457 = vmatpush1.msra.mxu0 0.0
        %5458 = vmatprep.subr.mxu0 0.0
        %5459 = vmatpush1.msra.mxu0 0.0
        %5460 = vmatprep.subr.mxu0 0.0
        %5461 = vmatpush1.msra.mxu0 0.0
        %5462 = vmatprep.subr.mxu0 0.0
        %5463 = vmatpush1.msra.mxu0 0.0
        %5464 = vmatprep.subr.mxu0 0.0
        %5465 = vmatpush1.msra.mxu0 0.0
        %5466 = vmatprep.subr.mxu0 0.0
        %5467 = vmatpush1.msra.mxu0 0.0
        %5468 = vmatprep.subr.mxu0 0.0
        %5469 = vmatpush1.msra.mxu0 0.0
        %5470 = vmatprep.subr.mxu0 0.0
        %5471 = vmatpush1.msra.mxu0 0.0
        %5472 = vmatprep.subr.mxu0 0.0
        %5473 = vmatpush1.msra.mxu0 0.0
        %5474 = vmatprep.subr.mxu0 0.0
        %5475 = vmatpush1.msra.mxu0 0.0
        %5476 = vmatprep.subr.mxu0 0.0
        %5477 = vmatpush1.msra.mxu0 0.0
        %5478 = vmatprep.subr.mxu0 0.0
        %5479 = vmatpush1.msra.mxu0 0.0
        %5480 = vmatprep.subr.mxu0 0.0
        %5481 = vmatpush1.msra.mxu0 %v5447
        %5482 = vmatprep.subr.mxu0 0.0
        %5483 = vmatpush1.msra.mxu0 %v5446
        %5484 = vmatprep.subr.mxu0 0.0
        %5485 = vmatpush1.msra.mxu0 %v5445
        %5486 = vmatprep.subr.mxu0 0.0
        %5487 = vmatpush1.msra.mxu0 %v5444
        %5488 = vmatprep.subr.mxu0 0.0
        %5489 = vmatpush2.msra.mxu0 0.0
        %5490 = vmatprep.subr.mxu0 0.0
        %5491 = vmatpush2.msra.mxu0 0.0
        %5492 = vmatprep.subr.mxu0 0.0
        %5493 = vmatpush2.msra.mxu0 0.0
        %5494 = vmatprep.subr.mxu0 0.0
        %5495 = vmatpush2.msra.mxu0 0.0
        %5496 = vmatprep.subr.mxu0 0.0
        %5497 = vmatpush2.msra.mxu0 0.0
        %5498 = vmatprep.subr.mxu0 0.0
        %5499 = vmatpush2.msra.mxu0 0.0
        %5500 = vmatprep.subr.mxu0 0.0
        %5501 = vmatpush2.msra.mxu0 0.0
        %5502 = vmatprep.subr.mxu0 0.0
        %5503 = vmatpush2.msra.mxu0 0.0
        %5504 = vmatprep.subr.mxu0 0.0
        %5505 = vmatpush2.msra.mxu0 0.0
        %5506 = vmatprep.subr.mxu0 0.0
        %5507 = vmatpush2.msra.mxu0 0.0
        %5508 = vmatprep.subr.mxu0 0.0
        %5509 = vmatpush2.msra.mxu0 0.0
        %5510 = vmatprep.subr.mxu0 0.0
        %5511 = vmatpush2.msra.mxu0 0.0
        %5512 = vmatprep.subr.mxu0 0.0
        %5513 = vmatpush2.msra.mxu0 0.0
        %5514 = vmatprep.subr.mxu0 0.0
        %5515 = vmatpush2.msra.mxu0 0.0
        %5516 = vmatprep.subr.mxu0 0.0
        %5517 = vmatpush2.msra.mxu0 0.0
        %5518 = vmatprep.subr.mxu0 0.0
        %5519 = vmatpush2.msra.mxu0 0.0
        %5520 = vmatprep.mubr.f32.mxu0 0.0
        %5521 = vmatmul.mubr.f32.gmra.mxu0 %v5288
        %v5522 = vpop.f32.mrf.mxu0
        %v5523 = vadd.f32 %v5454, %v5522
        %v5524 = vpop.f32.mrf.mxu0
        %5525 = vdwg.mxu0
        %v5527 = vsel %vm808, %v5357, 0
        %v5530 = vsel %vm808, %v5440, 0
        %5532 = vmatprep.subr.mxu0 0.0
        %5533 = vmatpush1.xpose.msra.mxu0 0.0
        %5534 = vmatprep.subr.mxu0 0.0
        %5535 = vmatpush1.xpose.msra.mxu0 0.0
        %5536 = vmatprep.subr.mxu0 0.0
        %5537 = vmatpush1.xpose.msra.mxu0 0.0
        %5538 = vmatprep.subr.mxu0 0.0
        %5539 = vmatpush1.xpose.msra.mxu0 0.0
        %5540 = vmatprep.subr.mxu0 0.0
        %5541 = vmatpush1.xpose.msra.mxu0 0.0
        %5542 = vmatprep.subr.mxu0 0.0
        %5543 = vmatpush1.xpose.msra.mxu0 0.0
        %5544 = vmatprep.subr.mxu0 0.0
        %5545 = vmatpush1.xpose.msra.mxu0 0.0
        %5546 = vmatprep.subr.mxu0 0.0
        %5547 = vmatpush1.xpose.msra.mxu0 0.0
        %5548 = vmatprep.subr.mxu0 0.0
        %5549 = vmatpush1.xpose.msra.mxu0 0.0
        %5550 = vmatprep.subr.mxu0 0.0
        %5551 = vmatpush1.xpose.msra.mxu0 0.0
        %5552 = vmatprep.subr.mxu0 0.0
        %5553 = vmatpush1.xpose.msra.mxu0 0.0
        %5554 = vmatprep.subr.mxu0 0.0
        %5555 = vmatpush1.xpose.msra.mxu0 0.0
        %5556 = vmatprep.subr.mxu0 0.0
        %5557 = vmatpush1.xpose.msra.mxu0 0.0
        %5558 = vmatprep.subr.mxu0 0.0
        %5559 = vmatpush1.xpose.msra.mxu0 0.0
        %5560 = vmatprep.subr.mxu0 0.0
        %5561 = vmatpush1.xpose.msra.mxu0 0.0
        %5562 = vmatprep.subr.mxu0 0.0
        %5563 = vmatpush1.xpose.msra.mxu0 %v5530
        %5564 = vmatprep.subr.mxu0 0.0
        %5565 = vmatpush2.xpose.msra.mxu0 0.0
        %5566 = vmatprep.subr.mxu0 0.0
        %5567 = vmatpush2.xpose.msra.mxu0 0.0
        %5568 = vmatprep.subr.mxu0 0.0
        %5569 = vmatpush2.xpose.msra.mxu0 0.0
        %5570 = vmatprep.subr.mxu0 0.0
        %5571 = vmatpush2.xpose.msra.mxu0 0.0
        %5572 = vmatprep.subr.mxu0 0.0
        %5573 = vmatpush2.xpose.msra.mxu0 0.0
        %5574 = vmatprep.subr.mxu0 0.0
        %5575 = vmatpush2.xpose.msra.mxu0 0.0
        %5576 = vmatprep.subr.mxu0 0.0
        %5577 = vmatpush2.xpose.msra.mxu0 0.0
        %5578 = vmatprep.subr.mxu0 0.0
        %5579 = vmatpush2.xpose.msra.mxu0 0.0
        %5580 = vmatprep.subr.mxu0 0.0
        %5581 = vmatpush2.xpose.msra.mxu0 0.0
        %5582 = vmatprep.subr.mxu0 0.0
        %5583 = vmatpush2.xpose.msra.mxu0 0.0
        %5584 = vmatprep.subr.mxu0 0.0
        %5585 = vmatpush2.xpose.msra.mxu0 0.0
        %5586 = vmatprep.subr.mxu0 0.0
        %5587 = vmatpush2.xpose.msra.mxu0 0.0
        %5588 = vmatprep.subr.mxu0 0.0
        %5589 = vmatpush2.xpose.msra.mxu0 0.0
        %5590 = vmatprep.subr.mxu0 0.0
        %5591 = vmatpush2.xpose.msra.mxu0 0.0
        %5592 = vmatprep.subr.mxu0 0.0
        %5593 = vmatpush2.xpose.msra.mxu0 0.0
        %5594 = vmatprep.subr.mxu0 0.0
        %5595 = vmatpush2.xpose.msra.mxu0 0.0
        %5596 = vmatprep.mubr.f32.mxu0 0.0
        %5597 = vmatmul.mubr.f32.gmra.mxu0 %v5527
        %v5598 = vpop.f32.mrf.mxu0
        %v5599 = vadd.f32 0.0, %v5598
        %v5600 = vpop.f32.mrf.mxu0
        %5601 = vdwg.mxu0
        %v5602 = vmul.f32 %v5599, 0.25
        %v5603 = vsel %vm886, %v5602, -inf
        %5604 = vmax.xlane.f32.xlu0 %v5603
        %v5605 = vpop.xlane.xlu0 %5604
        %v5606 = vsub.f32 %v5602, %v5605
        %v5607 = vmul.f32 %v5606, 1.442695
        %v5608 = vpow.pop %v5607
        %v5609 = vsel %vm886, %v5608, 0.0
        %5610 = vadd.xlane.f32.xlu0 %v5609
        %v5611 = vpop.xlane.xlu0 %5610
        %v5612 = vrcp.pop %v5611
        %v5613 = vmul.f32 %v5608, %v5612
        %v5615 = vsel %vm886, %v5613, 0
        %5617 = vmatprep.subr.mxu0 0.0
        %5618 = vmatpush1.msra.mxu0 0.0
        %5619 = vmatprep.subr.mxu0 0.0
        %5620 = vmatpush1.msra.mxu0 0.0
        %5621 = vmatprep.subr.mxu0 0.0
        %5622 = vmatpush1.msra.mxu0 0.0
        %5623 = vmatprep.subr.mxu0 0.0
        %5624 = vmatpush1.msra.mxu0 0.0
        %5625 = vmatprep.subr.mxu0 0.0
        %5626 = vmatpush1.msra.mxu0 0.0
        %5627 = vmatprep.subr.mxu0 0.0
        %5628 = vmatpush1.msra.mxu0 0.0
        %5629 = vmatprep.subr.mxu0 0.0
        %5630 = vmatpush1.msra.mxu0 0.0
        %5631 = vmatprep.subr.mxu0 0.0
        %5632 = vmatpush1.msra.mxu0 0.0
        %5633 = vmatprep.subr.mxu0 0.0
        %5634 = vmatpush1.msra.mxu0 0.0
        %5635 = vmatprep.subr.mxu0 0.0
        %5636 = vmatpush1.msra.mxu0 0.0
        %5637 = vmatprep.subr.mxu0 0.0
        %5638 = vmatpush1.msra.mxu0 0.0
        %5639 = vmatprep.subr.mxu0 0.0
        %5640 = vmatpush1.msra.mxu0 0.0
        %5641 = vmatprep.subr.mxu0 0.0
        %5642 = vmatpush1.msra.mxu0 0.0
        %5643 = vmatprep.subr.mxu0 0.0
        %5644 = vmatpush1.msra.mxu0 0.0
        %5645 = vmatprep.subr.mxu0 0.0
        %5646 = vmatpush1.msra.mxu0 0.0
        %5647 = vmatprep.subr.mxu0 0.0
        %5648 = vmatpush1.msra.mxu0 %v5523
        %5649 = vmatprep.subr.mxu0 0.0
        %5650 = vmatpush2.msra.mxu0 0.0
        %5651 = vmatprep.subr.mxu0 0.0
        %5652 = vmatpush2.msra.mxu0 0.0
        %5653 = vmatprep.subr.mxu0 0.0
        %5654 = vmatpush2.msra.mxu0 0.0
        %5655 = vmatprep.subr.mxu0 0.0
        %5656 = vmatpush2.msra.mxu0 0.0
        %5657 = vmatprep.subr.mxu0 0.0
        %5658 = vmatpush2.msra.mxu0 0.0
        %5659 = vmatprep.subr.mxu0 0.0
        %5660 = vmatpush2.msra.mxu0 0.0
        %5661 = vmatprep.subr.mxu0 0.0
        %5662 = vmatpush2.msra.mxu0 0.0
        %5663 = vmatprep.subr.mxu0 0.0
        %5664 = vmatpush2.msra.mxu0 0.0
        %5665 = vmatprep.subr.mxu0 0.0
        %5666 = vmatpush2.msra.mxu0 0.0
        %5667 = vmatprep.subr.mxu0 0.0
        %5668 = vmatpush2.msra.mxu0 0.0
        %5669 = vmatprep.subr.mxu0 0.0
        %5670 = vmatpush2.msra.mxu0 0.0
        %5671 = vmatprep.subr.mxu0 0.0
        %5672 = vmatpush2.msra.mxu0 0.0
        %5673 = vmatprep.subr.mxu0 0.0
        %5674 = vmatpush2.msra.mxu0 0.0
        %5675 = vmatprep.subr.mxu0 0.0
        %5676 = vmatpush2.msra.mxu0 0.0
        %5677 = vmatprep.subr.mxu0 0.0
        %5678 = vmatpush2.msra.mxu0 0.0
        %5679 = vmatprep.subr.mxu0 0.0
        %5680 = vmatpush2.msra.mxu0 0.0
        %5681 = vmatprep.mubr.f32.mxu0 0.0
        %5682 = vmatmul.mubr.f32.gmra.mxu0 %v5615
        %v5683 = vpop.f32.mrf.mxu0
        %v5684 = vadd.f32 0.0, %v5683
        %v5685 = vpop.f32.mrf.mxu0
        %5686 = vdwg.mxu0
        %s5687 = scalar_lea.vmem %s4, 128
        %v5688 = vld [vmem:[%s5687] sm:$0xff]
        %v5689 = vld [vmem:[%s5687 + $0x8] sm:$0xff]
        %s5690 = scalar_lea.vmem %s2, 864
        %v5691 = vld [vmem:[%s5690] sm:$0xff]
        %v5692 = vld [vmem:[%s5690 + $0x8] sm:$0xff]
        %v5693 = vld [vmem:[%s5690 + $0x10] sm:$0xff]
        %v5694 = vld [vmem:[%s5690 + $0x18] sm:$0xff]
        %s5695 = scalar_lea.vmem %s3, 27
        %v5696 = vld [vmem:[%s5695] sm:$0x1]
        %v5698 = vlaneseq
        %v5699 = vshrl.u32 %v5698, 7
        %v5700 = vsub.s32 0, %v5699
        %v5701 = vrot.slane %v5696, %v5700
        %5703 = vmatprep.subr.mxu0 0.0
        %5704 = vmatpush1.msra.mxu0 0.0
        %5705 = vmatprep.subr.mxu0 0.0
        %5706 = vmatpush1.msra.mxu0 0.0
        %5707 = vmatprep.subr.mxu0 0.0
        %5708 = vmatpush1.msra.mxu0 0.0
        %5709 = vmatprep.subr.mxu0 0.0
        %5710 = vmatpush1.msra.mxu0 0.0
        %5711 = vmatprep.subr.mxu0 0.0
        %5712 = vmatpush1.msra.mxu0 0.0
        %5713 = vmatprep.subr.mxu0 0.0
        %5714 = vmatpush1.msra.mxu0 0.0
        %5715 = vmatprep.subr.mxu0 0.0
        %5716 = vmatpush1.msra.mxu0 0.0
        %5717 = vmatprep.subr.mxu0 0.0
        %5718 = vmatpush1.msra.mxu0 0.0
        %5719 = vmatprep.subr.mxu0 0.0
        %5720 = vmatpush1.msra.mxu0 0.0
        %5721 = vmatprep.subr.mxu0 0.0
        %5722 = vmatpush1.msra.mxu0 0.0
        %5723 = vmatprep.subr.mxu0 0.0
        %5724 = vmatpush1.msra.mxu0 0.0
        %5725 = vmatprep.subr.mxu0 0.0
        %5726 = vmatpush1.msra.mxu0 0.0
        %5727 = vmatprep.subr.mxu0 0.0
        %5728 = vmatpush1.msra.mxu0 %v5694
        %5729 = vmatprep.subr.mxu0 0.0
        %5730 = vmatpush1.msra.mxu0 %v5693
        %5731 = vmatprep.subr.mxu0 0.0
        %5732 = vmatpush1.msra.mxu0 %v5692
        %5733 = vmatprep.subr.mxu0 0.0
        %5734 = vmatpush1.msra.mxu0 %v5691
        %5735 = vmatprep.subr.mxu0 0.0
        %5736 = vmatpush2.msra.mxu0 0.0
        %5737 = vmatprep.subr.mxu0 0.0
        %5738 = vmatpush2.msra.mxu0 0.0
        %5739 = vmatprep.subr.mxu0 0.0
        %5740 = vmatpush2.msra.mxu0 0.0
        %5741 = vmatprep.subr.mxu0 0.0
        %5742 = vmatpush2.msra.mxu0 0.0
        %5743 = vmatprep.subr.mxu0 0.0
        %5744 = vmatpush2.msra.mxu0 0.0
        %5745 = vmatprep.subr.mxu0 0.0
        %5746 = vmatpush2.msra.mxu0 0.0
        %5747 = vmatprep.subr.mxu0 0.0
        %5748 = vmatpush2.msra.mxu0 0.0
        %5749 = vmatprep.subr.mxu0 0.0
        %5750 = vmatpush2.msra.mxu0 0.0
        %5751 = vmatprep.subr.mxu0 0.0
        %5752 = vmatpush2.msra.mxu0 0.0
        %5753 = vmatprep.subr.mxu0 0.0
        %5754 = vmatpush2.msra.mxu0 0.0
        %5755 = vmatprep.subr.mxu0 0.0
        %5756 = vmatpush2.msra.mxu0 0.0
        %5757 = vmatprep.subr.mxu0 0.0
        %5758 = vmatpush2.msra.mxu0 0.0
        %5759 = vmatprep.subr.mxu0 0.0
        %5760 = vmatpush2.msra.mxu0 0.0
        %5761 = vmatprep.subr.mxu0 0.0
        %5762 = vmatpush2.msra.mxu0 0.0
        %5763 = vmatprep.subr.mxu0 0.0
        %5764 = vmatpush2.msra.mxu0 0.0
        %5765 = vmatprep.subr.mxu0 0.0
        %5766 = vmatpush2.msra.mxu0 0.0
        %5767 = vmatprep.mubr.f32.mxu0 0.0
        %5768 = vmatmul.mubr.f32.gmra.mxu0 %v5288
        %v5769 = vpop.f32.mrf.mxu0
        %v5770 = vadd.f32 %v5701, %v5769
        %v5771 = vpop.f32.mrf.mxu0
        %5772 = vdwg.mxu0
        %s5773 = scalar_lea.vmem %s2, 896
        %v5774 = vld [vmem:[%s5773] sm:$0xff]
        %v5775 = vld [vmem:[%s5773 + $0x8] sm:$0xff]
        %v5776 = vld [vmem:[%s5773 + $0x10] sm:$0xff]
        %v5777 = vld [vmem:[%s5773 + $0x18] sm:$0xff]
        %s5778 = scalar_lea.vmem %s3, 28
        %v5779 = vld [vmem:[%s5778] sm:$0x1]
        %v5781 = vlaneseq
        %v5782 = vshrl.u32 %v5781, 7
        %v5783 = vsub.s32 0, %v5782
        %v5784 = vrot.slane %v5779, %v5783
        %5786 = vmatprep.subr.mxu0 0.0
        %5787 = vmatpush1.msra.mxu0 0.0
        %5788 = vmatprep.subr.mxu0 0.0
        %5789 = vmatpush1.msra.mxu0 0.0
        %5790 = vmatprep.subr.mxu0 0.0
        %5791 = vmatpush1.msra.mxu0 0.0
        %5792 = vmatprep.subr.mxu0 0.0
        %5793 = vmatpush1.msra.mxu0 0.0
        %5794 = vmatprep.subr.mxu0 0.0
        %5795 = vmatpush1.msra.mxu0 0.0
        %5796 = vmatprep.subr.mxu0 0.0
        %5797 = vmatpush1.msra.mxu0 0.0
        %5798 = vmatprep.subr.mxu0 0.0
        %5799 = vmatpush1.msra.mxu0 0.0
        %5800 = vmatprep.subr.mxu0 0.0
        %5801 = vmatpush1.msra.mxu0 0.0
        %5802 = vmatprep.subr.mxu0 0.0
        %5803 = vmatpush1.msra.mxu0 0.0
        %5804 = vmatprep.subr.mxu0 0.0
        %5805 = vmatpush1.msra.mxu0 0.0
        %5806 = vmatprep.subr.mxu0 0.0
        %5807 = vmatpush1.msra.mxu0 0.0
        %5808 = vmatprep.subr.mxu0 0.0
        %5809 = vmatpush1.msra.mxu0 0.0
        %5810 = vmatprep.subr.mxu0 0.0
        %5811 = vmatpush1.msra.mxu0 %v5777
        %5812 = vmatprep.subr.mxu0 0.0
        %5813 = vmatpush1.msra.mxu0 %v5776
        %5814 = vmatprep.subr.mxu0 0.0
        %5815 = vmatpush1.msra.mxu0 %v5775
        %5816 = vmatprep.subr.mxu0 0.0
        %5817 = vmatpush1.msra.mxu0 %v5774
        %5818 = vmatprep.subr.mxu0 0.0
        %5819 = vmatpush2.msra.mxu0 0.0
        %5820 = vmatprep.subr.mxu0 0.0
        %5821 = vmatpush2.msra.mxu0 0.0
        %5822 = vmatprep.subr.mxu0 0.0
        %5823 = vmatpush2.msra.mxu0 0.0
        %5824 = vmatprep.subr.mxu0 0.0
        %5825 = vmatpush2.msra.mxu0 0.0
        %5826 = vmatprep.subr.mxu0 0.0
        %5827 = vmatpush2.msra.mxu0 0.0
        %5828 = vmatprep.subr.mxu0 0.0
        %5829 = vmatpush2.msra.mxu0 0.0
        %5830 = vmatprep.subr.mxu0 0.0
        %5831 = vmatpush2.msra.mxu0 0.0
        %5832 = vmatprep.subr.mxu0 0.0
        %5833 = vmatpush2.msra.mxu0 0.0
        %5834 = vmatprep.subr.mxu0 0.0
        %5835 = vmatpush2.msra.mxu0 0.0
        %5836 = vmatprep.subr.mxu0 0.0
        %5837 = vmatpush2.msra.mxu0 0.0
        %5838 = vmatprep.subr.mxu0 0.0
        %5839 = vmatpush2.msra.mxu0 0.0
        %5840 = vmatprep.subr.mxu0 0.0
        %5841 = vmatpush2.msra.mxu0 0.0
        %5842 = vmatprep.subr.mxu0 0.0
        %5843 = vmatpush2.msra.mxu0 0.0
        %5844 = vmatprep.subr.mxu0 0.0
        %5845 = vmatpush2.msra.mxu0 0.0
        %5846 = vmatprep.subr.mxu0 0.0
        %5847 = vmatpush2.msra.mxu0 0.0
        %5848 = vmatprep.subr.mxu0 0.0
        %5849 = vmatpush2.msra.mxu0 0.0
        %5850 = vmatprep.mubr.f32.mxu0 0.0
        %5851 = vmatmul.mubr.f32.gmra.mxu0 %v5288
        %v5852 = vpop.f32.mrf.mxu0
        %v5853 = vadd.f32 %v5784, %v5852
        %v5854 = vpop.f32.mrf.mxu0
        %5855 = vdwg.mxu0
        %s5856 = scalar_lea.vmem %s2, 928
        %v5857 = vld [vmem:[%s5856] sm:$0xff]
        %v5858 = vld [vmem:[%s5856 + $0x8] sm:$0xff]
        %v5859 = vld [vmem:[%s5856 + $0x10] sm:$0xff]
        %v5860 = vld [vmem:[%s5856 + $0x18] sm:$0xff]
        %s5861 = scalar_lea.vmem %s3, 29
        %v5862 = vld [vmem:[%s5861] sm:$0x1]
        %v5864 = vlaneseq
        %v5865 = vshrl.u32 %v5864, 7
        %v5866 = vsub.s32 0, %v5865
        %v5867 = vrot.slane %v5862, %v5866
        %5869 = vmatprep.subr.mxu0 0.0
        %5870 = vmatpush1.msra.mxu0 0.0
        %5871 = vmatprep.subr.mxu0 0.0
        %5872 = vmatpush1.msra.mxu0 0.0
        %5873 = vmatprep.subr.mxu0 0.0
        %5874 = vmatpush1.msra.mxu0 0.0
        %5875 = vmatprep.subr.mxu0 0.0
        %5876 = vmatpush1.msra.mxu0 0.0
        %5877 = vmatprep.subr.mxu0 0.0
        %5878 = vmatpush1.msra.mxu0 0.0
        %5879 = vmatprep.subr.mxu0 0.0
        %5880 = vmatpush1.msra.mxu0 0.0
        %5881 = vmatprep.subr.mxu0 0.0
        %5882 = vmatpush1.msra.mxu0 0.0
        %5883 = vmatprep.subr.mxu0 0.0
        %5884 = vmatpush1.msra.mxu0 0.0
        %5885 = vmatprep.subr.mxu0 0.0
        %5886 = vmatpush1.msra.mxu0 0.0
        %5887 = vmatprep.subr.mxu0 0.0
        %5888 = vmatpush1.msra.mxu0 0.0
        %5889 = vmatprep.subr.mxu0 0.0
        %5890 = vmatpush1.msra.mxu0 0.0
        %5891 = vmatprep.subr.mxu0 0.0
        %5892 = vmatpush1.msra.mxu0 0.0
        %5893 = vmatprep.subr.mxu0 0.0
        %5894 = vmatpush1.msra.mxu0 %v5860
        %5895 = vmatprep.subr.mxu0 0.0
        %5896 = vmatpush1.msra.mxu0 %v5859
        %5897 = vmatprep.subr.mxu0 0.0
        %5898 = vmatpush1.msra.mxu0 %v5858
        %5899 = vmatprep.subr.mxu0 0.0
        %5900 = vmatpush1.msra.mxu0 %v5857
        %5901 = vmatprep.subr.mxu0 0.0
        %5902 = vmatpush2.msra.mxu0 0.0
        %5903 = vmatprep.subr.mxu0 0.0
        %5904 = vmatpush2.msra.mxu0 0.0
        %5905 = vmatprep.subr.mxu0 0.0
        %5906 = vmatpush2.msra.mxu0 0.0
        %5907 = vmatprep.subr.mxu0 0.0
        %5908 = vmatpush2.msra.mxu0 0.0
        %5909 = vmatprep.subr.mxu0 0.0
        %5910 = vmatpush2.msra.mxu0 0.0
        %5911 = vmatprep.subr.mxu0 0.0
        %5912 = vmatpush2.msra.mxu0 0.0
        %5913 = vmatprep.subr.mxu0 0.0
        %5914 = vmatpush2.msra.mxu0 0.0
        %5915 = vmatprep.subr.mxu0 0.0
        %5916 = vmatpush2.msra.mxu0 0.0
        %5917 = vmatprep.subr.mxu0 0.0
        %5918 = vmatpush2.msra.mxu0 0.0
        %5919 = vmatprep.subr.mxu0 0.0
        %5920 = vmatpush2.msra.mxu0 0.0
        %5921 = vmatprep.subr.mxu0 0.0
        %5922 = vmatpush2.msra.mxu0 0.0
        %5923 = vmatprep.subr.mxu0 0.0
        %5924 = vmatpush2.msra.mxu0 0.0
        %5925 = vmatprep.subr.mxu0 0.0
        %5926 = vmatpush2.msra.mxu0 0.0
        %5927 = vmatprep.subr.mxu0 0.0
        %5928 = vmatpush2.msra.mxu0 0.0
        %5929 = vmatprep.subr.mxu0 0.0
        %5930 = vmatpush2.msra.mxu0 0.0
        %5931 = vmatprep.subr.mxu0 0.0
        %5932 = vmatpush2.msra.mxu0 0.0
        %5933 = vmatprep.mubr.f32.mxu0 0.0
        %5934 = vmatmul.mubr.f32.gmra.mxu0 %v5288
        %v5935 = vpop.f32.mrf.mxu0
        %v5936 = vadd.f32 %v5867, %v5935
        %v5937 = vpop.f32.mrf.mxu0
        %5938 = vdwg.mxu0
        %v5940 = vsel %vm808, %v5770, 0
        %v5943 = vsel %vm808, %v5853, 0
        %5945 = vmatprep.subr.mxu0 0.0
        %5946 = vmatpush1.xpose.msra.mxu0 0.0
        %5947 = vmatprep.subr.mxu0 0.0
        %5948 = vmatpush1.xpose.msra.mxu0 0.0
        %5949 = vmatprep.subr.mxu0 0.0
        %5950 = vmatpush1.xpose.msra.mxu0 0.0
        %5951 = vmatprep.subr.mxu0 0.0
        %5952 = vmatpush1.xpose.msra.mxu0 0.0
        %5953 = vmatprep.subr.mxu0 0.0
        %5954 = vmatpush1.xpose.msra.mxu0 0.0
        %5955 = vmatprep.subr.mxu0 0.0
        %5956 = vmatpush1.xpose.msra.mxu0 0.0
        %5957 = vmatprep.subr.mxu0 0.0
        %5958 = vmatpush1.xpose.msra.mxu0 0.0
        %5959 = vmatprep.subr.mxu0 0.0
        %5960 = vmatpush1.xpose.msra.mxu0 0.0
        %5961 = vmatprep.subr.mxu0 0.0
        %5962 = vmatpush1.xpose.msra.mxu0 0.0
        %5963 = vmatprep.subr.mxu0 0.0
        %5964 = vmatpush1.xpose.msra.mxu0 0.0
        %5965 = vmatprep.subr.mxu0 0.0
        %5966 = vmatpush1.xpose.msra.mxu0 0.0
        %5967 = vmatprep.subr.mxu0 0.0
        %5968 = vmatpush1.xpose.msra.mxu0 0.0
        %5969 = vmatprep.subr.mxu0 0.0
        %5970 = vmatpush1.xpose.msra.mxu0 0.0
        %5971 = vmatprep.subr.mxu0 0.0
        %5972 = vmatpush1.xpose.msra.mxu0 0.0
        %5973 = vmatprep.subr.mxu0 0.0
        %5974 = vmatpush1.xpose.msra.mxu0 0.0
        %5975 = vmatprep.subr.mxu0 0.0
        %5976 = vmatpush1.xpose.msra.mxu0 %v5943
        %5977 = vmatprep.subr.mxu0 0.0
        %5978 = vmatpush2.xpose.msra.mxu0 0.0
        %5979 = vmatprep.subr.mxu0 0.0
        %5980 = vmatpush2.xpose.msra.mxu0 0.0
        %5981 = vmatprep.subr.mxu0 0.0
        %5982 = vmatpush2.xpose.msra.mxu0 0.0
        %5983 = vmatprep.subr.mxu0 0.0
        %5984 = vmatpush2.xpose.msra.mxu0 0.0
        %5985 = vmatprep.subr.mxu0 0.0
        %5986 = vmatpush2.xpose.msra.mxu0 0.0
        %5987 = vmatprep.subr.mxu0 0.0
        %5988 = vmatpush2.xpose.msra.mxu0 0.0
        %5989 = vmatprep.subr.mxu0 0.0
        %5990 = vmatpush2.xpose.msra.mxu0 0.0
        %5991 = vmatprep.subr.mxu0 0.0
        %5992 = vmatpush2.xpose.msra.mxu0 0.0
        %5993 = vmatprep.subr.mxu0 0.0
        %5994 = vmatpush2.xpose.msra.mxu0 0.0
        %5995 = vmatprep.subr.mxu0 0.0
        %5996 = vmatpush2.xpose.msra.mxu0 0.0
        %5997 = vmatprep.subr.mxu0 0.0
        %5998 = vmatpush2.xpose.msra.mxu0 0.0
        %5999 = vmatprep.subr.mxu0 0.0
        %6000 = vmatpush2.xpose.msra.mxu0 0.0
        %6001 = vmatprep.subr.mxu0 0.0
        %6002 = vmatpush2.xpose.msra.mxu0 0.0
        %6003 = vmatprep.subr.mxu0 0.0
        %6004 = vmatpush2.xpose.msra.mxu0 0.0
        %6005 = vmatprep.subr.mxu0 0.0
        %6006 = vmatpush2.xpose.msra.mxu0 0.0
        %6007 = vmatprep.subr.mxu0 0.0
        %6008 = vmatpush2.xpose.msra.mxu0 0.0
        %6009 = vmatprep.mubr.f32.mxu0 0.0
        %6010 = vmatmul.mubr.f32.gmra.mxu0 %v5940
        %v6011 = vpop.f32.mrf.mxu0
        %v6012 = vadd.f32 0.0, %v6011
        %v6013 = vpop.f32.mrf.mxu0
        %6014 = vdwg.mxu0
        %v6015 = vmul.f32 %v6012, 0.25
        %v6016 = vsel %vm886, %v6015, -inf
        %6017 = vmax.xlane.f32.xlu0 %v6016
        %v6018 = vpop.xlane.xlu0 %6017
        %v6019 = vsub.f32 %v6015, %v6018
        %v6020 = vmul.f32 %v6019, 1.442695
        %v6021 = vpow.pop %v6020
        %v6022 = vsel %vm886, %v6021, 0.0
        %6023 = vadd.xlane.f32.xlu0 %v6022
        %v6024 = vpop.xlane.xlu0 %6023
        %v6025 = vrcp.pop %v6024
        %v6026 = vmul.f32 %v6021, %v6025
        %v6028 = vsel %vm886, %v6026, 0
        %6030 = vmatprep.subr.mxu0 0.0
        %6031 = vmatpush1.msra.mxu0 0.0
        %6032 = vmatprep.subr.mxu0 0.0
        %6033 = vmatpush1.msra.mxu0 0.0
        %6034 = vmatprep.subr.mxu0 0.0
        %6035 = vmatpush1.msra.mxu0 0.0
        %6036 = vmatprep.subr.mxu0 0.0
        %6037 = vmatpush1.msra.mxu0 0.0
        %6038 = vmatprep.subr.mxu0 0.0
        %6039 = vmatpush1.msra.mxu0 0.0
        %6040 = vmatprep.subr.mxu0 0.0
        %6041 = vmatpush1.msra.mxu0 0.0
        %6042 = vmatprep.subr.mxu0 0.0
        %6043 = vmatpush1.msra.mxu0 0.0
        %6044 = vmatprep.subr.mxu0 0.0
        %6045 = vmatpush1.msra.mxu0 0.0
        %6046 = vmatprep.subr.mxu0 0.0
        %6047 = vmatpush1.msra.mxu0 0.0
        %6048 = vmatprep.subr.mxu0 0.0
        %6049 = vmatpush1.msra.mxu0 0.0
        %6050 = vmatprep.subr.mxu0 0.0
        %6051 = vmatpush1.msra.mxu0 0.0
        %6052 = vmatprep.subr.mxu0 0.0
        %6053 = vmatpush1.msra.mxu0 0.0
        %6054 = vmatprep.subr.mxu0 0.0
        %6055 = vmatpush1.msra.mxu0 0.0
        %6056 = vmatprep.subr.mxu0 0.0
        %6057 = vmatpush1.msra.mxu0 0.0
        %6058 = vmatprep.subr.mxu0 0.0
        %6059 = vmatpush1.msra.mxu0 0.0
        %6060 = vmatprep.subr.mxu0 0.0
        %6061 = vmatpush1.msra.mxu0 %v5936
        %6062 = vmatprep.subr.mxu0 0.0
        %6063 = vmatpush2.msra.mxu0 0.0
        %6064 = vmatprep.subr.mxu0 0.0
        %6065 = vmatpush2.msra.mxu0 0.0
        %6066 = vmatprep.subr.mxu0 0.0
        %6067 = vmatpush2.msra.mxu0 0.0
        %6068 = vmatprep.subr.mxu0 0.0
        %6069 = vmatpush2.msra.mxu0 0.0
        %6070 = vmatprep.subr.mxu0 0.0
        %6071 = vmatpush2.msra.mxu0 0.0
        %6072 = vmatprep.subr.mxu0 0.0
        %6073 = vmatpush2.msra.mxu0 0.0
        %6074 = vmatprep.subr.mxu0 0.0
        %6075 = vmatpush2.msra.mxu0 0.0
        %6076 = vmatprep.subr.mxu0 0.0
        %6077 = vmatpush2.msra.mxu0 0.0
        %6078 = vmatprep.subr.mxu0 0.0
        %6079 = vmatpush2.msra.mxu0 0.0
        %6080 = vmatprep.subr.mxu0 0.0
        %6081 = vmatpush2.msra.mxu0 0.0
        %6082 = vmatprep.subr.mxu0 0.0
        %6083 = vmatpush2.msra.mxu0 0.0
        %6084 = vmatprep.subr.mxu0 0.0
        %6085 = vmatpush2.msra.mxu0 0.0
        %6086 = vmatprep.subr.mxu0 0.0
        %6087 = vmatpush2.msra.mxu0 0.0
        %6088 = vmatprep.subr.mxu0 0.0
        %6089 = vmatpush2.msra.mxu0 0.0
        %6090 = vmatprep.subr.mxu0 0.0
        %6091 = vmatpush2.msra.mxu0 0.0
        %6092 = vmatprep.subr.mxu0 0.0
        %6093 = vmatpush2.msra.mxu0 0.0
        %6094 = vmatprep.mubr.f32.mxu0 0.0
        %6095 = vmatmul.mubr.f32.gmra.mxu0 %v6028
        %v6096 = vpop.f32.mrf.mxu0
        %v6097 = vadd.f32 0.0, %v6096
        %v6098 = vpop.f32.mrf.mxu0
        %6099 = vdwg.mxu0
        %s6100 = scalar_lea.vmem %s4, 144
        %v6101 = vld [vmem:[%s6100] sm:$0xff]
        %v6102 = vld [vmem:[%s6100 + $0x8] sm:$0xff]
        %v6104 = vsel %vm808, %v6097, 0
        %6106 = vmatprep.subr.mxu0 0.0
        %6107 = vmatpush1.msra.mxu0 0.0
        %6108 = vmatprep.subr.mxu0 0.0
        %6109 = vmatpush1.msra.mxu0 0.0
        %6110 = vmatprep.subr.mxu0 0.0
        %6111 = vmatpush1.msra.mxu0 0.0
        %6112 = vmatprep.subr.mxu0 0.0
        %6113 = vmatpush1.msra.mxu0 0.0
        %6114 = vmatprep.subr.mxu0 0.0
        %6115 = vmatpush1.msra.mxu0 0.0
        %6116 = vmatprep.subr.mxu0 0.0
        %6117 = vmatpush1.msra.mxu0 0.0
        %6118 = vmatprep.subr.mxu0 0.0
        %6119 = vmatpush1.msra.mxu0 0.0
        %6120 = vmatprep.subr.mxu0 0.0
        %6121 = vmatpush1.msra.mxu0 0.0
        %6122 = vmatprep.subr.mxu0 0.0
        %6123 = vmatpush1.msra.mxu0 0.0
        %6124 = vmatprep.subr.mxu0 0.0
        %6125 = vmatpush1.msra.mxu0 0.0
        %6126 = vmatprep.subr.mxu0 0.0
        %6127 = vmatpush1.msra.mxu0 0.0
        %6128 = vmatprep.subr.mxu0 0.0
        %6129 = vmatpush1.msra.mxu0 0.0
        %6130 = vmatprep.subr.mxu0 0.0
        %6131 = vmatpush1.msra.mxu0 0.0
        %6132 = vmatprep.subr.mxu0 0.0
        %6133 = vmatpush1.msra.mxu0 0.0
        %6134 = vmatprep.subr.mxu0 0.0
        %6135 = vmatpush1.msra.mxu0 %v6102
        %6136 = vmatprep.subr.mxu0 0.0
        %6137 = vmatpush1.msra.mxu0 %v6101
        %6138 = vmatprep.subr.mxu0 0.0
        %6139 = vmatpush2.msra.mxu0 0.0
        %6140 = vmatprep.subr.mxu0 0.0
        %6141 = vmatpush2.msra.mxu0 0.0
        %6142 = vmatprep.subr.mxu0 0.0
        %6143 = vmatpush2.msra.mxu0 0.0
        %6144 = vmatprep.subr.mxu0 0.0
        %6145 = vmatpush2.msra.mxu0 0.0
        %6146 = vmatprep.subr.mxu0 0.0
        %6147 = vmatpush2.msra.mxu0 0.0
        %6148 = vmatprep.subr.mxu0 0.0
        %6149 = vmatpush2.msra.mxu0 0.0
        %6150 = vmatprep.subr.mxu0 0.0
        %6151 = vmatpush2.msra.mxu0 0.0
        %6152 = vmatprep.subr.mxu0 0.0
        %6153 = vmatpush2.msra.mxu0 0.0
        %6154 = vmatprep.subr.mxu0 0.0
        %6155 = vmatpush2.msra.mxu0 0.0
        %6156 = vmatprep.subr.mxu0 0.0
        %6157 = vmatpush2.msra.mxu0 0.0
        %6158 = vmatprep.subr.mxu0 0.0
        %6159 = vmatpush2.msra.mxu0 0.0
        %6160 = vmatprep.subr.mxu0 0.0
        %6161 = vmatpush2.msra.mxu0 0.0
        %6162 = vmatprep.subr.mxu0 0.0
        %6163 = vmatpush2.msra.mxu0 0.0
        %6164 = vmatprep.subr.mxu0 0.0
        %6165 = vmatpush2.msra.mxu0 0.0
        %6166 = vmatprep.subr.mxu0 0.0
        %6167 = vmatpush2.msra.mxu0 0.0
        %6168 = vmatprep.subr.mxu0 0.0
        %6169 = vmatpush2.msra.mxu0 0.0
        %6170 = vmatprep.mubr.f32.mxu0 0.0
        %6171 = vmatmul.mubr.f32.gmra.mxu0 %v6104
        %v6172 = vpop.f32.mrf.mxu0
        %v6173 = vadd.f32 0.0, %v6172
        %v6174 = vpop.f32.mrf.mxu0
        %6175 = vdwg.mxu0
        %v6177 = vsel %vm808, %v5684, 0
        %6179 = vmatprep.subr.mxu0 0.0
        %6180 = vmatpush1.msra.mxu0 0.0
        %6181 = vmatprep.subr.mxu0 0.0
        %6182 = vmatpush1.msra.mxu0 0.0
        %6183 = vmatprep.subr.mxu0 0.0
        %6184 = vmatpush1.msra.mxu0 0.0
        %6185 = vmatprep.subr.mxu0 0.0
        %6186 = vmatpush1.msra.mxu0 0.0
        %6187 = vmatprep.subr.mxu0 0.0
        %6188 = vmatpush1.msra.mxu0 0.0
        %6189 = vmatprep.subr.mxu0 0.0
        %6190 = vmatpush1.msra.mxu0 0.0
        %6191 = vmatprep.subr.mxu0 0.0
        %6192 = vmatpush1.msra.mxu0 0.0
        %6193 = vmatprep.subr.mxu0 0.0
        %6194 = vmatpush1.msra.mxu0 0.0
        %6195 = vmatprep.subr.mxu0 0.0
        %6196 = vmatpush1.msra.mxu0 0.0
        %6197 = vmatprep.subr.mxu0 0.0
        %6198 = vmatpush1.msra.mxu0 0.0
        %6199 = vmatprep.subr.mxu0 0.0
        %6200 = vmatpush1.msra.mxu0 0.0
        %6201 = vmatprep.subr.mxu0 0.0
        %6202 = vmatpush1.msra.mxu0 0.0
        %6203 = vmatprep.subr.mxu0 0.0
        %6204 = vmatpush1.msra.mxu0 0.0
        %6205 = vmatprep.subr.mxu0 0.0
        %6206 = vmatpush1.msra.mxu0 0.0
        %6207 = vmatprep.subr.mxu0 0.0
        %6208 = vmatpush1.msra.mxu0 %v5689
        %6209 = vmatprep.subr.mxu0 0.0
        %6210 = vmatpush1.msra.mxu0 %v5688
        %6211 = vmatprep.subr.mxu0 0.0
        %6212 = vmatpush2.msra.mxu0 0.0
        %6213 = vmatprep.subr.mxu0 0.0
        %6214 = vmatpush2.msra.mxu0 0.0
        %6215 = vmatprep.subr.mxu0 0.0
        %6216 = vmatpush2.msra.mxu0 0.0
        %6217 = vmatprep.subr.mxu0 0.0
        %6218 = vmatpush2.msra.mxu0 0.0
        %6219 = vmatprep.subr.mxu0 0.0
        %6220 = vmatpush2.msra.mxu0 0.0
        %6221 = vmatprep.subr.mxu0 0.0
        %6222 = vmatpush2.msra.mxu0 0.0
        %6223 = vmatprep.subr.mxu0 0.0
        %6224 = vmatpush2.msra.mxu0 0.0
        %6225 = vmatprep.subr.mxu0 0.0
        %6226 = vmatpush2.msra.mxu0 0.0
        %6227 = vmatprep.subr.mxu0 0.0
        %6228 = vmatpush2.msra.mxu0 0.0
        %6229 = vmatprep.subr.mxu0 0.0
        %6230 = vmatpush2.msra.mxu0 0.0
        %6231 = vmatprep.subr.mxu0 0.0
        %6232 = vmatpush2.msra.mxu0 0.0
        %6233 = vmatprep.subr.mxu0 0.0
        %6234 = vmatpush2.msra.mxu0 0.0
        %6235 = vmatprep.subr.mxu0 0.0
        %6236 = vmatpush2.msra.mxu0 0.0
        %6237 = vmatprep.subr.mxu0 0.0
        %6238 = vmatpush2.msra.mxu0 0.0
        %6239 = vmatprep.subr.mxu0 0.0
        %6240 = vmatpush2.msra.mxu0 0.0
        %6241 = vmatprep.subr.mxu0 0.0
        %6242 = vmatpush2.msra.mxu0 0.0
        %6243 = vmatprep.mubr.f32.mxu0 0.0
        %6244 = vmatmul.mubr.f32.gmra.mxu0 %v6177
        %v6245 = vpop.f32.mrf.mxu0
        %v6246 = vadd.f32 %v6173, %v6245
        %v6247 = vpop.f32.mrf.mxu0
        %6248 = vdwg.mxu0
        %s6249 = scalar_lea.vmem %s5, 4
        %v6250 = vld [vmem:[%s6249] sm:$0x1]
        %v6252 = vlaneseq
        %v6253 = vshrl.u32 %v6252, 7
        %v6254 = vsub.s32 0, %v6253
        %v6255 = vrot.slane %v6250, %v6254
        %v6257 = vadd.f32 %v6246, %v6255
        %v6258 = vadd.f32 %v5273, %v6257
        %v6259 = vsel %vm568, %v6258, 0.0
        %6260 = vadd.xlane.f32.xlu0 %v6259
        %v6261 = vpop.xlane.xlu0 %6260
        %v6262 = vmul.f32 %v6261, %v1544
        %v6263 = vsub.f32 %v6258, %v6262
        %v6264 = vmul.f32 %v6263, %v6263
        %v6265 = vsel %vm568, %v6264, 0.0
        %6266 = vadd.xlane.f32.xlu0 %v6265
        %v6267 = vpop.xlane.xlu0 %6266
        %v6268 = vmul.f32 %v6267, %v1544
        %v6269 = vadd.f32 %v6268, 1e-05
        %v6270 = vrsqrt.pop %v6269
        %v6271 = vmul.f32 %v6263, %v6270
        %s6272 = scalar_lea.vmem %s10, 8
        %v6273 = vld [vmem:[%s6272] sm:$0x1]
        %v6275 = vlaneseq
        %v6276 = vshrl.u32 %v6275, 7
        %v6277 = vsub.s32 0, %v6276
        %v6278 = vrot.slane %v6273, %v6277
        %v6280 = vmul.f32 %v6271, %v6278
        %s6281 = scalar_lea.vmem %s11, 8
        %v6282 = vld [vmem:[%s6281] sm:$0x1]
        %v6284 = vlaneseq
        %v6285 = vshrl.u32 %v6284, 7
        %v6286 = vsub.s32 0, %v6285
        %v6287 = vrot.slane %v6282, %v6286
        %v6289 = vadd.f32 %v6280, %v6287
        %s6290 = scalar_lea.vmem %s2, 960
        %v6291 = vld [vmem:[%s6290] sm:$0xff]
        %v6292 = vld [vmem:[%s6290 + $0x8] sm:$0xff]
        %v6293 = vld [vmem:[%s6290 + $0x10] sm:$0xff]
        %v6294 = vld [vmem:[%s6290 + $0x18] sm:$0xff]
        %s6295 = scalar_lea.vmem %s3, 30
        %v6296 = vld [vmem:[%s6295] sm:$0x1]
        %v6298 = vlaneseq
        %v6299 = vshrl.u32 %v6298, 7
        %v6300 = vsub.s32 0, %v6299
        %v6301 = vrot.slane %v6296, %v6300
        %v6304 = vsel %vm568, %v6289, 0
        %6306 = vmatprep.subr.mxu0 0.0
        %6307 = vmatpush1.msra.mxu0 0.0
        %6308 = vmatprep.subr.mxu0 0.0
        %6309 = vmatpush1.msra.mxu0 0.0
        %6310 = vmatprep.subr.mxu0 0.0
        %6311 = vmatpush1.msra.mxu0 0.0
        %6312 = vmatprep.subr.mxu0 0.0
        %6313 = vmatpush1.msra.mxu0 0.0
        %6314 = vmatprep.subr.mxu0 0.0
        %6315 = vmatpush1.msra.mxu0 0.0
        %6316 = vmatprep.subr.mxu0 0.0
        %6317 = vmatpush1.msra.mxu0 0.0
        %6318 = vmatprep.subr.mxu0 0.0
        %6319 = vmatpush1.msra.mxu0 0.0
        %6320 = vmatprep.subr.mxu0 0.0
        %6321 = vmatpush1.msra.mxu0 0.0
        %6322 = vmatprep.subr.mxu0 0.0
        %6323 = vmatpush1.msra.mxu0 0.0
        %6324 = vmatprep.subr.mxu0 0.0
        %6325 = vmatpush1.msra.mxu0 0.0
        %6326 = vmatprep.subr.mxu0 0.0
        %6327 = vmatpush1.msra.mxu0 0.0
        %6328 = vmatprep.subr.mxu0 0.0
        %6329 = vmatpush1.msra.mxu0 0.0
        %6330 = vmatprep.subr.mxu0 0.0
        %6331 = vmatpush1.msra.mxu0 %v6294
        %6332 = vmatprep.subr.mxu0 0.0
        %6333 = vmatpush1.msra.mxu0 %v6293
        %6334 = vmatprep.subr.mxu0 0.0
        %6335 = vmatpush1.msra.mxu0 %v6292
        %6336 = vmatprep.subr.mxu0 0.0
        %6337 = vmatpush1.msra.mxu0 %v6291
        %6338 = vmatprep.subr.mxu0 0.0
        %6339 = vmatpush2.msra.mxu0 0.0
        %6340 = vmatprep.subr.mxu0 0.0
        %6341 = vmatpush2.msra.mxu0 0.0
        %6342 = vmatprep.subr.mxu0 0.0
        %6343 = vmatpush2.msra.mxu0 0.0
        %6344 = vmatprep.subr.mxu0 0.0
        %6345 = vmatpush2.msra.mxu0 0.0
        %6346 = vmatprep.subr.mxu0 0.0
        %6347 = vmatpush2.msra.mxu0 0.0
        %6348 = vmatprep.subr.mxu0 0.0
        %6349 = vmatpush2.msra.mxu0 0.0
        %6350 = vmatprep.subr.mxu0 0.0
        %6351 = vmatpush2.msra.mxu0 0.0
        %6352 = vmatprep.subr.mxu0 0.0
        %6353 = vmatpush2.msra.mxu0 0.0
        %6354 = vmatprep.subr.mxu0 0.0
        %6355 = vmatpush2.msra.mxu0 0.0
        %6356 = vmatprep.subr.mxu0 0.0
        %6357 = vmatpush2.msra.mxu0 0.0
        %6358 = vmatprep.subr.mxu0 0.0
        %6359 = vmatpush2.msra.mxu0 0.0
        %6360 = vmatprep.subr.mxu0 0.0
        %6361 = vmatpush2.msra.mxu0 0.0
        %6362 = vmatprep.subr.mxu0 0.0
        %6363 = vmatpush2.msra.mxu0 0.0
        %6364 = vmatprep.subr.mxu0 0.0
        %6365 = vmatpush2.msra.mxu0 0.0
        %6366 = vmatprep.subr.mxu0 0.0
        %6367 = vmatpush2.msra.mxu0 0.0
        %6368 = vmatprep.subr.mxu0 0.0
        %6369 = vmatpush2.msra.mxu0 0.0
        %6370 = vmatprep.mubr.f32.mxu0 0.0
        %6371 = vmatmul.mubr.f32.gmra.mxu0 %v6304
        %v6372 = vpop.f32.mrf.mxu0
        %v6373 = vadd.f32 %v6301, %v6372
        %v6374 = vpop.f32.mrf.mxu0
        %6375 = vdwg.mxu0
        %s6376 = scalar_lea.vmem %s2, 992
        %v6377 = vld [vmem:[%s6376] sm:$0xff]
        %v6378 = vld [vmem:[%s6376 + $0x8] sm:$0xff]
        %v6379 = vld [vmem:[%s6376 + $0x10] sm:$0xff]
        %v6380 = vld [vmem:[%s6376 + $0x18] sm:$0xff]
        %s6381 = scalar_lea.vmem %s3, 31
        %v6382 = vld [vmem:[%s6381] sm:$0x1]
        %v6384 = vlaneseq
        %v6385 = vshrl.u32 %v6384, 7
        %v6386 = vsub.s32 0, %v6385
        %v6387 = vrot.slane %v6382, %v6386
        %6389 = vmatprep.subr.mxu0 0.0
        %6390 = vmatpush1.msra.mxu0 0.0
        %6391 = vmatprep.subr.mxu0 0.0
        %6392 = vmatpush1.msra.mxu0 0.0
        %6393 = vmatprep.subr.mxu0 0.0
        %6394 = vmatpush1.msra.mxu0 0.0
        %6395 = vmatprep.subr.mxu0 0.0
        %6396 = vmatpush1.msra.mxu0 0.0
        %6397 = vmatprep.subr.mxu0 0.0
        %6398 = vmatpush1.msra.mxu0 0.0
        %6399 = vmatprep.subr.mxu0 0.0
        %6400 = vmatpush1.msra.mxu0 0.0
        %6401 = vmatprep.subr.mxu0 0.0
        %6402 = vmatpush1.msra.mxu0 0.0
        %6403 = vmatprep.subr.mxu0 0.0
        %6404 = vmatpush1.msra.mxu0 0.0
        %6405 = vmatprep.subr.mxu0 0.0
        %6406 = vmatpush1.msra.mxu0 0.0
        %6407 = vmatprep.subr.mxu0 0.0
        %6408 = vmatpush1.msra.mxu0 0.0
        %6409 = vmatprep.subr.mxu0 0.0
        %6410 = vmatpush1.msra.mxu0 0.0
        %6411 = vmatprep.subr.mxu0 0.0
        %6412 = vmatpush1.msra.mxu0 0.0
        %6413 = vmatprep.subr.mxu0 0.0
        %6414 = vmatpush1.msra.mxu0 %v6380
        %6415 = vmatprep.subr.mxu0 0.0
        %6416 = vmatpush1.msra.mxu0 %v6379
        %6417 = vmatprep.subr.mxu0 0.0
        %6418 = vmatpush1.msra.mxu0 %v6378
        %6419 = vmatprep.subr.mxu0 0.0
        %6420 = vmatpush1.msra.mxu0 %v6377
        %6421 = vmatprep.subr.mxu0 0.0
        %6422 = vmatpush2.msra.mxu0 0.0
        %6423 = vmatprep.subr.mxu0 0.0
        %6424 = vmatpush2.msra.mxu0 0.0
        %6425 = vmatprep.subr.mxu0 0.0
        %6426 = vmatpush2.msra.mxu0 0.0
        %6427 = vmatprep.subr.mxu0 0.0
        %6428 = vmatpush2.msra.mxu0 0.0
        %6429 = vmatprep.subr.mxu0 0.0
        %6430 = vmatpush2.msra.mxu0 0.0
        %6431 = vmatprep.subr.mxu0 0.0
        %6432 = vmatpush2.msra.mxu0 0.0
        %6433 = vmatprep.subr.mxu0 0.0
        %6434 = vmatpush2.msra.mxu0 0.0
        %6435 = vmatprep.subr.mxu0 0.0
        %6436 = vmatpush2.msra.mxu0 0.0
        %6437 = vmatprep.subr.mxu0 0.0
        %6438 = vmatpush2.msra.mxu0 0.0
        %6439 = vmatprep.subr.mxu0 0.0
        %6440 = vmatpush2.msra.mxu0 0.0
        %6441 = vmatprep.subr.mxu0 0.0
        %6442 = vmatpush2.msra.mxu0 0.0
        %6443 = vmatprep.subr.mxu0 0.0
        %6444 = vmatpush2.msra.mxu0 0.0
        %6445 = vmatprep.subr.mxu0 0.0
        %6446 = vmatpush2.msra.mxu0 0.0
        %6447 = vmatprep.subr.mxu0 0.0
        %6448 = vmatpush2.msra.mxu0 0.0
        %6449 = vmatprep.subr.mxu0 0.0
        %6450 = vmatpush2.msra.mxu0 0.0
        %6451 = vmatprep.subr.mxu0 0.0
        %6452 = vmatpush2.msra.mxu0 0.0
        %6453 = vmatprep.mubr.f32.mxu0 0.0
        %6454 = vmatmul.mubr.f32.gmra.mxu0 %v4146
        %v6455 = vpop.f32.mrf.mxu0
        %v6456 = vadd.f32 %v6387, %v6455
        %v6457 = vpop.f32.mrf.mxu0
        %6458 = vdwg.mxu0
        %s6459 = scalar_lea.vmem %s2, 1024
        %v6460 = vld [vmem:[%s6459] sm:$0xff]
        %v6461 = vld [vmem:[%s6459 + $0x8] sm:$0xff]
        %v6462 = vld [vmem:[%s6459 + $0x10] sm:$0xff]
        %v6463 = vld [vmem:[%s6459 + $0x18] sm:$0xff]
        %s6464 = scalar_lea.vmem %s3, 32
        %v6465 = vld [vmem:[%s6464] sm:$0x1]
        %v6467 = vlaneseq
        %v6468 = vshrl.u32 %v6467, 7
        %v6469 = vsub.s32 0, %v6468
        %v6470 = vrot.slane %v6465, %v6469
        %6472 = vmatprep.subr.mxu0 0.0
        %6473 = vmatpush1.msra.mxu0 0.0
        %6474 = vmatprep.subr.mxu0 0.0
        %6475 = vmatpush1.msra.mxu0 0.0
        %6476 = vmatprep.subr.mxu0 0.0
        %6477 = vmatpush1.msra.mxu0 0.0
        %6478 = vmatprep.subr.mxu0 0.0
        %6479 = vmatpush1.msra.mxu0 0.0
        %6480 = vmatprep.subr.mxu0 0.0
        %6481 = vmatpush1.msra.mxu0 0.0
        %6482 = vmatprep.subr.mxu0 0.0
        %6483 = vmatpush1.msra.mxu0 0.0
        %6484 = vmatprep.subr.mxu0 0.0
        %6485 = vmatpush1.msra.mxu0 0.0
        %6486 = vmatprep.subr.mxu0 0.0
        %6487 = vmatpush1.msra.mxu0 0.0
        %6488 = vmatprep.subr.mxu0 0.0
        %6489 = vmatpush1.msra.mxu0 0.0
        %6490 = vmatprep.subr.mxu0 0.0
        %6491 = vmatpush1.msra.mxu0 0.0
        %6492 = vmatprep.subr.mxu0 0.0
        %6493 = vmatpush1.msra.mxu0 0.0
        %6494 = vmatprep.subr.mxu0 0.0
        %6495 = vmatpush1.msra.mxu0 0.0
        %6496 = vmatprep.subr.mxu0 0.0
        %6497 = vmatpush1.msra.mxu0 %v6463
        %6498 = vmatprep.subr.mxu0 0.0
        %6499 = vmatpush1.msra.mxu0 %v6462
        %6500 = vmatprep.subr.mxu0 0.0
        %6501 = vmatpush1.msra.mxu0 %v6461
        %6502 = vmatprep.subr.mxu0 0.0
        %6503 = vmatpush1.msra.mxu0 %v6460
        %6504 = vmatprep.subr.mxu0 0.0
        %6505 = vmatpush2.msra.mxu0 0.0
        %6506 = vmatprep.subr.mxu0 0.0
        %6507 = vmatpush2.msra.mxu0 0.0
        %6508 = vmatprep.subr.mxu0 0.0
        %6509 = vmatpush2.msra.mxu0 0.0
        %6510 = vmatprep.subr.mxu0 0.0
        %6511 = vmatpush2.msra.mxu0 0.0
        %6512 = vmatprep.subr.mxu0 0.0
        %6513 = vmatpush2.msra.mxu0 0.0
        %6514 = vmatprep.subr.mxu0 0.0
        %6515 = vmatpush2.msra.mxu0 0.0
        %6516 = vmatprep.subr.mxu0 0.0
        %6517 = vmatpush2.msra.mxu0 0.0
        %6518 = vmatprep.subr.mxu0 0.0
        %6519 = vmatpush2.msra.mxu0 0.0
        %6520 = vmatprep.subr.mxu0 0.0
        %6521 = vmatpush2.msra.mxu0 0.0
        %6522 = vmatprep.subr.mxu0 0.0
        %6523 = vmatpush2.msra.mxu0 0.0
        %6524 = vmatprep.subr.mxu0 0.0
        %6525 = vmatpush2.msra.mxu0 0.0
        %6526 = vmatprep.subr.mxu0 0.0
        %6527 = vmatpush2.msra.mxu0 0.0
        %6528 = vmatprep.subr.mxu0 0.0
        %6529 = vmatpush2.msra.mxu0 0.0
        %6530 = vmatprep.subr.mxu0 0.0
        %6531 = vmatpush2.msra.mxu0 0.0
        %6532 = vmatprep.subr.mxu0 0.0
        %6533 = vmatpush2.msra.mxu0 0.0
        %6534 = vmatprep.subr.mxu0 0.0
        %6535 = vmatpush2.msra.mxu0 0.0
        %6536 = vmatprep.mubr.f32.mxu0 0.0
        %6537 = vmatmul.mubr.f32.gmra.mxu0 %v4146
        %v6538 = vpop.f32.mrf.mxu0
        %v6539 = vadd.f32 %v6470, %v6538
        %v6540 = vpop.f32.mrf.mxu0
        %6541 = vdwg.mxu0
        %v6543 = vsel %vm808, %v6373, 0
        %v6546 = vsel %vm808, %v6456, 0
        %6548 = vmatprep.subr.mxu0 0.0
        %6549 = vmatpush1.xpose.msra.mxu0 0.0
        %6550 = vmatprep.subr.mxu0 0.0
        %6551 = vmatpush1.xpose.msra.mxu0 0.0
        %6552 = vmatprep.subr.mxu0 0.0
        %6553 = vmatpush1.xpose.msra.mxu0 0.0
        %6554 = vmatprep.subr.mxu0 0.0
        %6555 = vmatpush1.xpose.msra.mxu0 0.0
        %6556 = vmatprep.subr.mxu0 0.0
        %6557 = vmatpush1.xpose.msra.mxu0 0.0
        %6558 = vmatprep.subr.mxu0 0.0
        %6559 = vmatpush1.xpose.msra.mxu0 0.0
        %6560 = vmatprep.subr.mxu0 0.0
        %6561 = vmatpush1.xpose.msra.mxu0 0.0
        %6562 = vmatprep.subr.mxu0 0.0
        %6563 = vmatpush1.xpose.msra.mxu0 0.0
        %6564 = vmatprep.subr.mxu0 0.0
        %6565 = vmatpush1.xpose.msra.mxu0 0.0
        %6566 = vmatprep.subr.mxu0 0.0
        %6567 = vmatpush1.xpose.msra.mxu0 0.0
        %6568 = vmatprep.subr.mxu0 0.0
        %6569 = vmatpush1.xpose.msra.mxu0 0.0
        %6570 = vmatprep.subr.mxu0 0.0
        %6571 = vmatpush1.xpose.msra.mxu0 0.0
        %6572 = vmatprep.subr.mxu0 0.0
        %6573 = vmatpush1.xpose.msra.mxu0 0.0
        %6574 = vmatprep.subr.mxu0 0.0
        %6575 = vmatpush1.xpose.msra.mxu0 0.0
        %6576 = vmatprep.subr.mxu0 0.0
        %6577 = vmatpush1.xpose.msra.mxu0 0.0
        %6578 = vmatprep.subr.mxu0 0.0
        %6579 = vmatpush1.xpose.msra.mxu0 %v6546
        %6580 = vmatprep.subr.mxu0 0.0
        %6581 = vmatpush2.xpose.msra.mxu0 0.0
        %6582 = vmatprep.subr.mxu0 0.0
        %6583 = vmatpush2.xpose.msra.mxu0 0.0
        %6584 = vmatprep.subr.mxu0 0.0
        %6585 = vmatpush2.xpose.msra.mxu0 0.0
        %6586 = vmatprep.subr.mxu0 0.0
        %6587 = vmatpush2.xpose.msra.mxu0 0.0
        %6588 = vmatprep.subr.mxu0 0.0
        %6589 = vmatpush2.xpose.msra.mxu0 0.0
        %6590 = vmatprep.subr.mxu0 0.0
        %6591 = vmatpush2.xpose.msra.mxu0 0.0
        %6592 = vmatprep.subr.mxu0 0.0
        %6593 = vmatpush2.xpose.msra.mxu0 0.0
        %6594 = vmatprep.subr.mxu0 0.0
        %6595 = vmatpush2.xpose.msra.mxu0 0.0
        %6596 = vmatprep.subr.mxu0 0.0
        %6597 = vmatpush2.xpose.msra.mxu0 0.0
        %6598 = vmatprep.subr.mxu0 0.0
        %6599 = vmatpush2.xpose.msra.mxu0 0.0
        %6600 = vmatprep.subr.mxu0 0.0
        %6601 = vmatpush2.xpose.msra.mxu0 0.0
        %6602 = vmatprep.subr.mxu0 0.0
        %6603 = vmatpush2.xpose.msra.mxu0 0.0
        %6604 = vmatprep.subr.mxu0 0.0
        %6605 = vmatpush2.xpose.msra.mxu0 0.0
        %6606 = vmatprep.subr.mxu0 0.0
        %6607 = vmatpush2.xpose.msra.mxu0 0.0
        %6608 = vmatprep.subr.mxu0 0.0
        %6609 = vmatpush2.xpose.msra.mxu0 0.0
        %6610 = vmatprep.subr.mxu0 0.0
        %6611 = vmatpush2.xpose.msra.mxu0 0.0
        %6612 = vmatprep.mubr.f32.mxu0 0.0
        %6613 = vmatmul.mubr.f32.gmra.mxu0 %v6543
        %v6614 = vpop.f32.mrf.mxu0
        %v6615 = vadd.f32 0.0, %v6614
        %v6616 = vpop.f32.mrf.mxu0
        %6617 = vdwg.mxu0
        %v6618 = vmul.f32 %v6615, 0.25
        %v6619 = vsel %vm886, %v6618, -inf
        %6620 = vmax.xlane.f32.xlu0 %v6619
        %v6621 = vpop.xlane.xlu0 %6620
        %v6622 = vsub.f32 %v6618, %v6621
        %v6623 = vmul.f32 %v6622, 1.442695
        %v6624 = vpow.pop %v6623
        %v6625 = vsel %vm886, %v6624, 0.0
        %6626 = vadd.xlane.f32.xlu0 %v6625
        %v6627 = vpop.xlane.xlu0 %6626
        %v6628 = vrcp.pop %v6627
        %v6629 = vmul.f32 %v6624, %v6628
        %v6631 = vsel %vm886, %v6629, 0
        %6633 = vmatprep.subr.mxu0 0.0
        %6634 = vmatpush1.msra.mxu0 0.0
        %6635 = vmatprep.subr.mxu0 0.0
        %6636 = vmatpush1.msra.mxu0 0.0
        %6637 = vmatprep.subr.mxu0 0.0
        %6638 = vmatpush1.msra.mxu0 0.0
        %6639 = vmatprep.subr.mxu0 0.0
        %6640 = vmatpush1.msra.mxu0 0.0
        %6641 = vmatprep.subr.mxu0 0.0
        %6642 = vmatpush1.msra.mxu0 0.0
        %6643 = vmatprep.subr.mxu0 0.0
        %6644 = vmatpush1.msra.mxu0 0.0
        %6645 = vmatprep.subr.mxu0 0.0
        %6646 = vmatpush1.msra.mxu0 0.0
        %6647 = vmatprep.subr.mxu0 0.0
        %6648 = vmatpush1.msra.mxu0 0.0
        %6649 = vmatprep.subr.mxu0 0.0
        %6650 = vmatpush1.msra.mxu0 0.0
        %6651 = vmatprep.subr.mxu0 0.0
        %6652 = vmatpush1.msra.mxu0 0.0
        %6653 = vmatprep.subr.mxu0 0.0
        %6654 = vmatpush1.msra.mxu0 0.0
        %6655 = vmatprep.subr.mxu0 0.0
        %6656 = vmatpush1.msra.mxu0 0.0
        %6657 = vmatprep.subr.mxu0 0.0
        %6658 = vmatpush1.msra.mxu0 0.0
        %6659 = vmatprep.subr.mxu0 0.0
        %6660 = vmatpush1.msra.mxu0 0.0
        %6661 = vmatprep.subr.mxu0 0.0
        %6662 = vmatpush1.msra.mxu0 0.0
        %6663 = vmatprep.subr.mxu0 0.0
        %6664 = vmatpush1.msra.mxu0 %v6539
        %6665 = vmatprep.subr.mxu0 0.0
        %6666 = vmatpush2.msra.mxu0 0.0
        %6667 = vmatprep.subr.mxu0 0.0
        %6668 = vmatpush2.msra.mxu0 0.0
        %6669 = vmatprep.subr.mxu0 0.0
        %6670 = vmatpush2.msra.mxu0 0.0
        %6671 = vmatprep.subr.mxu0 0.0
        %6672 = vmatpush2.msra.mxu0 0.0
        %6673 = vmatprep.subr.mxu0 0.0
        %6674 = vmatpush2.msra.mxu0 0.0
        %6675 = vmatprep.subr.mxu0 0.0
        %6676 = vmatpush2.msra.mxu0 0.0
        %6677 = vmatprep.subr.mxu0 0.0
        %6678 = vmatpush2.msra.mxu0 0.0
        %6679 = vmatprep.subr.mxu0 0.0
        %6680 = vmatpush2.msra.mxu0 0.0
        %6681 = vmatprep.subr.mxu0 0.0
        %6682 = vmatpush2.msra.mxu0 0.0
        %6683 = vmatprep.subr.mxu0 0.0
        %6684 = vmatpush2.msra.mxu0 0.0
        %6685 = vmatprep.subr.mxu0 0.0
        %6686 = vmatpush2.msra.mxu0 0.0
        %6687 = vmatprep.subr.mxu0 0.0
        %6688 = vmatpush2.msra.mxu0 0.0
        %6689 = vmatprep.subr.mxu0 0.0
        %6690 = vmatpush2.msra.mxu0 0.0
        %6691 = vmatprep.subr.mxu0 0.0
        %6692 = vmatpush2.msra.mxu0 0.0
        %6693 = vmatprep.subr.mxu0 0.0
        %6694 = vmatpush2.msra.mxu0 0.0
        %6695 = vmatprep.subr.mxu0 0.0
        %6696 = vmatpush2.msra.mxu0 0.0
        %6697 = vmatprep.mubr.f32.mxu0 0.0
        %6698 = vmatmul.mubr.f32.gmra.mxu0 %v6631
        %v6699 = vpop.f32.mrf.mxu0
        %v6700 = vadd.f32 0.0, %v6699
        %v6701 = vpop.f32.mrf.mxu0
        %6702 = vdwg.mxu0
        %s6703 = scalar_lea.vmem %s4, 160
        %v6704 = vld [vmem:[%s6703] sm:$0xff]
        %v6705 = vld [vmem:[%s6703 + $0x8] sm:$0xff]
        %s6706 = scalar_lea.vmem %s2, 1056
        %v6707 = vld [vmem:[%s6706] sm:$0xff]
        %v6708 = vld [vmem:[%s6706 + $0x8] sm:$0xff]
        %v6709 = vld [vmem:[%s6706 + $0x10] sm:$0xff]
        %v6710 = vld [vmem:[%s6706 + $0x18] sm:$0xff]
        %s6711 = scalar_lea.vmem %s3, 33
        %v6712 = vld [vmem:[%s6711] sm:$0x1]
        %v6714 = vlaneseq
        %v6715 = vshrl.u32 %v6714, 7
        %v6716 = vsub.s32 0, %v6715
        %v6717 = vrot.slane %v6712, %v6716
        %6719 = vmatprep.subr.mxu0 0.0
        %6720 = vmatpush1.msra.mxu0 0.0
        %6721 = vmatprep.subr.mxu0 0.0
        %6722 = vmatpush1.msra.mxu0 0.0
        %6723 = vmatprep.subr.mxu0 0.0
        %6724 = vmatpush1.msra.mxu0 0.0
        %6725 = vmatprep.subr.mxu0 0.0
        %6726 = vmatpush1.msra.mxu0 0.0
        %6727 = vmatprep.subr.mxu0 0.0
        %6728 = vmatpush1.msra.mxu0 0.0
        %6729 = vmatprep.subr.mxu0 0.0
        %6730 = vmatpush1.msra.mxu0 0.0
        %6731 = vmatprep.subr.mxu0 0.0
        %6732 = vmatpush1.msra.mxu0 0.0
        %6733 = vmatprep.subr.mxu0 0.0
        %6734 = vmatpush1.msra.mxu0 0.0
        %6735 = vmatprep.subr.mxu0 0.0
        %6736 = vmatpush1.msra.mxu0 0.0
        %6737 = vmatprep.subr.mxu0 0.0
        %6738 = vmatpush1.msra.mxu0 0.0
        %6739 = vmatprep.subr.mxu0 0.0
        %6740 = vmatpush1.msra.mxu0 0.0
        %6741 = vmatprep.subr.mxu0 0.0
        %6742 = vmatpush1.msra.mxu0 0.0
        %6743 = vmatprep.subr.mxu0 0.0
        %6744 = vmatpush1.msra.mxu0 %v6710
        %6745 = vmatprep.subr.mxu0 0.0
        %6746 = vmatpush1.msra.mxu0 %v6709
        %6747 = vmatprep.subr.mxu0 0.0
        %6748 = vmatpush1.msra.mxu0 %v6708
        %6749 = vmatprep.subr.mxu0 0.0
        %6750 = vmatpush1.msra.mxu0 %v6707
        %6751 = vmatprep.subr.mxu0 0.0
        %6752 = vmatpush2.msra.mxu0 0.0
        %6753 = vmatprep.subr.mxu0 0.0
        %6754 = vmatpush2.msra.mxu0 0.0
        %6755 = vmatprep.subr.mxu0 0.0
        %6756 = vmatpush2.msra.mxu0 0.0
        %6757 = vmatprep.subr.mxu0 0.0
        %6758 = vmatpush2.msra.mxu0 0.0
        %6759 = vmatprep.subr.mxu0 0.0
        %6760 = vmatpush2.msra.mxu0 0.0
        %6761 = vmatprep.subr.mxu0 0.0
        %6762 = vmatpush2.msra.mxu0 0.0
        %6763 = vmatprep.subr.mxu0 0.0
        %6764 = vmatpush2.msra.mxu0 0.0
        %6765 = vmatprep.subr.mxu0 0.0
        %6766 = vmatpush2.msra.mxu0 0.0
        %6767 = vmatprep.subr.mxu0 0.0
        %6768 = vmatpush2.msra.mxu0 0.0
        %6769 = vmatprep.subr.mxu0 0.0
        %6770 = vmatpush2.msra.mxu0 0.0
        %6771 = vmatprep.subr.mxu0 0.0
        %6772 = vmatpush2.msra.mxu0 0.0
        %6773 = vmatprep.subr.mxu0 0.0
        %6774 = vmatpush2.msra.mxu0 0.0
        %6775 = vmatprep.subr.mxu0 0.0
        %6776 = vmatpush2.msra.mxu0 0.0
        %6777 = vmatprep.subr.mxu0 0.0
        %6778 = vmatpush2.msra.mxu0 0.0
        %6779 = vmatprep.subr.mxu0 0.0
        %6780 = vmatpush2.msra.mxu0 0.0
        %6781 = vmatprep.subr.mxu0 0.0
        %6782 = vmatpush2.msra.mxu0 0.0
        %6783 = vmatprep.mubr.f32.mxu0 0.0
        %6784 = vmatmul.mubr.f32.gmra.mxu0 %v6304
        %v6785 = vpop.f32.mrf.mxu0
        %v6786 = vadd.f32 %v6717, %v6785
        %v6787 = vpop.f32.mrf.mxu0
        %6788 = vdwg.mxu0
        %s6789 = scalar_lea.vmem %s2, 1088
        %v6790 = vld [vmem:[%s6789] sm:$0xff]
        %v6791 = vld [vmem:[%s6789 + $0x8] sm:$0xff]
        %v6792 = vld [vmem:[%s6789 + $0x10] sm:$0xff]
        %v6793 = vld [vmem:[%s6789 + $0x18] sm:$0xff]
        %s6794 = scalar_lea.vmem %s3, 34
        %v6795 = vld [vmem:[%s6794] sm:$0x1]
        %v6797 = vlaneseq
        %v6798 = vshrl.u32 %v6797, 7
        %v6799 = vsub.s32 0, %v6798
        %v6800 = vrot.slane %v6795, %v6799
        %6802 = vmatprep.subr.mxu0 0.0
        %6803 = vmatpush1.msra.mxu0 0.0
        %6804 = vmatprep.subr.mxu0 0.0
        %6805 = vmatpush1.msra.mxu0 0.0
        %6806 = vmatprep.subr.mxu0 0.0
        %6807 = vmatpush1.msra.mxu0 0.0
        %6808 = vmatprep.subr.mxu0 0.0
        %6809 = vmatpush1.msra.mxu0 0.0
        %6810 = vmatprep.subr.mxu0 0.0
        %6811 = vmatpush1.msra.mxu0 0.0
        %6812 = vmatprep.subr.mxu0 0.0
        %6813 = vmatpush1.msra.mxu0 0.0
        %6814 = vmatprep.subr.mxu0 0.0
        %6815 = vmatpush1.msra.mxu0 0.0
        %6816 = vmatprep.subr.mxu0 0.0
        %6817 = vmatpush1.msra.mxu0 0.0
        %6818 = vmatprep.subr.mxu0 0.0
        %6819 = vmatpush1.msra.mxu0 0.0
        %6820 = vmatprep.subr.mxu0 0.0
        %6821 = vmatpush1.msra.mxu0 0.0
        %6822 = vmatprep.subr.mxu0 0.0
        %6823 = vmatpush1.msra.mxu0 0.0
        %6824 = vmatprep.subr.mxu0 0.0
        %6825 = vmatpush1.msra.mxu0 0.0
        %6826 = vmatprep.subr.mxu0 0.0
        %6827 = vmatpush1.msra.mxu0 %v6793
        %6828 = vmatprep.subr.mxu0 0.0
        %6829 = vmatpush1.msra.mxu0 %v6792
        %6830 = vmatprep.subr.mxu0 0.0
        %6831 = vmatpush1.msra.mxu0 %v6791
        %6832 = vmatprep.subr.mxu0 0.0
        %6833 = vmatpush1.msra.mxu0 %v6790
        %6834 = vmatprep.subr.mxu0 0.0
        %6835 = vmatpush2.msra.mxu0 0.0
        %6836 = vmatprep.subr.mxu0 0.0
        %6837 = vmatpush2.msra.mxu0 0.0
        %6838 = vmatprep.subr.mxu0 0.0
        %6839 = vmatpush2.msra.mxu0 0.0
        %6840 = vmatprep.subr.mxu0 0.0
        %6841 = vmatpush2.msra.mxu0 0.0
        %6842 = vmatprep.subr.mxu0 0.0
        %6843 = vmatpush2.msra.mxu0 0.0
        %6844 = vmatprep.subr.mxu0 0.0
        %6845 = vmatpush2.msra.mxu0 0.0
        %6846 = vmatprep.subr.mxu0 0.0
        %6847 = vmatpush2.msra.mxu0 0.0
        %6848 = vmatprep.subr.mxu0 0.0
        %6849 = vmatpush2.msra.mxu0 0.0
        %6850 = vmatprep.subr.mxu0 0.0
        %6851 = vmatpush2.msra.mxu0 0.0
        %6852 = vmatprep.subr.mxu0 0.0
        %6853 = vmatpush2.msra.mxu0 0.0
        %6854 = vmatprep.subr.mxu0 0.0
        %6855 = vmatpush2.msra.mxu0 0.0
        %6856 = vmatprep.subr.mxu0 0.0
        %6857 = vmatpush2.msra.mxu0 0.0
        %6858 = vmatprep.subr.mxu0 0.0
        %6859 = vmatpush2.msra.mxu0 0.0
        %6860 = vmatprep.subr.mxu0 0.0
        %6861 = vmatpush2.msra.mxu0 0.0
        %6862 = vmatprep.subr.mxu0 0.0
        %6863 = vmatpush2.msra.mxu0 0.0
        %6864 = vmatprep.subr.mxu0 0.0
        %6865 = vmatpush2.msra.mxu0 0.0
        %6866 = vmatprep.mubr.f32.mxu0 0.0
        %6867 = vmatmul.mubr.f32.gmra.mxu0 %v4146
        %v6868 = vpop.f32.mrf.mxu0
        %v6869 = vadd.f32 %v6800, %v6868
        %v6870 = vpop.f32.mrf.mxu0
        %6871 = vdwg.mxu0
        %s6872 = scalar_lea.vmem %s2, 1120
        %v6873 = vld [vmem:[%s6872] sm:$0xff]
        %v6874 = vld [vmem:[%s6872 + $0x8] sm:$0xff]
        %v6875 = vld [vmem:[%s6872 + $0x10] sm:$0xff]
        %v6876 = vld [vmem:[%s6872 + $0x18] sm:$0xff]
        %s6877 = scalar_lea.vmem %s3, 35
        %v6878 = vld [vmem:[%s6877] sm:$0x1]
        %v6880 = vlaneseq
        %v6881 = vshrl.u32 %v6880, 7
        %v6882 = vsub.s32 0, %v6881
        %v6883 = vrot.slane %v6878, %v6882
        %6885 = vmatprep.subr.mxu0 0.0
        %6886 = vmatpush1.msra.mxu0 0.0
        %6887 = vmatprep.subr.mxu0 0.0
        %6888 = vmatpush1.msra.mxu0 0.0
        %6889 = vmatprep.subr.mxu0 0.0
        %6890 = vmatpush1.msra.mxu0 0.0
        %6891 = vmatprep.subr.mxu0 0.0
        %6892 = vmatpush1.msra.mxu0 0.0
        %6893 = vmatprep.subr.mxu0 0.0
        %6894 = vmatpush1.msra.mxu0 0.0
        %6895 = vmatprep.subr.mxu0 0.0
        %6896 = vmatpush1.msra.mxu0 0.0
        %6897 = vmatprep.subr.mxu0 0.0
        %6898 = vmatpush1.msra.mxu0 0.0
        %6899 = vmatprep.subr.mxu0 0.0
        %6900 = vmatpush1.msra.mxu0 0.0
        %6901 = vmatprep.subr.mxu0 0.0
        %6902 = vmatpush1.msra.mxu0 0.0
        %6903 = vmatprep.subr.mxu0 0.0
        %6904 = vmatpush1.msra.mxu0 0.0
        %6905 = vmatprep.subr.mxu0 0.0
        %6906 = vmatpush1.msra.mxu0 0.0
        %6907 = vmatprep.subr.mxu0 0.0
        %6908 = vmatpush1.msra.mxu0 0.0
        %6909 = vmatprep.subr.mxu0 0.0
        %6910 = vmatpush1.msra.mxu0 %v6876
        %6911 = vmatprep.subr.mxu0 0.0
        %6912 = vmatpush1.msra.mxu0 %v6875
        %6913 = vmatprep.subr.mxu0 0.0
        %6914 = vmatpush1.msra.mxu0 %v6874
        %6915 = vmatprep.subr.mxu0 0.0
        %6916 = vmatpush1.msra.mxu0 %v6873
        %6917 = vmatprep.subr.mxu0 0.0
        %6918 = vmatpush2.msra.mxu0 0.0
        %6919 = vmatprep.subr.mxu0 0.0
        %6920 = vmatpush2.msra.mxu0 0.0
        %6921 = vmatprep.subr.mxu0 0.0
        %6922 = vmatpush2.msra.mxu0 0.0
        %6923 = vmatprep.subr.mxu0 0.0
        %6924 = vmatpush2.msra.mxu0 0.0
        %6925 = vmatprep.subr.mxu0 0.0
        %6926 = vmatpush2.msra.mxu0 0.0
        %6927 = vmatprep.subr.mxu0 0.0
        %6928 = vmatpush2.msra.mxu0 0.0
        %6929 = vmatprep.subr.mxu0 0.0
        %6930 = vmatpush2.msra.mxu0 0.0
        %6931 = vmatprep.subr.mxu0 0.0
        %6932 = vmatpush2.msra.mxu0 0.0
        %6933 = vmatprep.subr.mxu0 0.0
        %6934 = vmatpush2.msra.mxu0 0.0
        %6935 = vmatprep.subr.mxu0 0.0
        %6936 = vmatpush2.msra.mxu0 0.0
        %6937 = vmatprep.subr.mxu0 0.0
        %6938 = vmatpush2.msra.mxu0 0.0
        %6939 = vmatprep.subr.mxu0 0.0
        %6940 = vmatpush2.msra.mxu0 0.0
        %6941 = vmatprep.subr.mxu0 0.0
        %6942 = vmatpush2.msra.mxu0 0.0
        %6943 = vmatprep.subr.mxu0 0.0
        %6944 = vmatpush2.msra.mxu0 0.0
        %6945 = vmatprep.subr.mxu0 0.0
        %6946 = vmatpush2.msra.mxu0 0.0
        %6947 = vmatprep.subr.mxu0 0.0
        %6948 = vmatpush2.msra.mxu0 0.0
        %6949 = vmatprep.mubr.f32.mxu0 0.0
        %6950 = vmatmul.mubr.f32.gmra.mxu0 %v4146
        %v6951 = vpop.f32.mrf.mxu0
        %v6952 = vadd.f32 %v6883, %v6951
        %v6953 = vpop.f32.mrf.mxu0
        %6954 = vdwg.mxu0
        %v6956 = vsel %vm808, %v6786, 0
        %v6959 = vsel %vm808, %v6869, 0
        %6961 = vmatprep.subr.mxu0 0.0
        %6962 = vmatpush1.xpose.msra.mxu0 0.0
        %6963 = vmatprep.subr.mxu0 0.0
        %6964 = vmatpush1.xpose.msra.mxu0 0.0
        %6965 = vmatprep.subr.mxu0 0.0
        %6966 = vmatpush1.xpose.msra.mxu0 0.0
        %6967 = vmatprep.subr.mxu0 0.0
        %6968 = vmatpush1.xpose.msra.mxu0 0.0
        %6969 = vmatprep.subr.mxu0 0.0
        %6970 = vmatpush1.xpose.msra.mxu0 0.0
        %6971 = vmatprep.subr.mxu0 0.0
        %6972 = vmatpush1.xpose.msra.mxu0 0.0
        %6973 = vmatprep.subr.mxu0 0.0
        %6974 = vmatpush1.xpose.msra.mxu0 0.0
        %6975 = vmatprep.subr.mxu0 0.0
        %6976 = vmatpush1.xpose.msra.mxu0 0.0
        %6977 = vmatprep.subr.mxu0 0.0
        %6978 = vmatpush1.xpose.msra.mxu0 0.0
        %6979 = vmatprep.subr.mxu0 0.0
        %6980 = vmatpush1.xpose.msra.mxu0 0.0
        %6981 = vmatprep.subr.mxu0 0.0
        %6982 = vmatpush1.xpose.msra.mxu0 0.0
        %6983 = vmatprep.subr.mxu0 0.0
        %6984 = vmatpush1.xpose.msra.mxu0 0.0
        %6985 = vmatprep.subr.mxu0 0.0
        %6986 = vmatpush1.xpose.msra.mxu0 0.0
        %6987 = vmatprep.subr.mxu0 0.0
        %6988 = vmatpush1.xpose.msra.mxu0 0.0
        %6989 = vmatprep.subr.mxu0 0.0
        %6990 = vmatpush1.xpose.msra.mxu0 0.0
        %6991 = vmatprep.subr.mxu0 0.0
        %6992 = vmatpush1.xpose.msra.mxu0 %v6959
        %6993 = vmatprep.subr.mxu0 0.0
        %6994 = vmatpush2.xpose.msra.mxu0 0.0
        %6995 = vmatprep.subr.mxu0 0.0
        %6996 = vmatpush2.xpose.msra.mxu0 0.0
        %6997 = vmatprep.subr.mxu0 0.0
        %6998 = vmatpush2.xpose.msra.mxu0 0.0
        %6999 = vmatprep.subr.mxu0 0.0
        %7000 = vmatpush2.xpose.msra.mxu0 0.0
        %7001 = vmatprep.subr.mxu0 0.0
        %7002 = vmatpush2.xpose.msra.mxu0 0.0
        %7003 = vmatprep.subr.mxu0 0.0
        %7004 = vmatpush2.xpose.msra.mxu0 0.0
        %7005 = vmatprep.subr.mxu0 0.0
        %7006 = vmatpush2.xpose.msra.mxu0 0.0
        %7007 = vmatprep.subr.mxu0 0.0
        %7008 = vmatpush2.xpose.msra.mxu0 0.0
        %7009 = vmatprep.subr.mxu0 0.0
        %7010 = vmatpush2.xpose.msra.mxu0 0.0
        %7011 = vmatprep.subr.mxu0 0.0
        %7012 = vmatpush2.xpose.msra.mxu0 0.0
        %7013 = vmatprep.subr.mxu0 0.0
        %7014 = vmatpush2.xpose.msra.mxu0 0.0
        %7015 = vmatprep.subr.mxu0 0.0
        %7016 = vmatpush2.xpose.msra.mxu0 0.0
        %7017 = vmatprep.subr.mxu0 0.0
        %7018 = vmatpush2.xpose.msra.mxu0 0.0
        %7019 = vmatprep.subr.mxu0 0.0
        %7020 = vmatpush2.xpose.msra.mxu0 0.0
        %7021 = vmatprep.subr.mxu0 0.0
        %7022 = vmatpush2.xpose.msra.mxu0 0.0
        %7023 = vmatprep.subr.mxu0 0.0
        %7024 = vmatpush2.xpose.msra.mxu0 0.0
        %7025 = vmatprep.mubr.f32.mxu0 0.0
        %7026 = vmatmul.mubr.f32.gmra.mxu0 %v6956
        %v7027 = vpop.f32.mrf.mxu0
        %v7028 = vadd.f32 0.0, %v7027
        %v7029 = vpop.f32.mrf.mxu0
        %7030 = vdwg.mxu0
        %v7031 = vmul.f32 %v7028, 0.25
        %v7032 = vsel %vm886, %v7031, -inf
        %7033 = vmax.xlane.f32.xlu0 %v7032
        %v7034 = vpop.xlane.xlu0 %7033
        %v7035 = vsub.f32 %v7031, %v7034
        %v7036 = vmul.f32 %v7035, 1.442695
        %v7037 = vpow.pop %v7036
        %v7038 = vsel %vm886, %v7037, 0.0
        %7039 = vadd.xlane.f32.xlu0 %v7038
        %v7040 = vpop.xlane.xlu0 %7039
        %v7041 = vrcp.pop %v7040
        %v7042 = vmul.f32 %v7037, %v7041
        %v7044 = vsel %vm886, %v7042, 0
        %7046 = vmatprep.subr.mxu0 0.0
        %7047 = vmatpush1.msra.mxu0 0.0
        %7048 = vmatprep.subr.mxu0 0.0
        %7049 = vmatpush1.msra.mxu0 0.0
        %7050 = vmatprep.subr.mxu0 0.0
        %7051 = vmatpush1.msra.mxu0 0.0
        %7052 = vmatprep.subr.mxu0 0.0
        %7053 = vmatpush1.msra.mxu0 0.0
        %7054 = vmatprep.subr.mxu0 0.0
        %7055 = vmatpush1.msra.mxu0 0.0
        %7056 = vmatprep.subr.mxu0 0.0
        %7057 = vmatpush1.msra.mxu0 0.0
        %7058 = vmatprep.subr.mxu0 0.0
        %7059 = vmatpush1.msra.mxu0 0.0
        %7060 = vmatprep.subr.mxu0 0.0
        %7061 = vmatpush1.msra.mxu0 0.0
        %7062 = vmatprep.subr.mxu0 0.0
        %7063 = vmatpush1.msra.mxu0 0.0
        %7064 = vmatprep.subr.mxu0 0.0
        %7065 = vmatpush1.msra.mxu0 0.0
        %7066 = vmatprep.subr.mxu0 0.0
        %7067 = vmatpush1.msra.mxu0 0.0
        %7068 = vmatprep.subr.mxu0 0.0
        %7069 = vmatpush1.msra.mxu0 0.0
        %7070 = vmatprep.subr.mxu0 0.0
        %7071 = vmatpush1.msra.mxu0 0.0
        %7072 = vmatprep.subr.mxu0 0.0
        %7073 = vmatpush1.msra.mxu0 0.0
        %7074 = vmatprep.subr.mxu0 0.0
        %7075 = vmatpush1.msra.mxu0 0.0
        %7076 = vmatprep.subr.mxu0 0.0
        %7077 = vmatpush1.msra.mxu0 %v6952
        %7078 = vmatprep.subr.mxu0 0.0
        %7079 = vmatpush2.msra.mxu0 0.0
        %7080 = vmatprep.subr.mxu0 0.0
        %7081 = vmatpush2.msra.mxu0 0.0
        %7082 = vmatprep.subr.mxu0 0.0
        %7083 = vmatpush2.msra.mxu0 0.0
        %7084 = vmatprep.subr.mxu0 0.0
        %7085 = vmatpush2.msra.mxu0 0.0
        %7086 = vmatprep.subr.mxu0 0.0
        %7087 = vmatpush2.msra.mxu0 0.0
        %7088 = vmatprep.subr.mxu0 0.0
        %7089 = vmatpush2.msra.mxu0 0.0
        %7090 = vmatprep.subr.mxu0 0.0
        %7091 = vmatpush2.msra.mxu0 0.0
        %7092 = vmatprep.subr.mxu0 0.0
        %7093 = vmatpush2.msra.mxu0 0.0
        %7094 = vmatprep.subr.mxu0 0.0
        %7095 = vmatpush2.msra.mxu0 0.0
        %7096 = vmatprep.subr.mxu0 0.0
        %7097 = vmatpush2.msra.mxu0 0.0
        %7098 = vmatprep.subr.mxu0 0.0
        %7099 = vmatpush2.msra.mxu0 0.0
        %7100 = vmatprep.subr.mxu0 0.0
        %7101 = vmatpush2.msra.mxu0 0.0
        %7102 = vmatprep.subr.mxu0 0.0
        %7103 = vmatpush2.msra.mxu0 0.0
        %7104 = vmatprep.subr.mxu0 0.0
        %7105 = vmatpush2.msra.mxu0 0.0
        %7106 = vmatprep.subr.mxu0 0.0
        %7107 = vmatpush2.msra.mxu0 0.0
        %7108 = vmatprep.subr.mxu0 0.0
        %7109 = vmatpush2.msra.mxu0 0.0
        %7110 = vmatprep.mubr.f32.mxu0 0.0
        %7111 = vmatmul.mubr.f32.gmra.mxu0 %v7044
        %v7112 = vpop.f32.mrf.mxu0
        %v7113 = vadd.f32 0.0, %v7112
        %v7114 = vpop.f32.mrf.mxu0
        %7115 = vdwg.mxu0
        %s7116 = scalar_lea.vmem %s4, 176
        %v7117 = vld [vmem:[%s7116] sm:$0xff]
        %v7118 = vld [vmem:[%s7116 + $0x8] sm:$0xff]
        %v7120 = vsel %vm808, %v7113, 0
        %7122 = vmatprep.subr.mxu0 0.0
        %7123 = vmatpush1.msra.mxu0 0.0
        %7124 = vmatprep.subr.mxu0 0.0
        %7125 = vmatpush1.msra.mxu0 0.0
        %7126 = vmatprep.subr.mxu0 0.0
        %7127 = vmatpush1.msra.mxu0 0.0
        %7128 = vmatprep.subr.mxu0 0.0
        %7129 = vmatpush1.msra.mxu0 0.0
        %7130 = vmatprep.subr.mxu0 0.0
        %7131 = vmatpush1.msra.mxu0 0.0
        %7132 = vmatprep.subr.mxu0 0.0
        %7133 = vmatpush1.msra.mxu0 0.0
        %7134 = vmatprep.subr.mxu0 0.0
        %7135 = vmatpush1.msra.mxu0 0.0
        %7136 = vmatprep.subr.mxu0 0.0
        %7137 = vmatpush1.msra.mxu0 0.0
        %7138 = vmatprep.subr.mxu0 0.0
        %7139 = vmatpush1.msra.mxu0 0.0
        %7140 = vmatprep.subr.mxu0 0.0
        %7141 = vmatpush1.msra.mxu0 0.0
        %7142 = vmatprep.subr.mxu0 0.0
        %7143 = vmatpush1.msra.mxu0 0.0
        %7144 = vmatprep.subr.mxu0 0.0
        %7145 = vmatpush1.msra.mxu0 0.0
        %7146 = vmatprep.subr.mxu0 0.0
        %7147 = vmatpush1.msra.mxu0 0.0
        %7148 = vmatprep.subr.mxu0 0.0
        %7149 = vmatpush1.msra.mxu0 0.0
        %7150 = vmatprep.subr.mxu0 0.0
        %7151 = vmatpush1.msra.mxu0 %v7118
        %7152 = vmatprep.subr.mxu0 0.0
        %7153 = vmatpush1.msra.mxu0 %v7117
        %7154 = vmatprep.subr.mxu0 0.0
        %7155 = vmatpush2.msra.mxu0 0.0
        %7156 = vmatprep.subr.mxu0 0.0
        %7157 = vmatpush2.msra.mxu0 0.0
        %7158 = vmatprep.subr.mxu0 0.0
        %7159 = vmatpush2.msra.mxu0 0.0
        %7160 = vmatprep.subr.mxu0 0.0
        %7161 = vmatpush2.msra.mxu0 0.0
        %7162 = vmatprep.subr.mxu0 0.0
        %7163 = vmatpush2.msra.mxu0 0.0
        %7164 = vmatprep.subr.mxu0 0.0
        %7165 = vmatpush2.msra.mxu0 0.0
        %7166 = vmatprep.subr.mxu0 0.0
        %7167 = vmatpush2.msra.mxu0 0.0
        %7168 = vmatprep.subr.mxu0 0.0
        %7169 = vmatpush2.msra.mxu0 0.0
        %7170 = vmatprep.subr.mxu0 0.0
        %7171 = vmatpush2.msra.mxu0 0.0
        %7172 = vmatprep.subr.mxu0 0.0
        %7173 = vmatpush2.msra.mxu0 0.0
        %7174 = vmatprep.subr.mxu0 0.0
        %7175 = vmatpush2.msra.mxu0 0.0
        %7176 = vmatprep.subr.mxu0 0.0
        %7177 = vmatpush2.msra.mxu0 0.0
        %7178 = vmatprep.subr.mxu0 0.0
        %7179 = vmatpush2.msra.mxu0 0.0
        %7180 = vmatprep.subr.mxu0 0.0
        %7181 = vmatpush2.msra.mxu0 0.0
        %7182 = vmatprep.subr.mxu0 0.0
        %7183 = vmatpush2.msra.mxu0 0.0
        %7184 = vmatprep.subr.mxu0 0.0
        %7185 = vmatpush2.msra.mxu0 0.0
        %7186 = vmatprep.mubr.f32.mxu0 0.0
        %7187 = vmatmul.mubr.f32.gmra.mxu0 %v7120
        %v7188 = vpop.f32.mrf.mxu0
        %v7189 = vadd.f32 0.0, %v7188
        %v7190 = vpop.f32.mrf.mxu0
        %7191 = vdwg.mxu0
        %v7193 = vsel %vm808, %v6700, 0
        %7195 = vmatprep.subr.mxu0 0.0
        %7196 = vmatpush1.msra.mxu0 0.0
        %7197 = vmatprep.subr.mxu0 0.0
        %7198 = vmatpush1.msra.mxu0 0.0
        %7199 = vmatprep.subr.mxu0 0.0
        %7200 = vmatpush1.msra.mxu0 0.0
        %7201 = vmatprep.subr.mxu0 0.0
        %7202 = vmatpush1.msra.mxu0 0.0
        %7203 = vmatprep.subr.mxu0 0.0
        %7204 = vmatpush1.msra.mxu0 0.0
        %7205 = vmatprep.subr.mxu0 0.0
        %7206 = vmatpush1.msra.mxu0 0.0
        %7207 = vmatprep.subr.mxu0 0.0
        %7208 = vmatpush1.msra.mxu0 0.0
        %7209 = vmatprep.subr.mxu0 0.0
        %7210 = vmatpush1.msra.mxu0 0.0
        %7211 = vmatprep.subr.mxu0 0.0
        %7212 = vmatpush1.msra.mxu0 0.0
        %7213 = vmatprep.subr.mxu0 0.0
        %7214 = vmatpush1.msra.mxu0 0.0
        %7215 = vmatprep.subr.mxu0 0.0
        %7216 = vmatpush1.msra.mxu0 0.0
        %7217 = vmatprep.subr.mxu0 0.0
        %7218 = vmatpush1.msra.mxu0 0.0
        %7219 = vmatprep.subr.mxu0 0.0
        %7220 = vmatpush1.msra.mxu0 0.0
        %7221 = vmatprep.subr.mxu0 0.0
        %7222 = vmatpush1.msra.mxu0 0.0
        %7223 = vmatprep.subr.mxu0 0.0
        %7224 = vmatpush1.msra.mxu0 %v6705
        %7225 = vmatprep.subr.mxu0 0.0
        %7226 = vmatpush1.msra.mxu0 %v6704
        %7227 = vmatprep.subr.mxu0 0.0
        %7228 = vmatpush2.msra.mxu0 0.0
        %7229 = vmatprep.subr.mxu0 0.0
        %7230 = vmatpush2.msra.mxu0 0.0
        %7231 = vmatprep.subr.mxu0 0.0
        %7232 = vmatpush2.msra.mxu0 0.0
        %7233 = vmatprep.subr.mxu0 0.0
        %7234 = vmatpush2.msra.mxu0 0.0
        %7235 = vmatprep.subr.mxu0 0.0
        %7236 = vmatpush2.msra.mxu0 0.0
        %7237 = vmatprep.subr.mxu0 0.0
        %7238 = vmatpush2.msra.mxu0 0.0
        %7239 = vmatprep.subr.mxu0 0.0
        %7240 = vmatpush2.msra.mxu0 0.0
        %7241 = vmatprep.subr.mxu0 0.0
        %7242 = vmatpush2.msra.mxu0 0.0
        %7243 = vmatprep.subr.mxu0 0.0
        %7244 = vmatpush2.msra.mxu0 0.0
        %7245 = vmatprep.subr.mxu0 0.0
        %7246 = vmatpush2.msra.mxu0 0.0
        %7247 = vmatprep.subr.mxu0 0.0
        %7248 = vmatpush2.msra.mxu0 0.0
        %7249 = vmatprep.subr.mxu0 0.0
        %7250 = vmatpush2.msra.mxu0 0.0
        %7251 = vmatprep.subr.mxu0 0.0
        %7252 = vmatpush2.msra.mxu0 0.0
        %7253 = vmatprep.subr.mxu0 0.0
        %7254 = vmatpush2.msra.mxu0 0.0
        %7255 = vmatprep.subr.mxu0 0.0
        %7256 = vmatpush2.msra.mxu0 0.0
        %7257 = vmatprep.subr.mxu0 0.0
        %7258 = vmatpush2.msra.mxu0 0.0
        %7259 = vmatprep.mubr.f32.mxu0 0.0
        %7260 = vmatmul.mubr.f32.gmra.mxu0 %v7193
        %v7261 = vpop.f32.mrf.mxu0
        %v7262 = vadd.f32 %v7189, %v7261
        %v7263 = vpop.f32.mrf.mxu0
        %7264 = vdwg.mxu0
        %s7265 = scalar_lea.vmem %s5, 5
        %v7266 = vld [vmem:[%s7265] sm:$0x1]
        %v7268 = vlaneseq
        %v7269 = vshrl.u32 %v7268, 7
        %v7270 = vsub.s32 0, %v7269
        %v7271 = vrot.slane %v7266, %v7270
        %v7273 = vadd.f32 %v7262, %v7271
        %v7274 = vadd.f32 %v6289, %v7273
        %v7275 = vsel %vm568, %v7274, 0.0
        %7276 = vadd.xlane.f32.xlu0 %v7275
        %v7277 = vpop.xlane.xlu0 %7276
        %v7278 = vmul.f32 %v7277, %v1544
        %v7279 = vsub.f32 %v7274, %v7278
        %v7280 = vmul.f32 %v7279, %v7279
        %v7281 = vsel %vm568, %v7280, 0.0
        %7282 = vadd.xlane.f32.xlu0 %v7281
        %v7283 = vpop.xlane.xlu0 %7282
        %v7284 = vmul.f32 %v7283, %v1544
        %v7285 = vadd.f32 %v7284, 1e-05
        %v7286 = vrsqrt.pop %v7285
        %v7287 = vmul.f32 %v7279, %v7286
        %s7288 = scalar_lea.vmem %s10, 9
        %v7289 = vld [vmem:[%s7288] sm:$0x1]
        %v7291 = vlaneseq
        %v7292 = vshrl.u32 %v7291, 7
        %v7293 = vsub.s32 0, %v7292
        %v7294 = vrot.slane %v7289, %v7293
        %v7296 = vmul.f32 %v7287, %v7294
        %s7297 = scalar_lea.vmem %s11, 9
        %v7298 = vld [vmem:[%s7297] sm:$0x1]
        %v7300 = vlaneseq
        %v7301 = vshrl.u32 %v7300, 7
        %v7302 = vsub.s32 0, %v7301
        %v7303 = vrot.slane %v7298, %v7302
        %v7305 = vadd.f32 %v7296, %v7303
        %s7306 = scalar_lea.vmem %s6, 96
        %v7307 = vld [vmem:[%s7306] sm:$0xff]
        %v7308 = vld [vmem:[%s7306 + $0x8] sm:$0xff]
        %v7309 = vld [vmem:[%s7306 + $0x10] sm:$0xff]
        %v7310 = vld [vmem:[%s7306 + $0x18] sm:$0xff]
        %s7311 = scalar_lea.vmem %s7, 3
        %v7312 = vld [vmem:[%s7311] sm:$0x1]
        %v7314 = vlaneseq
        %v7315 = vshrl.u32 %v7314, 7
        %v7316 = vsub.s32 0, %v7315
        %v7317 = vrot.slane %v7312, %v7316
        %v7320 = vsel %vm568, %v7305, 0
        %7322 = vmatprep.subr.mxu0 0.0
        %7323 = vmatpush1.msra.mxu0 0.0
        %7324 = vmatprep.subr.mxu0 0.0
        %7325 = vmatpush1.msra.mxu0 0.0
        %7326 = vmatprep.subr.mxu0 0.0
        %7327 = vmatpush1.msra.mxu0 0.0
        %7328 = vmatprep.subr.mxu0 0.0
        %7329 = vmatpush1.msra.mxu0 0.0
        %7330 = vmatprep.subr.mxu0 0.0
        %7331 = vmatpush1.msra.mxu0 0.0
        %7332 = vmatprep.subr.mxu0 0.0
        %7333 = vmatpush1.msra.mxu0 0.0
        %7334 = vmatprep.subr.mxu0 0.0
        %7335 = vmatpush1.msra.mxu0 0.0
        %7336 = vmatprep.subr.mxu0 0.0
        %7337 = vmatpush1.msra.mxu0 0.0
        %7338 = vmatprep.subr.mxu0 0.0
        %7339 = vmatpush1.msra.mxu0 0.0
        %7340 = vmatprep.subr.mxu0 0.0
        %7341 = vmatpush1.msra.mxu0 0.0
        %7342 = vmatprep.subr.mxu0 0.0
        %7343 = vmatpush1.msra.mxu0 0.0
        %7344 = vmatprep.subr.mxu0 0.0
        %7345 = vmatpush1.msra.mxu0 0.0
        %7346 = vmatprep.subr.mxu0 0.0
        %7347 = vmatpush1.msra.mxu0 %v7310
        %7348 = vmatprep.subr.mxu0 0.0
        %7349 = vmatpush1.msra.mxu0 %v7309
        %7350 = vmatprep.subr.mxu0 0.0
        %7351 = vmatpush1.msra.mxu0 %v7308
        %7352 = vmatprep.subr.mxu0 0.0
        %7353 = vmatpush1.msra.mxu0 %v7307
        %7354 = vmatprep.subr.mxu0 0.0
        %7355 = vmatpush2.msra.mxu0 0.0
        %7356 = vmatprep.subr.mxu0 0.0
        %7357 = vmatpush2.msra.mxu0 0.0
        %7358 = vmatprep.subr.mxu0 0.0
        %7359 = vmatpush2.msra.mxu0 0.0
        %7360 = vmatprep.subr.mxu0 0.0
        %7361 = vmatpush2.msra.mxu0 0.0
        %7362 = vmatprep.subr.mxu0 0.0
        %7363 = vmatpush2.msra.mxu0 0.0
        %7364 = vmatprep.subr.mxu0 0.0
        %7365 = vmatpush2.msra.mxu0 0.0
        %7366 = vmatprep.subr.mxu0 0.0
        %7367 = vmatpush2.msra.mxu0 0.0
        %7368 = vmatprep.subr.mxu0 0.0
        %7369 = vmatpush2.msra.mxu0 0.0
        %7370 = vmatprep.subr.mxu0 0.0
        %7371 = vmatpush2.msra.mxu0 0.0
        %7372 = vmatprep.subr.mxu0 0.0
        %7373 = vmatpush2.msra.mxu0 0.0
        %7374 = vmatprep.subr.mxu0 0.0
        %7375 = vmatpush2.msra.mxu0 0.0
        %7376 = vmatprep.subr.mxu0 0.0
        %7377 = vmatpush2.msra.mxu0 0.0
        %7378 = vmatprep.subr.mxu0 0.0
        %7379 = vmatpush2.msra.mxu0 0.0
        %7380 = vmatprep.subr.mxu0 0.0
        %7381 = vmatpush2.msra.mxu0 0.0
        %7382 = vmatprep.subr.mxu0 0.0
        %7383 = vmatpush2.msra.mxu0 0.0
        %7384 = vmatprep.subr.mxu0 0.0
        %7385 = vmatpush2.msra.mxu0 0.0
        %7386 = vmatprep.mubr.f32.mxu0 0.0
        %7387 = vmatmul.mubr.f32.gmra.mxu0 %v7320
        %v7388 = vpop.f32.mrf.mxu0
        %v7389 = vadd.f32 %v7317, %v7388
        %v7390 = vpop.f32.mrf.mxu0
        %7391 = vdwg.mxu0
        %v7392 = vmax.f32 %v7389, 0.0
        %s7393 = scalar_lea.vmem %s8, 192
        %v7394 = vld [vmem:[%s7393] sm:$0xff]
        %v7395 = vld [vmem:[%s7393 + $0x8] sm:$0xff]
        %v7396 = vld [vmem:[%s7393 + $0x10] sm:$0xff]
        %v7397 = vld [vmem:[%s7393 + $0x18] sm:$0xff]
        %v7398 = vld [vmem:[%s7393 + $0x20] sm:$0xff]
        %v7399 = vld [vmem:[%s7393 + $0x28] sm:$0xff]
        %v7400 = vld [vmem:[%s7393 + $0x30] sm:$0xff]
        %v7401 = vld [vmem:[%s7393 + $0x38] sm:$0xff]
        %s7402 = scalar_lea.vmem %s9, 3
        %v7403 = vld [vmem:[%s7402] sm:$0x1]
        %v7405 = vlaneseq
        %v7406 = vshrl.u32 %v7405, 7
        %v7407 = vsub.s32 0, %v7406
        %v7408 = vrot.slane %v7403, %v7407
        %v7411 = vsel %vm1671, %v7392, 0
        %7413 = vmatprep.subr.mxu0 0.0
        %7414 = vmatpush1.msra.mxu0 0.0
        %7415 = vmatprep.subr.mxu0 0.0
        %7416 = vmatpush1.msra.mxu0 0.0
        %7417 = vmatprep.subr.mxu0 0.0
        %7418 = vmatpush1.msra.mxu0 0.0
        %7419 = vmatprep.subr.mxu0 0.0
        %7420 = vmatpush1.msra.mxu0 0.0
        %7421 = vmatprep.subr.mxu0 0.0
        %7422 = vmatpush1.msra.mxu0 0.0
        %7423 = vmatprep.subr.mxu0 0.0
        %7424 = vmatpush1.msra.mxu0 0.0
        %7425 = vmatprep.subr.mxu0 0.0
        %7426 = vmatpush1.msra.mxu0 0.0
        %7427 = vmatprep.subr.mxu0 0.0
        %7428 = vmatpush1.msra.mxu0 0.0
        %7429 = vmatprep.subr.mxu0 0.0
        %7430 = vmatpush1.msra.mxu0 %v7401
        %7431 = vmatprep.subr.mxu0 0.0
        %7432 = vmatpush1.msra.mxu0 %v7400
        %7433 = vmatprep.subr.mxu0 0.0
        %7434 = vmatpush1.msra.mxu0 %v7399
        %7435 = vmatprep.subr.mxu0 0.0
        %7436 = vmatpush1.msra.mxu0 %v7398
        %7437 = vmatprep.subr.mxu0 0.0
        %7438 = vmatpush1.msra.mxu0 %v7397
        %7439 = vmatprep.subr.mxu0 0.0
        %7440 = vmatpush1.msra.mxu0 %v7396
        %7441 = vmatprep.subr.mxu0 0.0
        %7442 = vmatpush1.msra.mxu0 %v7395
        %7443 = vmatprep.subr.mxu0 0.0
        %7444 = vmatpush1.msra.mxu0 %v7394
        %7445 = vmatprep.subr.mxu0 0.0
        %7446 = vmatpush2.msra.mxu0 0.0
        %7447 = vmatprep.subr.mxu0 0.0
        %7448 = vmatpush2.msra.mxu0 0.0
        %7449 = vmatprep.subr.mxu0 0.0
        %7450 = vmatpush2.msra.mxu0 0.0
        %7451 = vmatprep.subr.mxu0 0.0
        %7452 = vmatpush2.msra.mxu0 0.0
        %7453 = vmatprep.subr.mxu0 0.0
        %7454 = vmatpush2.msra.mxu0 0.0
        %7455 = vmatprep.subr.mxu0 0.0
        %7456 = vmatpush2.msra.mxu0 0.0
        %7457 = vmatprep.subr.mxu0 0.0
        %7458 = vmatpush2.msra.mxu0 0.0
        %7459 = vmatprep.subr.mxu0 0.0
        %7460 = vmatpush2.msra.mxu0 0.0
        %7461 = vmatprep.subr.mxu0 0.0
        %7462 = vmatpush2.msra.mxu0 0.0
        %7463 = vmatprep.subr.mxu0 0.0
        %7464 = vmatpush2.msra.mxu0 0.0
        %7465 = vmatprep.subr.mxu0 0.0
        %7466 = vmatpush2.msra.mxu0 0.0
        %7467 = vmatprep.subr.mxu0 0.0
        %7468 = vmatpush2.msra.mxu0 0.0
        %7469 = vmatprep.subr.mxu0 0.0
        %7470 = vmatpush2.msra.mxu0 0.0
        %7471 = vmatprep.subr.mxu0 0.0
        %7472 = vmatpush2.msra.mxu0 0.0
        %7473 = vmatprep.subr.mxu0 0.0
        %7474 = vmatpush2.msra.mxu0 0.0
        %7475 = vmatprep.subr.mxu0 0.0
        %7476 = vmatpush2.msra.mxu0 0.0
        %7477 = vmatprep.mubr.f32.mxu0 0.0
        %7478 = vmatmul.mubr.f32.gmra.mxu0 %v7411
        %v7479 = vpop.f32.mrf.mxu0
        %v7480 = vadd.f32 %v7408, %v7479
        %v7481 = vpop.f32.mrf.mxu0
        %7482 = vdwg.mxu0
        %v7483 = vadd.f32 %v7305, %v7480
        %v7484 = vsel %vm568, %v7483, 0.0
        %7485 = vadd.xlane.f32.xlu0 %v7484
        %v7486 = vpop.xlane.xlu0 %7485
        %v7487 = vmul.f32 %v7486, %v1544
        %v7488 = vsub.f32 %v7483, %v7487
        %v7489 = vmul.f32 %v7488, %v7488
        %v7490 = vsel %vm568, %v7489, 0.0
        %7491 = vadd.xlane.f32.xlu0 %v7490
        %v7492 = vpop.xlane.xlu0 %7491
        %v7493 = vmul.f32 %v7492, %v1544
        %v7494 = vadd.f32 %v7493, 1e-05
        %v7495 = vrsqrt.pop %v7494
        %v7496 = vmul.f32 %v7488, %v7495
        %s7497 = scalar_lea.vmem %s10, 10
        %v7498 = vld [vmem:[%s7497] sm:$0x1]
        %v7500 = vlaneseq
        %v7501 = vshrl.u32 %v7500, 7
        %v7502 = vsub.s32 0, %v7501
        %v7503 = vrot.slane %v7498, %v7502
        %v7505 = vmul.f32 %v7496, %v7503
        %s7506 = scalar_lea.vmem %s11, 10
        %v7507 = vld [vmem:[%s7506] sm:$0x1]
        %v7509 = vlaneseq
        %v7510 = vshrl.u32 %v7509, 7
        %v7511 = vsub.s32 0, %v7510
        %v7512 = vrot.slane %v7507, %v7511
        %v7514 = vadd.f32 %v7505, %v7512
        %v7515 = vsel %vm568, %v7514, 0.0
        %7516 = vadd.xlane.f32.xlu0 %v7515
        %v7517 = vpop.xlane.xlu0 %7516
        %v7518 = vmul.f32 %v7517, %v1544
        %v7519 = vsub.f32 %v7514, %v7518
        %v7520 = vmul.f32 %v7519, %v7519
        %v7521 = vsel %vm568, %v7520, 0.0
        %7522 = vadd.xlane.f32.xlu0 %v7521
        %v7523 = vpop.xlane.xlu0 %7522
        %v7524 = vmul.f32 %v7523, %v1544
        %v7525 = vadd.f32 %v7524, 1e-05
        %v7526 = vrsqrt.pop %v7525
        %v7527 = vmul.f32 %v7519, %v7526
        %s7528 = scalar_lea.vmem %s10, 11
        %v7529 = vld [vmem:[%s7528] sm:$0x1]
        %v7531 = vlaneseq
        %v7532 = vshrl.u32 %v7531, 7
        %v7533 = vsub.s32 0, %v7532
        %v7534 = vrot.slane %v7529, %v7533
        %v7536 = vmul.f32 %v7527, %v7534
        %s7537 = scalar_lea.vmem %s11, 11
        %v7538 = vld [vmem:[%s7537] sm:$0x1]
        %v7540 = vlaneseq
        %v7541 = vshrl.u32 %v7540, 7
        %v7542 = vsub.s32 0, %v7541
        %v7543 = vrot.slane %v7538, %v7542
        %v7545 = vadd.f32 %v7536, %v7543
        %v7546 = vld [vmem:[%s12] sm:$0xff]
        %v7547 = vld [vmem:[%s12 + $0x8] sm:$0xff]
        %v7548 = vld [vmem:[%s12 + $0x10] sm:$0xff]
        %v7549 = vld [vmem:[%s12 + $0x18] sm:$0xff]
        %v7550 = vld [vmem:[%s13] sm:$0x1]
        %v7552 = vlaneseq
        %v7553 = vshrl.u32 %v7552, 7
        %v7554 = vsub.s32 0, %v7553
        %v7555 = vrot.slane %v7550, %v7554
        %v7558 = vsel %vm568, %v7545, 0
        %7560 = vmatprep.subr.mxu0 0.0
        %7561 = vmatpush1.msra.mxu0 0.0
        %7562 = vmatprep.subr.mxu0 0.0
        %7563 = vmatpush1.msra.mxu0 0.0
        %7564 = vmatprep.subr.mxu0 0.0
        %7565 = vmatpush1.msra.mxu0 0.0
        %7566 = vmatprep.subr.mxu0 0.0
        %7567 = vmatpush1.msra.mxu0 0.0
        %7568 = vmatprep.subr.mxu0 0.0
        %7569 = vmatpush1.msra.mxu0 0.0
        %7570 = vmatprep.subr.mxu0 0.0
        %7571 = vmatpush1.msra.mxu0 0.0
        %7572 = vmatprep.subr.mxu0 0.0
        %7573 = vmatpush1.msra.mxu0 0.0
        %7574 = vmatprep.subr.mxu0 0.0
        %7575 = vmatpush1.msra.mxu0 0.0
        %7576 = vmatprep.subr.mxu0 0.0
        %7577 = vmatpush1.msra.mxu0 0.0
        %7578 = vmatprep.subr.mxu0 0.0
        %7579 = vmatpush1.msra.mxu0 0.0
        %7580 = vmatprep.subr.mxu0 0.0
        %7581 = vmatpush1.msra.mxu0 0.0
        %7582 = vmatprep.subr.mxu0 0.0
        %7583 = vmatpush1.msra.mxu0 0.0
        %7584 = vmatprep.subr.mxu0 0.0
        %7585 = vmatpush1.msra.mxu0 %v7549
        %7586 = vmatprep.subr.mxu0 0.0
        %7587 = vmatpush1.msra.mxu0 %v7548
        %7588 = vmatprep.subr.mxu0 0.0
        %7589 = vmatpush1.msra.mxu0 %v7547
        %7590 = vmatprep.subr.mxu0 0.0
        %7591 = vmatpush1.msra.mxu0 %v7546
        %7592 = vmatprep.subr.mxu0 0.0
        %7593 = vmatpush2.msra.mxu0 0.0
        %7594 = vmatprep.subr.mxu0 0.0
        %7595 = vmatpush2.msra.mxu0 0.0
        %7596 = vmatprep.subr.mxu0 0.0
        %7597 = vmatpush2.msra.mxu0 0.0
        %7598 = vmatprep.subr.mxu0 0.0
        %7599 = vmatpush2.msra.mxu0 0.0
        %7600 = vmatprep.subr.mxu0 0.0
        %7601 = vmatpush2.msra.mxu0 0.0
        %7602 = vmatprep.subr.mxu0 0.0
        %7603 = vmatpush2.msra.mxu0 0.0
        %7604 = vmatprep.subr.mxu0 0.0
        %7605 = vmatpush2.msra.mxu0 0.0
        %7606 = vmatprep.subr.mxu0 0.0
        %7607 = vmatpush2.msra.mxu0 0.0
        %7608 = vmatprep.subr.mxu0 0.0
        %7609 = vmatpush2.msra.mxu0 0.0
        %7610 = vmatprep.subr.mxu0 0.0
        %7611 = vmatpush2.msra.mxu0 0.0
        %7612 = vmatprep.subr.mxu0 0.0
        %7613 = vmatpush2.msra.mxu0 0.0
        %7614 = vmatprep.subr.mxu0 0.0
        %7615 = vmatpush2.msra.mxu0 0.0
        %7616 = vmatprep.subr.mxu0 0.0
        %7617 = vmatpush2.msra.mxu0 0.0
        %7618 = vmatprep.subr.mxu0 0.0
        %7619 = vmatpush2.msra.mxu0 0.0
        %7620 = vmatprep.subr.mxu0 0.0
        %7621 = vmatpush2.msra.mxu0 0.0
        %7622 = vmatprep.subr.mxu0 0.0
        %7623 = vmatpush2.msra.mxu0 0.0
        %7624 = vmatprep.mubr.f32.mxu0 0.0
        %7625 = vmatmul.mubr.f32.gmra.mxu0 %v7558
        %v7626 = vpop.f32.mrf.mxu0
        %v7627 = vadd.f32 %v7555, %v7626
        %v7628 = vpop.f32.mrf.mxu0
        %7629 = vdwg.mxu0
        %7630 = vst [vmem:[%s458] sm:$0xff] %v7627
        %s7631 = sand.u32 %s335, 1
        %s7632 = scalar_lea.sflag [#allocation3], %s7631
        %s7633 = sand.u32 %s335, 1
        %s7634 = smul.addr %s7633, 8
        %s7635 = scalar_lea.vmem [#allocation2], %s7634
        // Predicated region
        $region77: #{simple_transformer_forward.1} parent=75 // pred_check
          %p7636 = pneg %p345
        $region78: #{simple_transformer_forward.1} parent=75 // pred_check_branch
          %7638 = sbr.rel (%p7636) target = $region80
        $region79: #{simple_transformer_forward.1} parent=75 // pred_region
          %s7640 = ssub.s32 128, 128
          %7641 = vsyncadd %s7632, %s7640
          %s7642 = smul.addr %s28, 128
          %s7643 = scalar_lea.hbm %s14, %s7642
          %s7645 = sshll.u32 %s7635, 4
          %s7646 = int_to_ptr.vmem [resolvable:$true] %s7645
          %7648 = dma.vmem_to_hbm [thread:$0]  %s7646, 128, %s7643, %s7632
        $region80: #{simple_transformer_forward.1} parent=75 // pred_fallthru
          _
      $region76: #{simple_transformer_forward.1} parent=5 // pred_fallthru
        _
      %p7649 = scmp.le.s32.totalorder 2, %s23
      // Predicated region
      $region81: #{simple_transformer_forward.1} parent=5 // pred_check
        %p7650 = pneg %p7649
      $region82: #{simple_transformer_forward.1} parent=5 // pred_check_branch
        %7652 = sbr.rel (%p7650) target = $region84
      $region83: #{simple_transformer_forward.1} parent=5 // pred_region
        %s7653 = ssub.s32 %s23, 2
        // Predicated region
        $region85: #{simple_transformer_forward.1} parent=83 // pred_check
          %p7654 = pneg %p351
        $region86: #{simple_transformer_forward.1} parent=83 // pred_check_branch
          %7656 = sbr.rel (%p7654) target = $region88
        $region87: #{simple_transformer_forward.1} parent=83 // pred_region
          %s7657 = sand.u32 %s336, 1
          %s7658 = scalar_lea.sflag [#allocation3], %s7657
          %s7659 = sand.u32 %s336, 1
          %s7660 = smul.addr %s7659, 8
          %s7661 = scalar_lea.vmem [#allocation2], %s7660
          %7662 = dma.done %s7658, 128
        $region88: #{simple_transformer_forward.1} parent=83 // pred_fallthru
          _
      $region84: #{simple_transformer_forward.1} parent=5 // pred_fallthru
        _
    $region6: #{simple_transformer_forward.1} parent=1 // loop_footer
      %s27 = sadd.s32 1, %s23
    $region7: #{simple_transformer_forward.1} parent=1 // loop_footer_branch
      %22 = sbr.rel target = $region3
    $region8: #{simple_transformer_forward.1} parent=1 // loop_exit
      _
    %7663 = vsyncpa [#allocation3], 1
    %s7664 = scalar_lea.sflag [#allocation3], 1
    %7665 = vsyncpa %s7664, 1

</llo_original>
